<compile_context>
chip_gen: v7x
topology: tpu7x:2x2x1
jax: 0.10.0
libtpu: 0.0.40
codegen_flags: <defaults>
</compile_context>

<pallas_src>
import functools

import jax
import jax.numpy as jnp
import numpy as np
from jax.experimental import pallas as pl
from jax.experimental.pallas import tpu as pltpu


def _round_up(n, m):
    return ((n + m - 1) // m) * m


def _convlstm_kernel(x_ref, h_ref, c_ref, w_ref, b_ref,
                     wci_ref, wcf_ref, wco_ref,
                     ch_ref, cc_ref,
                     flat_ref, acc_ref,
                     *, H, W, K, Cin, Ch, pad, Ws, VMARG):
    """One batch element per grid step.

    x_ref   : (1, H, W, Cin)       input x (f32, NHWC)
    h_ref   : (1, H, W, Ch)        hidden state h (f32, NHWC)
    c_ref   : (1, Ch, H*W)         cell state, channel-major (f32)
    w_ref   : (K*K, CP, 4*Ch)      fused conv weights (bf16), gate order [i,f,c,o]
    b_ref   : (1, 4*Ch)            fused x-conv biases (f32)
    wci/wcf/wco_ref : (Ch, H*W)    peephole weights, channel-major (f32)
    ch_ref, cc_ref  : (1, Ch, H*W) outputs, channel-major (f32)
    flat_ref : (TOT, CP) f32       row-strided combined x|h image:
                                   pixel (y, x) lives at flat row
                                   VMARG + y*Ws + x, lanes [0, Cin+Ch);
                                   margins / row tails / spare lanes are zero.
    acc_ref  : (H*Ws, 4*Ch) f32    conv-gate accumulator (gap rows are junk).
    """
    HW = H * W
    M = H * Ws
    CP = flat_ref.shape[-1]
    TOT = flat_ref.shape[0]
    f32 = jnp.float32

    # ---- (re)build the flat combined image ---------------------------------
    # Only the halo is re-zeroed; data rows are fully overwritten (all CP
    # lanes) every step -> no cross-step scratch dependence ("parallel"-safe),
    # and no uninitialized VMEM can ever feed the MXU.
    if VMARG > 0:
        flat_ref[0:VMARG, :] = jnp.zeros((VMARG, CP), f32)
    if TOT > VMARG + M:
        flat_ref[VMARG + M:TOT, :] = jnp.zeros((TOT - VMARG - M, CP), f32)

    lane_pad = CP - Cin - Ch
    lane_z = jnp.zeros((W, lane_pad), f32) if lane_pad > 0 else None   # hoisted
    tail_z = jnp.zeros((Ws - W, CP), f32) if Ws > W else None          # hoisted
    for yi in range(H):
        r0 = VMARG + yi * Ws                      # multiple of 8 -> aligned
        parts = [x_ref[0, yi].astype(f32), h_ref[0, yi].astype(f32)]
        if lane_z is not None:
            parts.append(lane_z)
        flat_ref[r0:r0 + W, :] = jnp.concatenate(parts, axis=-1)       # (W, CP)
        if tail_z is not None:
            flat_ref[r0 + W:r0 + Ws, :] = tail_z

    # ---- all 8 convolutions: K*K accumulated MXU dots (bf16 in, f32 acc) ----
    # Tap (dy, dx) operand is a plain static row-offset slice of the flat
    # scratch; the zero gaps/margins provide the conv zero-padding exactly.
    for dy in range(K):
        for dx in range(K):
            tap = dy * K + dx
            start = VMARG + (dy - pad) * Ws + (dx - pad)
            opnd = flat_ref[start:start + M, :].astype(jnp.bfloat16)
            contrib = jnp.dot(opnd, w_ref[tap],
                              preferred_element_type=f32)              # (M, 4*Ch)
            if tap == 0:
                acc_ref[...] = contrib
            else:
                acc_ref[...] += contrib

    # ---- extract the real rows, add bias, go lane-dense ---------------------
    # Ws is a multiple of 8 and the slice starts at 0, so both reshapes and
    # the slice are layout-preserving / tile-aligned.
    gates = acc_ref[...].reshape(H, Ws, 4 * Ch)[:, 0:W, :].reshape(HW, 4 * Ch)
    gates = gates + b_ref[...]
    gt = jnp.transpose(gates)                     # (4*Ch, HW): one XLU transpose

    gi = gt[0 * Ch:1 * Ch, :]
    gf = gt[1 * Ch:2 * Ch, :]
    gc = gt[2 * Ch:3 * Ch, :]
    go = gt[3 * Ch:4 * Ch, :]

    c = c_ref[0]                                  # (Ch, HW) f32

    # ---- peephole ConvLSTM gate math (all f32, full 256-lane vregs) ---------
    ci = jax.nn.sigmoid(gi + c * wci_ref[...])
    cf = jax.nn.sigmoid(gf + c * wcf_ref[...])
    cc = cf * c + ci * jnp.tanh(gc)
    co = jax.nn.sigmoid(go + cc * wco_ref[...])
    ch = co * jnp.tanh(cc)

    ch_ref[0] = ch.astype(ch_ref.dtype)           # unmasked 256-wide stores
    cc_ref[0] = cc.astype(cc_ref.dtype)


def convlstm_cell_forward(x, h, c, wx, wh, bias, wci, wcf, wco, kernel_size):
    """x, h, c in NHWC.  wx: (K*K, Cin, 4*Ch), wh: (K*K, Ch, 4*Ch),
    bias: (1, 4*Ch), wci/wcf/wco: (H, W, Ch).  Gate order [i, f, c, o].
    Returns (ch, cc) in NHWC."""
    B, H, W, Cin = x.shape
    Ch = h.shape[-1]
    K = kernel_size
    pad = (K - 1) // 2
    HW = H * W

    # Combined contraction chunk: x lanes [0,Cin), h lanes [Cin,Cin+Ch),
    # rest zero (matching zero weight rows).
    CP = max(128, _round_up(Cin + Ch, 128))
    # Flat-scratch geometry (see kernel docstring).
    Ws = _round_up(W + 2 * pad, 8)                # row stride, sublane aligned
    VMARG = _round_up(pad * (Ws + 1), 8)          # top margin (zeros)
    M = H * Ws                                    # accumulator rows
    TOT = _round_up(VMARG + pad * Ws + pad + M, 8)

    # Fused conv weight: (tap, [x chans | h chans | zero pad], 4*Ch gates).
    w_fused = jnp.zeros((K * K, CP, 4 * Ch), jnp.float32)
    w_fused = w_fused.at[:, 0:Cin, :].set(wx)
    w_fused = w_fused.at[:, Cin:Cin + Ch, :].set(wh)
    w_fused = w_fused.astype(jnp.bfloat16)

    # Channel-major (lane-dense) layouts for state / peephole / outputs.
    c2 = jnp.transpose(c, (0, 3, 1, 2)).reshape(B, Ch, HW)
    wci2 = jnp.transpose(wci, (2, 0, 1)).reshape(Ch, HW)
    wcf2 = jnp.transpose(wcf, (2, 0, 1)).reshape(Ch, HW)
    wco2 = jnp.transpose(wco, (2, 0, 1)).reshape(Ch, HW)

    kernel = functools.partial(_convlstm_kernel, H=H, W=W, K=K, Cin=Cin,
                               Ch=Ch, pad=pad, Ws=Ws, VMARG=VMARG)

    out_shapes = (
        jax.ShapeDtypeStruct((B, Ch, HW), jnp.float32),
        jax.ShapeDtypeStruct((B, Ch, HW), jnp.float32),
    )

    grid_spec = pltpu.PrefetchScalarGridSpec(
        num_scalar_prefetch=0,
        grid=(B,),
        in_specs=[
            pl.BlockSpec((1, H, W, Cin), lambda b: (b, 0, 0, 0)),   # x
            pl.BlockSpec((1, H, W, Ch), lambda b: (b, 0, 0, 0)),    # h
            pl.BlockSpec((1, Ch, HW), lambda b: (b, 0, 0)),         # c
            pl.BlockSpec((K * K, CP, 4 * Ch), lambda b: (0, 0, 0)), # fused W
            pl.BlockSpec((1, 4 * Ch), lambda b: (0, 0)),            # bias
            pl.BlockSpec((Ch, HW), lambda b: (0, 0)),               # Wci
            pl.BlockSpec((Ch, HW), lambda b: (0, 0)),               # Wcf
            pl.BlockSpec((Ch, HW), lambda b: (0, 0)),               # Wco
        ],
        out_specs=[
            pl.BlockSpec((1, Ch, HW), lambda b: (b, 0, 0)),
            pl.BlockSpec((1, Ch, HW), lambda b: (b, 0, 0)),
        ],
        scratch_shapes=[
            pltpu.VMEM((TOT, CP), jnp.float32),        # flat combined image
            pltpu.VMEM((M, 4 * Ch), jnp.float32),      # gate accumulator
        ],
    )

    # Batch axis is "parallel": the kernel has no cross-step scratch state, so
    # it is safe under any core partitioning (v7x).  At production H/W, add a
    # spatial grid axis with a (K-1)-row halo and set vmem_limit_bytes for
    # v7x's 64 MiB VMEM.
    ch2, cc2 = pl.pallas_call(
        kernel,
        out_shape=out_shapes,
        grid_spec=grid_spec,
        compiler_params=pltpu.CompilerParams(
            dimension_semantics=("parallel",)),
    )(x, h, c2, w_fused, bias, wci2, wcf2, wco2)

    ch_out = jnp.transpose(ch2.reshape(B, Ch, H, W), (0, 2, 3, 1))
    cc_out = jnp.transpose(cc2.reshape(B, Ch, H, W), (0, 2, 3, 1))
    return ch_out, cc_out


# --------------------------- pure-JAX reference ---------------------------
def _conv_nhwc(x, w_hwio, bias, pad):
    out = jax.lax.conv_general_dilated(
        x, w_hwio, window_strides=(1, 1),
        padding=[(pad, pad), (pad, pad)],
        dimension_numbers=("NHWC", "HWIO", "NHWC"),
        precision=jax.lax.Precision.HIGHEST)
    if bias is not None:
        out = out + bias
    return out


def convlstm_reference(x, h, c, wx, wh, bias, wci, wcf, wco, kernel_size):
    """Pure-JAX reference.  Mirrors the kernel's bf16 MXU inputs, f32 math."""
    K = kernel_size
    pad = (K - 1) // 2
    Cin = x.shape[-1]
    Ch = h.shape[-1]
    f32 = jnp.float32

    xb = x.astype(jnp.bfloat16).astype(f32)
    hb = h.astype(jnp.bfloat16).astype(f32)
    wx_hwio = wx.astype(jnp.bfloat16).astype(f32).reshape(K, K, Cin, 4 * Ch)
    wh_hwio = wh.astype(jnp.bfloat16).astype(f32).reshape(K, K, Ch, 4 * Ch)

    gx = _conv_nhwc(xb, wx_hwio, bias[0], pad)
    gh = _conv_nhwc(hb, wh_hwio, None, pad)
    g = gx + gh
    gi, gf, gc, go = (g[..., i * Ch:(i + 1) * Ch] for i in range(4))

    ci = jax.nn.sigmoid(gi + c * wci[None])
    cf = jax.nn.sigmoid(gf + c * wcf[None])
    cc = cf * c + ci * jnp.tanh(gc)
    co = jax.nn.sigmoid(go + cc * wco[None])
    ch = co * jnp.tanh(cc)
    return ch, cc


if __name__ == "__main__":
    # Small shapes consistent with the module: batch=2, input_channels=4,
    # hidden_channels=32, spatial 16x16, kernel_size=3.
    B, Cin, Ch, H, W, K = 2, 4, 32, 16, 16, 3

    key = jax.random.PRNGKey(0)
    keys = jax.random.split(key, 9)

    # Deterministic synthetic parameters (gate order [i, f, c, o]).
    wx = 0.1 * jax.random.normal(keys[0], (K * K, Cin, 4 * Ch), jnp.float32)
    wh = 0.1 * jax.random.normal(keys[1], (K * K, Ch, 4 * Ch), jnp.float32)
    bias = 0.1 * jax.random.normal(keys[2], (1, 4 * Ch), jnp.float32)
    # Peephole weights (init_hidden zero-inits them; small random values here
    # so the peephole path of the kernel is actually exercised).
    wci = 0.1 * jax.random.normal(keys[3], (H, W, Ch), jnp.float32)
    wcf = 0.1 * jax.random.normal(keys[4], (H, W, Ch), jnp.float32)
    wco = 0.1 * jax.random.normal(keys[5], (H, W, Ch), jnp.float32)

    x = jax.random.normal(keys[6], (B, H, W, Cin), jnp.float32)
    h = jax.random.normal(keys[7], (B, H, W, Ch), jnp.float32)
    c = jax.random.normal(keys[8], (B, H, W, Ch), jnp.float32)

    ch_out, cc_out = convlstm_cell_forward(
        x, h, c, wx, wh, bias, wci, wcf, wco, K)
    jax.block_until_ready((ch_out, cc_out))

    ch_ref, cc_ref = convlstm_reference(
        x, h, c, wx, wh, bias, wci, wcf, wco, K)

    assert np.allclose(np.asarray(ch_out), np.asarray(ch_ref),
                       rtol=1e-3, atol=2e-4), "ch mismatch vs reference"
    assert np.allclose(np.asarray(cc_out), np.asarray(cc_ref),
                       rtol=1e-3, atol=2e-4), "cc mismatch vs reference"

    print("KERNEL_OK")
</pallas_src>

<mosaic_0001>
module attributes {stable_mosaic.version = 11 : i64} {
  func.func @_convlstm_kernel(%arg0: i32, %arg1: memref<1x16x16x4xf32, #tpu.memory_space<vmem>>, %arg2: memref<1x16x16x32xf32, #tpu.memory_space<vmem>>, %arg3: memref<1x32x256xf32, #tpu.memory_space<vmem>>, %arg4: memref<9x128x128xbf16, #tpu.memory_space<vmem>>, %arg5: memref<1x128xf32, #tpu.memory_space<vmem>>, %arg6: memref<32x256xf32, #tpu.memory_space<vmem>>, %arg7: memref<32x256xf32, #tpu.memory_space<vmem>>, %arg8: memref<32x256xf32, #tpu.memory_space<vmem>>, %arg9: memref<1x32x256xf32, #tpu.memory_space<vmem>>, %arg10: memref<1x32x256xf32, #tpu.memory_space<vmem>>, %arg11: memref<448x128xf32, #tpu.memory_space<vmem>>, %arg12: memref<384x128xf32, #tpu.memory_space<vmem>>) attributes {dimension_semantics = [#tpu.dimension_semantics<parallel>], iteration_bounds = array<i64: 2>, scalar_prefetch = 0 : i64, scratch_operands = 2 : i64, tpu.core_type = #tpu.core_type<tc>, window_params = [{transform_indices = @transform_0, window_bounds = array<i64: 1, 16, 16, 4>}, {transform_indices = @transform_1, window_bounds = array<i64: 1, 16, 16, 32>}, {transform_indices = @transform_2, window_bounds = array<i64: 1, 32, 256>}, {pipeline_mode = #tpu.pipeline_mode<synchronous>, transform_indices = @transform_3, window_bounds = array<i64: 9, 128, 128>}, {pipeline_mode = #tpu.pipeline_mode<synchronous>, transform_indices = @transform_4, window_bounds = array<i64: 1, 128>}, {pipeline_mode = #tpu.pipeline_mode<synchronous>, transform_indices = @transform_5, window_bounds = array<i64: 32, 256>}, {pipeline_mode = #tpu.pipeline_mode<synchronous>, transform_indices = @transform_6, window_bounds = array<i64: 32, 256>}, {pipeline_mode = #tpu.pipeline_mode<synchronous>, transform_indices = @transform_7, window_bounds = array<i64: 32, 256>}, {transform_indices = @transform_8, window_bounds = array<i64: 1, 32, 256>}, {transform_indices = @transform_9, window_bounds = array<i64: 1, 32, 256>}]} {
    %cst = arith.constant 0.000000e+00 : f32
    %0 = vector.broadcast %cst : f32 to vector<32x128xf32>
    %c0 = arith.constant 0 : index
    %c0_0 = arith.constant 0 : index
    %1 = vector.load %arg11[%c0, %c0_0] : memref<448x128xf32, #tpu.memory_space<vmem>>, vector<32x128xf32>
    tpu.vector_store %arg11[%c0, %c0_0], %0 {strides = array<i32>} : memref<448x128xf32, #tpu.memory_space<vmem>>, vector<32x128xf32>,
    %cst_1 = arith.constant 0.000000e+00 : f32
    %2 = vector.broadcast %cst_1 : f32 to vector<32x128xf32>
    %c416 = arith.constant 416 : index
    %c0_2 = arith.constant 0 : index
    %3 = vector.load %arg11[%c416, %c0_2] : memref<448x128xf32, #tpu.memory_space<vmem>>, vector<32x128xf32>
    tpu.vector_store %arg11[%c416, %c0_2], %2 {strides = array<i32>} : memref<448x128xf32, #tpu.memory_space<vmem>>, vector<32x128xf32>,
    %cst_3 = arith.constant 0.000000e+00 : f32
    %4 = vector.broadcast %cst_3 : f32 to vector<16x92xf32>
    %cst_4 = arith.constant 0.000000e+00 : f32
    %5 = vector.broadcast %cst_4 : f32 to vector<8x128xf32>
    %c0_5 = arith.constant 0 : index
    %c0_6 = arith.constant 0 : index
    %c0_7 = arith.constant 0 : index
    %c0_8 = arith.constant 0 : index
    %6 = vector.load %arg1[%c0_5, %c0_6, %c0_7, %c0_8] : memref<1x16x16x4xf32, #tpu.memory_space<vmem>>, vector<1x1x16x4xf32>
    %7 = vector.shape_cast %6 : vector<1x1x16x4xf32> to vector<16x4xf32>
    %c0_9 = arith.constant 0 : index
    %c0_10 = arith.constant 0 : index
    %c0_11 = arith.constant 0 : index
    %c0_12 = arith.constant 0 : index
    %8 = vector.load %arg2[%c0_9, %c0_10, %c0_11, %c0_12] : memref<1x16x16x32xf32, #tpu.memory_space<vmem>>, vector<1x1x16x32xf32>
    %9 = vector.shape_cast %8 : vector<1x1x16x32xf32> to vector<16x32xf32>
    %10 = tpu.concatenate %7, %9, %4 in 1 : vector<16x4xf32>, vector<16x32xf32>, vector<16x92xf32> -> vector<16x128xf32>
    %c32 = arith.constant 32 : index
    %c0_13 = arith.constant 0 : index
    %11 = vector.load %arg11[%c32, %c0_13] : memref<448x128xf32, #tpu.memory_space<vmem>>, vector<16x128xf32>
    tpu.vector_store %arg11[%c32, %c0_13], %10 {strides = array<i32>} : memref<448x128xf32, #tpu.memory_space<vmem>>, vector<16x128xf32>,
    %c48 = arith.constant 48 : index
    %c0_14 = arith.constant 0 : index
    %12 = vector.load %arg11[%c48, %c0_14] : memref<448x128xf32, #tpu.memory_space<vmem>>, vector<8x128xf32>
    tpu.vector_store %arg11[%c48, %c0_14], %5 {strides = array<i32>} : memref<448x128xf32, #tpu.memory_space<vmem>>, vector<8x128xf32>,
    %c0_15 = arith.constant 0 : index
    %c1 = arith.constant 1 : index
    %c0_16 = arith.constant 0 : index
    %c0_17 = arith.constant 0 : index
    %13 = vector.load %arg1[%c0_15, %c1, %c0_16, %c0_17] : memref<1x16x16x4xf32, #tpu.memory_space<vmem>>, vector<1x1x16x4xf32>
    %14 = vector.shape_cast %13 : vector<1x1x16x4xf32> to vector<16x4xf32>
    %c0_18 = arith.constant 0 : index
    %c1_19 = arith.constant 1 : index
    %c0_20 = arith.constant 0 : index
    %c0_21 = arith.constant 0 : index
    %15 = vector.load %arg2[%c0_18, %c1_19, %c0_20, %c0_21] : memref<1x16x16x32xf32, #tpu.memory_space<vmem>>, vector<1x1x16x32xf32>
    %16 = vector.shape_cast %15 : vector<1x1x16x32xf32> to vector<16x32xf32>
    %17 = tpu.concatenate %14, %16, %4 in 1 : vector<16x4xf32>, vector<16x32xf32>, vector<16x92xf32> -> vector<16x128xf32>
    %c56 = arith.constant 56 : index
    %c0_22 = arith.constant 0 : index
    %18 = vector.load %arg11[%c56, %c0_22] : memref<448x128xf32, #tpu.memory_space<vmem>>, vector<16x128xf32>
    tpu.vector_store %arg11[%c56, %c0_22], %17 {strides = array<i32>} : memref<448x128xf32, #tpu.memory_space<vmem>>, vector<16x128xf32>,
    %c72 = arith.constant 72 : index
    %c0_23 = arith.constant 0 : index
    %19 = vector.load %arg11[%c72, %c0_23] : memref<448x128xf32, #tpu.memory_space<vmem>>, vector<8x128xf32>
    tpu.vector_store %arg11[%c72, %c0_23], %5 {strides = array<i32>} : memref<448x128xf32, #tpu.memory_space<vmem>>, vector<8x128xf32>,
    %c0_24 = arith.constant 0 : index
    %c2 = arith.constant 2 : index
    %c0_25 = arith.constant 0 : index
    %c0_26 = arith.constant 0 : index
    %20 = vector.load %arg1[%c0_24, %c2, %c0_25, %c0_26] : memref<1x16x16x4xf32, #tpu.memory_space<vmem>>, vector<1x1x16x4xf32>
    %21 = vector.shape_cast %20 : vector<1x1x16x4xf32> to vector<16x4xf32>
    %c0_27 = arith.constant 0 : index
    %c2_28 = arith.constant 2 : index
    %c0_29 = arith.constant 0 : index
    %c0_30 = arith.constant 0 : index
    %22 = vector.load %arg2[%c0_27, %c2_28, %c0_29, %c0_30] : memref<1x16x16x32xf32, #tpu.memory_space<vmem>>, vector<1x1x16x32xf32>
    %23 = vector.shape_cast %22 : vector<1x1x16x32xf32> to vector<16x32xf32>
    %24 = tpu.concatenate %21, %23, %4 in 1 : vector<16x4xf32>, vector<16x32xf32>, vector<16x92xf32> -> vector<16x128xf32>
    %c80 = arith.constant 80 : index
    %c0_31 = arith.constant 0 : index
    %25 = vector.load %arg11[%c80, %c0_31] : memref<448x128xf32, #tpu.memory_space<vmem>>, vector<16x128xf32>
    tpu.vector_store %arg11[%c80, %c0_31], %24 {strides = array<i32>} : memref<448x128xf32, #tpu.memory_space<vmem>>, vector<16x128xf32>,
    %c96 = arith.constant 96 : index
    %c0_32 = arith.constant 0 : index
    %26 = vector.load %arg11[%c96, %c0_32] : memref<448x128xf32, #tpu.memory_space<vmem>>, vector<8x128xf32>
    tpu.vector_store %arg11[%c96, %c0_32], %5 {strides = array<i32>} : memref<448x128xf32, #tpu.memory_space<vmem>>, vector<8x128xf32>,
    %c0_33 = arith.constant 0 : index
    %c3 = arith.constant 3 : index
    %c0_34 = arith.constant 0 : index
    %c0_35 = arith.constant 0 : index
    %27 = vector.load %arg1[%c0_33, %c3, %c0_34, %c0_35] : memref<1x16x16x4xf32, #tpu.memory_space<vmem>>, vector<1x1x16x4xf32>
    %28 = vector.shape_cast %27 : vector<1x1x16x4xf32> to vector<16x4xf32>
    %c0_36 = arith.constant 0 : index
    %c3_37 = arith.constant 3 : index
    %c0_38 = arith.constant 0 : index
    %c0_39 = arith.constant 0 : index
    %29 = vector.load %arg2[%c0_36, %c3_37, %c0_38, %c0_39] : memref<1x16x16x32xf32, #tpu.memory_space<vmem>>, vector<1x1x16x32xf32>
    %30 = vector.shape_cast %29 : vector<1x1x16x32xf32> to vector<16x32xf32>
    %31 = tpu.concatenate %28, %30, %4 in 1 : vector<16x4xf32>, vector<16x32xf32>, vector<16x92xf32> -> vector<16x128xf32>
    %c104 = arith.constant 104 : index
    %c0_40 = arith.constant 0 : index
    %32 = vector.load %arg11[%c104, %c0_40] : memref<448x128xf32, #tpu.memory_space<vmem>>, vector<16x128xf32>
    tpu.vector_store %arg11[%c104, %c0_40], %31 {strides = array<i32>} : memref<448x128xf32, #tpu.memory_space<vmem>>, vector<16x128xf32>,
    %c120 = arith.constant 120 : index
    %c0_41 = arith.constant 0 : index
    %33 = vector.load %arg11[%c120, %c0_41] : memref<448x128xf32, #tpu.memory_space<vmem>>, vector<8x128xf32>
    tpu.vector_store %arg11[%c120, %c0_41], %5 {strides = array<i32>} : memref<448x128xf32, #tpu.memory_space<vmem>>, vector<8x128xf32>,
    %c0_42 = arith.constant 0 : index
    %c4 = arith.constant 4 : index
    %c0_43 = arith.constant 0 : index
    %c0_44 = arith.constant 0 : index
    %34 = vector.load %arg1[%c0_42, %c4, %c0_43, %c0_44] : memref<1x16x16x4xf32, #tpu.memory_space<vmem>>, vector<1x1x16x4xf32>
    %35 = vector.shape_cast %34 : vector<1x1x16x4xf32> to vector<16x4xf32>
    %c0_45 = arith.constant 0 : index
    %c4_46 = arith.constant 4 : index
    %c0_47 = arith.constant 0 : index
    %c0_48 = arith.constant 0 : index
    %36 = vector.load %arg2[%c0_45, %c4_46, %c0_47, %c0_48] : memref<1x16x16x32xf32, #tpu.memory_space<vmem>>, vector<1x1x16x32xf32>
    %37 = vector.shape_cast %36 : vector<1x1x16x32xf32> to vector<16x32xf32>
    %38 = tpu.concatenate %35, %37, %4 in 1 : vector<16x4xf32>, vector<16x32xf32>, vector<16x92xf32> -> vector<16x128xf32>
    %c128 = arith.constant 128 : index
    %c0_49 = arith.constant 0 : index
    %39 = vector.load %arg11[%c128, %c0_49] : memref<448x128xf32, #tpu.memory_space<vmem>>, vector<16x128xf32>
    tpu.vector_store %arg11[%c128, %c0_49], %38 {strides = array<i32>} : memref<448x128xf32, #tpu.memory_space<vmem>>, vector<16x128xf32>,
    %c144 = arith.constant 144 : index
    %c0_50 = arith.constant 0 : index
    %40 = vector.load %arg11[%c144, %c0_50] : memref<448x128xf32, #tpu.memory_space<vmem>>, vector<8x128xf32>
    tpu.vector_store %arg11[%c144, %c0_50], %5 {strides = array<i32>} : memref<448x128xf32, #tpu.memory_space<vmem>>, vector<8x128xf32>,
    %c0_51 = arith.constant 0 : index
    %c5 = arith.constant 5 : index
    %c0_52 = arith.constant 0 : index
    %c0_53 = arith.constant 0 : index
    %41 = vector.load %arg1[%c0_51, %c5, %c0_52, %c0_53] : memref<1x16x16x4xf32, #tpu.memory_space<vmem>>, vector<1x1x16x4xf32>
    %42 = vector.shape_cast %41 : vector<1x1x16x4xf32> to vector<16x4xf32>
    %c0_54 = arith.constant 0 : index
    %c5_55 = arith.constant 5 : index
    %c0_56 = arith.constant 0 : index
    %c0_57 = arith.constant 0 : index
    %43 = vector.load %arg2[%c0_54, %c5_55, %c0_56, %c0_57] : memref<1x16x16x32xf32, #tpu.memory_space<vmem>>, vector<1x1x16x32xf32>
    %44 = vector.shape_cast %43 : vector<1x1x16x32xf32> to vector<16x32xf32>
    %45 = tpu.concatenate %42, %44, %4 in 1 : vector<16x4xf32>, vector<16x32xf32>, vector<16x92xf32> -> vector<16x128xf32>
    %c152 = arith.constant 152 : index
    %c0_58 = arith.constant 0 : index
    %46 = vector.load %arg11[%c152, %c0_58] : memref<448x128xf32, #tpu.memory_space<vmem>>, vector<16x128xf32>
    tpu.vector_store %arg11[%c152, %c0_58], %45 {strides = array<i32>} : memref<448x128xf32, #tpu.memory_space<vmem>>, vector<16x128xf32>,
    %c168 = arith.constant 168 : index
    %c0_59 = arith.constant 0 : index
    %47 = vector.load %arg11[%c168, %c0_59] : memref<448x128xf32, #tpu.memory_space<vmem>>, vector<8x128xf32>
    tpu.vector_store %arg11[%c168, %c0_59], %5 {strides = array<i32>} : memref<448x128xf32, #tpu.memory_space<vmem>>, vector<8x128xf32>,
    %c0_60 = arith.constant 0 : index
    %c6 = arith.constant 6 : index
    %c0_61 = arith.constant 0 : index
    %c0_62 = arith.constant 0 : index
    %48 = vector.load %arg1[%c0_60, %c6, %c0_61, %c0_62] : memref<1x16x16x4xf32, #tpu.memory_space<vmem>>, vector<1x1x16x4xf32>
    %49 = vector.shape_cast %48 : vector<1x1x16x4xf32> to vector<16x4xf32>
    %c0_63 = arith.constant 0 : index
    %c6_64 = arith.constant 6 : index
    %c0_65 = arith.constant 0 : index
    %c0_66 = arith.constant 0 : index
    %50 = vector.load %arg2[%c0_63, %c6_64, %c0_65, %c0_66] : memref<1x16x16x32xf32, #tpu.memory_space<vmem>>, vector<1x1x16x32xf32>
    %51 = vector.shape_cast %50 : vector<1x1x16x32xf32> to vector<16x32xf32>
    %52 = tpu.concatenate %49, %51, %4 in 1 : vector<16x4xf32>, vector<16x32xf32>, vector<16x92xf32> -> vector<16x128xf32>
    %c176 = arith.constant 176 : index
    %c0_67 = arith.constant 0 : index
    %53 = vector.load %arg11[%c176, %c0_67] : memref<448x128xf32, #tpu.memory_space<vmem>>, vector<16x128xf32>
    tpu.vector_store %arg11[%c176, %c0_67], %52 {strides = array<i32>} : memref<448x128xf32, #tpu.memory_space<vmem>>, vector<16x128xf32>,
    %c192 = arith.constant 192 : index
    %c0_68 = arith.constant 0 : index
    %54 = vector.load %arg11[%c192, %c0_68] : memref<448x128xf32, #tpu.memory_space<vmem>>, vector<8x128xf32>
    tpu.vector_store %arg11[%c192, %c0_68], %5 {strides = array<i32>} : memref<448x128xf32, #tpu.memory_space<vmem>>, vector<8x128xf32>,
    %c0_69 = arith.constant 0 : index
    %c7 = arith.constant 7 : index
    %c0_70 = arith.constant 0 : index
    %c0_71 = arith.constant 0 : index
    %55 = vector.load %arg1[%c0_69, %c7, %c0_70, %c0_71] : memref<1x16x16x4xf32, #tpu.memory_space<vmem>>, vector<1x1x16x4xf32>
    %56 = vector.shape_cast %55 : vector<1x1x16x4xf32> to vector<16x4xf32>
    %c0_72 = arith.constant 0 : index
    %c7_73 = arith.constant 7 : index
    %c0_74 = arith.constant 0 : index
    %c0_75 = arith.constant 0 : index
    %57 = vector.load %arg2[%c0_72, %c7_73, %c0_74, %c0_75] : memref<1x16x16x32xf32, #tpu.memory_space<vmem>>, vector<1x1x16x32xf32>
    %58 = vector.shape_cast %57 : vector<1x1x16x32xf32> to vector<16x32xf32>
    %59 = tpu.concatenate %56, %58, %4 in 1 : vector<16x4xf32>, vector<16x32xf32>, vector<16x92xf32> -> vector<16x128xf32>
    %c200 = arith.constant 200 : index
    %c0_76 = arith.constant 0 : index
    %60 = vector.load %arg11[%c200, %c0_76] : memref<448x128xf32, #tpu.memory_space<vmem>>, vector<16x128xf32>
    tpu.vector_store %arg11[%c200, %c0_76], %59 {strides = array<i32>} : memref<448x128xf32, #tpu.memory_space<vmem>>, vector<16x128xf32>,
    %c216 = arith.constant 216 : index
    %c0_77 = arith.constant 0 : index
    %61 = vector.load %arg11[%c216, %c0_77] : memref<448x128xf32, #tpu.memory_space<vmem>>, vector<8x128xf32>
    tpu.vector_store %arg11[%c216, %c0_77], %5 {strides = array<i32>} : memref<448x128xf32, #tpu.memory_space<vmem>>, vector<8x128xf32>,
    %c0_78 = arith.constant 0 : index
    %c8 = arith.constant 8 : index
    %c0_79 = arith.constant 0 : index
    %c0_80 = arith.constant 0 : index
    %62 = vector.load %arg1[%c0_78, %c8, %c0_79, %c0_80] : memref<1x16x16x4xf32, #tpu.memory_space<vmem>>, vector<1x1x16x4xf32>
    %63 = vector.shape_cast %62 : vector<1x1x16x4xf32> to vector<16x4xf32>
    %c0_81 = arith.constant 0 : index
    %c8_82 = arith.constant 8 : index
    %c0_83 = arith.constant 0 : index
    %c0_84 = arith.constant 0 : index
    %64 = vector.load %arg2[%c0_81, %c8_82, %c0_83, %c0_84] : memref<1x16x16x32xf32, #tpu.memory_space<vmem>>, vector<1x1x16x32xf32>
    %65 = vector.shape_cast %64 : vector<1x1x16x32xf32> to vector<16x32xf32>
    %66 = tpu.concatenate %63, %65, %4 in 1 : vector<16x4xf32>, vector<16x32xf32>, vector<16x92xf32> -> vector<16x128xf32>
    %c224 = arith.constant 224 : index
    %c0_85 = arith.constant 0 : index
    %67 = vector.load %arg11[%c224, %c0_85] : memref<448x128xf32, #tpu.memory_space<vmem>>, vector<16x128xf32>
    tpu.vector_store %arg11[%c224, %c0_85], %66 {strides = array<i32>} : memref<448x128xf32, #tpu.memory_space<vmem>>, vector<16x128xf32>,
    %c240 = arith.constant 240 : index
    %c0_86 = arith.constant 0 : index
    %68 = vector.load %arg11[%c240, %c0_86] : memref<448x128xf32, #tpu.memory_space<vmem>>, vector<8x128xf32>
    tpu.vector_store %arg11[%c240, %c0_86], %5 {strides = array<i32>} : memref<448x128xf32, #tpu.memory_space<vmem>>, vector<8x128xf32>,
    %c0_87 = arith.constant 0 : index
    %c9 = arith.constant 9 : index
    %c0_88 = arith.constant 0 : index
    %c0_89 = arith.constant 0 : index
    %69 = vector.load %arg1[%c0_87, %c9, %c0_88, %c0_89] : memref<1x16x16x4xf32, #tpu.memory_space<vmem>>, vector<1x1x16x4xf32>
    %70 = vector.shape_cast %69 : vector<1x1x16x4xf32> to vector<16x4xf32>
    %c0_90 = arith.constant 0 : index
    %c9_91 = arith.constant 9 : index
    %c0_92 = arith.constant 0 : index
    %c0_93 = arith.constant 0 : index
    %71 = vector.load %arg2[%c0_90, %c9_91, %c0_92, %c0_93] : memref<1x16x16x32xf32, #tpu.memory_space<vmem>>, vector<1x1x16x32xf32>
    %72 = vector.shape_cast %71 : vector<1x1x16x32xf32> to vector<16x32xf32>
    %73 = tpu.concatenate %70, %72, %4 in 1 : vector<16x4xf32>, vector<16x32xf32>, vector<16x92xf32> -> vector<16x128xf32>
    %c248 = arith.constant 248 : index
    %c0_94 = arith.constant 0 : index
    %74 = vector.load %arg11[%c248, %c0_94] : memref<448x128xf32, #tpu.memory_space<vmem>>, vector<16x128xf32>
    tpu.vector_store %arg11[%c248, %c0_94], %73 {strides = array<i32>} : memref<448x128xf32, #tpu.memory_space<vmem>>, vector<16x128xf32>,
    %c264 = arith.constant 264 : index
    %c0_95 = arith.constant 0 : index
    %75 = vector.load %arg11[%c264, %c0_95] : memref<448x128xf32, #tpu.memory_space<vmem>>, vector<8x128xf32>
    tpu.vector_store %arg11[%c264, %c0_95], %5 {strides = array<i32>} : memref<448x128xf32, #tpu.memory_space<vmem>>, vector<8x128xf32>,
    %c0_96 = arith.constant 0 : index
    %c10 = arith.constant 10 : index
    %c0_97 = arith.constant 0 : index
    %c0_98 = arith.constant 0 : index
    %76 = vector.load %arg1[%c0_96, %c10, %c0_97, %c0_98] : memref<1x16x16x4xf32, #tpu.memory_space<vmem>>, vector<1x1x16x4xf32>
    %77 = vector.shape_cast %76 : vector<1x1x16x4xf32> to vector<16x4xf32>
    %c0_99 = arith.constant 0 : index
    %c10_100 = arith.constant 10 : index
    %c0_101 = arith.constant 0 : index
    %c0_102 = arith.constant 0 : index
    %78 = vector.load %arg2[%c0_99, %c10_100, %c0_101, %c0_102] : memref<1x16x16x32xf32, #tpu.memory_space<vmem>>, vector<1x1x16x32xf32>
    %79 = vector.shape_cast %78 : vector<1x1x16x32xf32> to vector<16x32xf32>
    %80 = tpu.concatenate %77, %79, %4 in 1 : vector<16x4xf32>, vector<16x32xf32>, vector<16x92xf32> -> vector<16x128xf32>
    %c272 = arith.constant 272 : index
    %c0_103 = arith.constant 0 : index
    %81 = vector.load %arg11[%c272, %c0_103] : memref<448x128xf32, #tpu.memory_space<vmem>>, vector<16x128xf32>
    tpu.vector_store %arg11[%c272, %c0_103], %80 {strides = array<i32>} : memref<448x128xf32, #tpu.memory_space<vmem>>, vector<16x128xf32>,
    %c288 = arith.constant 288 : index
    %c0_104 = arith.constant 0 : index
    %82 = vector.load %arg11[%c288, %c0_104] : memref<448x128xf32, #tpu.memory_space<vmem>>, vector<8x128xf32>
    tpu.vector_store %arg11[%c288, %c0_104], %5 {strides = array<i32>} : memref<448x128xf32, #tpu.memory_space<vmem>>, vector<8x128xf32>,
    %c0_105 = arith.constant 0 : index
    %c11 = arith.constant 11 : index
    %c0_106 = arith.constant 0 : index
    %c0_107 = arith.constant 0 : index
    %83 = vector.load %arg1[%c0_105, %c11, %c0_106, %c0_107] : memref<1x16x16x4xf32, #tpu.memory_space<vmem>>, vector<1x1x16x4xf32>
    %84 = vector.shape_cast %83 : vector<1x1x16x4xf32> to vector<16x4xf32>
    %c0_108 = arith.constant 0 : index
    %c11_109 = arith.constant 11 : index
    %c0_110 = arith.constant 0 : index
    %c0_111 = arith.constant 0 : index
    %85 = vector.load %arg2[%c0_108, %c11_109, %c0_110, %c0_111] : memref<1x16x16x32xf32, #tpu.memory_space<vmem>>, vector<1x1x16x32xf32>
    %86 = vector.shape_cast %85 : vector<1x1x16x32xf32> to vector<16x32xf32>
    %87 = tpu.concatenate %84, %86, %4 in 1 : vector<16x4xf32>, vector<16x32xf32>, vector<16x92xf32> -> vector<16x128xf32>
    %c296 = arith.constant 296 : index
    %c0_112 = arith.constant 0 : index
    %88 = vector.load %arg11[%c296, %c0_112] : memref<448x128xf32, #tpu.memory_space<vmem>>, vector<16x128xf32>
    tpu.vector_store %arg11[%c296, %c0_112], %87 {strides = array<i32>} : memref<448x128xf32, #tpu.memory_space<vmem>>, vector<16x128xf32>,
    %c312 = arith.constant 312 : index
    %c0_113 = arith.constant 0 : index
    %89 = vector.load %arg11[%c312, %c0_113] : memref<448x128xf32, #tpu.memory_space<vmem>>, vector<8x128xf32>
    tpu.vector_store %arg11[%c312, %c0_113], %5 {strides = array<i32>} : memref<448x128xf32, #tpu.memory_space<vmem>>, vector<8x128xf32>,
    %c0_114 = arith.constant 0 : index
    %c12 = arith.constant 12 : index
    %c0_115 = arith.constant 0 : index
    %c0_116 = arith.constant 0 : index
    %90 = vector.load %arg1[%c0_114, %c12, %c0_115, %c0_116] : memref<1x16x16x4xf32, #tpu.memory_space<vmem>>, vector<1x1x16x4xf32>
    %91 = vector.shape_cast %90 : vector<1x1x16x4xf32> to vector<16x4xf32>
    %c0_117 = arith.constant 0 : index
    %c12_118 = arith.constant 12 : index
    %c0_119 = arith.constant 0 : index
    %c0_120 = arith.constant 0 : index
    %92 = vector.load %arg2[%c0_117, %c12_118, %c0_119, %c0_120] : memref<1x16x16x32xf32, #tpu.memory_space<vmem>>, vector<1x1x16x32xf32>
    %93 = vector.shape_cast %92 : vector<1x1x16x32xf32> to vector<16x32xf32>
    %94 = tpu.concatenate %91, %93, %4 in 1 : vector<16x4xf32>, vector<16x32xf32>, vector<16x92xf32> -> vector<16x128xf32>
    %c320 = arith.constant 320 : index
    %c0_121 = arith.constant 0 : index
    %95 = vector.load %arg11[%c320, %c0_121] : memref<448x128xf32, #tpu.memory_space<vmem>>, vector<16x128xf32>
    tpu.vector_store %arg11[%c320, %c0_121], %94 {strides = array<i32>} : memref<448x128xf32, #tpu.memory_space<vmem>>, vector<16x128xf32>,
    %c336 = arith.constant 336 : index
    %c0_122 = arith.constant 0 : index
    %96 = vector.load %arg11[%c336, %c0_122] : memref<448x128xf32, #tpu.memory_space<vmem>>, vector<8x128xf32>
    tpu.vector_store %arg11[%c336, %c0_122], %5 {strides = array<i32>} : memref<448x128xf32, #tpu.memory_space<vmem>>, vector<8x128xf32>,
    %c0_123 = arith.constant 0 : index
    %c13 = arith.constant 13 : index
    %c0_124 = arith.constant 0 : index
    %c0_125 = arith.constant 0 : index
    %97 = vector.load %arg1[%c0_123, %c13, %c0_124, %c0_125] : memref<1x16x16x4xf32, #tpu.memory_space<vmem>>, vector<1x1x16x4xf32>
    %98 = vector.shape_cast %97 : vector<1x1x16x4xf32> to vector<16x4xf32>
    %c0_126 = arith.constant 0 : index
    %c13_127 = arith.constant 13 : index
    %c0_128 = arith.constant 0 : index
    %c0_129 = arith.constant 0 : index
    %99 = vector.load %arg2[%c0_126, %c13_127, %c0_128, %c0_129] : memref<1x16x16x32xf32, #tpu.memory_space<vmem>>, vector<1x1x16x32xf32>
    %100 = vector.shape_cast %99 : vector<1x1x16x32xf32> to vector<16x32xf32>
    %101 = tpu.concatenate %98, %100, %4 in 1 : vector<16x4xf32>, vector<16x32xf32>, vector<16x92xf32> -> vector<16x128xf32>
    %c344 = arith.constant 344 : index
    %c0_130 = arith.constant 0 : index
    %102 = vector.load %arg11[%c344, %c0_130] : memref<448x128xf32, #tpu.memory_space<vmem>>, vector<16x128xf32>
    tpu.vector_store %arg11[%c344, %c0_130], %101 {strides = array<i32>} : memref<448x128xf32, #tpu.memory_space<vmem>>, vector<16x128xf32>,
    %c360 = arith.constant 360 : index
    %c0_131 = arith.constant 0 : index
    %103 = vector.load %arg11[%c360, %c0_131] : memref<448x128xf32, #tpu.memory_space<vmem>>, vector<8x128xf32>
    tpu.vector_store %arg11[%c360, %c0_131], %5 {strides = array<i32>} : memref<448x128xf32, #tpu.memory_space<vmem>>, vector<8x128xf32>,
    %c0_132 = arith.constant 0 : index
    %c14 = arith.constant 14 : index
    %c0_133 = arith.constant 0 : index
    %c0_134 = arith.constant 0 : index
    %104 = vector.load %arg1[%c0_132, %c14, %c0_133, %c0_134] : memref<1x16x16x4xf32, #tpu.memory_space<vmem>>, vector<1x1x16x4xf32>
    %105 = vector.shape_cast %104 : vector<1x1x16x4xf32> to vector<16x4xf32>
    %c0_135 = arith.constant 0 : index
    %c14_136 = arith.constant 14 : index
    %c0_137 = arith.constant 0 : index
    %c0_138 = arith.constant 0 : index
    %106 = vector.load %arg2[%c0_135, %c14_136, %c0_137, %c0_138] : memref<1x16x16x32xf32, #tpu.memory_space<vmem>>, vector<1x1x16x32xf32>
    %107 = vector.shape_cast %106 : vector<1x1x16x32xf32> to vector<16x32xf32>
    %108 = tpu.concatenate %105, %107, %4 in 1 : vector<16x4xf32>, vector<16x32xf32>, vector<16x92xf32> -> vector<16x128xf32>
    %c368 = arith.constant 368 : index
    %c0_139 = arith.constant 0 : index
    %109 = vector.load %arg11[%c368, %c0_139] : memref<448x128xf32, #tpu.memory_space<vmem>>, vector<16x128xf32>
    tpu.vector_store %arg11[%c368, %c0_139], %108 {strides = array<i32>} : memref<448x128xf32, #tpu.memory_space<vmem>>, vector<16x128xf32>,
    %c384 = arith.constant 384 : index
    %c0_140 = arith.constant 0 : index
    %110 = vector.load %arg11[%c384, %c0_140] : memref<448x128xf32, #tpu.memory_space<vmem>>, vector<8x128xf32>
    tpu.vector_store %arg11[%c384, %c0_140], %5 {strides = array<i32>} : memref<448x128xf32, #tpu.memory_space<vmem>>, vector<8x128xf32>,
    %c0_141 = arith.constant 0 : index
    %c15 = arith.constant 15 : index
    %c0_142 = arith.constant 0 : index
    %c0_143 = arith.constant 0 : index
    %111 = vector.load %arg1[%c0_141, %c15, %c0_142, %c0_143] : memref<1x16x16x4xf32, #tpu.memory_space<vmem>>, vector<1x1x16x4xf32>
    %112 = vector.shape_cast %111 : vector<1x1x16x4xf32> to vector<16x4xf32>
    %c0_144 = arith.constant 0 : index
    %c15_145 = arith.constant 15 : index
    %c0_146 = arith.constant 0 : index
    %c0_147 = arith.constant 0 : index
    %113 = vector.load %arg2[%c0_144, %c15_145, %c0_146, %c0_147] : memref<1x16x16x32xf32, #tpu.memory_space<vmem>>, vector<1x1x16x32xf32>
    %114 = vector.shape_cast %113 : vector<1x1x16x32xf32> to vector<16x32xf32>
    %115 = tpu.concatenate %112, %114, %4 in 1 : vector<16x4xf32>, vector<16x32xf32>, vector<16x92xf32> -> vector<16x128xf32>
    %c392 = arith.constant 392 : index
    %c0_148 = arith.constant 0 : index
    %116 = vector.load %arg11[%c392, %c0_148] : memref<448x128xf32, #tpu.memory_space<vmem>>, vector<16x128xf32>
    tpu.vector_store %arg11[%c392, %c0_148], %115 {strides = array<i32>} : memref<448x128xf32, #tpu.memory_space<vmem>>, vector<16x128xf32>,
    %c408 = arith.constant 408 : index
    %c0_149 = arith.constant 0 : index
    %117 = vector.load %arg11[%c408, %c0_149] : memref<448x128xf32, #tpu.memory_space<vmem>>, vector<8x128xf32>
    tpu.vector_store %arg11[%c408, %c0_149], %5 {strides = array<i32>} : memref<448x128xf32, #tpu.memory_space<vmem>>, vector<8x128xf32>,
    %c7_150 = arith.constant 7 : index
    %c0_151 = arith.constant 0 : index
    %118 = vector.load %arg11[%c7_150, %c0_151] : memref<448x128xf32, #tpu.memory_space<vmem>>, vector<384x128xf32>
    %119 = arith.truncf %118 : vector<384x128xf32> to vector<384x128xbf16>
    %c0_152 = arith.constant 0 : index
    %c0_153 = arith.constant 0 : index
    %c0_154 = arith.constant 0 : index
    %120 = vector.load %arg4[%c0_152, %c0_153, %c0_154] : memref<9x128x128xbf16, #tpu.memory_space<vmem>>, vector<1x128x128xbf16>
    %121 = vector.shape_cast %120 : vector<1x128x128xbf16> to vector<128x128xbf16>
    %cst_155 = arith.constant dense<0.000000e+00> : vector<384x128xf32>
    %122 = tpu.matmul %119, %121, %cst_155 {dimension_numbers = #tpu.dot_dimension_numbers<[1], [0], [0], [1], [0, 0, 1, 1], [], []>} : vector<384x128xbf16>, vector<128x128xbf16>, vector<384x128xf32> -> vector<384x128xf32>
    %c0_156 = arith.constant 0 : index
    %c0_157 = arith.constant 0 : index
    %123 = vector.load %arg12[%c0_156, %c0_157] : memref<384x128xf32, #tpu.memory_space<vmem>>, vector<384x128xf32>
    tpu.vector_store %arg12[%c0_156, %c0_157], %122 {strides = array<i32>} : memref<384x128xf32, #tpu.memory_space<vmem>>, vector<384x128xf32>,
    %c8_158 = arith.constant 8 : index
    %c0_159 = arith.constant 0 : index
    %124 = vector.load %arg11[%c8_158, %c0_159] : memref<448x128xf32, #tpu.memory_space<vmem>>, vector<384x128xf32>
    %125 = arith.truncf %124 : vector<384x128xf32> to vector<384x128xbf16>
    %c1_160 = arith.constant 1 : index
    %c0_161 = arith.constant 0 : index
    %c0_162 = arith.constant 0 : index
    %126 = vector.load %arg4[%c1_160, %c0_161, %c0_162] : memref<9x128x128xbf16, #tpu.memory_space<vmem>>, vector<1x128x128xbf16>
    %127 = vector.shape_cast %126 : vector<1x128x128xbf16> to vector<128x128xbf16>
    %cst_163 = arith.constant dense<0.000000e+00> : vector<384x128xf32>
    %128 = tpu.matmul %125, %127, %cst_163 {dimension_numbers = #tpu.dot_dimension_numbers<[1], [0], [0], [1], [0, 0, 1, 1], [], []>} : vector<384x128xbf16>, vector<128x128xbf16>, vector<384x128xf32> -> vector<384x128xf32>
    %c0_164 = arith.constant 0 : index
    %c0_165 = arith.constant 0 : index
    %129 = vector.load %arg12[%c0_164, %c0_165] : memref<384x128xf32, #tpu.memory_space<vmem>>, vector<384x128xf32>
    %130 = arith.addf %129, %128 : vector<384x128xf32>
    %c0_166 = arith.constant 0 : index
    %c0_167 = arith.constant 0 : index
    %131 = vector.load %arg12[%c0_166, %c0_167] : memref<384x128xf32, #tpu.memory_space<vmem>>, vector<384x128xf32>
    tpu.vector_store %arg12[%c0_166, %c0_167], %130 {strides = array<i32>} : memref<384x128xf32, #tpu.memory_space<vmem>>, vector<384x128xf32>,
    %c9_168 = arith.constant 9 : index
    %c0_169 = arith.constant 0 : index
    %132 = vector.load %arg11[%c9_168, %c0_169] : memref<448x128xf32, #tpu.memory_space<vmem>>, vector<384x128xf32>
    %133 = arith.truncf %132 : vector<384x128xf32> to vector<384x128xbf16>
    %c2_170 = arith.constant 2 : index
    %c0_171 = arith.constant 0 : index
    %c0_172 = arith.constant 0 : index
    %134 = vector.load %arg4[%c2_170, %c0_171, %c0_172] : memref<9x128x128xbf16, #tpu.memory_space<vmem>>, vector<1x128x128xbf16>
    %135 = vector.shape_cast %134 : vector<1x128x128xbf16> to vector<128x128xbf16>
    %cst_173 = arith.constant dense<0.000000e+00> : vector<384x128xf32>
    %136 = tpu.matmul %133, %135, %cst_173 {dimension_numbers = #tpu.dot_dimension_numbers<[1], [0], [0], [1], [0, 0, 1, 1], [], []>} : vector<384x128xbf16>, vector<128x128xbf16>, vector<384x128xf32> -> vector<384x128xf32>
    %c0_174 = arith.constant 0 : index
    %c0_175 = arith.constant 0 : index
    %137 = vector.load %arg12[%c0_174, %c0_175] : memref<384x128xf32, #tpu.memory_space<vmem>>, vector<384x128xf32>
    %138 = arith.addf %137, %136 : vector<384x128xf32>
    %c0_176 = arith.constant 0 : index
    %c0_177 = arith.constant 0 : index
    %139 = vector.load %arg12[%c0_176, %c0_177] : memref<384x128xf32, #tpu.memory_space<vmem>>, vector<384x128xf32>
    tpu.vector_store %arg12[%c0_176, %c0_177], %138 {strides = array<i32>} : memref<384x128xf32, #tpu.memory_space<vmem>>, vector<384x128xf32>,
    %c31 = arith.constant 31 : index
    %c0_178 = arith.constant 0 : index
    %140 = vector.load %arg11[%c31, %c0_178] : memref<448x128xf32, #tpu.memory_space<vmem>>, vector<384x128xf32>
    %141 = arith.truncf %140 : vector<384x128xf32> to vector<384x128xbf16>
    %c3_179 = arith.constant 3 : index
    %c0_180 = arith.constant 0 : index
    %c0_181 = arith.constant 0 : index
    %142 = vector.load %arg4[%c3_179, %c0_180, %c0_181] : memref<9x128x128xbf16, #tpu.memory_space<vmem>>, vector<1x128x128xbf16>
    %143 = vector.shape_cast %142 : vector<1x128x128xbf16> to vector<128x128xbf16>
    %cst_182 = arith.constant dense<0.000000e+00> : vector<384x128xf32>
    %144 = tpu.matmul %141, %143, %cst_182 {dimension_numbers = #tpu.dot_dimension_numbers<[1], [0], [0], [1], [0, 0, 1, 1], [], []>} : vector<384x128xbf16>, vector<128x128xbf16>, vector<384x128xf32> -> vector<384x128xf32>
    %c0_183 = arith.constant 0 : index
    %c0_184 = arith.constant 0 : index
    %145 = vector.load %arg12[%c0_183, %c0_184] : memref<384x128xf32, #tpu.memory_space<vmem>>, vector<384x128xf32>
    %146 = arith.addf %145, %144 : vector<384x128xf32>
    %c0_185 = arith.constant 0 : index
    %c0_186 = arith.constant 0 : index
    %147 = vector.load %arg12[%c0_185, %c0_186] : memref<384x128xf32, #tpu.memory_space<vmem>>, vector<384x128xf32>
    tpu.vector_store %arg12[%c0_185, %c0_186], %146 {strides = array<i32>} : memref<384x128xf32, #tpu.memory_space<vmem>>, vector<384x128xf32>,
    %c32_187 = arith.constant 32 : index
    %c0_188 = arith.constant 0 : index
    %148 = vector.load %arg11[%c32_187, %c0_188] : memref<448x128xf32, #tpu.memory_space<vmem>>, vector<384x128xf32>
    %149 = arith.truncf %148 : vector<384x128xf32> to vector<384x128xbf16>
    %c4_189 = arith.constant 4 : index
    %c0_190 = arith.constant 0 : index
    %c0_191 = arith.constant 0 : index
    %150 = vector.load %arg4[%c4_189, %c0_190, %c0_191] : memref<9x128x128xbf16, #tpu.memory_space<vmem>>, vector<1x128x128xbf16>
    %151 = vector.shape_cast %150 : vector<1x128x128xbf16> to vector<128x128xbf16>
    %cst_192 = arith.constant dense<0.000000e+00> : vector<384x128xf32>
    %152 = tpu.matmul %149, %151, %cst_192 {dimension_numbers = #tpu.dot_dimension_numbers<[1], [0], [0], [1], [0, 0, 1, 1], [], []>} : vector<384x128xbf16>, vector<128x128xbf16>, vector<384x128xf32> -> vector<384x128xf32>
    %c0_193 = arith.constant 0 : index
    %c0_194 = arith.constant 0 : index
    %153 = vector.load %arg12[%c0_193, %c0_194] : memref<384x128xf32, #tpu.memory_space<vmem>>, vector<384x128xf32>
    %154 = arith.addf %153, %152 : vector<384x128xf32>
    %c0_195 = arith.constant 0 : index
    %c0_196 = arith.constant 0 : index
    %155 = vector.load %arg12[%c0_195, %c0_196] : memref<384x128xf32, #tpu.memory_space<vmem>>, vector<384x128xf32>
    tpu.vector_store %arg12[%c0_195, %c0_196], %154 {strides = array<i32>} : memref<384x128xf32, #tpu.memory_space<vmem>>, vector<384x128xf32>,
    %c33 = arith.constant 33 : index
    %c0_197 = arith.constant 0 : index
    %156 = vector.load %arg11[%c33, %c0_197] : memref<448x128xf32, #tpu.memory_space<vmem>>, vector<384x128xf32>
    %157 = arith.truncf %156 : vector<384x128xf32> to vector<384x128xbf16>
    %c5_198 = arith.constant 5 : index
    %c0_199 = arith.constant 0 : index
    %c0_200 = arith.constant 0 : index
    %158 = vector.load %arg4[%c5_198, %c0_199, %c0_200] : memref<9x128x128xbf16, #tpu.memory_space<vmem>>, vector<1x128x128xbf16>
    %159 = vector.shape_cast %158 : vector<1x128x128xbf16> to vector<128x128xbf16>
    %cst_201 = arith.constant dense<0.000000e+00> : vector<384x128xf32>
    %160 = tpu.matmul %157, %159, %cst_201 {dimension_numbers = #tpu.dot_dimension_numbers<[1], [0], [0], [1], [0, 0, 1, 1], [], []>} : vector<384x128xbf16>, vector<128x128xbf16>, vector<384x128xf32> -> vector<384x128xf32>
    %c0_202 = arith.constant 0 : index
    %c0_203 = arith.constant 0 : index
    %161 = vector.load %arg12[%c0_202, %c0_203] : memref<384x128xf32, #tpu.memory_space<vmem>>, vector<384x128xf32>
    %162 = arith.addf %161, %160 : vector<384x128xf32>
    %c0_204 = arith.constant 0 : index
    %c0_205 = arith.constant 0 : index
    %163 = vector.load %arg12[%c0_204, %c0_205] : memref<384x128xf32, #tpu.memory_space<vmem>>, vector<384x128xf32>
    tpu.vector_store %arg12[%c0_204, %c0_205], %162 {strides = array<i32>} : memref<384x128xf32, #tpu.memory_space<vmem>>, vector<384x128xf32>,
    %c55 = arith.constant 55 : index
    %c0_206 = arith.constant 0 : index
    %164 = vector.load %arg11[%c55, %c0_206] : memref<448x128xf32, #tpu.memory_space<vmem>>, vector<384x128xf32>
    %165 = arith.truncf %164 : vector<384x128xf32> to vector<384x128xbf16>
    %c6_207 = arith.constant 6 : index
    %c0_208 = arith.constant 0 : index
    %c0_209 = arith.constant 0 : index
    %166 = vector.load %arg4[%c6_207, %c0_208, %c0_209] : memref<9x128x128xbf16, #tpu.memory_space<vmem>>, vector<1x128x128xbf16>
    %167 = vector.shape_cast %166 : vector<1x128x128xbf16> to vector<128x128xbf16>
    %cst_210 = arith.constant dense<0.000000e+00> : vector<384x128xf32>
    %168 = tpu.matmul %165, %167, %cst_210 {dimension_numbers = #tpu.dot_dimension_numbers<[1], [0], [0], [1], [0, 0, 1, 1], [], []>} : vector<384x128xbf16>, vector<128x128xbf16>, vector<384x128xf32> -> vector<384x128xf32>
    %c0_211 = arith.constant 0 : index
    %c0_212 = arith.constant 0 : index
    %169 = vector.load %arg12[%c0_211, %c0_212] : memref<384x128xf32, #tpu.memory_space<vmem>>, vector<384x128xf32>
    %170 = arith.addf %169, %168 : vector<384x128xf32>
    %c0_213 = arith.constant 0 : index
    %c0_214 = arith.constant 0 : index
    %171 = vector.load %arg12[%c0_213, %c0_214] : memref<384x128xf32, #tpu.memory_space<vmem>>, vector<384x128xf32>
    tpu.vector_store %arg12[%c0_213, %c0_214], %170 {strides = array<i32>} : memref<384x128xf32, #tpu.memory_space<vmem>>, vector<384x128xf32>,
    %c56_215 = arith.constant 56 : index
    %c0_216 = arith.constant 0 : index
    %172 = vector.load %arg11[%c56_215, %c0_216] : memref<448x128xf32, #tpu.memory_space<vmem>>, vector<384x128xf32>
    %173 = arith.truncf %172 : vector<384x128xf32> to vector<384x128xbf16>
    %c7_217 = arith.constant 7 : index
    %c0_218 = arith.constant 0 : index
    %c0_219 = arith.constant 0 : index
    %174 = vector.load %arg4[%c7_217, %c0_218, %c0_219] : memref<9x128x128xbf16, #tpu.memory_space<vmem>>, vector<1x128x128xbf16>
    %175 = vector.shape_cast %174 : vector<1x128x128xbf16> to vector<128x128xbf16>
    %cst_220 = arith.constant dense<0.000000e+00> : vector<384x128xf32>
    %176 = tpu.matmul %173, %175, %cst_220 {dimension_numbers = #tpu.dot_dimension_numbers<[1], [0], [0], [1], [0, 0, 1, 1], [], []>} : vector<384x128xbf16>, vector<128x128xbf16>, vector<384x128xf32> -> vector<384x128xf32>
    %c0_221 = arith.constant 0 : index
    %c0_222 = arith.constant 0 : index
    %177 = vector.load %arg12[%c0_221, %c0_222] : memref<384x128xf32, #tpu.memory_space<vmem>>, vector<384x128xf32>
    %178 = arith.addf %177, %176 : vector<384x128xf32>
    %c0_223 = arith.constant 0 : index
    %c0_224 = arith.constant 0 : index
    %179 = vector.load %arg12[%c0_223, %c0_224] : memref<384x128xf32, #tpu.memory_space<vmem>>, vector<384x128xf32>
    tpu.vector_store %arg12[%c0_223, %c0_224], %178 {strides = array<i32>} : memref<384x128xf32, #tpu.memory_space<vmem>>, vector<384x128xf32>,
    %c57 = arith.constant 57 : index
    %c0_225 = arith.constant 0 : index
    %180 = vector.load %arg11[%c57, %c0_225] : memref<448x128xf32, #tpu.memory_space<vmem>>, vector<384x128xf32>
    %181 = arith.truncf %180 : vector<384x128xf32> to vector<384x128xbf16>
    %c8_226 = arith.constant 8 : index
    %c0_227 = arith.constant 0 : index
    %c0_228 = arith.constant 0 : index
    %182 = vector.load %arg4[%c8_226, %c0_227, %c0_228] : memref<9x128x128xbf16, #tpu.memory_space<vmem>>, vector<1x128x128xbf16>
    %183 = vector.shape_cast %182 : vector<1x128x128xbf16> to vector<128x128xbf16>
    %cst_229 = arith.constant dense<0.000000e+00> : vector<384x128xf32>
    %184 = tpu.matmul %181, %183, %cst_229 {dimension_numbers = #tpu.dot_dimension_numbers<[1], [0], [0], [1], [0, 0, 1, 1], [], []>} : vector<384x128xbf16>, vector<128x128xbf16>, vector<384x128xf32> -> vector<384x128xf32>
    %c0_230 = arith.constant 0 : index
    %c0_231 = arith.constant 0 : index
    %185 = vector.load %arg12[%c0_230, %c0_231] : memref<384x128xf32, #tpu.memory_space<vmem>>, vector<384x128xf32>
    %186 = arith.addf %185, %184 : vector<384x128xf32>
    %c0_232 = arith.constant 0 : index
    %c0_233 = arith.constant 0 : index
    %187 = vector.load %arg12[%c0_232, %c0_233] : memref<384x128xf32, #tpu.memory_space<vmem>>, vector<384x128xf32>
    tpu.vector_store %arg12[%c0_232, %c0_233], %186 {strides = array<i32>} : memref<384x128xf32, #tpu.memory_space<vmem>>, vector<384x128xf32>,
    %c0_234 = arith.constant 0 : index
    %c0_235 = arith.constant 0 : index
    %188 = vector.load %arg12[%c0_234, %c0_235] : memref<384x128xf32, #tpu.memory_space<vmem>>, vector<384x128xf32>
    %189 = vector.shape_cast %188 : vector<384x128xf32> to vector<16x24x128xf32>
    %190 = vector.extract_strided_slice %189 {offsets = [0, 0, 0], sizes = [16, 16, 128], strides = [1, 1, 1]} : vector<16x24x128xf32> to vector<16x16x128xf32>
    %191 = vector.shape_cast %190 : vector<16x16x128xf32> to vector<256x128xf32>
    %c0_236 = arith.constant 0 : index
    %c0_237 = arith.constant 0 : index
    %192 = vector.load %arg5[%c0_236, %c0_237] : memref<1x128xf32, #tpu.memory_space<vmem>>, vector<1x128xf32>
    %193 = vector.broadcast %192 : vector<1x128xf32> to vector<256x128xf32>
    %194 = arith.addf %191, %193 : vector<256x128xf32>
    %195 = tpu.transpose %194, [1, 0] : vector<256x128xf32> -> vector<128x256xf32>
    %196 = vector.extract_strided_slice %195 {offsets = [0, 0], sizes = [32, 256], strides = [1, 1]} : vector<128x256xf32> to vector<32x256xf32>
    %197 = vector.extract_strided_slice %195 {offsets = [32, 0], sizes = [32, 256], strides = [1, 1]} : vector<128x256xf32> to vector<32x256xf32>
    %198 = vector.extract_strided_slice %195 {offsets = [64, 0], sizes = [32, 256], strides = [1, 1]} : vector<128x256xf32> to vector<32x256xf32>
    %199 = vector.extract_strided_slice %195 {offsets = [96, 0], sizes = [32, 256], strides = [1, 1]} : vector<128x256xf32> to vector<32x256xf32>
    %c0_238 = arith.constant 0 : index
    %c0_239 = arith.constant 0 : index
    %c0_240 = arith.constant 0 : index
    %200 = vector.load %arg3[%c0_238, %c0_239, %c0_240] : memref<1x32x256xf32, #tpu.memory_space<vmem>>, vector<1x32x256xf32>
    %201 = vector.shape_cast %200 : vector<1x32x256xf32> to vector<32x256xf32>
    %c0_241 = arith.constant 0 : index
    %c0_242 = arith.constant 0 : index
    %202 = vector.load %arg6[%c0_241, %c0_242] : memref<32x256xf32, #tpu.memory_space<vmem>>, vector<32x256xf32>
    %203 = arith.mulf %201, %202 : vector<32x256xf32>
    %204 = arith.addf %196, %203 : vector<32x256xf32>
    %205 = arith.negf %204 : vector<32x256xf32>
    %206 = math.exp %205 : vector<32x256xf32>
    %cst_243 = arith.constant 1.000000e+00 : f32
    %207 = vector.broadcast %cst_243 : f32 to vector<32x256xf32>
    %208 = arith.addf %207, %206 : vector<32x256xf32>
    %209 = arith.divf %207, %208 : vector<32x256xf32>
    %c0_244 = arith.constant 0 : index
    %c0_245 = arith.constant 0 : index
    %210 = vector.load %arg7[%c0_244, %c0_245] : memref<32x256xf32, #tpu.memory_space<vmem>>, vector<32x256xf32>
    %211 = arith.mulf %201, %210 : vector<32x256xf32>
    %212 = arith.addf %197, %211 : vector<32x256xf32>
    %213 = arith.negf %212 : vector<32x256xf32>
    %214 = math.exp %213 : vector<32x256xf32>
    %cst_246 = arith.constant 1.000000e+00 : f32
    %215 = vector.broadcast %cst_246 : f32 to vector<32x256xf32>
    %216 = arith.addf %215, %214 : vector<32x256xf32>
    %217 = arith.divf %215, %216 : vector<32x256xf32>
    %218 = arith.mulf %217, %201 : vector<32x256xf32>
    %219 = math.tanh %198 : vector<32x256xf32>
    %220 = arith.mulf %209, %219 : vector<32x256xf32>
    %221 = arith.addf %218, %220 : vector<32x256xf32>
    %c0_247 = arith.constant 0 : index
    %c0_248 = arith.constant 0 : index
    %222 = vector.load %arg8[%c0_247, %c0_248] : memref<32x256xf32, #tpu.memory_space<vmem>>, vector<32x256xf32>
    %223 = arith.mulf %221, %222 : vector<32x256xf32>
    %224 = arith.addf %199, %223 : vector<32x256xf32>
    %225 = arith.negf %224 : vector<32x256xf32>
    %226 = math.exp %225 : vector<32x256xf32>
    %cst_249 = arith.constant 1.000000e+00 : f32
    %227 = vector.broadcast %cst_249 : f32 to vector<32x256xf32>
    %228 = arith.addf %227, %226 : vector<32x256xf32>
    %229 = arith.divf %227, %228 : vector<32x256xf32>
    %230 = math.tanh %221 : vector<32x256xf32>
    %231 = arith.mulf %229, %230 : vector<32x256xf32>
    %c0_250 = arith.constant 0 : index
    %c0_251 = arith.constant 0 : index
    %c0_252 = arith.constant 0 : index
    %232 = vector.load %arg9[%c0_250, %c0_251, %c0_252] : memref<1x32x256xf32, #tpu.memory_space<vmem>>, vector<1x32x256xf32>
    %233 = vector.shape_cast %232 : vector<1x32x256xf32> to vector<32x256xf32>
    %234 = vector.shape_cast %231 : vector<32x256xf32> to vector<1x32x256xf32>
    tpu.vector_store %arg9[%c0_250, %c0_251, %c0_252], %234 {strides = array<i32>} : memref<1x32x256xf32, #tpu.memory_space<vmem>>, vector<1x32x256xf32>,
    %c0_253 = arith.constant 0 : index
    %c0_254 = arith.constant 0 : index
    %c0_255 = arith.constant 0 : index
    %235 = vector.load %arg10[%c0_253, %c0_254, %c0_255] : memref<1x32x256xf32, #tpu.memory_space<vmem>>, vector<1x32x256xf32>
    %236 = vector.shape_cast %235 : vector<1x32x256xf32> to vector<32x256xf32>
    %237 = vector.shape_cast %221 : vector<32x256xf32> to vector<1x32x256xf32>
    tpu.vector_store %arg10[%c0_253, %c0_254, %c0_255], %237 {strides = array<i32>} : memref<1x32x256xf32, #tpu.memory_space<vmem>>, vector<1x32x256xf32>,
    return
  }
  func.func @transform_0(%arg0: i32) -> (i32, i32, i32, i32) {
    %c0_i32 = arith.constant 0 : i32
    %c0_i32_0 = arith.constant 0 : i32
    %c0_i32_1 = arith.constant 0 : i32
    %c0_i32_2 = arith.constant 0 : i32
    return %arg0, %c0_i32, %c0_i32_0, %c0_i32_1 : i32, i32, i32, i32
  }
  func.func @transform_1(%arg0: i32) -> (i32, i32, i32, i32) {
    %c0_i32 = arith.constant 0 : i32
    %c0_i32_0 = arith.constant 0 : i32
    %c0_i32_1 = arith.constant 0 : i32
    %c0_i32_2 = arith.constant 0 : i32
    return %arg0, %c0_i32, %c0_i32_0, %c0_i32_1 : i32, i32, i32, i32
  }
  func.func @transform_2(%arg0: i32) -> (i32, i32, i32) {
    %c0_i32 = arith.constant 0 : i32
    %c0_i32_0 = arith.constant 0 : i32
    %c0_i32_1 = arith.constant 0 : i32
    return %arg0, %c0_i32, %c0_i32_0 : i32, i32, i32
  }
  func.func @transform_3(%arg0: i32) -> (i32, i32, i32) {
    %c0_i32 = arith.constant 0 : i32
    %c0_i32_0 = arith.constant 0 : i32
    %c0_i32_1 = arith.constant 0 : i32
    %c0_i32_2 = arith.constant 0 : i32
    return %c0_i32, %c0_i32_0, %c0_i32_1 : i32, i32, i32
  }
  func.func @transform_4(%arg0: i32) -> (i32, i32) {
    %c0_i32 = arith.constant 0 : i32
    %c0_i32_0 = arith.constant 0 : i32
    %c0_i32_1 = arith.constant 0 : i32
    return %c0_i32, %c0_i32_0 : i32, i32
  }
  func.func @transform_5(%arg0: i32) -> (i32, i32) {
    %c0_i32 = arith.constant 0 : i32
    %c0_i32_0 = arith.constant 0 : i32
    %c0_i32_1 = arith.constant 0 : i32
    return %c0_i32, %c0_i32_0 : i32, i32
  }
  func.func @transform_6(%arg0: i32) -> (i32, i32) {
    %c0_i32 = arith.constant 0 : i32
    %c0_i32_0 = arith.constant 0 : i32
    %c0_i32_1 = arith.constant 0 : i32
    return %c0_i32, %c0_i32_0 : i32, i32
  }
  func.func @transform_7(%arg0: i32) -> (i32, i32) {
    %c0_i32 = arith.constant 0 : i32
    %c0_i32_0 = arith.constant 0 : i32
    %c0_i32_1 = arith.constant 0 : i32
    return %c0_i32, %c0_i32_0 : i32, i32
  }
  func.func @transform_8(%arg0: i32) -> (i32, i32, i32) {
    %c0_i32 = arith.constant 0 : i32
    %c0_i32_0 = arith.constant 0 : i32
    %c0_i32_1 = arith.constant 0 : i32
    return %arg0, %c0_i32, %c0_i32_0 : i32, i32, i32
  }
  func.func @transform_9(%arg0: i32) -> (i32, i32, i32) {
    %c0_i32 = arith.constant 0 : i32
    %c0_i32_0 = arith.constant 0 : i32
    %c0_i32_1 = arith.constant 0 : i32
    return %arg0, %c0_i32, %c0_i32_0 : i32, i32, i32
  }
}

</mosaic_0001>

<llo_original>
// kernel: tpu_custom_call.1
$region0: #{tpu_custom_call.1}
  #allocation0 [shape = 'u32[]', space=smem, size = 0x4, offset = 0x4, fixed_abs, tag = 'smem constant byte address 0x4 - core index']
  #allocation1 [shape = 'u32[144,128]{1,0:T(1,128)}', space=vmem, size = 0x12000, scoped, tag = 'internal scratch']
  #allocation2 [shape = 'f32[448,128]{1,0:T(8,128)}', space=vmem, size = 0x38000, scoped, tag = 'scratch operand']
  #allocation3 [shape = 'f32[384,128]{1,0:T(8,128)}', space=vmem, size = 0x30000, scoped, tag = 'scratch operand']
  %s0 = inlined_call_operand.vmem [shape: f32[2,16,16,4], index: 0, kind: input, shape index: {}]
  %s1 = inlined_call_operand.hbm [shape: f32[2,16,16,32], index: 1, kind: input, shape index: {}]
  %s2 = inlined_call_operand.hbm [shape: f32[2,32,256], index: 2, kind: input, shape index: {}]
  %s3 = inlined_call_operand.vmem [shape: bf16[9,128,128], index: 3, kind: input, shape index: {}]
  %s4 = inlined_call_operand.vmem [shape: f32[1,128], index: 4, kind: input, shape index: {}]
  %s5 = inlined_call_operand.vmem [shape: f32[32,256], index: 5, kind: input, shape index: {}]
  %s6 = inlined_call_operand.hbm [shape: f32[32,256], index: 6, kind: input, shape index: {}]
  %s7 = inlined_call_operand.hbm [shape: f32[32,256], index: 7, kind: input, shape index: {}]
  %s8 = inlined_call_operand.hbm [shape: f32[2,32,256], index: 8, kind: output, shape index: {0}]
  %s9 = inlined_call_operand.hbm [shape: f32[2,32,256], index: 9, kind: output, shape index: {1}]
  %10 = xla_tuple %s8, %s9
  %s11 = sld [smem:[#allocation0]]
  $region89: #{tpu_custom_call.1} parent=0
    _
  %s13 = ssub.s32 1, %s11
  %s14 = scalar_select 0, %s13, %s11
  $region1: #{tpu_custom_call.1} parent=0
    #allocation4 [shape = 'u8[262144]{0}', space=vmem, size = 0x40000, scoped, tag = 'input window, operand 1']
    #allocation5 [shape = 's32[2]{0}', space=sflag, size = 0x8, scoped, tag = 'scoped memory for tpu_custom_call.1']
    #allocation6 [shape = 's32[2]{0}', space=sflag, size = 0x8, scoped, tag = 'scoped memory for tpu_custom_call.1']
    #allocation7 [shape = 'u8[65536]{0}', space=vmem, size = 0x10000, scoped, tag = 'input window, operand 2']
    #allocation8 [shape = 's32[2]{0}', space=sflag, size = 0x8, scoped, tag = 'scoped memory for tpu_custom_call.1']
    #allocation9 [shape = 'u8[32768]{0}', space=vmem, size = 0x8000, scoped, tag = 'input window, operand 6, single buffered']
    #allocation10 [shape = 'u8[32768]{0}', space=vmem, size = 0x8000, scoped, tag = 'input window, operand 7, single buffered']
    #allocation11 [shape = 's32[1]{0}', space=sflag, size = 0x4, scoped, tag = 'scoped memory for tpu_custom_call.1']
    #allocation12 [shape = 'u8[65536]{0}', space=vmem, size = 0x10000, scoped, tag = 'output window, operand 0']
    #allocation13 [shape = 'u8[65536]{0}', space=vmem, size = 0x10000, scoped, tag = 'output window, operand 1']
    #allocation14 [shape = 's32[2]{0}', space=sflag, size = 0x8, scoped, tag = 'scoped memory for tpu_custom_call.1']
    %15 = vsyncpa [#allocation5], 0
    %s16 = scalar_lea.sflag [#allocation5], 1
    %17 = vsyncpa %s16, 0
    %18 = vsyncpa [#allocation8], 0
    %s19 = scalar_lea.sflag [#allocation8], 1
    %20 = vsyncpa %s19, 0
    %21 = vsyncpa [#allocation11], 0
    %22 = vsyncpa [#allocation6], 0
    %s23 = scalar_lea.sflag [#allocation6], 1
    %24 = vsyncpa %s23, 0
    %25 = vsyncpa [#allocation14], 0
    %s26 = scalar_lea.sflag [#allocation14], 1
    %27 = vsyncpa %s26, 0
    loop: start=0, step=1, limit=4
    $region2: #{tpu_custom_call.1} parent=1 // loop_pre_header
      _
    $region3: #{tpu_custom_call.1} parent=1 // loop_header
      %s29 = sphi 0, %s33
      %p30 = scmp.ge.s32.totalorder %s29, 4
      %s39 = sphi 0, %s41
      %s42 = sphi 0, %s39
      %s43 = sphi 0, %s42
      %s59 = sphi 0, %s43
      %s65 = sphi 0, %s67
      %s68 = sphi 0, %s65
      %s69 = sphi 0, %s68
      %s85 = sphi 0, %s69
      %s91 = sphi 0, %s93
      %s94 = sphi 0, %s91
      %s95 = sphi 0, %s94
      %s111 = sphi 0, %s95
      %s115 = sphi 0, %s115
      %s117 = sphi 0, %s115
      %s118 = sphi 0, %s117
      %s132 = sphi 0, %s118
      %s136 = sphi 0, %s136
      %s138 = sphi 0, %s136
      %s139 = sphi 0, %s138
      %s153 = sphi 0, %s139
      %s157 = sphi 0, %s157
      %s159 = sphi 0, %s157
      %s160 = sphi 0, %s159
      %s174 = sphi 0, %s160
      %s178 = sphi 0, %s178
      %s180 = sphi 0, %s178
      %s181 = sphi 0, %s180
      %s195 = sphi 0, %s181
      %s199 = sphi 0, %s199
      %s201 = sphi 0, %s199
      %s202 = sphi 0, %s201
      %s216 = sphi 0, %s202
      %s222 = sphi 0, %s224
      %s225 = sphi 0, %s222
      %s226 = sphi 0, %s225
      %s242 = sphi 0, %s226
      %s248 = sphi 0, %s250
      %s251 = sphi 0, %s248
      %s252 = sphi 0, %s251
      %s268 = sphi 0, %s252
    $region4: #{tpu_custom_call.1} parent=1 // loop_header_branch
      %32 = sbr.rel (%p30) target = $region8
    $region5: #{tpu_custom_call.1} parent=1 // loop_body
      %s34 = ssub.s32 %s29, 1
      %s35 = ssub.s32 %s29, 2
      %s36 = sadd.s32 %s29, 1
      %s37 = ssub.s32 %s29, %s36
      %p38 = scmp.eq.s32.totalorder %s37, 0
      %s40 = sadd.s32 %s39, 1
      %s41 = scalar_select %p38, %s39, %s40
      %p44 = pneg %p38
      %p45 = scmp.eq.s32.totalorder %s29, 1
      %p46 = por %p44, %p45
      %p47 = scmp.ne.s32.totalorder %s39, %s42
      %p48 = scmp.eq.s32.totalorder %s29, 0
      %p49 = por %p47, %p48
      %p50 = scmp.ne.s32.totalorder %s39, %s42
      %p51 = scmp.eq.s32.totalorder %s34, 1
      %p52 = por %p50, %p51
      %p53 = scmp.ne.s32.totalorder %s42, %s43
      %p54 = scmp.eq.s32.totalorder %s34, 0
      %p55 = por %p53, %p54
      %p56 = scmp.ne.s32.totalorder %s42, %s43
      %p57 = scmp.eq.s32.totalorder %s35, 1
      %p58 = por %p56, %p57
      %p60 = scmp.ne.s32.totalorder %s43, %s59
      %p61 = scmp.eq.s32.totalorder %s35, 0
      %p62 = por %p60, %p61
      %s63 = ssub.s32 %s29, %s36
      %p64 = scmp.eq.s32.totalorder %s63, 0
      %s66 = sadd.s32 %s65, 1
      %s67 = scalar_select %p64, %s65, %s66
      %p70 = pneg %p64
      %p71 = scmp.eq.s32.totalorder %s29, 1
      %p72 = por %p70, %p71
      %p73 = scmp.ne.s32.totalorder %s65, %s68
      %p74 = scmp.eq.s32.totalorder %s29, 0
      %p75 = por %p73, %p74
      %p76 = scmp.ne.s32.totalorder %s65, %s68
      %p77 = scmp.eq.s32.totalorder %s34, 1
      %p78 = por %p76, %p77
      %p79 = scmp.ne.s32.totalorder %s68, %s69
      %p80 = scmp.eq.s32.totalorder %s34, 0
      %p81 = por %p79, %p80
      %p82 = scmp.ne.s32.totalorder %s68, %s69
      %p83 = scmp.eq.s32.totalorder %s35, 1
      %p84 = por %p82, %p83
      %p86 = scmp.ne.s32.totalorder %s69, %s85
      %p87 = scmp.eq.s32.totalorder %s35, 0
      %p88 = por %p86, %p87
      %s89 = ssub.s32 %s29, %s36
      %p90 = scmp.eq.s32.totalorder %s89, 0
      %s92 = sadd.s32 %s91, 1
      %s93 = scalar_select %p90, %s91, %s92
      %p96 = pneg %p90
      %p97 = scmp.eq.s32.totalorder %s29, 1
      %p98 = por %p96, %p97
      %p99 = scmp.ne.s32.totalorder %s91, %s94
      %p100 = scmp.eq.s32.totalorder %s29, 0
      %p101 = por %p99, %p100
      %p102 = scmp.ne.s32.totalorder %s91, %s94
      %p103 = scmp.eq.s32.totalorder %s34, 1
      %p104 = por %p102, %p103
      %p105 = scmp.ne.s32.totalorder %s94, %s95
      %p106 = scmp.eq.s32.totalorder %s34, 0
      %p107 = por %p105, %p106
      %p108 = scmp.ne.s32.totalorder %s94, %s95
      %p109 = scmp.eq.s32.totalorder %s35, 1
      %p110 = por %p108, %p109
      %p112 = scmp.ne.s32.totalorder %s95, %s111
      %p113 = scmp.eq.s32.totalorder %s35, 0
      %p114 = por %p112, %p113
      %s116 = sadd.s32 %s115, 1
      %p119 = scmp.eq.s32.totalorder %s29, 1
      %p120 = scmp.ne.s32.totalorder %s115, %s117
      %p121 = scmp.eq.s32.totalorder %s29, 0
      %p122 = por %p120, %p121
      %p123 = scmp.ne.s32.totalorder %s115, %s117
      %p124 = scmp.eq.s32.totalorder %s34, 1
      %p125 = por %p123, %p124
      %p126 = scmp.ne.s32.totalorder %s117, %s118
      %p127 = scmp.eq.s32.totalorder %s34, 0
      %p128 = por %p126, %p127
      %p129 = scmp.ne.s32.totalorder %s117, %s118
      %p130 = scmp.eq.s32.totalorder %s35, 1
      %p131 = por %p129, %p130
      %p133 = scmp.ne.s32.totalorder %s118, %s132
      %p134 = scmp.eq.s32.totalorder %s35, 0
      %p135 = por %p133, %p134
      %s137 = sadd.s32 %s136, 1
      %p140 = scmp.eq.s32.totalorder %s29, 1
      %p141 = scmp.ne.s32.totalorder %s136, %s138
      %p142 = scmp.eq.s32.totalorder %s29, 0
      %p143 = por %p141, %p142
      %p144 = scmp.ne.s32.totalorder %s136, %s138
      %p145 = scmp.eq.s32.totalorder %s34, 1
      %p146 = por %p144, %p145
      %p147 = scmp.ne.s32.totalorder %s138, %s139
      %p148 = scmp.eq.s32.totalorder %s34, 0
      %p149 = por %p147, %p148
      %p150 = scmp.ne.s32.totalorder %s138, %s139
      %p151 = scmp.eq.s32.totalorder %s35, 1
      %p152 = por %p150, %p151
      %p154 = scmp.ne.s32.totalorder %s139, %s153
      %p155 = scmp.eq.s32.totalorder %s35, 0
      %p156 = por %p154, %p155
      %s158 = sadd.s32 %s157, 1
      %p161 = scmp.eq.s32.totalorder %s29, 1
      %p162 = scmp.ne.s32.totalorder %s157, %s159
      %p163 = scmp.eq.s32.totalorder %s29, 0
      %p164 = por %p162, %p163
      %p165 = scmp.ne.s32.totalorder %s157, %s159
      %p166 = scmp.eq.s32.totalorder %s34, 1
      %p167 = por %p165, %p166
      %p168 = scmp.ne.s32.totalorder %s159, %s160
      %p169 = scmp.eq.s32.totalorder %s34, 0
      %p170 = por %p168, %p169
      %p171 = scmp.ne.s32.totalorder %s159, %s160
      %p172 = scmp.eq.s32.totalorder %s35, 1
      %p173 = por %p171, %p172
      %p175 = scmp.ne.s32.totalorder %s160, %s174
      %p176 = scmp.eq.s32.totalorder %s35, 0
      %p177 = por %p175, %p176
      %s179 = sadd.s32 %s178, 1
      %p182 = scmp.eq.s32.totalorder %s29, 1
      %p183 = scmp.ne.s32.totalorder %s178, %s180
      %p184 = scmp.eq.s32.totalorder %s29, 0
      %p185 = por %p183, %p184
      %p186 = scmp.ne.s32.totalorder %s178, %s180
      %p187 = scmp.eq.s32.totalorder %s34, 1
      %p188 = por %p186, %p187
      %p189 = scmp.ne.s32.totalorder %s180, %s181
      %p190 = scmp.eq.s32.totalorder %s34, 0
      %p191 = por %p189, %p190
      %p192 = scmp.ne.s32.totalorder %s180, %s181
      %p193 = scmp.eq.s32.totalorder %s35, 1
      %p194 = por %p192, %p193
      %p196 = scmp.ne.s32.totalorder %s181, %s195
      %p197 = scmp.eq.s32.totalorder %s35, 0
      %p198 = por %p196, %p197
      %s200 = sadd.s32 %s199, 1
      %p203 = scmp.eq.s32.totalorder %s29, 1
      %p204 = scmp.ne.s32.totalorder %s199, %s201
      %p205 = scmp.eq.s32.totalorder %s29, 0
      %p206 = por %p204, %p205
      %p207 = scmp.ne.s32.totalorder %s199, %s201
      %p208 = scmp.eq.s32.totalorder %s34, 1
      %p209 = por %p207, %p208
      %p210 = scmp.ne.s32.totalorder %s201, %s202
      %p211 = scmp.eq.s32.totalorder %s34, 0
      %p212 = por %p210, %p211
      %p213 = scmp.ne.s32.totalorder %s201, %s202
      %p214 = scmp.eq.s32.totalorder %s35, 1
      %p215 = por %p213, %p214
      %p217 = scmp.ne.s32.totalorder %s202, %s216
      %p218 = scmp.eq.s32.totalorder %s35, 0
      %p219 = por %p217, %p218
      %s220 = ssub.s32 %s29, %s36
      %p221 = scmp.eq.s32.totalorder %s220, 0
      %s223 = sadd.s32 %s222, 1
      %s224 = scalar_select %p221, %s222, %s223
      %p227 = pneg %p221
      %p228 = scmp.eq.s32.totalorder %s29, 1
      %p229 = por %p227, %p228
      %p230 = scmp.ne.s32.totalorder %s222, %s225
      %p231 = scmp.eq.s32.totalorder %s29, 0
      %p232 = por %p230, %p231
      %p233 = scmp.ne.s32.totalorder %s222, %s225
      %p234 = scmp.eq.s32.totalorder %s34, 1
      %p235 = por %p233, %p234
      %p236 = scmp.ne.s32.totalorder %s225, %s226
      %p237 = scmp.eq.s32.totalorder %s34, 0
      %p238 = por %p236, %p237
      %p239 = scmp.ne.s32.totalorder %s225, %s226
      %p240 = scmp.eq.s32.totalorder %s35, 1
      %p241 = por %p239, %p240
      %p243 = scmp.ne.s32.totalorder %s226, %s242
      %p244 = scmp.eq.s32.totalorder %s35, 0
      %p245 = por %p243, %p244
      %s246 = ssub.s32 %s29, %s36
      %p247 = scmp.eq.s32.totalorder %s246, 0
      %s249 = sadd.s32 %s248, 1
      %s250 = scalar_select %p247, %s248, %s249
      %p253 = pneg %p247
      %p254 = scmp.eq.s32.totalorder %s29, 1
      %p255 = por %p253, %p254
      %p256 = scmp.ne.s32.totalorder %s248, %s251
      %p257 = scmp.eq.s32.totalorder %s29, 0
      %p258 = por %p256, %p257
      %p259 = scmp.ne.s32.totalorder %s248, %s251
      %p260 = scmp.eq.s32.totalorder %s34, 1
      %p261 = por %p259, %p260
      %p262 = scmp.ne.s32.totalorder %s251, %s252
      %p263 = scmp.eq.s32.totalorder %s34, 0
      %p264 = por %p262, %p263
      %p265 = scmp.ne.s32.totalorder %s251, %s252
      %p266 = scmp.eq.s32.totalorder %s35, 1
      %p267 = por %p265, %p266
      %p269 = scmp.ne.s32.totalorder %s252, %s268
      %p270 = scmp.eq.s32.totalorder %s35, 0
      %p271 = por %p269, %p270
      %p272 = scmp.le.s32.totalorder 1, %s29
      %p273 = scmp.lt.s32.totalorder %s29, 3
      %p274 = pnand %p272, %p273
      %p275 = pneg %p274
      // Predicated region
      $region9: #{tpu_custom_call.1} parent=5 // pred_check
        _
      $region10: #{tpu_custom_call.1} parent=5 // pred_check_branch
        %277 = sbr.rel (%p274) target = $region12
      $region11: #{tpu_custom_call.1} parent=5 // pred_region
        %s278 = ssub.s32 %s29, 1
        // Predicated region
        $region13: #{tpu_custom_call.1} parent=11 // pred_check
          %p279 = pneg %p128
        $region14: #{tpu_custom_call.1} parent=11 // pred_check_branch
          %281 = sbr.rel (%p279) target = $region16
        $region15: #{tpu_custom_call.1} parent=11 // pred_region
          _
        $region16: #{tpu_custom_call.1} parent=11 // pred_fallthru
          _
        // Predicated region
        $region17: #{tpu_custom_call.1} parent=11 // pred_check
          %p282 = pneg %p149
        $region18: #{tpu_custom_call.1} parent=11 // pred_check_branch
          %284 = sbr.rel (%p282) target = $region20
        $region19: #{tpu_custom_call.1} parent=11 // pred_region
          _
        $region20: #{tpu_custom_call.1} parent=11 // pred_fallthru
          _
        // Predicated region
        $region21: #{tpu_custom_call.1} parent=11 // pred_check
          %p285 = pneg %p170
        $region22: #{tpu_custom_call.1} parent=11 // pred_check_branch
          %287 = sbr.rel (%p285) target = $region24
        $region23: #{tpu_custom_call.1} parent=11 // pred_region
          _
        $region24: #{tpu_custom_call.1} parent=11 // pred_fallthru
          _
        // Predicated region
        $region25: #{tpu_custom_call.1} parent=11 // pred_check
          %p288 = pneg %p191
        $region26: #{tpu_custom_call.1} parent=11 // pred_check_branch
          %290 = sbr.rel (%p288) target = $region28
        $region27: #{tpu_custom_call.1} parent=11 // pred_region
          %s292 = ssub.s32 1024, 1024
          %293 = vsyncadd [#allocation8], %s292
          %s294 = sshll.u32 [#allocation9], 4
          %s295 = int_to_ptr.vmem [resolvable:$true] %s294
          %300 = dma.hbm_to_vmem [thread:$0]  %s6, 1024, %s295, [#allocation8], 256, 256, 16
        $region28: #{tpu_custom_call.1} parent=11 // pred_fallthru
          _
        // Predicated region
        $region29: #{tpu_custom_call.1} parent=11 // pred_check
          %p301 = pneg %p212
        $region30: #{tpu_custom_call.1} parent=11 // pred_check_branch
          %303 = sbr.rel (%p301) target = $region32
        $region31: #{tpu_custom_call.1} parent=11 // pred_region
          %s305 = ssub.s32 1024, 1024
          %306 = vsyncadd [#allocation11], %s305
          %s307 = sshll.u32 [#allocation10], 4
          %s308 = int_to_ptr.vmem [resolvable:$true] %s307
          %313 = dma.hbm_to_vmem [thread:$0]  %s7, 1024, %s308, [#allocation11], 256, 256, 16
        $region32: #{tpu_custom_call.1} parent=11 // pred_fallthru
          _
      $region12: #{tpu_custom_call.1} parent=5 // pred_fallthru
        _
      %p314 = scmp.lt.s32.totalorder %s29, 2
      // Predicated region
      $region33: #{tpu_custom_call.1} parent=5 // pred_check
        %p315 = pneg %p314
      $region34: #{tpu_custom_call.1} parent=5 // pred_check_branch
        %317 = sbr.rel (%p315) target = $region36
      $region35: #{tpu_custom_call.1} parent=5 // pred_region
        // Predicated region
        $region37: #{tpu_custom_call.1} parent=35 // pred_check
          %p318 = pneg %p49
        $region38: #{tpu_custom_call.1} parent=35 // pred_check_branch
          %320 = sbr.rel (%p318) target = $region40
        $region39: #{tpu_custom_call.1} parent=35 // pred_region
          %p321 = scmp.lt.s32.totalorder %s29, 1
          %s322 = scalar_select %p321, %s29, 1
          %s323 = smul.addr %s322, 32
          %s324 = smul.addr %s323, 8
          %s325 = scalar_lea.vmem %s0, %s324
        $region40: #{tpu_custom_call.1} parent=35 // pred_fallthru
          _
        // Predicated region
        $region41: #{tpu_custom_call.1} parent=35 // pred_check
          %p326 = pneg %p75
        $region42: #{tpu_custom_call.1} parent=35 // pred_check_branch
          %328 = sbr.rel (%p326) target = $region44
        $region43: #{tpu_custom_call.1} parent=35 // pred_region
          %s329 = sand.u32 %s65, 1
          %s330 = scalar_lea.sflag [#allocation5], %s329
          %s331 = sand.u32 %s65, 1
          %s332 = smul.addr %s331, 256
          %s333 = scalar_lea.vmem [#allocation4], %s332
          %s335 = ssub.s32 4096, 4096
          %336 = vsyncadd %s330, %s335
          %s337 = smul.addr %s29, 32
          %s338 = smul.addr %s337, 128
          %s339 = scalar_lea.hbm %s1, %s338
          %s340 = sshll.u32 %s333, 4
          %s341 = int_to_ptr.vmem [resolvable:$true] %s340
          %346 = dma.hbm_to_vmem [thread:$0]  %s339, 4096, %s341, %s330, 128, 128, 8
        $region44: #{tpu_custom_call.1} parent=35 // pred_fallthru
          _
        // Predicated region
        $region45: #{tpu_custom_call.1} parent=35 // pred_check
          %p347 = pneg %p101
        $region46: #{tpu_custom_call.1} parent=35 // pred_check_branch
          %349 = sbr.rel (%p347) target = $region48
        $region47: #{tpu_custom_call.1} parent=35 // pred_region
          %s350 = sand.u32 %s29, 1
          %s351 = scalar_lea.sflag [#allocation8], %s350
          %s352 = sand.u32 %s91, 1
          %s353 = smul.addr %s352, 64
          %s354 = scalar_lea.vmem [#allocation7], %s353
          %s356 = ssub.s32 1024, 1024
          %357 = vsyncadd %s351, %s356
          %s358 = smul.addr %s29, 8
          %s359 = smul.addr %s358, 128
          %s360 = scalar_lea.hbm %s2, %s359
          %s361 = sshll.u32 %s354, 4
          %s362 = int_to_ptr.vmem [resolvable:$true] %s361
          %367 = dma.hbm_to_vmem [thread:$0]  %s360, 1024, %s362, %s351, 256, 256, 16
        $region48: #{tpu_custom_call.1} parent=35 // pred_fallthru
          _
      $region36: #{tpu_custom_call.1} parent=5 // pred_fallthru
        _
      %p368 = scmp.le.s32.totalorder 1, %s29
      %p369 = scmp.lt.s32.totalorder %s29, 3
      %p370 = pnand %p368, %p369
      %p371 = pneg %p370
      // Predicated region
      $region49: #{tpu_custom_call.1} parent=5 // pred_check
        _
      $region50: #{tpu_custom_call.1} parent=5 // pred_check_branch
        %373 = sbr.rel (%p370) target = $region52
      $region51: #{tpu_custom_call.1} parent=5 // pred_region
        %s374 = ssub.s32 %s29, 1
        %s375 = sand.u32 %s68, 1
        %s376 = scalar_lea.sflag [#allocation5], %s375
        %s377 = sand.u32 %s68, 1
        %s378 = smul.addr %s377, 256
        %s379 = scalar_lea.vmem [#allocation4], %s378
        // Predicated region
        $region53: #{tpu_custom_call.1} parent=51 // pred_check
          %p380 = pneg %p81
        $region54: #{tpu_custom_call.1} parent=51 // pred_check_branch
          %382 = sbr.rel (%p380) target = $region56
        $region55: #{tpu_custom_call.1} parent=51 // pred_region
          %383 = dma.done %s376, 4096
        $region56: #{tpu_custom_call.1} parent=51 // pred_fallthru
          _
        %s384 = sand.u32 %s34, 1
        %s385 = scalar_lea.sflag [#allocation8], %s384
        %s386 = sand.u32 %s94, 1
        %s387 = smul.addr %s386, 64
        %s388 = scalar_lea.vmem [#allocation7], %s387
        // Predicated region
        $region57: #{tpu_custom_call.1} parent=51 // pred_check
          %p389 = pneg %p107
        $region58: #{tpu_custom_call.1} parent=51 // pred_check_branch
          %391 = sbr.rel (%p389) target = $region60
        $region59: #{tpu_custom_call.1} parent=51 // pred_region
          %392 = dma.done %s385, 1024
        $region60: #{tpu_custom_call.1} parent=51 // pred_fallthru
          _
        // Predicated region
        $region61: #{tpu_custom_call.1} parent=51 // pred_check
          %p393 = pneg %p191
        $region62: #{tpu_custom_call.1} parent=51 // pred_check_branch
          %395 = sbr.rel (%p393) target = $region64
        $region63: #{tpu_custom_call.1} parent=51 // pred_region
          %396 = dma.done [#allocation8], 1024
        $region64: #{tpu_custom_call.1} parent=51 // pred_fallthru
          _
        // Predicated region
        $region65: #{tpu_custom_call.1} parent=51 // pred_check
          %p397 = pneg %p212
        $region66: #{tpu_custom_call.1} parent=51 // pred_check_branch
          %399 = sbr.rel (%p397) target = $region68
        $region67: #{tpu_custom_call.1} parent=51 // pred_region
          %400 = dma.done [#allocation11], 1024
        $region68: #{tpu_custom_call.1} parent=51 // pred_fallthru
          _
        %p401 = scmp.lt.s32.totalorder %s34, 1
        %s402 = scalar_select %p401, %s34, 1
        %s403 = smul.addr %s402, 32
        %s404 = smul.addr %s403, 8
        %s405 = scalar_lea.vmem %s0, %s404
        %p406 = pneg %p55
        %p407 = pneg %p52
        %s408 = sand.u32 %s68, 1
        %s409 = scalar_lea.sflag [#allocation5], %s408
        %s410 = sand.u32 %s68, 1
        %s411 = smul.addr %s410, 256
        %s412 = scalar_lea.vmem [#allocation4], %s411
        %p413 = pneg %p81
        %p414 = pneg %p78
        %s415 = sand.u32 %s34, 1
        %s416 = scalar_lea.sflag [#allocation8], %s415
        %s417 = sand.u32 %s94, 1
        %s418 = smul.addr %s417, 64
        %s419 = scalar_lea.vmem [#allocation7], %s418
        %p420 = pneg %p107
        %p421 = pneg %p104
        %p422 = pneg %p128
        %p423 = pneg %p125
        %p424 = pneg %p149
        %p425 = pneg %p146
        %p426 = pneg %p170
        %p427 = pneg %p167
        %p428 = pneg %p191
        %p429 = pneg %p188
        %p430 = pneg %p212
        %p431 = pneg %p209
        %p432 = pneg %p238
        %p433 = pneg %p235
        %s434 = sand.u32 %s225, 1
        %s435 = scalar_lea.sflag [#allocation6], %s434
        %s436 = sand.u32 %s225, 1
        %s437 = smul.addr %s436, 64
        %s438 = scalar_lea.vmem [#allocation12], %s437
        %p439 = pneg %p264
        %p440 = pneg %p261
        %s441 = sand.u32 %s251, 1
        %s442 = scalar_lea.sflag [#allocation14], %s441
        %s443 = sand.u32 %s251, 1
        %s444 = smul.addr %s443, 64
        %s445 = scalar_lea.vmem [#allocation13], %s444
        %p446 = scmp.lt.s32.totalorder %s34, 1
        %s447 = scalar_select %p446, %s34, 1
        %s448 = smul.addr %s447, 32
        %s449 = smul.addr %s448, 8
        %s450 = scalar_lea.vmem %s0, %s449
        %452 = vst [vmem:[#allocation2] sm:$0xff] 0.0
        %453 = vst [vmem:[#allocation2 + $0x8] sm:$0xff] 0.0
        %454 = vst [vmem:[#allocation2 + $0x10] sm:$0xff] 0.0
        %455 = vst [vmem:[#allocation2 + $0x18] sm:$0xff] 0.0
        %456 = vst [vmem:[#allocation2 + $0x1a0] sm:$0xff] 0.0
        %457 = vst [vmem:[#allocation2 + $0x1a8] sm:$0xff] 0.0
        %458 = vst [vmem:[#allocation2 + $0x1b0] sm:$0xff] 0.0
        %459 = vst [vmem:[#allocation2 + $0x1b8] sm:$0xff] 0.0
        %v460 = vld [vmem:[%s450] sm:$0xff]
        %v461 = vld [vmem:[%s450 + $0x8] sm:$0xff]
        %v462 = vld [vmem:[%s379] sm:$0xff]
        %v463 = vld [vmem:[%s379 + $0x8] sm:$0xff]
        %466 = vrot.lane.b32.xlu0 %v462, 4
        %v467 = vpop.permute.xlu0 %466
        %468 = vrot.lane.b32.xlu0 %v463, 4
        %v469 = vpop.permute.xlu0 %468
        %vm472 = vcmask 31744
        %v473 = vsel %vm472, %v460, %v467
        %v474 = vsel %vm472, %v461, %v469
        %vm475 = vcmask 293888
        %v476 = vsel %vm475, %v473, 0.0
        %v477 = vsel %vm475, %v474, 0.0
        %478 = vst [vmem:[#allocation2 + $0x20] sm:$0xff] %v476
        %479 = vst [vmem:[#allocation2 + $0x28] sm:$0xff] %v477
        %480 = vst [vmem:[#allocation2 + $0x30] sm:$0xff] 0.0
        %s481 = scalar_lea.vmem %s450, 16
        %v482 = vld [vmem:[%s481] sm:$0xff]
        %v483 = vld [vmem:[%s481 + $0x8] sm:$0xff]
        %s484 = scalar_lea.vmem %s379, 16 [#allocation4]
        %v485 = vld [vmem:[%s484] sm:$0xff]
        %v486 = vld [vmem:[%s484 + $0x8] sm:$0xff]
        %489 = vrot.lane.b32.xlu0 %v485, 4
        %v490 = vpop.permute.xlu0 %489
        %491 = vrot.lane.b32.xlu0 %v486, 4
        %v492 = vpop.permute.xlu0 %491
        %v495 = vsel %vm472, %v482, %v490
        %v496 = vsel %vm472, %v483, %v492
        %v497 = vsel %vm475, %v495, 0.0
        %v498 = vsel %vm475, %v496, 0.0
        %499 = vst [vmem:[#allocation2 + $0x38] sm:$0xff] %v497
        %500 = vst [vmem:[#allocation2 + $0x40] sm:$0xff] %v498
        %501 = vst [vmem:[#allocation2 + $0x48] sm:$0xff] 0.0
        %s502 = scalar_lea.vmem %s450, 32
        %v503 = vld [vmem:[%s502] sm:$0xff]
        %v504 = vld [vmem:[%s502 + $0x8] sm:$0xff]
        %s505 = scalar_lea.vmem %s379, 32 [#allocation4]
        %v506 = vld [vmem:[%s505] sm:$0xff]
        %v507 = vld [vmem:[%s505 + $0x8] sm:$0xff]
        %510 = vrot.lane.b32.xlu0 %v506, 4
        %v511 = vpop.permute.xlu0 %510
        %512 = vrot.lane.b32.xlu0 %v507, 4
        %v513 = vpop.permute.xlu0 %512
        %v516 = vsel %vm472, %v503, %v511
        %v517 = vsel %vm472, %v504, %v513
        %v518 = vsel %vm475, %v516, 0.0
        %v519 = vsel %vm475, %v517, 0.0
        %520 = vst [vmem:[#allocation2 + $0x50] sm:$0xff] %v518
        %521 = vst [vmem:[#allocation2 + $0x58] sm:$0xff] %v519
        %522 = vst [vmem:[#allocation2 + $0x60] sm:$0xff] 0.0
        %s523 = scalar_lea.vmem %s450, 48
        %v524 = vld [vmem:[%s523] sm:$0xff]
        %v525 = vld [vmem:[%s523 + $0x8] sm:$0xff]
        %s526 = scalar_lea.vmem %s379, 48 [#allocation4]
        %v527 = vld [vmem:[%s526] sm:$0xff]
        %v528 = vld [vmem:[%s526 + $0x8] sm:$0xff]
        %531 = vrot.lane.b32.xlu0 %v527, 4
        %v532 = vpop.permute.xlu0 %531
        %533 = vrot.lane.b32.xlu0 %v528, 4
        %v534 = vpop.permute.xlu0 %533
        %v537 = vsel %vm472, %v524, %v532
        %v538 = vsel %vm472, %v525, %v534
        %v539 = vsel %vm475, %v537, 0.0
        %v540 = vsel %vm475, %v538, 0.0
        %541 = vst [vmem:[#allocation2 + $0x68] sm:$0xff] %v539
        %542 = vst [vmem:[#allocation2 + $0x70] sm:$0xff] %v540
        %543 = vst [vmem:[#allocation2 + $0x78] sm:$0xff] 0.0
        %s544 = scalar_lea.vmem %s450, 64
        %v545 = vld [vmem:[%s544] sm:$0xff]
        %v546 = vld [vmem:[%s544 + $0x8] sm:$0xff]
        %s547 = scalar_lea.vmem %s379, 64 [#allocation4]
        %v548 = vld [vmem:[%s547] sm:$0xff]
        %v549 = vld [vmem:[%s547 + $0x8] sm:$0xff]
        %552 = vrot.lane.b32.xlu0 %v548, 4
        %v553 = vpop.permute.xlu0 %552
        %554 = vrot.lane.b32.xlu0 %v549, 4
        %v555 = vpop.permute.xlu0 %554
        %v558 = vsel %vm472, %v545, %v553
        %v559 = vsel %vm472, %v546, %v555
        %v560 = vsel %vm475, %v558, 0.0
        %v561 = vsel %vm475, %v559, 0.0
        %562 = vst [vmem:[#allocation2 + $0x80] sm:$0xff] %v560
        %563 = vst [vmem:[#allocation2 + $0x88] sm:$0xff] %v561
        %564 = vst [vmem:[#allocation2 + $0x90] sm:$0xff] 0.0
        %s565 = scalar_lea.vmem %s450, 80
        %v566 = vld [vmem:[%s565] sm:$0xff]
        %v567 = vld [vmem:[%s565 + $0x8] sm:$0xff]
        %s568 = scalar_lea.vmem %s379, 80 [#allocation4]
        %v569 = vld [vmem:[%s568] sm:$0xff]
        %v570 = vld [vmem:[%s568 + $0x8] sm:$0xff]
        %573 = vrot.lane.b32.xlu0 %v569, 4
        %v574 = vpop.permute.xlu0 %573
        %575 = vrot.lane.b32.xlu0 %v570, 4
        %v576 = vpop.permute.xlu0 %575
        %v579 = vsel %vm472, %v566, %v574
        %v580 = vsel %vm472, %v567, %v576
        %v581 = vsel %vm475, %v579, 0.0
        %v582 = vsel %vm475, %v580, 0.0
        %583 = vst [vmem:[#allocation2 + $0x98] sm:$0xff] %v581
        %584 = vst [vmem:[#allocation2 + $0xa0] sm:$0xff] %v582
        %585 = vst [vmem:[#allocation2 + $0xa8] sm:$0xff] 0.0
        %s586 = scalar_lea.vmem %s450, 96
        %v587 = vld [vmem:[%s586] sm:$0xff]
        %v588 = vld [vmem:[%s586 + $0x8] sm:$0xff]
        %s589 = scalar_lea.vmem %s379, 96 [#allocation4]
        %v590 = vld [vmem:[%s589] sm:$0xff]
        %v591 = vld [vmem:[%s589 + $0x8] sm:$0xff]
        %594 = vrot.lane.b32.xlu0 %v590, 4
        %v595 = vpop.permute.xlu0 %594
        %596 = vrot.lane.b32.xlu0 %v591, 4
        %v597 = vpop.permute.xlu0 %596
        %v600 = vsel %vm472, %v587, %v595
        %v601 = vsel %vm472, %v588, %v597
        %v602 = vsel %vm475, %v600, 0.0
        %v603 = vsel %vm475, %v601, 0.0
        %604 = vst [vmem:[#allocation2 + $0xb0] sm:$0xff] %v602
        %605 = vst [vmem:[#allocation2 + $0xb8] sm:$0xff] %v603
        %606 = vst [vmem:[#allocation2 + $0xc0] sm:$0xff] 0.0
        %s607 = scalar_lea.vmem %s450, 112
        %v608 = vld [vmem:[%s607] sm:$0xff]
        %v609 = vld [vmem:[%s607 + $0x8] sm:$0xff]
        %s610 = scalar_lea.vmem %s379, 112 [#allocation4]
        %v611 = vld [vmem:[%s610] sm:$0xff]
        %v612 = vld [vmem:[%s610 + $0x8] sm:$0xff]
        %615 = vrot.lane.b32.xlu0 %v611, 4
        %v616 = vpop.permute.xlu0 %615
        %617 = vrot.lane.b32.xlu0 %v612, 4
        %v618 = vpop.permute.xlu0 %617
        %v621 = vsel %vm472, %v608, %v616
        %v622 = vsel %vm472, %v609, %v618
        %v623 = vsel %vm475, %v621, 0.0
        %v624 = vsel %vm475, %v622, 0.0
        %625 = vst [vmem:[#allocation2 + $0xc8] sm:$0xff] %v623
        %626 = vst [vmem:[#allocation2 + $0xd0] sm:$0xff] %v624
        %627 = vst [vmem:[#allocation2 + $0xd8] sm:$0xff] 0.0
        %s628 = scalar_lea.vmem %s450, 128
        %v629 = vld [vmem:[%s628] sm:$0xff]
        %v630 = vld [vmem:[%s628 + $0x8] sm:$0xff]
        %s631 = scalar_lea.vmem %s379, 128 [#allocation4]
        %v632 = vld [vmem:[%s631] sm:$0xff]
        %v633 = vld [vmem:[%s631 + $0x8] sm:$0xff]
        %636 = vrot.lane.b32.xlu0 %v632, 4
        %v637 = vpop.permute.xlu0 %636
        %638 = vrot.lane.b32.xlu0 %v633, 4
        %v639 = vpop.permute.xlu0 %638
        %v642 = vsel %vm472, %v629, %v637
        %v643 = vsel %vm472, %v630, %v639
        %v644 = vsel %vm475, %v642, 0.0
        %v645 = vsel %vm475, %v643, 0.0
        %646 = vst [vmem:[#allocation2 + $0xe0] sm:$0xff] %v644
        %647 = vst [vmem:[#allocation2 + $0xe8] sm:$0xff] %v645
        %648 = vst [vmem:[#allocation2 + $0xf0] sm:$0xff] 0.0
        %s649 = scalar_lea.vmem %s450, 144
        %v650 = vld [vmem:[%s649] sm:$0xff]
        %v651 = vld [vmem:[%s649 + $0x8] sm:$0xff]
        %s652 = scalar_lea.vmem %s379, 144 [#allocation4]
        %v653 = vld [vmem:[%s652] sm:$0xff]
        %v654 = vld [vmem:[%s652 + $0x8] sm:$0xff]
        %657 = vrot.lane.b32.xlu0 %v653, 4
        %v658 = vpop.permute.xlu0 %657
        %659 = vrot.lane.b32.xlu0 %v654, 4
        %v660 = vpop.permute.xlu0 %659
        %v663 = vsel %vm472, %v650, %v658
        %v664 = vsel %vm472, %v651, %v660
        %v665 = vsel %vm475, %v663, 0.0
        %v666 = vsel %vm475, %v664, 0.0
        %667 = vst [vmem:[#allocation2 + $0xf8] sm:$0xff] %v665
        %668 = vst [vmem:[#allocation2 + $0x100] sm:$0xff] %v666
        %669 = vst [vmem:[#allocation2 + $0x108] sm:$0xff] 0.0
        %s670 = scalar_lea.vmem %s450, 160
        %v671 = vld [vmem:[%s670] sm:$0xff]
        %v672 = vld [vmem:[%s670 + $0x8] sm:$0xff]
        %s673 = scalar_lea.vmem %s379, 160 [#allocation4]
        %v674 = vld [vmem:[%s673] sm:$0xff]
        %v675 = vld [vmem:[%s673 + $0x8] sm:$0xff]
        %678 = vrot.lane.b32.xlu0 %v674, 4
        %v679 = vpop.permute.xlu0 %678
        %680 = vrot.lane.b32.xlu0 %v675, 4
        %v681 = vpop.permute.xlu0 %680
        %v684 = vsel %vm472, %v671, %v679
        %v685 = vsel %vm472, %v672, %v681
        %v686 = vsel %vm475, %v684, 0.0
        %v687 = vsel %vm475, %v685, 0.0
        %688 = vst [vmem:[#allocation2 + $0x110] sm:$0xff] %v686
        %689 = vst [vmem:[#allocation2 + $0x118] sm:$0xff] %v687
        %690 = vst [vmem:[#allocation2 + $0x120] sm:$0xff] 0.0
        %s691 = scalar_lea.vmem %s450, 176
        %v692 = vld [vmem:[%s691] sm:$0xff]
        %v693 = vld [vmem:[%s691 + $0x8] sm:$0xff]
        %s694 = scalar_lea.vmem %s379, 176 [#allocation4]
        %v695 = vld [vmem:[%s694] sm:$0xff]
        %v696 = vld [vmem:[%s694 + $0x8] sm:$0xff]
        %699 = vrot.lane.b32.xlu0 %v695, 4
        %v700 = vpop.permute.xlu0 %699
        %701 = vrot.lane.b32.xlu0 %v696, 4
        %v702 = vpop.permute.xlu0 %701
        %v705 = vsel %vm472, %v692, %v700
        %v706 = vsel %vm472, %v693, %v702
        %v707 = vsel %vm475, %v705, 0.0
        %v708 = vsel %vm475, %v706, 0.0
        %709 = vst [vmem:[#allocation2 + $0x128] sm:$0xff] %v707
        %710 = vst [vmem:[#allocation2 + $0x130] sm:$0xff] %v708
        %711 = vst [vmem:[#allocation2 + $0x138] sm:$0xff] 0.0
        %s712 = scalar_lea.vmem %s450, 192
        %v713 = vld [vmem:[%s712] sm:$0xff]
        %v714 = vld [vmem:[%s712 + $0x8] sm:$0xff]
        %s715 = scalar_lea.vmem %s379, 192 [#allocation4]
        %v716 = vld [vmem:[%s715] sm:$0xff]
        %v717 = vld [vmem:[%s715 + $0x8] sm:$0xff]
        %720 = vrot.lane.b32.xlu0 %v716, 4
        %v721 = vpop.permute.xlu0 %720
        %722 = vrot.lane.b32.xlu0 %v717, 4
        %v723 = vpop.permute.xlu0 %722
        %v726 = vsel %vm472, %v713, %v721
        %v727 = vsel %vm472, %v714, %v723
        %v728 = vsel %vm475, %v726, 0.0
        %v729 = vsel %vm475, %v727, 0.0
        %730 = vst [vmem:[#allocation2 + $0x140] sm:$0xff] %v728
        %731 = vst [vmem:[#allocation2 + $0x148] sm:$0xff] %v729
        %732 = vst [vmem:[#allocation2 + $0x150] sm:$0xff] 0.0
        %s733 = scalar_lea.vmem %s450, 208
        %v734 = vld [vmem:[%s733] sm:$0xff]
        %v735 = vld [vmem:[%s733 + $0x8] sm:$0xff]
        %s736 = scalar_lea.vmem %s379, 208 [#allocation4]
        %v737 = vld [vmem:[%s736] sm:$0xff]
        %v738 = vld [vmem:[%s736 + $0x8] sm:$0xff]
        %741 = vrot.lane.b32.xlu0 %v737, 4
        %v742 = vpop.permute.xlu0 %741
        %743 = vrot.lane.b32.xlu0 %v738, 4
        %v744 = vpop.permute.xlu0 %743
        %v747 = vsel %vm472, %v734, %v742
        %v748 = vsel %vm472, %v735, %v744
        %v749 = vsel %vm475, %v747, 0.0
        %v750 = vsel %vm475, %v748, 0.0
        %751 = vst [vmem:[#allocation2 + $0x158] sm:$0xff] %v749
        %752 = vst [vmem:[#allocation2 + $0x160] sm:$0xff] %v750
        %753 = vst [vmem:[#allocation2 + $0x168] sm:$0xff] 0.0
        %s754 = scalar_lea.vmem %s450, 224
        %v755 = vld [vmem:[%s754] sm:$0xff]
        %v756 = vld [vmem:[%s754 + $0x8] sm:$0xff]
        %s757 = scalar_lea.vmem %s379, 224 [#allocation4]
        %v758 = vld [vmem:[%s757] sm:$0xff]
        %v759 = vld [vmem:[%s757 + $0x8] sm:$0xff]
        %762 = vrot.lane.b32.xlu0 %v758, 4
        %v763 = vpop.permute.xlu0 %762
        %764 = vrot.lane.b32.xlu0 %v759, 4
        %v765 = vpop.permute.xlu0 %764
        %v768 = vsel %vm472, %v755, %v763
        %v769 = vsel %vm472, %v756, %v765
        %v770 = vsel %vm475, %v768, 0.0
        %v771 = vsel %vm475, %v769, 0.0
        %772 = vst [vmem:[#allocation2 + $0x170] sm:$0xff] %v770
        %773 = vst [vmem:[#allocation2 + $0x178] sm:$0xff] %v771
        %774 = vst [vmem:[#allocation2 + $0x180] sm:$0xff] 0.0
        %s775 = scalar_lea.vmem %s450, 240
        %v776 = vld [vmem:[%s775] sm:$0xff]
        %v777 = vld [vmem:[%s775 + $0x8] sm:$0xff]
        %s778 = scalar_lea.vmem %s379, 240 [#allocation4]
        %v779 = vld [vmem:[%s778] sm:$0xff]
        %v780 = vld [vmem:[%s778 + $0x8] sm:$0xff]
        %783 = vrot.lane.b32.xlu0 %v779, 4
        %v784 = vpop.permute.xlu0 %783
        %785 = vrot.lane.b32.xlu0 %v780, 4
        %v786 = vpop.permute.xlu0 %785
        %v789 = vsel %vm472, %v776, %v784
        %v790 = vsel %vm472, %v777, %v786
        %v791 = vsel %vm475, %v789, 0.0
        %v792 = vsel %vm475, %v790, 0.0
        %793 = vst [vmem:[#allocation2 + $0x188] sm:$0xff] %v791
        %794 = vst [vmem:[#allocation2 + $0x190] sm:$0xff] %v792
        %795 = vst [vmem:[#allocation2 + $0x198] sm:$0xff] 0.0
        %v796 = vld [vmem:[#allocation2 + $0x7] sm:$0xff]
        %v797 = vld [vmem:[#allocation2 + $0xf] sm:$0xff]
        %v798 = vld [vmem:[#allocation2 + $0x17] sm:$0xff]
        %v799 = vld [vmem:[#allocation2 + $0x1f] sm:$0xff]
        %v800 = vld [vmem:[#allocation2 + $0x27] sm:$0xff]
        %v801 = vld [vmem:[#allocation2 + $0x2f] sm:$0xff]
        %v802 = vld [vmem:[#allocation2 + $0x37] sm:$0xff]
        %v803 = vld [vmem:[#allocation2 + $0x3f] sm:$0xff]
        %v804 = vld [vmem:[#allocation2 + $0x47] sm:$0xff]
        %v805 = vld [vmem:[#allocation2 + $0x4f] sm:$0xff]
        %v806 = vld [vmem:[#allocation2 + $0x57] sm:$0xff]
        %v807 = vld [vmem:[#allocation2 + $0x5f] sm:$0xff]
        %v808 = vld [vmem:[#allocation2 + $0x67] sm:$0xff]
        %v809 = vld [vmem:[#allocation2 + $0x6f] sm:$0xff]
        %v810 = vld [vmem:[#allocation2 + $0x77] sm:$0xff]
        %v811 = vld [vmem:[#allocation2 + $0x7f] sm:$0xff]
        %v812 = vld [vmem:[#allocation2 + $0x87] sm:$0xff]
        %v813 = vld [vmem:[#allocation2 + $0x8f] sm:$0xff]
        %v814 = vld [vmem:[#allocation2 + $0x97] sm:$0xff]
        %v815 = vld [vmem:[#allocation2 + $0x9f] sm:$0xff]
        %v816 = vld [vmem:[#allocation2 + $0xa7] sm:$0xff]
        %v817 = vld [vmem:[#allocation2 + $0xaf] sm:$0xff]
        %v818 = vld [vmem:[#allocation2 + $0xb7] sm:$0xff]
        %v819 = vld [vmem:[#allocation2 + $0xbf] sm:$0xff]
        %v820 = vld [vmem:[#allocation2 + $0xc7] sm:$0xff]
        %v821 = vld [vmem:[#allocation2 + $0xcf] sm:$0xff]
        %v822 = vld [vmem:[#allocation2 + $0xd7] sm:$0xff]
        %v823 = vld [vmem:[#allocation2 + $0xdf] sm:$0xff]
        %v824 = vld [vmem:[#allocation2 + $0xe7] sm:$0xff]
        %v825 = vld [vmem:[#allocation2 + $0xef] sm:$0xff]
        %v826 = vld [vmem:[#allocation2 + $0xf7] sm:$0xff]
        %v827 = vld [vmem:[#allocation2 + $0xff] sm:$0xff]
        %v828 = vld [vmem:[#allocation2 + $0x107] sm:$0xff]
        %v829 = vld [vmem:[#allocation2 + $0x10f] sm:$0xff]
        %v830 = vld [vmem:[#allocation2 + $0x117] sm:$0xff]
        %v831 = vld [vmem:[#allocation2 + $0x11f] sm:$0xff]
        %v832 = vld [vmem:[#allocation2 + $0x127] sm:$0xff]
        %v833 = vld [vmem:[#allocation2 + $0x12f] sm:$0xff]
        %v834 = vld [vmem:[#allocation2 + $0x137] sm:$0xff]
        %v835 = vld [vmem:[#allocation2 + $0x13f] sm:$0xff]
        %v836 = vld [vmem:[#allocation2 + $0x147] sm:$0xff]
        %v837 = vld [vmem:[#allocation2 + $0x14f] sm:$0xff]
        %v838 = vld [vmem:[#allocation2 + $0x157] sm:$0xff]
        %v839 = vld [vmem:[#allocation2 + $0x15f] sm:$0xff]
        %v840 = vld [vmem:[#allocation2 + $0x167] sm:$0xff]
        %v841 = vld [vmem:[#allocation2 + $0x16f] sm:$0xff]
        %v842 = vld [vmem:[#allocation2 + $0x177] sm:$0xff]
        %v843 = vld [vmem:[#allocation2 + $0x17f] sm:$0xff]
        %v844 = vpack.c.bf16 %v797, %v796
        %v845 = vpack.c.bf16 %v799, %v798
        %v846 = vpack.c.bf16 %v801, %v800
        %v847 = vpack.c.bf16 %v803, %v802
        %v848 = vpack.c.bf16 %v805, %v804
        %v849 = vpack.c.bf16 %v807, %v806
        %v850 = vpack.c.bf16 %v809, %v808
        %v851 = vpack.c.bf16 %v811, %v810
        %v852 = vpack.c.bf16 %v813, %v812
        %v853 = vpack.c.bf16 %v815, %v814
        %v854 = vpack.c.bf16 %v817, %v816
        %v855 = vpack.c.bf16 %v819, %v818
        %v856 = vpack.c.bf16 %v821, %v820
        %v857 = vpack.c.bf16 %v823, %v822
        %v858 = vpack.c.bf16 %v825, %v824
        %v859 = vpack.c.bf16 %v827, %v826
        %v860 = vpack.c.bf16 %v829, %v828
        %v861 = vpack.c.bf16 %v831, %v830
        %v862 = vpack.c.bf16 %v833, %v832
        %v863 = vpack.c.bf16 %v835, %v834
        %v864 = vpack.c.bf16 %v837, %v836
        %v865 = vpack.c.bf16 %v839, %v838
        %v866 = vpack.c.bf16 %v841, %v840
        %v867 = vpack.c.bf16 %v843, %v842
        %v868 = vld [vmem:[%s3] sm:$0xf]
        %v869 = vld [vmem:[%s3 + $0x4] sm:$0xf]
        %v870 = vld [vmem:[%s3 + $0x8] sm:$0xf]
        %v871 = vld [vmem:[%s3 + $0xc] sm:$0xf]
        %v872 = vld [vmem:[%s3 + $0x10] sm:$0xf]
        %v873 = vld [vmem:[%s3 + $0x14] sm:$0xf]
        %v874 = vld [vmem:[%s3 + $0x18] sm:$0xf]
        %v875 = vld [vmem:[%s3 + $0x1c] sm:$0xf]
        %v876 = vld [vmem:[%s3 + $0x20] sm:$0xf]
        %v877 = vld [vmem:[%s3 + $0x24] sm:$0xf]
        %v878 = vld [vmem:[%s3 + $0x28] sm:$0xf]
        %v879 = vld [vmem:[%s3 + $0x2c] sm:$0xf]
        %v880 = vld [vmem:[%s3 + $0x30] sm:$0xf]
        %v881 = vld [vmem:[%s3 + $0x34] sm:$0xf]
        %v882 = vld [vmem:[%s3 + $0x38] sm:$0xf]
        %v883 = vld [vmem:[%s3 + $0x3c] sm:$0xf]
        %v900 = vunpack.c.l.b16 %v868
        %v901 = vunpack.c.l.b16 %v869
        %v902 = vunpack.c.l.b16 %v870
        %v903 = vunpack.c.l.b16 %v871
        %v904 = vunpack.c.l.b16 %v872
        %v905 = vunpack.c.l.b16 %v873
        %v906 = vunpack.c.l.b16 %v874
        %v907 = vunpack.c.l.b16 %v875
        %v908 = vunpack.c.l.b16 %v876
        %v909 = vunpack.c.l.b16 %v877
        %v910 = vunpack.c.l.b16 %v878
        %v911 = vunpack.c.l.b16 %v879
        %v912 = vunpack.c.l.b16 %v880
        %v913 = vunpack.c.l.b16 %v881
        %v914 = vunpack.c.l.b16 %v882
        %v915 = vunpack.c.l.b16 %v883
        %v916 = vpack.c.b16 %v901, %v900
        %v917 = vpack.c.b16 %v903, %v902
        %v918 = vpack.c.b16 %v905, %v904
        %v919 = vpack.c.b16 %v907, %v906
        %v920 = vpack.c.b16 %v909, %v908
        %v921 = vpack.c.b16 %v911, %v910
        %v922 = vpack.c.b16 %v913, %v912
        %v923 = vpack.c.b16 %v915, %v914
        %932 = vmatprep.subr.bf16.mxu0 0
        %933 = vmatpush1.bf16.msra.mxu0 %v916
        %934 = vmatprep.subr.bf16.mxu0 0
        %935 = vmatpush1.bf16.msra.mxu0 %v917
        %936 = vmatprep.subr.bf16.mxu0 0
        %937 = vmatpush1.bf16.msra.mxu0 %v918
        %938 = vmatprep.subr.bf16.mxu0 0
        %939 = vmatpush1.bf16.msra.mxu0 %v919
        %940 = vmatprep.subr.bf16.mxu0 0
        %941 = vmatpush1.bf16.msra.mxu0 %v920
        %942 = vmatprep.subr.bf16.mxu0 0
        %943 = vmatpush1.bf16.msra.mxu0 %v921
        %944 = vmatprep.subr.bf16.mxu0 0
        %945 = vmatpush1.bf16.msra.mxu0 %v922
        %946 = vmatprep.subr.bf16.mxu0 0
        %947 = vmatpush1.bf16.msra.mxu0 %v923
        %948 = vmatprep.subr.bf16.mxu0 0
        %949 = vmatpush1.bf16.msra.mxu0 0
        %950 = vmatprep.subr.bf16.mxu0 0
        %951 = vmatpush1.bf16.msra.mxu0 0
        %952 = vmatprep.subr.bf16.mxu0 0
        %953 = vmatpush1.bf16.msra.mxu0 0
        %954 = vmatprep.subr.bf16.mxu0 0
        %955 = vmatpush1.bf16.msra.mxu0 0
        %956 = vmatprep.subr.bf16.mxu0 0
        %957 = vmatpush1.bf16.msra.mxu0 0
        %958 = vmatprep.subr.bf16.mxu0 0
        %959 = vmatpush1.bf16.msra.mxu0 0
        %960 = vmatprep.subr.bf16.mxu0 0
        %961 = vmatpush1.bf16.msra.mxu0 0
        %962 = vmatprep.subr.bf16.mxu0 0
        %963 = vmatpush1.bf16.msra.mxu0 0
        %964 = vmatprep.mubr.bf16.mxu0 0
        %965 = vmatmul.mubr.bf16.gmra.mrb[0].mxu0 %v844
        %v966 = vpop.f32.mrb[0].mxu0
        %v967 = vadd.f32 0.0, %v966
        %v968 = vpop.f32.mrb[0].mxu0
        %v969 = vpop.f32.mrb[0].mxu0
        %v970 = vadd.f32 0.0, %v969
        %v971 = vpop.f32.mrb[0].mxu0
        %972 = vmatprep.mubr.bf16.mxu0 0
        %973 = vmatmul.mubr.bf16.gmra.mrb[0].mxu0 %v845
        %v974 = vpop.f32.mrb[0].mxu0
        %v975 = vadd.f32 0.0, %v974
        %v976 = vpop.f32.mrb[0].mxu0
        %v977 = vpop.f32.mrb[0].mxu0
        %v978 = vadd.f32 0.0, %v977
        %v979 = vpop.f32.mrb[0].mxu0
        %980 = vmatprep.mubr.bf16.mxu0 0
        %981 = vmatmul.mubr.bf16.gmra.mrb[0].mxu0 %v846
        %v982 = vpop.f32.mrb[0].mxu0
        %v983 = vadd.f32 0.0, %v982
        %v984 = vpop.f32.mrb[0].mxu0
        %v985 = vpop.f32.mrb[0].mxu0
        %v986 = vadd.f32 0.0, %v985
        %v987 = vpop.f32.mrb[0].mxu0
        %988 = vmatprep.mubr.bf16.mxu0 0
        %989 = vmatmul.mubr.bf16.gmra.mrb[0].mxu0 %v847
        %v990 = vpop.f32.mrb[0].mxu0
        %v991 = vadd.f32 0.0, %v990
        %v992 = vpop.f32.mrb[0].mxu0
        %v993 = vpop.f32.mrb[0].mxu0
        %v994 = vadd.f32 0.0, %v993
        %v995 = vpop.f32.mrb[0].mxu0
        %996 = vmatprep.mubr.bf16.mxu0 0
        %997 = vmatmul.mubr.bf16.gmra.mrb[0].mxu0 %v848
        %v998 = vpop.f32.mrb[0].mxu0
        %v999 = vadd.f32 0.0, %v998
        %v1000 = vpop.f32.mrb[0].mxu0
        %v1001 = vpop.f32.mrb[0].mxu0
        %v1002 = vadd.f32 0.0, %v1001
        %v1003 = vpop.f32.mrb[0].mxu0
        %1004 = vmatprep.mubr.bf16.mxu0 0
        %1005 = vmatmul.mubr.bf16.gmra.mrb[0].mxu0 %v849
        %v1006 = vpop.f32.mrb[0].mxu0
        %v1007 = vadd.f32 0.0, %v1006
        %v1008 = vpop.f32.mrb[0].mxu0
        %v1009 = vpop.f32.mrb[0].mxu0
        %v1010 = vadd.f32 0.0, %v1009
        %v1011 = vpop.f32.mrb[0].mxu0
        %1012 = vmatprep.mubr.bf16.mxu0 0
        %1013 = vmatmul.mubr.bf16.gmra.mrb[0].mxu0 %v850
        %v1014 = vpop.f32.mrb[0].mxu0
        %v1015 = vadd.f32 0.0, %v1014
        %v1016 = vpop.f32.mrb[0].mxu0
        %v1017 = vpop.f32.mrb[0].mxu0
        %v1018 = vadd.f32 0.0, %v1017
        %v1019 = vpop.f32.mrb[0].mxu0
        %1020 = vmatprep.mubr.bf16.mxu0 0
        %1021 = vmatmul.mubr.bf16.gmra.mrb[0].mxu0 %v851
        %v1022 = vpop.f32.mrb[0].mxu0
        %v1023 = vadd.f32 0.0, %v1022
        %v1024 = vpop.f32.mrb[0].mxu0
        %v1025 = vpop.f32.mrb[0].mxu0
        %v1026 = vadd.f32 0.0, %v1025
        %v1027 = vpop.f32.mrb[0].mxu0
        %1028 = vmatprep.mubr.bf16.mxu0 0
        %1029 = vmatmul.mubr.bf16.gmra.mrb[0].mxu0 %v852
        %v1030 = vpop.f32.mrb[0].mxu0
        %v1031 = vadd.f32 0.0, %v1030
        %v1032 = vpop.f32.mrb[0].mxu0
        %v1033 = vpop.f32.mrb[0].mxu0
        %v1034 = vadd.f32 0.0, %v1033
        %v1035 = vpop.f32.mrb[0].mxu0
        %1036 = vmatprep.mubr.bf16.mxu0 0
        %1037 = vmatmul.mubr.bf16.gmra.mrb[0].mxu0 %v853
        %v1038 = vpop.f32.mrb[0].mxu0
        %v1039 = vadd.f32 0.0, %v1038
        %v1040 = vpop.f32.mrb[0].mxu0
        %v1041 = vpop.f32.mrb[0].mxu0
        %v1042 = vadd.f32 0.0, %v1041
        %v1043 = vpop.f32.mrb[0].mxu0
        %1044 = vmatprep.mubr.bf16.mxu0 0
        %1045 = vmatmul.mubr.bf16.gmra.mrb[0].mxu0 %v854
        %v1046 = vpop.f32.mrb[0].mxu0
        %v1047 = vadd.f32 0.0, %v1046
        %v1048 = vpop.f32.mrb[0].mxu0
        %v1049 = vpop.f32.mrb[0].mxu0
        %v1050 = vadd.f32 0.0, %v1049
        %v1051 = vpop.f32.mrb[0].mxu0
        %1052 = vmatprep.mubr.bf16.mxu0 0
        %1053 = vmatmul.mubr.bf16.gmra.mrb[0].mxu0 %v855
        %v1054 = vpop.f32.mrb[0].mxu0
        %v1055 = vadd.f32 0.0, %v1054
        %v1056 = vpop.f32.mrb[0].mxu0
        %v1057 = vpop.f32.mrb[0].mxu0
        %v1058 = vadd.f32 0.0, %v1057
        %v1059 = vpop.f32.mrb[0].mxu0
        %1060 = vmatprep.mubr.bf16.mxu0 0
        %1061 = vmatmul.mubr.bf16.gmra.mrb[0].mxu0 %v856
        %v1062 = vpop.f32.mrb[0].mxu0
        %v1063 = vadd.f32 0.0, %v1062
        %v1064 = vpop.f32.mrb[0].mxu0
        %v1065 = vpop.f32.mrb[0].mxu0
        %v1066 = vadd.f32 0.0, %v1065
        %v1067 = vpop.f32.mrb[0].mxu0
        %1068 = vmatprep.mubr.bf16.mxu0 0
        %1069 = vmatmul.mubr.bf16.gmra.mrb[0].mxu0 %v857
        %v1070 = vpop.f32.mrb[0].mxu0
        %v1071 = vadd.f32 0.0, %v1070
        %v1072 = vpop.f32.mrb[0].mxu0
        %v1073 = vpop.f32.mrb[0].mxu0
        %v1074 = vadd.f32 0.0, %v1073
        %v1075 = vpop.f32.mrb[0].mxu0
        %1076 = vmatprep.mubr.bf16.mxu0 0
        %1077 = vmatmul.mubr.bf16.gmra.mrb[0].mxu0 %v858
        %v1078 = vpop.f32.mrb[0].mxu0
        %v1079 = vadd.f32 0.0, %v1078
        %v1080 = vpop.f32.mrb[0].mxu0
        %v1081 = vpop.f32.mrb[0].mxu0
        %v1082 = vadd.f32 0.0, %v1081
        %v1083 = vpop.f32.mrb[0].mxu0
        %1084 = vmatprep.mubr.bf16.mxu0 0
        %1085 = vmatmul.mubr.bf16.gmra.mrb[0].mxu0 %v859
        %v1086 = vpop.f32.mrb[0].mxu0
        %v1087 = vadd.f32 0.0, %v1086
        %v1088 = vpop.f32.mrb[0].mxu0
        %v1089 = vpop.f32.mrb[0].mxu0
        %v1090 = vadd.f32 0.0, %v1089
        %v1091 = vpop.f32.mrb[0].mxu0
        %1092 = vmatprep.mubr.bf16.mxu0 0
        %1093 = vmatmul.mubr.bf16.gmra.mrb[0].mxu0 %v860
        %v1094 = vpop.f32.mrb[0].mxu0
        %v1095 = vadd.f32 0.0, %v1094
        %v1096 = vpop.f32.mrb[0].mxu0
        %v1097 = vpop.f32.mrb[0].mxu0
        %v1098 = vadd.f32 0.0, %v1097
        %v1099 = vpop.f32.mrb[0].mxu0
        %1100 = vmatprep.mubr.bf16.mxu0 0
        %1101 = vmatmul.mubr.bf16.gmra.mrb[0].mxu0 %v861
        %v1102 = vpop.f32.mrb[0].mxu0
        %v1103 = vadd.f32 0.0, %v1102
        %v1104 = vpop.f32.mrb[0].mxu0
        %v1105 = vpop.f32.mrb[0].mxu0
        %v1106 = vadd.f32 0.0, %v1105
        %v1107 = vpop.f32.mrb[0].mxu0
        %1108 = vmatprep.mubr.bf16.mxu0 0
        %1109 = vmatmul.mubr.bf16.gmra.mrb[0].mxu0 %v862
        %v1110 = vpop.f32.mrb[0].mxu0
        %v1111 = vadd.f32 0.0, %v1110
        %v1112 = vpop.f32.mrb[0].mxu0
        %v1113 = vpop.f32.mrb[0].mxu0
        %v1114 = vadd.f32 0.0, %v1113
        %v1115 = vpop.f32.mrb[0].mxu0
        %1116 = vmatprep.mubr.bf16.mxu0 0
        %1117 = vmatmul.mubr.bf16.gmra.mrb[0].mxu0 %v863
        %v1118 = vpop.f32.mrb[0].mxu0
        %v1119 = vadd.f32 0.0, %v1118
        %v1120 = vpop.f32.mrb[0].mxu0
        %v1121 = vpop.f32.mrb[0].mxu0
        %v1122 = vadd.f32 0.0, %v1121
        %v1123 = vpop.f32.mrb[0].mxu0
        %1124 = vmatprep.mubr.bf16.mxu0 0
        %1125 = vmatmul.mubr.bf16.gmra.mrb[0].mxu0 %v864
        %v1126 = vpop.f32.mrb[0].mxu0
        %v1127 = vadd.f32 0.0, %v1126
        %v1128 = vpop.f32.mrb[0].mxu0
        %v1129 = vpop.f32.mrb[0].mxu0
        %v1130 = vadd.f32 0.0, %v1129
        %v1131 = vpop.f32.mrb[0].mxu0
        %1132 = vmatprep.mubr.bf16.mxu0 0
        %1133 = vmatmul.mubr.bf16.gmra.mrb[0].mxu0 %v865
        %v1134 = vpop.f32.mrb[0].mxu0
        %v1135 = vadd.f32 0.0, %v1134
        %v1136 = vpop.f32.mrb[0].mxu0
        %v1137 = vpop.f32.mrb[0].mxu0
        %v1138 = vadd.f32 0.0, %v1137
        %v1139 = vpop.f32.mrb[0].mxu0
        %1140 = vmatprep.mubr.bf16.mxu0 0
        %1141 = vmatmul.mubr.bf16.gmra.mrb[0].mxu0 %v866
        %v1142 = vpop.f32.mrb[0].mxu0
        %v1143 = vadd.f32 0.0, %v1142
        %v1144 = vpop.f32.mrb[0].mxu0
        %v1145 = vpop.f32.mrb[0].mxu0
        %v1146 = vadd.f32 0.0, %v1145
        %v1147 = vpop.f32.mrb[0].mxu0
        %1148 = vmatprep.mubr.bf16.mxu0 0
        %1149 = vmatmul.mubr.bf16.gmra.mrb[0].mxu0 %v867
        %v1150 = vpop.f32.mrb[0].mxu0
        %v1151 = vadd.f32 0.0, %v1150
        %v1152 = vpop.f32.mrb[0].mxu0
        %v1153 = vpop.f32.mrb[0].mxu0
        %v1154 = vadd.f32 0.0, %v1153
        %v1155 = vpop.f32.mrb[0].mxu0
        %1156 = vdwg.mxu0
        %1157 = vst [vmem:[#allocation3] sm:$0xff] %v967
        %1158 = vst [vmem:[#allocation3 + $0x8] sm:$0xff] %v970
        %1159 = vst [vmem:[#allocation3 + $0x10] sm:$0xff] %v975
        %1160 = vst [vmem:[#allocation3 + $0x18] sm:$0xff] %v978
        %1161 = vst [vmem:[#allocation3 + $0x20] sm:$0xff] %v983
        %1162 = vst [vmem:[#allocation3 + $0x28] sm:$0xff] %v986
        %1163 = vst [vmem:[#allocation3 + $0x30] sm:$0xff] %v991
        %1164 = vst [vmem:[#allocation3 + $0x38] sm:$0xff] %v994
        %1165 = vst [vmem:[#allocation3 + $0x40] sm:$0xff] %v999
        %1166 = vst [vmem:[#allocation3 + $0x48] sm:$0xff] %v1002
        %1167 = vst [vmem:[#allocation3 + $0x50] sm:$0xff] %v1007
        %1168 = vst [vmem:[#allocation3 + $0x58] sm:$0xff] %v1010
        %1169 = vst [vmem:[#allocation3 + $0x60] sm:$0xff] %v1015
        %1170 = vst [vmem:[#allocation3 + $0x68] sm:$0xff] %v1018
        %1171 = vst [vmem:[#allocation3 + $0x70] sm:$0xff] %v1023
        %1172 = vst [vmem:[#allocation3 + $0x78] sm:$0xff] %v1026
        %1173 = vst [vmem:[#allocation3 + $0x80] sm:$0xff] %v1031
        %1174 = vst [vmem:[#allocation3 + $0x88] sm:$0xff] %v1034
        %1175 = vst [vmem:[#allocation3 + $0x90] sm:$0xff] %v1039
        %1176 = vst [vmem:[#allocation3 + $0x98] sm:$0xff] %v1042
        %1177 = vst [vmem:[#allocation3 + $0xa0] sm:$0xff] %v1047
        %1178 = vst [vmem:[#allocation3 + $0xa8] sm:$0xff] %v1050
        %1179 = vst [vmem:[#allocation3 + $0xb0] sm:$0xff] %v1055
        %1180 = vst [vmem:[#allocation3 + $0xb8] sm:$0xff] %v1058
        %1181 = vst [vmem:[#allocation3 + $0xc0] sm:$0xff] %v1063
        %1182 = vst [vmem:[#allocation3 + $0xc8] sm:$0xff] %v1066
        %1183 = vst [vmem:[#allocation3 + $0xd0] sm:$0xff] %v1071
        %1184 = vst [vmem:[#allocation3 + $0xd8] sm:$0xff] %v1074
        %1185 = vst [vmem:[#allocation3 + $0xe0] sm:$0xff] %v1079
        %1186 = vst [vmem:[#allocation3 + $0xe8] sm:$0xff] %v1082
        %1187 = vst [vmem:[#allocation3 + $0xf0] sm:$0xff] %v1087
        %1188 = vst [vmem:[#allocation3 + $0xf8] sm:$0xff] %v1090
        %1189 = vst [vmem:[#allocation3 + $0x100] sm:$0xff] %v1095
        %1190 = vst [vmem:[#allocation3 + $0x108] sm:$0xff] %v1098
        %1191 = vst [vmem:[#allocation3 + $0x110] sm:$0xff] %v1103
        %1192 = vst [vmem:[#allocation3 + $0x118] sm:$0xff] %v1106
        %1193 = vst [vmem:[#allocation3 + $0x120] sm:$0xff] %v1111
        %1194 = vst [vmem:[#allocation3 + $0x128] sm:$0xff] %v1114
        %1195 = vst [vmem:[#allocation3 + $0x130] sm:$0xff] %v1119
        %1196 = vst [vmem:[#allocation3 + $0x138] sm:$0xff] %v1122
        %1197 = vst [vmem:[#allocation3 + $0x140] sm:$0xff] %v1127
        %1198 = vst [vmem:[#allocation3 + $0x148] sm:$0xff] %v1130
        %1199 = vst [vmem:[#allocation3 + $0x150] sm:$0xff] %v1135
        %1200 = vst [vmem:[#allocation3 + $0x158] sm:$0xff] %v1138
        %1201 = vst [vmem:[#allocation3 + $0x160] sm:$0xff] %v1143
        %1202 = vst [vmem:[#allocation3 + $0x168] sm:$0xff] %v1146
        %1203 = vst [vmem:[#allocation3 + $0x170] sm:$0xff] %v1151
        %1204 = vst [vmem:[#allocation3 + $0x178] sm:$0xff] %v1154
        %v1205 = vld [vmem:[#allocation2 + $0x8] sm:$0xff]
        %v1206 = vld [vmem:[#allocation2 + $0x10] sm:$0xff]
        %v1207 = vld [vmem:[#allocation2 + $0x18] sm:$0xff]
        %v1208 = vld [vmem:[#allocation2 + $0x20] sm:$0xff]
        %v1209 = vld [vmem:[#allocation2 + $0x28] sm:$0xff]
        %v1210 = vld [vmem:[#allocation2 + $0x30] sm:$0xff]
        %v1211 = vld [vmem:[#allocation2 + $0x38] sm:$0xff]
        %v1212 = vld [vmem:[#allocation2 + $0x40] sm:$0xff]
        %v1213 = vld [vmem:[#allocation2 + $0x48] sm:$0xff]
        %v1214 = vld [vmem:[#allocation2 + $0x50] sm:$0xff]
        %v1215 = vld [vmem:[#allocation2 + $0x58] sm:$0xff]
        %v1216 = vld [vmem:[#allocation2 + $0x60] sm:$0xff]
        %v1217 = vld [vmem:[#allocation2 + $0x68] sm:$0xff]
        %v1218 = vld [vmem:[#allocation2 + $0x70] sm:$0xff]
        %v1219 = vld [vmem:[#allocation2 + $0x78] sm:$0xff]
        %v1220 = vld [vmem:[#allocation2 + $0x80] sm:$0xff]
        %v1221 = vld [vmem:[#allocation2 + $0x88] sm:$0xff]
        %v1222 = vld [vmem:[#allocation2 + $0x90] sm:$0xff]
        %v1223 = vld [vmem:[#allocation2 + $0x98] sm:$0xff]
        %v1224 = vld [vmem:[#allocation2 + $0xa0] sm:$0xff]
        %v1225 = vld [vmem:[#allocation2 + $0xa8] sm:$0xff]
        %v1226 = vld [vmem:[#allocation2 + $0xb0] sm:$0xff]
        %v1227 = vld [vmem:[#allocation2 + $0xb8] sm:$0xff]
        %v1228 = vld [vmem:[#allocation2 + $0xc0] sm:$0xff]
        %v1229 = vld [vmem:[#allocation2 + $0xc8] sm:$0xff]
        %v1230 = vld [vmem:[#allocation2 + $0xd0] sm:$0xff]
        %v1231 = vld [vmem:[#allocation2 + $0xd8] sm:$0xff]
        %v1232 = vld [vmem:[#allocation2 + $0xe0] sm:$0xff]
        %v1233 = vld [vmem:[#allocation2 + $0xe8] sm:$0xff]
        %v1234 = vld [vmem:[#allocation2 + $0xf0] sm:$0xff]
        %v1235 = vld [vmem:[#allocation2 + $0xf8] sm:$0xff]
        %v1236 = vld [vmem:[#allocation2 + $0x100] sm:$0xff]
        %v1237 = vld [vmem:[#allocation2 + $0x108] sm:$0xff]
        %v1238 = vld [vmem:[#allocation2 + $0x110] sm:$0xff]
        %v1239 = vld [vmem:[#allocation2 + $0x118] sm:$0xff]
        %v1240 = vld [vmem:[#allocation2 + $0x120] sm:$0xff]
        %v1241 = vld [vmem:[#allocation2 + $0x128] sm:$0xff]
        %v1242 = vld [vmem:[#allocation2 + $0x130] sm:$0xff]
        %v1243 = vld [vmem:[#allocation2 + $0x138] sm:$0xff]
        %v1244 = vld [vmem:[#allocation2 + $0x140] sm:$0xff]
        %v1245 = vld [vmem:[#allocation2 + $0x148] sm:$0xff]
        %v1246 = vld [vmem:[#allocation2 + $0x150] sm:$0xff]
        %v1247 = vld [vmem:[#allocation2 + $0x158] sm:$0xff]
        %v1248 = vld [vmem:[#allocation2 + $0x160] sm:$0xff]
        %v1249 = vld [vmem:[#allocation2 + $0x168] sm:$0xff]
        %v1250 = vld [vmem:[#allocation2 + $0x170] sm:$0xff]
        %v1251 = vld [vmem:[#allocation2 + $0x178] sm:$0xff]
        %v1252 = vld [vmem:[#allocation2 + $0x180] sm:$0xff]
        %v1253 = vpack.c.bf16 %v1206, %v1205
        %v1254 = vpack.c.bf16 %v1208, %v1207
        %v1255 = vpack.c.bf16 %v1210, %v1209
        %v1256 = vpack.c.bf16 %v1212, %v1211
        %v1257 = vpack.c.bf16 %v1214, %v1213
        %v1258 = vpack.c.bf16 %v1216, %v1215
        %v1259 = vpack.c.bf16 %v1218, %v1217
        %v1260 = vpack.c.bf16 %v1220, %v1219
        %v1261 = vpack.c.bf16 %v1222, %v1221
        %v1262 = vpack.c.bf16 %v1224, %v1223
        %v1263 = vpack.c.bf16 %v1226, %v1225
        %v1264 = vpack.c.bf16 %v1228, %v1227
        %v1265 = vpack.c.bf16 %v1230, %v1229
        %v1266 = vpack.c.bf16 %v1232, %v1231
        %v1267 = vpack.c.bf16 %v1234, %v1233
        %v1268 = vpack.c.bf16 %v1236, %v1235
        %v1269 = vpack.c.bf16 %v1238, %v1237
        %v1270 = vpack.c.bf16 %v1240, %v1239
        %v1271 = vpack.c.bf16 %v1242, %v1241
        %v1272 = vpack.c.bf16 %v1244, %v1243
        %v1273 = vpack.c.bf16 %v1246, %v1245
        %v1274 = vpack.c.bf16 %v1248, %v1247
        %v1275 = vpack.c.bf16 %v1250, %v1249
        %v1276 = vpack.c.bf16 %v1252, %v1251
        %s1277 = scalar_lea.vmem %s3, 64
        %v1278 = vld [vmem:[%s1277] sm:$0xf]
        %v1279 = vld [vmem:[%s1277 + $0x4] sm:$0xf]
        %v1280 = vld [vmem:[%s1277 + $0x8] sm:$0xf]
        %v1281 = vld [vmem:[%s1277 + $0xc] sm:$0xf]
        %v1282 = vld [vmem:[%s1277 + $0x10] sm:$0xf]
        %v1283 = vld [vmem:[%s1277 + $0x14] sm:$0xf]
        %v1284 = vld [vmem:[%s1277 + $0x18] sm:$0xf]
        %v1285 = vld [vmem:[%s1277 + $0x1c] sm:$0xf]
        %v1286 = vld [vmem:[%s1277 + $0x20] sm:$0xf]
        %v1287 = vld [vmem:[%s1277 + $0x24] sm:$0xf]
        %v1288 = vld [vmem:[%s1277 + $0x28] sm:$0xf]
        %v1289 = vld [vmem:[%s1277 + $0x2c] sm:$0xf]
        %v1290 = vld [vmem:[%s1277 + $0x30] sm:$0xf]
        %v1291 = vld [vmem:[%s1277 + $0x34] sm:$0xf]
        %v1292 = vld [vmem:[%s1277 + $0x38] sm:$0xf]
        %v1293 = vld [vmem:[%s1277 + $0x3c] sm:$0xf]
        %v1310 = vunpack.c.l.b16 %v1278
        %v1311 = vunpack.c.l.b16 %v1279
        %v1312 = vunpack.c.l.b16 %v1280
        %v1313 = vunpack.c.l.b16 %v1281
        %v1314 = vunpack.c.l.b16 %v1282
        %v1315 = vunpack.c.l.b16 %v1283
        %v1316 = vunpack.c.l.b16 %v1284
        %v1317 = vunpack.c.l.b16 %v1285
        %v1318 = vunpack.c.l.b16 %v1286
        %v1319 = vunpack.c.l.b16 %v1287
        %v1320 = vunpack.c.l.b16 %v1288
        %v1321 = vunpack.c.l.b16 %v1289
        %v1322 = vunpack.c.l.b16 %v1290
        %v1323 = vunpack.c.l.b16 %v1291
        %v1324 = vunpack.c.l.b16 %v1292
        %v1325 = vunpack.c.l.b16 %v1293
        %v1326 = vpack.c.b16 %v1311, %v1310
        %v1327 = vpack.c.b16 %v1313, %v1312
        %v1328 = vpack.c.b16 %v1315, %v1314
        %v1329 = vpack.c.b16 %v1317, %v1316
        %v1330 = vpack.c.b16 %v1319, %v1318
        %v1331 = vpack.c.b16 %v1321, %v1320
        %v1332 = vpack.c.b16 %v1323, %v1322
        %v1333 = vpack.c.b16 %v1325, %v1324
        %1342 = vmatprep.subr.bf16.mxu0 0
        %1343 = vmatpush1.bf16.msra.mxu0 %v1326
        %1344 = vmatprep.subr.bf16.mxu0 0
        %1345 = vmatpush1.bf16.msra.mxu0 %v1327
        %1346 = vmatprep.subr.bf16.mxu0 0
        %1347 = vmatpush1.bf16.msra.mxu0 %v1328
        %1348 = vmatprep.subr.bf16.mxu0 0
        %1349 = vmatpush1.bf16.msra.mxu0 %v1329
        %1350 = vmatprep.subr.bf16.mxu0 0
        %1351 = vmatpush1.bf16.msra.mxu0 %v1330
        %1352 = vmatprep.subr.bf16.mxu0 0
        %1353 = vmatpush1.bf16.msra.mxu0 %v1331
        %1354 = vmatprep.subr.bf16.mxu0 0
        %1355 = vmatpush1.bf16.msra.mxu0 %v1332
        %1356 = vmatprep.subr.bf16.mxu0 0
        %1357 = vmatpush1.bf16.msra.mxu0 %v1333
        %1358 = vmatprep.subr.bf16.mxu0 0
        %1359 = vmatpush1.bf16.msra.mxu0 0
        %1360 = vmatprep.subr.bf16.mxu0 0
        %1361 = vmatpush1.bf16.msra.mxu0 0
        %1362 = vmatprep.subr.bf16.mxu0 0
        %1363 = vmatpush1.bf16.msra.mxu0 0
        %1364 = vmatprep.subr.bf16.mxu0 0
        %1365 = vmatpush1.bf16.msra.mxu0 0
        %1366 = vmatprep.subr.bf16.mxu0 0
        %1367 = vmatpush1.bf16.msra.mxu0 0
        %1368 = vmatprep.subr.bf16.mxu0 0
        %1369 = vmatpush1.bf16.msra.mxu0 0
        %1370 = vmatprep.subr.bf16.mxu0 0
        %1371 = vmatpush1.bf16.msra.mxu0 0
        %1372 = vmatprep.subr.bf16.mxu0 0
        %1373 = vmatpush1.bf16.msra.mxu0 0
        %1374 = vmatprep.mubr.bf16.mxu0 0
        %1375 = vmatmul.mubr.bf16.gmra.mrb[0].mxu0 %v1253
        %v1376 = vpop.f32.mrb[0].mxu0
        %v1377 = vadd.f32 0.0, %v1376
        %v1378 = vpop.f32.mrb[0].mxu0
        %v1379 = vpop.f32.mrb[0].mxu0
        %v1380 = vadd.f32 0.0, %v1379
        %v1381 = vpop.f32.mrb[0].mxu0
        %1382 = vmatprep.mubr.bf16.mxu0 0
        %1383 = vmatmul.mubr.bf16.gmra.mrb[0].mxu0 %v1254
        %v1384 = vpop.f32.mrb[0].mxu0
        %v1385 = vadd.f32 0.0, %v1384
        %v1386 = vpop.f32.mrb[0].mxu0
        %v1387 = vpop.f32.mrb[0].mxu0
        %v1388 = vadd.f32 0.0, %v1387
        %v1389 = vpop.f32.mrb[0].mxu0
        %1390 = vmatprep.mubr.bf16.mxu0 0
        %1391 = vmatmul.mubr.bf16.gmra.mrb[0].mxu0 %v1255
        %v1392 = vpop.f32.mrb[0].mxu0
        %v1393 = vadd.f32 0.0, %v1392
        %v1394 = vpop.f32.mrb[0].mxu0
        %v1395 = vpop.f32.mrb[0].mxu0
        %v1396 = vadd.f32 0.0, %v1395
        %v1397 = vpop.f32.mrb[0].mxu0
        %1398 = vmatprep.mubr.bf16.mxu0 0
        %1399 = vmatmul.mubr.bf16.gmra.mrb[0].mxu0 %v1256
        %v1400 = vpop.f32.mrb[0].mxu0
        %v1401 = vadd.f32 0.0, %v1400
        %v1402 = vpop.f32.mrb[0].mxu0
        %v1403 = vpop.f32.mrb[0].mxu0
        %v1404 = vadd.f32 0.0, %v1403
        %v1405 = vpop.f32.mrb[0].mxu0
        %1406 = vmatprep.mubr.bf16.mxu0 0
        %1407 = vmatmul.mubr.bf16.gmra.mrb[0].mxu0 %v1257
        %v1408 = vpop.f32.mrb[0].mxu0
        %v1409 = vadd.f32 0.0, %v1408
        %v1410 = vpop.f32.mrb[0].mxu0
        %v1411 = vpop.f32.mrb[0].mxu0
        %v1412 = vadd.f32 0.0, %v1411
        %v1413 = vpop.f32.mrb[0].mxu0
        %1414 = vmatprep.mubr.bf16.mxu0 0
        %1415 = vmatmul.mubr.bf16.gmra.mrb[0].mxu0 %v1258
        %v1416 = vpop.f32.mrb[0].mxu0
        %v1417 = vadd.f32 0.0, %v1416
        %v1418 = vpop.f32.mrb[0].mxu0
        %v1419 = vpop.f32.mrb[0].mxu0
        %v1420 = vadd.f32 0.0, %v1419
        %v1421 = vpop.f32.mrb[0].mxu0
        %1422 = vmatprep.mubr.bf16.mxu0 0
        %1423 = vmatmul.mubr.bf16.gmra.mrb[0].mxu0 %v1259
        %v1424 = vpop.f32.mrb[0].mxu0
        %v1425 = vadd.f32 0.0, %v1424
        %v1426 = vpop.f32.mrb[0].mxu0
        %v1427 = vpop.f32.mrb[0].mxu0
        %v1428 = vadd.f32 0.0, %v1427
        %v1429 = vpop.f32.mrb[0].mxu0
        %1430 = vmatprep.mubr.bf16.mxu0 0
        %1431 = vmatmul.mubr.bf16.gmra.mrb[0].mxu0 %v1260
        %v1432 = vpop.f32.mrb[0].mxu0
        %v1433 = vadd.f32 0.0, %v1432
        %v1434 = vpop.f32.mrb[0].mxu0
        %v1435 = vpop.f32.mrb[0].mxu0
        %v1436 = vadd.f32 0.0, %v1435
        %v1437 = vpop.f32.mrb[0].mxu0
        %1438 = vmatprep.mubr.bf16.mxu0 0
        %1439 = vmatmul.mubr.bf16.gmra.mrb[0].mxu0 %v1261
        %v1440 = vpop.f32.mrb[0].mxu0
        %v1441 = vadd.f32 0.0, %v1440
        %v1442 = vpop.f32.mrb[0].mxu0
        %v1443 = vpop.f32.mrb[0].mxu0
        %v1444 = vadd.f32 0.0, %v1443
        %v1445 = vpop.f32.mrb[0].mxu0
        %1446 = vmatprep.mubr.bf16.mxu0 0
        %1447 = vmatmul.mubr.bf16.gmra.mrb[0].mxu0 %v1262
        %v1448 = vpop.f32.mrb[0].mxu0
        %v1449 = vadd.f32 0.0, %v1448
        %v1450 = vpop.f32.mrb[0].mxu0
        %v1451 = vpop.f32.mrb[0].mxu0
        %v1452 = vadd.f32 0.0, %v1451
        %v1453 = vpop.f32.mrb[0].mxu0
        %1454 = vmatprep.mubr.bf16.mxu0 0
        %1455 = vmatmul.mubr.bf16.gmra.mrb[0].mxu0 %v1263
        %v1456 = vpop.f32.mrb[0].mxu0
        %v1457 = vadd.f32 0.0, %v1456
        %v1458 = vpop.f32.mrb[0].mxu0
        %v1459 = vpop.f32.mrb[0].mxu0
        %v1460 = vadd.f32 0.0, %v1459
        %v1461 = vpop.f32.mrb[0].mxu0
        %1462 = vmatprep.mubr.bf16.mxu0 0
        %1463 = vmatmul.mubr.bf16.gmra.mrb[0].mxu0 %v1264
        %v1464 = vpop.f32.mrb[0].mxu0
        %v1465 = vadd.f32 0.0, %v1464
        %v1466 = vpop.f32.mrb[0].mxu0
        %v1467 = vpop.f32.mrb[0].mxu0
        %v1468 = vadd.f32 0.0, %v1467
        %v1469 = vpop.f32.mrb[0].mxu0
        %1470 = vmatprep.mubr.bf16.mxu0 0
        %1471 = vmatmul.mubr.bf16.gmra.mrb[0].mxu0 %v1265
        %v1472 = vpop.f32.mrb[0].mxu0
        %v1473 = vadd.f32 0.0, %v1472
        %v1474 = vpop.f32.mrb[0].mxu0
        %v1475 = vpop.f32.mrb[0].mxu0
        %v1476 = vadd.f32 0.0, %v1475
        %v1477 = vpop.f32.mrb[0].mxu0
        %1478 = vmatprep.mubr.bf16.mxu0 0
        %1479 = vmatmul.mubr.bf16.gmra.mrb[0].mxu0 %v1266
        %v1480 = vpop.f32.mrb[0].mxu0
        %v1481 = vadd.f32 0.0, %v1480
        %v1482 = vpop.f32.mrb[0].mxu0
        %v1483 = vpop.f32.mrb[0].mxu0
        %v1484 = vadd.f32 0.0, %v1483
        %v1485 = vpop.f32.mrb[0].mxu0
        %1486 = vmatprep.mubr.bf16.mxu0 0
        %1487 = vmatmul.mubr.bf16.gmra.mrb[0].mxu0 %v1267
        %v1488 = vpop.f32.mrb[0].mxu0
        %v1489 = vadd.f32 0.0, %v1488
        %v1490 = vpop.f32.mrb[0].mxu0
        %v1491 = vpop.f32.mrb[0].mxu0
        %v1492 = vadd.f32 0.0, %v1491
        %v1493 = vpop.f32.mrb[0].mxu0
        %1494 = vmatprep.mubr.bf16.mxu0 0
        %1495 = vmatmul.mubr.bf16.gmra.mrb[0].mxu0 %v1268
        %v1496 = vpop.f32.mrb[0].mxu0
        %v1497 = vadd.f32 0.0, %v1496
        %v1498 = vpop.f32.mrb[0].mxu0
        %v1499 = vpop.f32.mrb[0].mxu0
        %v1500 = vadd.f32 0.0, %v1499
        %v1501 = vpop.f32.mrb[0].mxu0
        %1502 = vmatprep.mubr.bf16.mxu0 0
        %1503 = vmatmul.mubr.bf16.gmra.mrb[0].mxu0 %v1269
        %v1504 = vpop.f32.mrb[0].mxu0
        %v1505 = vadd.f32 0.0, %v1504
        %v1506 = vpop.f32.mrb[0].mxu0
        %v1507 = vpop.f32.mrb[0].mxu0
        %v1508 = vadd.f32 0.0, %v1507
        %v1509 = vpop.f32.mrb[0].mxu0
        %1510 = vmatprep.mubr.bf16.mxu0 0
        %1511 = vmatmul.mubr.bf16.gmra.mrb[0].mxu0 %v1270
        %v1512 = vpop.f32.mrb[0].mxu0
        %v1513 = vadd.f32 0.0, %v1512
        %v1514 = vpop.f32.mrb[0].mxu0
        %v1515 = vpop.f32.mrb[0].mxu0
        %v1516 = vadd.f32 0.0, %v1515
        %v1517 = vpop.f32.mrb[0].mxu0
        %1518 = vmatprep.mubr.bf16.mxu0 0
        %1519 = vmatmul.mubr.bf16.gmra.mrb[0].mxu0 %v1271
        %v1520 = vpop.f32.mrb[0].mxu0
        %v1521 = vadd.f32 0.0, %v1520
        %v1522 = vpop.f32.mrb[0].mxu0
        %v1523 = vpop.f32.mrb[0].mxu0
        %v1524 = vadd.f32 0.0, %v1523
        %v1525 = vpop.f32.mrb[0].mxu0
        %1526 = vmatprep.mubr.bf16.mxu0 0
        %1527 = vmatmul.mubr.bf16.gmra.mrb[0].mxu0 %v1272
        %v1528 = vpop.f32.mrb[0].mxu0
        %v1529 = vadd.f32 0.0, %v1528
        %v1530 = vpop.f32.mrb[0].mxu0
        %v1531 = vpop.f32.mrb[0].mxu0
        %v1532 = vadd.f32 0.0, %v1531
        %v1533 = vpop.f32.mrb[0].mxu0
        %1534 = vmatprep.mubr.bf16.mxu0 0
        %1535 = vmatmul.mubr.bf16.gmra.mrb[0].mxu0 %v1273
        %v1536 = vpop.f32.mrb[0].mxu0
        %v1537 = vadd.f32 0.0, %v1536
        %v1538 = vpop.f32.mrb[0].mxu0
        %v1539 = vpop.f32.mrb[0].mxu0
        %v1540 = vadd.f32 0.0, %v1539
        %v1541 = vpop.f32.mrb[0].mxu0
        %1542 = vmatprep.mubr.bf16.mxu0 0
        %1543 = vmatmul.mubr.bf16.gmra.mrb[0].mxu0 %v1274
        %v1544 = vpop.f32.mrb[0].mxu0
        %v1545 = vadd.f32 0.0, %v1544
        %v1546 = vpop.f32.mrb[0].mxu0
        %v1547 = vpop.f32.mrb[0].mxu0
        %v1548 = vadd.f32 0.0, %v1547
        %v1549 = vpop.f32.mrb[0].mxu0
        %1550 = vmatprep.mubr.bf16.mxu0 0
        %1551 = vmatmul.mubr.bf16.gmra.mrb[0].mxu0 %v1275
        %v1552 = vpop.f32.mrb[0].mxu0
        %v1553 = vadd.f32 0.0, %v1552
        %v1554 = vpop.f32.mrb[0].mxu0
        %v1555 = vpop.f32.mrb[0].mxu0
        %v1556 = vadd.f32 0.0, %v1555
        %v1557 = vpop.f32.mrb[0].mxu0
        %1558 = vmatprep.mubr.bf16.mxu0 0
        %1559 = vmatmul.mubr.bf16.gmra.mrb[0].mxu0 %v1276
        %v1560 = vpop.f32.mrb[0].mxu0
        %v1561 = vadd.f32 0.0, %v1560
        %v1562 = vpop.f32.mrb[0].mxu0
        %v1563 = vpop.f32.mrb[0].mxu0
        %v1564 = vadd.f32 0.0, %v1563
        %v1565 = vpop.f32.mrb[0].mxu0
        %1566 = vdwg.mxu0
        %v1567 = vld [vmem:[#allocation3] sm:$0xff]
        %v1568 = vld [vmem:[#allocation3 + $0x8] sm:$0xff]
        %v1569 = vld [vmem:[#allocation3 + $0x10] sm:$0xff]
        %v1570 = vld [vmem:[#allocation3 + $0x18] sm:$0xff]
        %v1571 = vld [vmem:[#allocation3 + $0x20] sm:$0xff]
        %v1572 = vld [vmem:[#allocation3 + $0x28] sm:$0xff]
        %v1573 = vld [vmem:[#allocation3 + $0x30] sm:$0xff]
        %v1574 = vld [vmem:[#allocation3 + $0x38] sm:$0xff]
        %v1575 = vld [vmem:[#allocation3 + $0x40] sm:$0xff]
        %v1576 = vld [vmem:[#allocation3 + $0x48] sm:$0xff]
        %v1577 = vld [vmem:[#allocation3 + $0x50] sm:$0xff]
        %v1578 = vld [vmem:[#allocation3 + $0x58] sm:$0xff]
        %v1579 = vld [vmem:[#allocation3 + $0x60] sm:$0xff]
        %v1580 = vld [vmem:[#allocation3 + $0x68] sm:$0xff]
        %v1581 = vld [vmem:[#allocation3 + $0x70] sm:$0xff]
        %v1582 = vld [vmem:[#allocation3 + $0x78] sm:$0xff]
        %v1583 = vld [vmem:[#allocation3 + $0x80] sm:$0xff]
        %v1584 = vld [vmem:[#allocation3 + $0x88] sm:$0xff]
        %v1585 = vld [vmem:[#allocation3 + $0x90] sm:$0xff]
        %v1586 = vld [vmem:[#allocation3 + $0x98] sm:$0xff]
        %v1587 = vld [vmem:[#allocation3 + $0xa0] sm:$0xff]
        %v1588 = vld [vmem:[#allocation3 + $0xa8] sm:$0xff]
        %v1589 = vld [vmem:[#allocation3 + $0xb0] sm:$0xff]
        %v1590 = vld [vmem:[#allocation3 + $0xb8] sm:$0xff]
        %v1591 = vld [vmem:[#allocation3 + $0xc0] sm:$0xff]
        %v1592 = vld [vmem:[#allocation3 + $0xc8] sm:$0xff]
        %v1593 = vld [vmem:[#allocation3 + $0xd0] sm:$0xff]
        %v1594 = vld [vmem:[#allocation3 + $0xd8] sm:$0xff]
        %v1595 = vld [vmem:[#allocation3 + $0xe0] sm:$0xff]
        %v1596 = vld [vmem:[#allocation3 + $0xe8] sm:$0xff]
        %v1597 = vld [vmem:[#allocation3 + $0xf0] sm:$0xff]
        %v1598 = vld [vmem:[#allocation3 + $0xf8] sm:$0xff]
        %v1599 = vld [vmem:[#allocation3 + $0x100] sm:$0xff]
        %v1600 = vld [vmem:[#allocation3 + $0x108] sm:$0xff]
        %v1601 = vld [vmem:[#allocation3 + $0x110] sm:$0xff]
        %v1602 = vld [vmem:[#allocation3 + $0x118] sm:$0xff]
        %v1603 = vld [vmem:[#allocation3 + $0x120] sm:$0xff]
        %v1604 = vld [vmem:[#allocation3 + $0x128] sm:$0xff]
        %v1605 = vld [vmem:[#allocation3 + $0x130] sm:$0xff]
        %v1606 = vld [vmem:[#allocation3 + $0x138] sm:$0xff]
        %v1607 = vld [vmem:[#allocation3 + $0x140] sm:$0xff]
        %v1608 = vld [vmem:[#allocation3 + $0x148] sm:$0xff]
        %v1609 = vld [vmem:[#allocation3 + $0x150] sm:$0xff]
        %v1610 = vld [vmem:[#allocation3 + $0x158] sm:$0xff]
        %v1611 = vld [vmem:[#allocation3 + $0x160] sm:$0xff]
        %v1612 = vld [vmem:[#allocation3 + $0x168] sm:$0xff]
        %v1613 = vld [vmem:[#allocation3 + $0x170] sm:$0xff]
        %v1614 = vld [vmem:[#allocation3 + $0x178] sm:$0xff]
        %v1615 = vadd.f32 %v1567, %v1377
        %v1616 = vadd.f32 %v1568, %v1380
        %v1617 = vadd.f32 %v1569, %v1385
        %v1618 = vadd.f32 %v1570, %v1388
        %v1619 = vadd.f32 %v1571, %v1393
        %v1620 = vadd.f32 %v1572, %v1396
        %v1621 = vadd.f32 %v1573, %v1401
        %v1622 = vadd.f32 %v1574, %v1404
        %v1623 = vadd.f32 %v1575, %v1409
        %v1624 = vadd.f32 %v1576, %v1412
        %v1625 = vadd.f32 %v1577, %v1417
        %v1626 = vadd.f32 %v1578, %v1420
        %v1627 = vadd.f32 %v1579, %v1425
        %v1628 = vadd.f32 %v1580, %v1428
        %v1629 = vadd.f32 %v1581, %v1433
        %v1630 = vadd.f32 %v1582, %v1436
        %v1631 = vadd.f32 %v1583, %v1441
        %v1632 = vadd.f32 %v1584, %v1444
        %v1633 = vadd.f32 %v1585, %v1449
        %v1634 = vadd.f32 %v1586, %v1452
        %v1635 = vadd.f32 %v1587, %v1457
        %v1636 = vadd.f32 %v1588, %v1460
        %v1637 = vadd.f32 %v1589, %v1465
        %v1638 = vadd.f32 %v1590, %v1468
        %v1639 = vadd.f32 %v1591, %v1473
        %v1640 = vadd.f32 %v1592, %v1476
        %v1641 = vadd.f32 %v1593, %v1481
        %v1642 = vadd.f32 %v1594, %v1484
        %v1643 = vadd.f32 %v1595, %v1489
        %v1644 = vadd.f32 %v1596, %v1492
        %v1645 = vadd.f32 %v1597, %v1497
        %v1646 = vadd.f32 %v1598, %v1500
        %v1647 = vadd.f32 %v1599, %v1505
        %v1648 = vadd.f32 %v1600, %v1508
        %v1649 = vadd.f32 %v1601, %v1513
        %v1650 = vadd.f32 %v1602, %v1516
        %v1651 = vadd.f32 %v1603, %v1521
        %v1652 = vadd.f32 %v1604, %v1524
        %v1653 = vadd.f32 %v1605, %v1529
        %v1654 = vadd.f32 %v1606, %v1532
        %v1655 = vadd.f32 %v1607, %v1537
        %v1656 = vadd.f32 %v1608, %v1540
        %v1657 = vadd.f32 %v1609, %v1545
        %v1658 = vadd.f32 %v1610, %v1548
        %v1659 = vadd.f32 %v1611, %v1553
        %v1660 = vadd.f32 %v1612, %v1556
        %v1661 = vadd.f32 %v1613, %v1561
        %v1662 = vadd.f32 %v1614, %v1564
        %1663 = vst [vmem:[#allocation3] sm:$0xff] %v1615
        %1664 = vst [vmem:[#allocation3 + $0x8] sm:$0xff] %v1616
        %1665 = vst [vmem:[#allocation3 + $0x10] sm:$0xff] %v1617
        %1666 = vst [vmem:[#allocation3 + $0x18] sm:$0xff] %v1618
        %1667 = vst [vmem:[#allocation3 + $0x20] sm:$0xff] %v1619
        %1668 = vst [vmem:[#allocation3 + $0x28] sm:$0xff] %v1620
        %1669 = vst [vmem:[#allocation3 + $0x30] sm:$0xff] %v1621
        %1670 = vst [vmem:[#allocation3 + $0x38] sm:$0xff] %v1622
        %1671 = vst [vmem:[#allocation3 + $0x40] sm:$0xff] %v1623
        %1672 = vst [vmem:[#allocation3 + $0x48] sm:$0xff] %v1624
        %1673 = vst [vmem:[#allocation3 + $0x50] sm:$0xff] %v1625
        %1674 = vst [vmem:[#allocation3 + $0x58] sm:$0xff] %v1626
        %1675 = vst [vmem:[#allocation3 + $0x60] sm:$0xff] %v1627
        %1676 = vst [vmem:[#allocation3 + $0x68] sm:$0xff] %v1628
        %1677 = vst [vmem:[#allocation3 + $0x70] sm:$0xff] %v1629
        %1678 = vst [vmem:[#allocation3 + $0x78] sm:$0xff] %v1630
        %1679 = vst [vmem:[#allocation3 + $0x80] sm:$0xff] %v1631
        %1680 = vst [vmem:[#allocation3 + $0x88] sm:$0xff] %v1632
        %1681 = vst [vmem:[#allocation3 + $0x90] sm:$0xff] %v1633
        %1682 = vst [vmem:[#allocation3 + $0x98] sm:$0xff] %v1634
        %1683 = vst [vmem:[#allocation3 + $0xa0] sm:$0xff] %v1635
        %1684 = vst [vmem:[#allocation3 + $0xa8] sm:$0xff] %v1636
        %1685 = vst [vmem:[#allocation3 + $0xb0] sm:$0xff] %v1637
        %1686 = vst [vmem:[#allocation3 + $0xb8] sm:$0xff] %v1638
        %1687 = vst [vmem:[#allocation3 + $0xc0] sm:$0xff] %v1639
        %1688 = vst [vmem:[#allocation3 + $0xc8] sm:$0xff] %v1640
        %1689 = vst [vmem:[#allocation3 + $0xd0] sm:$0xff] %v1641
        %1690 = vst [vmem:[#allocation3 + $0xd8] sm:$0xff] %v1642
        %1691 = vst [vmem:[#allocation3 + $0xe0] sm:$0xff] %v1643
        %1692 = vst [vmem:[#allocation3 + $0xe8] sm:$0xff] %v1644
        %1693 = vst [vmem:[#allocation3 + $0xf0] sm:$0xff] %v1645
        %1694 = vst [vmem:[#allocation3 + $0xf8] sm:$0xff] %v1646
        %1695 = vst [vmem:[#allocation3 + $0x100] sm:$0xff] %v1647
        %1696 = vst [vmem:[#allocation3 + $0x108] sm:$0xff] %v1648
        %1697 = vst [vmem:[#allocation3 + $0x110] sm:$0xff] %v1649
        %1698 = vst [vmem:[#allocation3 + $0x118] sm:$0xff] %v1650
        %1699 = vst [vmem:[#allocation3 + $0x120] sm:$0xff] %v1651
        %1700 = vst [vmem:[#allocation3 + $0x128] sm:$0xff] %v1652
        %1701 = vst [vmem:[#allocation3 + $0x130] sm:$0xff] %v1653
        %1702 = vst [vmem:[#allocation3 + $0x138] sm:$0xff] %v1654
        %1703 = vst [vmem:[#allocation3 + $0x140] sm:$0xff] %v1655
        %1704 = vst [vmem:[#allocation3 + $0x148] sm:$0xff] %v1656
        %1705 = vst [vmem:[#allocation3 + $0x150] sm:$0xff] %v1657
        %1706 = vst [vmem:[#allocation3 + $0x158] sm:$0xff] %v1658
        %1707 = vst [vmem:[#allocation3 + $0x160] sm:$0xff] %v1659
        %1708 = vst [vmem:[#allocation3 + $0x168] sm:$0xff] %v1660
        %1709 = vst [vmem:[#allocation3 + $0x170] sm:$0xff] %v1661
        %1710 = vst [vmem:[#allocation3 + $0x178] sm:$0xff] %v1662
        %v1711 = vld [vmem:[#allocation2 + $0x9] sm:$0xff]
        %v1712 = vld [vmem:[#allocation2 + $0x11] sm:$0xff]
        %v1713 = vld [vmem:[#allocation2 + $0x19] sm:$0xff]
        %v1714 = vld [vmem:[#allocation2 + $0x21] sm:$0xff]
        %v1715 = vld [vmem:[#allocation2 + $0x29] sm:$0xff]
        %v1716 = vld [vmem:[#allocation2 + $0x31] sm:$0xff]
        %v1717 = vld [vmem:[#allocation2 + $0x39] sm:$0xff]
        %v1718 = vld [vmem:[#allocation2 + $0x41] sm:$0xff]
        %v1719 = vld [vmem:[#allocation2 + $0x49] sm:$0xff]
        %v1720 = vld [vmem:[#allocation2 + $0x51] sm:$0xff]
        %v1721 = vld [vmem:[#allocation2 + $0x59] sm:$0xff]
        %v1722 = vld [vmem:[#allocation2 + $0x61] sm:$0xff]
        %v1723 = vld [vmem:[#allocation2 + $0x69] sm:$0xff]
        %v1724 = vld [vmem:[#allocation2 + $0x71] sm:$0xff]
        %v1725 = vld [vmem:[#allocation2 + $0x79] sm:$0xff]
        %v1726 = vld [vmem:[#allocation2 + $0x81] sm:$0xff]
        %v1727 = vld [vmem:[#allocation2 + $0x89] sm:$0xff]
        %v1728 = vld [vmem:[#allocation2 + $0x91] sm:$0xff]
        %v1729 = vld [vmem:[#allocation2 + $0x99] sm:$0xff]
        %v1730 = vld [vmem:[#allocation2 + $0xa1] sm:$0xff]
        %v1731 = vld [vmem:[#allocation2 + $0xa9] sm:$0xff]
        %v1732 = vld [vmem:[#allocation2 + $0xb1] sm:$0xff]
        %v1733 = vld [vmem:[#allocation2 + $0xb9] sm:$0xff]
        %v1734 = vld [vmem:[#allocation2 + $0xc1] sm:$0xff]
        %v1735 = vld [vmem:[#allocation2 + $0xc9] sm:$0xff]
        %v1736 = vld [vmem:[#allocation2 + $0xd1] sm:$0xff]
        %v1737 = vld [vmem:[#allocation2 + $0xd9] sm:$0xff]
        %v1738 = vld [vmem:[#allocation2 + $0xe1] sm:$0xff]
        %v1739 = vld [vmem:[#allocation2 + $0xe9] sm:$0xff]
        %v1740 = vld [vmem:[#allocation2 + $0xf1] sm:$0xff]
        %v1741 = vld [vmem:[#allocation2 + $0xf9] sm:$0xff]
        %v1742 = vld [vmem:[#allocation2 + $0x101] sm:$0xff]
        %v1743 = vld [vmem:[#allocation2 + $0x109] sm:$0xff]
        %v1744 = vld [vmem:[#allocation2 + $0x111] sm:$0xff]
        %v1745 = vld [vmem:[#allocation2 + $0x119] sm:$0xff]
        %v1746 = vld [vmem:[#allocation2 + $0x121] sm:$0xff]
        %v1747 = vld [vmem:[#allocation2 + $0x129] sm:$0xff]
        %v1748 = vld [vmem:[#allocation2 + $0x131] sm:$0xff]
        %v1749 = vld [vmem:[#allocation2 + $0x139] sm:$0xff]
        %v1750 = vld [vmem:[#allocation2 + $0x141] sm:$0xff]
        %v1751 = vld [vmem:[#allocation2 + $0x149] sm:$0xff]
        %v1752 = vld [vmem:[#allocation2 + $0x151] sm:$0xff]
        %v1753 = vld [vmem:[#allocation2 + $0x159] sm:$0xff]
        %v1754 = vld [vmem:[#allocation2 + $0x161] sm:$0xff]
        %v1755 = vld [vmem:[#allocation2 + $0x169] sm:$0xff]
        %v1756 = vld [vmem:[#allocation2 + $0x171] sm:$0xff]
        %v1757 = vld [vmem:[#allocation2 + $0x179] sm:$0xff]
        %v1758 = vld [vmem:[#allocation2 + $0x181] sm:$0xff]
        %v1759 = vpack.c.bf16 %v1712, %v1711
        %v1760 = vpack.c.bf16 %v1714, %v1713
        %v1761 = vpack.c.bf16 %v1716, %v1715
        %v1762 = vpack.c.bf16 %v1718, %v1717
        %v1763 = vpack.c.bf16 %v1720, %v1719
        %v1764 = vpack.c.bf16 %v1722, %v1721
        %v1765 = vpack.c.bf16 %v1724, %v1723
        %v1766 = vpack.c.bf16 %v1726, %v1725
        %v1767 = vpack.c.bf16 %v1728, %v1727
        %v1768 = vpack.c.bf16 %v1730, %v1729
        %v1769 = vpack.c.bf16 %v1732, %v1731
        %v1770 = vpack.c.bf16 %v1734, %v1733
        %v1771 = vpack.c.bf16 %v1736, %v1735
        %v1772 = vpack.c.bf16 %v1738, %v1737
        %v1773 = vpack.c.bf16 %v1740, %v1739
        %v1774 = vpack.c.bf16 %v1742, %v1741
        %v1775 = vpack.c.bf16 %v1744, %v1743
        %v1776 = vpack.c.bf16 %v1746, %v1745
        %v1777 = vpack.c.bf16 %v1748, %v1747
        %v1778 = vpack.c.bf16 %v1750, %v1749
        %v1779 = vpack.c.bf16 %v1752, %v1751
        %v1780 = vpack.c.bf16 %v1754, %v1753
        %v1781 = vpack.c.bf16 %v1756, %v1755
        %v1782 = vpack.c.bf16 %v1758, %v1757
        %s1783 = scalar_lea.vmem %s3, 128
        %v1784 = vld [vmem:[%s1783] sm:$0xf]
        %v1785 = vld [vmem:[%s1783 + $0x4] sm:$0xf]
        %v1786 = vld [vmem:[%s1783 + $0x8] sm:$0xf]
        %v1787 = vld [vmem:[%s1783 + $0xc] sm:$0xf]
        %v1788 = vld [vmem:[%s1783 + $0x10] sm:$0xf]
        %v1789 = vld [vmem:[%s1783 + $0x14] sm:$0xf]
        %v1790 = vld [vmem:[%s1783 + $0x18] sm:$0xf]
        %v1791 = vld [vmem:[%s1783 + $0x1c] sm:$0xf]
        %v1792 = vld [vmem:[%s1783 + $0x20] sm:$0xf]
        %v1793 = vld [vmem:[%s1783 + $0x24] sm:$0xf]
        %v1794 = vld [vmem:[%s1783 + $0x28] sm:$0xf]
        %v1795 = vld [vmem:[%s1783 + $0x2c] sm:$0xf]
        %v1796 = vld [vmem:[%s1783 + $0x30] sm:$0xf]
        %v1797 = vld [vmem:[%s1783 + $0x34] sm:$0xf]
        %v1798 = vld [vmem:[%s1783 + $0x38] sm:$0xf]
        %v1799 = vld [vmem:[%s1783 + $0x3c] sm:$0xf]
        %v1816 = vunpack.c.l.b16 %v1784
        %v1817 = vunpack.c.l.b16 %v1785
        %v1818 = vunpack.c.l.b16 %v1786
        %v1819 = vunpack.c.l.b16 %v1787
        %v1820 = vunpack.c.l.b16 %v1788
        %v1821 = vunpack.c.l.b16 %v1789
        %v1822 = vunpack.c.l.b16 %v1790
        %v1823 = vunpack.c.l.b16 %v1791
        %v1824 = vunpack.c.l.b16 %v1792
        %v1825 = vunpack.c.l.b16 %v1793
        %v1826 = vunpack.c.l.b16 %v1794
        %v1827 = vunpack.c.l.b16 %v1795
        %v1828 = vunpack.c.l.b16 %v1796
        %v1829 = vunpack.c.l.b16 %v1797
        %v1830 = vunpack.c.l.b16 %v1798
        %v1831 = vunpack.c.l.b16 %v1799
        %v1832 = vpack.c.b16 %v1817, %v1816
        %v1833 = vpack.c.b16 %v1819, %v1818
        %v1834 = vpack.c.b16 %v1821, %v1820
        %v1835 = vpack.c.b16 %v1823, %v1822
        %v1836 = vpack.c.b16 %v1825, %v1824
        %v1837 = vpack.c.b16 %v1827, %v1826
        %v1838 = vpack.c.b16 %v1829, %v1828
        %v1839 = vpack.c.b16 %v1831, %v1830
        %1848 = vmatprep.subr.bf16.mxu0 0
        %1849 = vmatpush1.bf16.msra.mxu0 %v1832
        %1850 = vmatprep.subr.bf16.mxu0 0
        %1851 = vmatpush1.bf16.msra.mxu0 %v1833
        %1852 = vmatprep.subr.bf16.mxu0 0
        %1853 = vmatpush1.bf16.msra.mxu0 %v1834
        %1854 = vmatprep.subr.bf16.mxu0 0
        %1855 = vmatpush1.bf16.msra.mxu0 %v1835
        %1856 = vmatprep.subr.bf16.mxu0 0
        %1857 = vmatpush1.bf16.msra.mxu0 %v1836
        %1858 = vmatprep.subr.bf16.mxu0 0
        %1859 = vmatpush1.bf16.msra.mxu0 %v1837
        %1860 = vmatprep.subr.bf16.mxu0 0
        %1861 = vmatpush1.bf16.msra.mxu0 %v1838
        %1862 = vmatprep.subr.bf16.mxu0 0
        %1863 = vmatpush1.bf16.msra.mxu0 %v1839
        %1864 = vmatprep.subr.bf16.mxu0 0
        %1865 = vmatpush1.bf16.msra.mxu0 0
        %1866 = vmatprep.subr.bf16.mxu0 0
        %1867 = vmatpush1.bf16.msra.mxu0 0
        %1868 = vmatprep.subr.bf16.mxu0 0
        %1869 = vmatpush1.bf16.msra.mxu0 0
        %1870 = vmatprep.subr.bf16.mxu0 0
        %1871 = vmatpush1.bf16.msra.mxu0 0
        %1872 = vmatprep.subr.bf16.mxu0 0
        %1873 = vmatpush1.bf16.msra.mxu0 0
        %1874 = vmatprep.subr.bf16.mxu0 0
        %1875 = vmatpush1.bf16.msra.mxu0 0
        %1876 = vmatprep.subr.bf16.mxu0 0
        %1877 = vmatpush1.bf16.msra.mxu0 0
        %1878 = vmatprep.subr.bf16.mxu0 0
        %1879 = vmatpush1.bf16.msra.mxu0 0
        %1880 = vmatprep.mubr.bf16.mxu0 0
        %1881 = vmatmul.mubr.bf16.gmra.mrb[0].mxu0 %v1759
        %v1882 = vpop.f32.mrb[0].mxu0
        %v1883 = vadd.f32 0.0, %v1882
        %v1884 = vpop.f32.mrb[0].mxu0
        %v1885 = vpop.f32.mrb[0].mxu0
        %v1886 = vadd.f32 0.0, %v1885
        %v1887 = vpop.f32.mrb[0].mxu0
        %1888 = vmatprep.mubr.bf16.mxu0 0
        %1889 = vmatmul.mubr.bf16.gmra.mrb[0].mxu0 %v1760
        %v1890 = vpop.f32.mrb[0].mxu0
        %v1891 = vadd.f32 0.0, %v1890
        %v1892 = vpop.f32.mrb[0].mxu0
        %v1893 = vpop.f32.mrb[0].mxu0
        %v1894 = vadd.f32 0.0, %v1893
        %v1895 = vpop.f32.mrb[0].mxu0
        %1896 = vmatprep.mubr.bf16.mxu0 0
        %1897 = vmatmul.mubr.bf16.gmra.mrb[0].mxu0 %v1761
        %v1898 = vpop.f32.mrb[0].mxu0
        %v1899 = vadd.f32 0.0, %v1898
        %v1900 = vpop.f32.mrb[0].mxu0
        %v1901 = vpop.f32.mrb[0].mxu0
        %v1902 = vadd.f32 0.0, %v1901
        %v1903 = vpop.f32.mrb[0].mxu0
        %1904 = vmatprep.mubr.bf16.mxu0 0
        %1905 = vmatmul.mubr.bf16.gmra.mrb[0].mxu0 %v1762
        %v1906 = vpop.f32.mrb[0].mxu0
        %v1907 = vadd.f32 0.0, %v1906
        %v1908 = vpop.f32.mrb[0].mxu0
        %v1909 = vpop.f32.mrb[0].mxu0
        %v1910 = vadd.f32 0.0, %v1909
        %v1911 = vpop.f32.mrb[0].mxu0
        %1912 = vmatprep.mubr.bf16.mxu0 0
        %1913 = vmatmul.mubr.bf16.gmra.mrb[0].mxu0 %v1763
        %v1914 = vpop.f32.mrb[0].mxu0
        %v1915 = vadd.f32 0.0, %v1914
        %v1916 = vpop.f32.mrb[0].mxu0
        %v1917 = vpop.f32.mrb[0].mxu0
        %v1918 = vadd.f32 0.0, %v1917
        %v1919 = vpop.f32.mrb[0].mxu0
        %1920 = vmatprep.mubr.bf16.mxu0 0
        %1921 = vmatmul.mubr.bf16.gmra.mrb[0].mxu0 %v1764
        %v1922 = vpop.f32.mrb[0].mxu0
        %v1923 = vadd.f32 0.0, %v1922
        %v1924 = vpop.f32.mrb[0].mxu0
        %v1925 = vpop.f32.mrb[0].mxu0
        %v1926 = vadd.f32 0.0, %v1925
        %v1927 = vpop.f32.mrb[0].mxu0
        %1928 = vmatprep.mubr.bf16.mxu0 0
        %1929 = vmatmul.mubr.bf16.gmra.mrb[0].mxu0 %v1765
        %v1930 = vpop.f32.mrb[0].mxu0
        %v1931 = vadd.f32 0.0, %v1930
        %v1932 = vpop.f32.mrb[0].mxu0
        %v1933 = vpop.f32.mrb[0].mxu0
        %v1934 = vadd.f32 0.0, %v1933
        %v1935 = vpop.f32.mrb[0].mxu0
        %1936 = vmatprep.mubr.bf16.mxu0 0
        %1937 = vmatmul.mubr.bf16.gmra.mrb[0].mxu0 %v1766
        %v1938 = vpop.f32.mrb[0].mxu0
        %v1939 = vadd.f32 0.0, %v1938
        %v1940 = vpop.f32.mrb[0].mxu0
        %v1941 = vpop.f32.mrb[0].mxu0
        %v1942 = vadd.f32 0.0, %v1941
        %v1943 = vpop.f32.mrb[0].mxu0
        %1944 = vmatprep.mubr.bf16.mxu0 0
        %1945 = vmatmul.mubr.bf16.gmra.mrb[0].mxu0 %v1767
        %v1946 = vpop.f32.mrb[0].mxu0
        %v1947 = vadd.f32 0.0, %v1946
        %v1948 = vpop.f32.mrb[0].mxu0
        %v1949 = vpop.f32.mrb[0].mxu0
        %v1950 = vadd.f32 0.0, %v1949
        %v1951 = vpop.f32.mrb[0].mxu0
        %1952 = vmatprep.mubr.bf16.mxu0 0
        %1953 = vmatmul.mubr.bf16.gmra.mrb[0].mxu0 %v1768
        %v1954 = vpop.f32.mrb[0].mxu0
        %v1955 = vadd.f32 0.0, %v1954
        %v1956 = vpop.f32.mrb[0].mxu0
        %v1957 = vpop.f32.mrb[0].mxu0
        %v1958 = vadd.f32 0.0, %v1957
        %v1959 = vpop.f32.mrb[0].mxu0
        %1960 = vmatprep.mubr.bf16.mxu0 0
        %1961 = vmatmul.mubr.bf16.gmra.mrb[0].mxu0 %v1769
        %v1962 = vpop.f32.mrb[0].mxu0
        %v1963 = vadd.f32 0.0, %v1962
        %v1964 = vpop.f32.mrb[0].mxu0
        %v1965 = vpop.f32.mrb[0].mxu0
        %v1966 = vadd.f32 0.0, %v1965
        %v1967 = vpop.f32.mrb[0].mxu0
        %1968 = vmatprep.mubr.bf16.mxu0 0
        %1969 = vmatmul.mubr.bf16.gmra.mrb[0].mxu0 %v1770
        %v1970 = vpop.f32.mrb[0].mxu0
        %v1971 = vadd.f32 0.0, %v1970
        %v1972 = vpop.f32.mrb[0].mxu0
        %v1973 = vpop.f32.mrb[0].mxu0
        %v1974 = vadd.f32 0.0, %v1973
        %v1975 = vpop.f32.mrb[0].mxu0
        %1976 = vmatprep.mubr.bf16.mxu0 0
        %1977 = vmatmul.mubr.bf16.gmra.mrb[0].mxu0 %v1771
        %v1978 = vpop.f32.mrb[0].mxu0
        %v1979 = vadd.f32 0.0, %v1978
        %v1980 = vpop.f32.mrb[0].mxu0
        %v1981 = vpop.f32.mrb[0].mxu0
        %v1982 = vadd.f32 0.0, %v1981
        %v1983 = vpop.f32.mrb[0].mxu0
        %1984 = vmatprep.mubr.bf16.mxu0 0
        %1985 = vmatmul.mubr.bf16.gmra.mrb[0].mxu0 %v1772
        %v1986 = vpop.f32.mrb[0].mxu0
        %v1987 = vadd.f32 0.0, %v1986
        %v1988 = vpop.f32.mrb[0].mxu0
        %v1989 = vpop.f32.mrb[0].mxu0
        %v1990 = vadd.f32 0.0, %v1989
        %v1991 = vpop.f32.mrb[0].mxu0
        %1992 = vmatprep.mubr.bf16.mxu0 0
        %1993 = vmatmul.mubr.bf16.gmra.mrb[0].mxu0 %v1773
        %v1994 = vpop.f32.mrb[0].mxu0
        %v1995 = vadd.f32 0.0, %v1994
        %v1996 = vpop.f32.mrb[0].mxu0
        %v1997 = vpop.f32.mrb[0].mxu0
        %v1998 = vadd.f32 0.0, %v1997
        %v1999 = vpop.f32.mrb[0].mxu0
        %2000 = vmatprep.mubr.bf16.mxu0 0
        %2001 = vmatmul.mubr.bf16.gmra.mrb[0].mxu0 %v1774
        %v2002 = vpop.f32.mrb[0].mxu0
        %v2003 = vadd.f32 0.0, %v2002
        %v2004 = vpop.f32.mrb[0].mxu0
        %v2005 = vpop.f32.mrb[0].mxu0
        %v2006 = vadd.f32 0.0, %v2005
        %v2007 = vpop.f32.mrb[0].mxu0
        %2008 = vmatprep.mubr.bf16.mxu0 0
        %2009 = vmatmul.mubr.bf16.gmra.mrb[0].mxu0 %v1775
        %v2010 = vpop.f32.mrb[0].mxu0
        %v2011 = vadd.f32 0.0, %v2010
        %v2012 = vpop.f32.mrb[0].mxu0
        %v2013 = vpop.f32.mrb[0].mxu0
        %v2014 = vadd.f32 0.0, %v2013
        %v2015 = vpop.f32.mrb[0].mxu0
        %2016 = vmatprep.mubr.bf16.mxu0 0
        %2017 = vmatmul.mubr.bf16.gmra.mrb[0].mxu0 %v1776
        %v2018 = vpop.f32.mrb[0].mxu0
        %v2019 = vadd.f32 0.0, %v2018
        %v2020 = vpop.f32.mrb[0].mxu0
        %v2021 = vpop.f32.mrb[0].mxu0
        %v2022 = vadd.f32 0.0, %v2021
        %v2023 = vpop.f32.mrb[0].mxu0
        %2024 = vmatprep.mubr.bf16.mxu0 0
        %2025 = vmatmul.mubr.bf16.gmra.mrb[0].mxu0 %v1777
        %v2026 = vpop.f32.mrb[0].mxu0
        %v2027 = vadd.f32 0.0, %v2026
        %v2028 = vpop.f32.mrb[0].mxu0
        %v2029 = vpop.f32.mrb[0].mxu0
        %v2030 = vadd.f32 0.0, %v2029
        %v2031 = vpop.f32.mrb[0].mxu0
        %2032 = vmatprep.mubr.bf16.mxu0 0
        %2033 = vmatmul.mubr.bf16.gmra.mrb[0].mxu0 %v1778
        %v2034 = vpop.f32.mrb[0].mxu0
        %v2035 = vadd.f32 0.0, %v2034
        %v2036 = vpop.f32.mrb[0].mxu0
        %v2037 = vpop.f32.mrb[0].mxu0
        %v2038 = vadd.f32 0.0, %v2037
        %v2039 = vpop.f32.mrb[0].mxu0
        %2040 = vmatprep.mubr.bf16.mxu0 0
        %2041 = vmatmul.mubr.bf16.gmra.mrb[0].mxu0 %v1779
        %v2042 = vpop.f32.mrb[0].mxu0
        %v2043 = vadd.f32 0.0, %v2042
        %v2044 = vpop.f32.mrb[0].mxu0
        %v2045 = vpop.f32.mrb[0].mxu0
        %v2046 = vadd.f32 0.0, %v2045
        %v2047 = vpop.f32.mrb[0].mxu0
        %2048 = vmatprep.mubr.bf16.mxu0 0
        %2049 = vmatmul.mubr.bf16.gmra.mrb[0].mxu0 %v1780
        %v2050 = vpop.f32.mrb[0].mxu0
        %v2051 = vadd.f32 0.0, %v2050
        %v2052 = vpop.f32.mrb[0].mxu0
        %v2053 = vpop.f32.mrb[0].mxu0
        %v2054 = vadd.f32 0.0, %v2053
        %v2055 = vpop.f32.mrb[0].mxu0
        %2056 = vmatprep.mubr.bf16.mxu0 0
        %2057 = vmatmul.mubr.bf16.gmra.mrb[0].mxu0 %v1781
        %v2058 = vpop.f32.mrb[0].mxu0
        %v2059 = vadd.f32 0.0, %v2058
        %v2060 = vpop.f32.mrb[0].mxu0
        %v2061 = vpop.f32.mrb[0].mxu0
        %v2062 = vadd.f32 0.0, %v2061
        %v2063 = vpop.f32.mrb[0].mxu0
        %2064 = vmatprep.mubr.bf16.mxu0 0
        %2065 = vmatmul.mubr.bf16.gmra.mrb[0].mxu0 %v1782
        %v2066 = vpop.f32.mrb[0].mxu0
        %v2067 = vadd.f32 0.0, %v2066
        %v2068 = vpop.f32.mrb[0].mxu0
        %v2069 = vpop.f32.mrb[0].mxu0
        %v2070 = vadd.f32 0.0, %v2069
        %v2071 = vpop.f32.mrb[0].mxu0
        %2072 = vdwg.mxu0
        %v2073 = vld [vmem:[#allocation3] sm:$0xff]
        %v2074 = vld [vmem:[#allocation3 + $0x8] sm:$0xff]
        %v2075 = vld [vmem:[#allocation3 + $0x10] sm:$0xff]
        %v2076 = vld [vmem:[#allocation3 + $0x18] sm:$0xff]
        %v2077 = vld [vmem:[#allocation3 + $0x20] sm:$0xff]
        %v2078 = vld [vmem:[#allocation3 + $0x28] sm:$0xff]
        %v2079 = vld [vmem:[#allocation3 + $0x30] sm:$0xff]
        %v2080 = vld [vmem:[#allocation3 + $0x38] sm:$0xff]
        %v2081 = vld [vmem:[#allocation3 + $0x40] sm:$0xff]
        %v2082 = vld [vmem:[#allocation3 + $0x48] sm:$0xff]
        %v2083 = vld [vmem:[#allocation3 + $0x50] sm:$0xff]
        %v2084 = vld [vmem:[#allocation3 + $0x58] sm:$0xff]
        %v2085 = vld [vmem:[#allocation3 + $0x60] sm:$0xff]
        %v2086 = vld [vmem:[#allocation3 + $0x68] sm:$0xff]
        %v2087 = vld [vmem:[#allocation3 + $0x70] sm:$0xff]
        %v2088 = vld [vmem:[#allocation3 + $0x78] sm:$0xff]
        %v2089 = vld [vmem:[#allocation3 + $0x80] sm:$0xff]
        %v2090 = vld [vmem:[#allocation3 + $0x88] sm:$0xff]
        %v2091 = vld [vmem:[#allocation3 + $0x90] sm:$0xff]
        %v2092 = vld [vmem:[#allocation3 + $0x98] sm:$0xff]
        %v2093 = vld [vmem:[#allocation3 + $0xa0] sm:$0xff]
        %v2094 = vld [vmem:[#allocation3 + $0xa8] sm:$0xff]
        %v2095 = vld [vmem:[#allocation3 + $0xb0] sm:$0xff]
        %v2096 = vld [vmem:[#allocation3 + $0xb8] sm:$0xff]
        %v2097 = vld [vmem:[#allocation3 + $0xc0] sm:$0xff]
        %v2098 = vld [vmem:[#allocation3 + $0xc8] sm:$0xff]
        %v2099 = vld [vmem:[#allocation3 + $0xd0] sm:$0xff]
        %v2100 = vld [vmem:[#allocation3 + $0xd8] sm:$0xff]
        %v2101 = vld [vmem:[#allocation3 + $0xe0] sm:$0xff]
        %v2102 = vld [vmem:[#allocation3 + $0xe8] sm:$0xff]
        %v2103 = vld [vmem:[#allocation3 + $0xf0] sm:$0xff]
        %v2104 = vld [vmem:[#allocation3 + $0xf8] sm:$0xff]
        %v2105 = vld [vmem:[#allocation3 + $0x100] sm:$0xff]
        %v2106 = vld [vmem:[#allocation3 + $0x108] sm:$0xff]
        %v2107 = vld [vmem:[#allocation3 + $0x110] sm:$0xff]
        %v2108 = vld [vmem:[#allocation3 + $0x118] sm:$0xff]
        %v2109 = vld [vmem:[#allocation3 + $0x120] sm:$0xff]
        %v2110 = vld [vmem:[#allocation3 + $0x128] sm:$0xff]
        %v2111 = vld [vmem:[#allocation3 + $0x130] sm:$0xff]
        %v2112 = vld [vmem:[#allocation3 + $0x138] sm:$0xff]
        %v2113 = vld [vmem:[#allocation3 + $0x140] sm:$0xff]
        %v2114 = vld [vmem:[#allocation3 + $0x148] sm:$0xff]
        %v2115 = vld [vmem:[#allocation3 + $0x150] sm:$0xff]
        %v2116 = vld [vmem:[#allocation3 + $0x158] sm:$0xff]
        %v2117 = vld [vmem:[#allocation3 + $0x160] sm:$0xff]
        %v2118 = vld [vmem:[#allocation3 + $0x168] sm:$0xff]
        %v2119 = vld [vmem:[#allocation3 + $0x170] sm:$0xff]
        %v2120 = vld [vmem:[#allocation3 + $0x178] sm:$0xff]
        %v2121 = vadd.f32 %v2073, %v1883
        %v2122 = vadd.f32 %v2074, %v1886
        %v2123 = vadd.f32 %v2075, %v1891
        %v2124 = vadd.f32 %v2076, %v1894
        %v2125 = vadd.f32 %v2077, %v1899
        %v2126 = vadd.f32 %v2078, %v1902
        %v2127 = vadd.f32 %v2079, %v1907
        %v2128 = vadd.f32 %v2080, %v1910
        %v2129 = vadd.f32 %v2081, %v1915
        %v2130 = vadd.f32 %v2082, %v1918
        %v2131 = vadd.f32 %v2083, %v1923
        %v2132 = vadd.f32 %v2084, %v1926
        %v2133 = vadd.f32 %v2085, %v1931
        %v2134 = vadd.f32 %v2086, %v1934
        %v2135 = vadd.f32 %v2087, %v1939
        %v2136 = vadd.f32 %v2088, %v1942
        %v2137 = vadd.f32 %v2089, %v1947
        %v2138 = vadd.f32 %v2090, %v1950
        %v2139 = vadd.f32 %v2091, %v1955
        %v2140 = vadd.f32 %v2092, %v1958
        %v2141 = vadd.f32 %v2093, %v1963
        %v2142 = vadd.f32 %v2094, %v1966
        %v2143 = vadd.f32 %v2095, %v1971
        %v2144 = vadd.f32 %v2096, %v1974
        %v2145 = vadd.f32 %v2097, %v1979
        %v2146 = vadd.f32 %v2098, %v1982
        %v2147 = vadd.f32 %v2099, %v1987
        %v2148 = vadd.f32 %v2100, %v1990
        %v2149 = vadd.f32 %v2101, %v1995
        %v2150 = vadd.f32 %v2102, %v1998
        %v2151 = vadd.f32 %v2103, %v2003
        %v2152 = vadd.f32 %v2104, %v2006
        %v2153 = vadd.f32 %v2105, %v2011
        %v2154 = vadd.f32 %v2106, %v2014
        %v2155 = vadd.f32 %v2107, %v2019
        %v2156 = vadd.f32 %v2108, %v2022
        %v2157 = vadd.f32 %v2109, %v2027
        %v2158 = vadd.f32 %v2110, %v2030
        %v2159 = vadd.f32 %v2111, %v2035
        %v2160 = vadd.f32 %v2112, %v2038
        %v2161 = vadd.f32 %v2113, %v2043
        %v2162 = vadd.f32 %v2114, %v2046
        %v2163 = vadd.f32 %v2115, %v2051
        %v2164 = vadd.f32 %v2116, %v2054
        %v2165 = vadd.f32 %v2117, %v2059
        %v2166 = vadd.f32 %v2118, %v2062
        %v2167 = vadd.f32 %v2119, %v2067
        %v2168 = vadd.f32 %v2120, %v2070
        %2169 = vst [vmem:[#allocation3] sm:$0xff] %v2121
        %2170 = vst [vmem:[#allocation3 + $0x8] sm:$0xff] %v2122
        %2171 = vst [vmem:[#allocation3 + $0x10] sm:$0xff] %v2123
        %2172 = vst [vmem:[#allocation3 + $0x18] sm:$0xff] %v2124
        %2173 = vst [vmem:[#allocation3 + $0x20] sm:$0xff] %v2125
        %2174 = vst [vmem:[#allocation3 + $0x28] sm:$0xff] %v2126
        %2175 = vst [vmem:[#allocation3 + $0x30] sm:$0xff] %v2127
        %2176 = vst [vmem:[#allocation3 + $0x38] sm:$0xff] %v2128
        %2177 = vst [vmem:[#allocation3 + $0x40] sm:$0xff] %v2129
        %2178 = vst [vmem:[#allocation3 + $0x48] sm:$0xff] %v2130
        %2179 = vst [vmem:[#allocation3 + $0x50] sm:$0xff] %v2131
        %2180 = vst [vmem:[#allocation3 + $0x58] sm:$0xff] %v2132
        %2181 = vst [vmem:[#allocation3 + $0x60] sm:$0xff] %v2133
        %2182 = vst [vmem:[#allocation3 + $0x68] sm:$0xff] %v2134
        %2183 = vst [vmem:[#allocation3 + $0x70] sm:$0xff] %v2135
        %2184 = vst [vmem:[#allocation3 + $0x78] sm:$0xff] %v2136
        %2185 = vst [vmem:[#allocation3 + $0x80] sm:$0xff] %v2137
        %2186 = vst [vmem:[#allocation3 + $0x88] sm:$0xff] %v2138
        %2187 = vst [vmem:[#allocation3 + $0x90] sm:$0xff] %v2139
        %2188 = vst [vmem:[#allocation3 + $0x98] sm:$0xff] %v2140
        %2189 = vst [vmem:[#allocation3 + $0xa0] sm:$0xff] %v2141
        %2190 = vst [vmem:[#allocation3 + $0xa8] sm:$0xff] %v2142
        %2191 = vst [vmem:[#allocation3 + $0xb0] sm:$0xff] %v2143
        %2192 = vst [vmem:[#allocation3 + $0xb8] sm:$0xff] %v2144
        %2193 = vst [vmem:[#allocation3 + $0xc0] sm:$0xff] %v2145
        %2194 = vst [vmem:[#allocation3 + $0xc8] sm:$0xff] %v2146
        %2195 = vst [vmem:[#allocation3 + $0xd0] sm:$0xff] %v2147
        %2196 = vst [vmem:[#allocation3 + $0xd8] sm:$0xff] %v2148
        %2197 = vst [vmem:[#allocation3 + $0xe0] sm:$0xff] %v2149
        %2198 = vst [vmem:[#allocation3 + $0xe8] sm:$0xff] %v2150
        %2199 = vst [vmem:[#allocation3 + $0xf0] sm:$0xff] %v2151
        %2200 = vst [vmem:[#allocation3 + $0xf8] sm:$0xff] %v2152
        %2201 = vst [vmem:[#allocation3 + $0x100] sm:$0xff] %v2153
        %2202 = vst [vmem:[#allocation3 + $0x108] sm:$0xff] %v2154
        %2203 = vst [vmem:[#allocation3 + $0x110] sm:$0xff] %v2155
        %2204 = vst [vmem:[#allocation3 + $0x118] sm:$0xff] %v2156
        %2205 = vst [vmem:[#allocation3 + $0x120] sm:$0xff] %v2157
        %2206 = vst [vmem:[#allocation3 + $0x128] sm:$0xff] %v2158
        %2207 = vst [vmem:[#allocation3 + $0x130] sm:$0xff] %v2159
        %2208 = vst [vmem:[#allocation3 + $0x138] sm:$0xff] %v2160
        %2209 = vst [vmem:[#allocation3 + $0x140] sm:$0xff] %v2161
        %2210 = vst [vmem:[#allocation3 + $0x148] sm:$0xff] %v2162
        %2211 = vst [vmem:[#allocation3 + $0x150] sm:$0xff] %v2163
        %2212 = vst [vmem:[#allocation3 + $0x158] sm:$0xff] %v2164
        %2213 = vst [vmem:[#allocation3 + $0x160] sm:$0xff] %v2165
        %2214 = vst [vmem:[#allocation3 + $0x168] sm:$0xff] %v2166
        %2215 = vst [vmem:[#allocation3 + $0x170] sm:$0xff] %v2167
        %2216 = vst [vmem:[#allocation3 + $0x178] sm:$0xff] %v2168
        %v2217 = vld [vmem:[#allocation2 + $0x1f] sm:$0xff]
        %v2218 = vld [vmem:[#allocation2 + $0x27] sm:$0xff]
        %v2219 = vld [vmem:[#allocation2 + $0x2f] sm:$0xff]
        %v2220 = vld [vmem:[#allocation2 + $0x37] sm:$0xff]
        %v2221 = vld [vmem:[#allocation2 + $0x3f] sm:$0xff]
        %v2222 = vld [vmem:[#allocation2 + $0x47] sm:$0xff]
        %v2223 = vld [vmem:[#allocation2 + $0x4f] sm:$0xff]
        %v2224 = vld [vmem:[#allocation2 + $0x57] sm:$0xff]
        %v2225 = vld [vmem:[#allocation2 + $0x5f] sm:$0xff]
        %v2226 = vld [vmem:[#allocation2 + $0x67] sm:$0xff]
        %v2227 = vld [vmem:[#allocation2 + $0x6f] sm:$0xff]
        %v2228 = vld [vmem:[#allocation2 + $0x77] sm:$0xff]
        %v2229 = vld [vmem:[#allocation2 + $0x7f] sm:$0xff]
        %v2230 = vld [vmem:[#allocation2 + $0x87] sm:$0xff]
        %v2231 = vld [vmem:[#allocation2 + $0x8f] sm:$0xff]
        %v2232 = vld [vmem:[#allocation2 + $0x97] sm:$0xff]
        %v2233 = vld [vmem:[#allocation2 + $0x9f] sm:$0xff]
        %v2234 = vld [vmem:[#allocation2 + $0xa7] sm:$0xff]
        %v2235 = vld [vmem:[#allocation2 + $0xaf] sm:$0xff]
        %v2236 = vld [vmem:[#allocation2 + $0xb7] sm:$0xff]
        %v2237 = vld [vmem:[#allocation2 + $0xbf] sm:$0xff]
        %v2238 = vld [vmem:[#allocation2 + $0xc7] sm:$0xff]
        %v2239 = vld [vmem:[#allocation2 + $0xcf] sm:$0xff]
        %v2240 = vld [vmem:[#allocation2 + $0xd7] sm:$0xff]
        %v2241 = vld [vmem:[#allocation2 + $0xdf] sm:$0xff]
        %v2242 = vld [vmem:[#allocation2 + $0xe7] sm:$0xff]
        %v2243 = vld [vmem:[#allocation2 + $0xef] sm:$0xff]
        %v2244 = vld [vmem:[#allocation2 + $0xf7] sm:$0xff]
        %v2245 = vld [vmem:[#allocation2 + $0xff] sm:$0xff]
        %v2246 = vld [vmem:[#allocation2 + $0x107] sm:$0xff]
        %v2247 = vld [vmem:[#allocation2 + $0x10f] sm:$0xff]
        %v2248 = vld [vmem:[#allocation2 + $0x117] sm:$0xff]
        %v2249 = vld [vmem:[#allocation2 + $0x11f] sm:$0xff]
        %v2250 = vld [vmem:[#allocation2 + $0x127] sm:$0xff]
        %v2251 = vld [vmem:[#allocation2 + $0x12f] sm:$0xff]
        %v2252 = vld [vmem:[#allocation2 + $0x137] sm:$0xff]
        %v2253 = vld [vmem:[#allocation2 + $0x13f] sm:$0xff]
        %v2254 = vld [vmem:[#allocation2 + $0x147] sm:$0xff]
        %v2255 = vld [vmem:[#allocation2 + $0x14f] sm:$0xff]
        %v2256 = vld [vmem:[#allocation2 + $0x157] sm:$0xff]
        %v2257 = vld [vmem:[#allocation2 + $0x15f] sm:$0xff]
        %v2258 = vld [vmem:[#allocation2 + $0x167] sm:$0xff]
        %v2259 = vld [vmem:[#allocation2 + $0x16f] sm:$0xff]
        %v2260 = vld [vmem:[#allocation2 + $0x177] sm:$0xff]
        %v2261 = vld [vmem:[#allocation2 + $0x17f] sm:$0xff]
        %v2262 = vld [vmem:[#allocation2 + $0x187] sm:$0xff]
        %v2263 = vld [vmem:[#allocation2 + $0x18f] sm:$0xff]
        %v2264 = vld [vmem:[#allocation2 + $0x197] sm:$0xff]
        %v2265 = vpack.c.bf16 %v2218, %v2217
        %v2266 = vpack.c.bf16 %v2220, %v2219
        %v2267 = vpack.c.bf16 %v2222, %v2221
        %v2268 = vpack.c.bf16 %v2224, %v2223
        %v2269 = vpack.c.bf16 %v2226, %v2225
        %v2270 = vpack.c.bf16 %v2228, %v2227
        %v2271 = vpack.c.bf16 %v2230, %v2229
        %v2272 = vpack.c.bf16 %v2232, %v2231
        %v2273 = vpack.c.bf16 %v2234, %v2233
        %v2274 = vpack.c.bf16 %v2236, %v2235
        %v2275 = vpack.c.bf16 %v2238, %v2237
        %v2276 = vpack.c.bf16 %v2240, %v2239
        %v2277 = vpack.c.bf16 %v2242, %v2241
        %v2278 = vpack.c.bf16 %v2244, %v2243
        %v2279 = vpack.c.bf16 %v2246, %v2245
        %v2280 = vpack.c.bf16 %v2248, %v2247
        %v2281 = vpack.c.bf16 %v2250, %v2249
        %v2282 = vpack.c.bf16 %v2252, %v2251
        %v2283 = vpack.c.bf16 %v2254, %v2253
        %v2284 = vpack.c.bf16 %v2256, %v2255
        %v2285 = vpack.c.bf16 %v2258, %v2257
        %v2286 = vpack.c.bf16 %v2260, %v2259
        %v2287 = vpack.c.bf16 %v2262, %v2261
        %v2288 = vpack.c.bf16 %v2264, %v2263
        %s2289 = scalar_lea.vmem %s3, 192
        %v2290 = vld [vmem:[%s2289] sm:$0xf]
        %v2291 = vld [vmem:[%s2289 + $0x4] sm:$0xf]
        %v2292 = vld [vmem:[%s2289 + $0x8] sm:$0xf]
        %v2293 = vld [vmem:[%s2289 + $0xc] sm:$0xf]
        %v2294 = vld [vmem:[%s2289 + $0x10] sm:$0xf]
        %v2295 = vld [vmem:[%s2289 + $0x14] sm:$0xf]
        %v2296 = vld [vmem:[%s2289 + $0x18] sm:$0xf]
        %v2297 = vld [vmem:[%s2289 + $0x1c] sm:$0xf]
        %v2298 = vld [vmem:[%s2289 + $0x20] sm:$0xf]
        %v2299 = vld [vmem:[%s2289 + $0x24] sm:$0xf]
        %v2300 = vld [vmem:[%s2289 + $0x28] sm:$0xf]
        %v2301 = vld [vmem:[%s2289 + $0x2c] sm:$0xf]
        %v2302 = vld [vmem:[%s2289 + $0x30] sm:$0xf]
        %v2303 = vld [vmem:[%s2289 + $0x34] sm:$0xf]
        %v2304 = vld [vmem:[%s2289 + $0x38] sm:$0xf]
        %v2305 = vld [vmem:[%s2289 + $0x3c] sm:$0xf]
        %v2322 = vunpack.c.l.b16 %v2290
        %v2323 = vunpack.c.l.b16 %v2291
        %v2324 = vunpack.c.l.b16 %v2292
        %v2325 = vunpack.c.l.b16 %v2293
        %v2326 = vunpack.c.l.b16 %v2294
        %v2327 = vunpack.c.l.b16 %v2295
        %v2328 = vunpack.c.l.b16 %v2296
        %v2329 = vunpack.c.l.b16 %v2297
        %v2330 = vunpack.c.l.b16 %v2298
        %v2331 = vunpack.c.l.b16 %v2299
        %v2332 = vunpack.c.l.b16 %v2300
        %v2333 = vunpack.c.l.b16 %v2301
        %v2334 = vunpack.c.l.b16 %v2302
        %v2335 = vunpack.c.l.b16 %v2303
        %v2336 = vunpack.c.l.b16 %v2304
        %v2337 = vunpack.c.l.b16 %v2305
        %v2338 = vpack.c.b16 %v2323, %v2322
        %v2339 = vpack.c.b16 %v2325, %v2324
        %v2340 = vpack.c.b16 %v2327, %v2326
        %v2341 = vpack.c.b16 %v2329, %v2328
        %v2342 = vpack.c.b16 %v2331, %v2330
        %v2343 = vpack.c.b16 %v2333, %v2332
        %v2344 = vpack.c.b16 %v2335, %v2334
        %v2345 = vpack.c.b16 %v2337, %v2336
        %2354 = vmatprep.subr.bf16.mxu0 0
        %2355 = vmatpush1.bf16.msra.mxu0 %v2338
        %2356 = vmatprep.subr.bf16.mxu0 0
        %2357 = vmatpush1.bf16.msra.mxu0 %v2339
        %2358 = vmatprep.subr.bf16.mxu0 0
        %2359 = vmatpush1.bf16.msra.mxu0 %v2340
        %2360 = vmatprep.subr.bf16.mxu0 0
        %2361 = vmatpush1.bf16.msra.mxu0 %v2341
        %2362 = vmatprep.subr.bf16.mxu0 0
        %2363 = vmatpush1.bf16.msra.mxu0 %v2342
        %2364 = vmatprep.subr.bf16.mxu0 0
        %2365 = vmatpush1.bf16.msra.mxu0 %v2343
        %2366 = vmatprep.subr.bf16.mxu0 0
        %2367 = vmatpush1.bf16.msra.mxu0 %v2344
        %2368 = vmatprep.subr.bf16.mxu0 0
        %2369 = vmatpush1.bf16.msra.mxu0 %v2345
        %2370 = vmatprep.subr.bf16.mxu0 0
        %2371 = vmatpush1.bf16.msra.mxu0 0
        %2372 = vmatprep.subr.bf16.mxu0 0
        %2373 = vmatpush1.bf16.msra.mxu0 0
        %2374 = vmatprep.subr.bf16.mxu0 0
        %2375 = vmatpush1.bf16.msra.mxu0 0
        %2376 = vmatprep.subr.bf16.mxu0 0
        %2377 = vmatpush1.bf16.msra.mxu0 0
        %2378 = vmatprep.subr.bf16.mxu0 0
        %2379 = vmatpush1.bf16.msra.mxu0 0
        %2380 = vmatprep.subr.bf16.mxu0 0
        %2381 = vmatpush1.bf16.msra.mxu0 0
        %2382 = vmatprep.subr.bf16.mxu0 0
        %2383 = vmatpush1.bf16.msra.mxu0 0
        %2384 = vmatprep.subr.bf16.mxu0 0
        %2385 = vmatpush1.bf16.msra.mxu0 0
        %2386 = vmatprep.mubr.bf16.mxu0 0
        %2387 = vmatmul.mubr.bf16.gmra.mrb[0].mxu0 %v2265
        %v2388 = vpop.f32.mrb[0].mxu0
        %v2389 = vadd.f32 0.0, %v2388
        %v2390 = vpop.f32.mrb[0].mxu0
        %v2391 = vpop.f32.mrb[0].mxu0
        %v2392 = vadd.f32 0.0, %v2391
        %v2393 = vpop.f32.mrb[0].mxu0
        %2394 = vmatprep.mubr.bf16.mxu0 0
        %2395 = vmatmul.mubr.bf16.gmra.mrb[0].mxu0 %v2266
        %v2396 = vpop.f32.mrb[0].mxu0
        %v2397 = vadd.f32 0.0, %v2396
        %v2398 = vpop.f32.mrb[0].mxu0
        %v2399 = vpop.f32.mrb[0].mxu0
        %v2400 = vadd.f32 0.0, %v2399
        %v2401 = vpop.f32.mrb[0].mxu0
        %2402 = vmatprep.mubr.bf16.mxu0 0
        %2403 = vmatmul.mubr.bf16.gmra.mrb[0].mxu0 %v2267
        %v2404 = vpop.f32.mrb[0].mxu0
        %v2405 = vadd.f32 0.0, %v2404
        %v2406 = vpop.f32.mrb[0].mxu0
        %v2407 = vpop.f32.mrb[0].mxu0
        %v2408 = vadd.f32 0.0, %v2407
        %v2409 = vpop.f32.mrb[0].mxu0
        %2410 = vmatprep.mubr.bf16.mxu0 0
        %2411 = vmatmul.mubr.bf16.gmra.mrb[0].mxu0 %v2268
        %v2412 = vpop.f32.mrb[0].mxu0
        %v2413 = vadd.f32 0.0, %v2412
        %v2414 = vpop.f32.mrb[0].mxu0
        %v2415 = vpop.f32.mrb[0].mxu0
        %v2416 = vadd.f32 0.0, %v2415
        %v2417 = vpop.f32.mrb[0].mxu0
        %2418 = vmatprep.mubr.bf16.mxu0 0
        %2419 = vmatmul.mubr.bf16.gmra.mrb[0].mxu0 %v2269
        %v2420 = vpop.f32.mrb[0].mxu0
        %v2421 = vadd.f32 0.0, %v2420
        %v2422 = vpop.f32.mrb[0].mxu0
        %v2423 = vpop.f32.mrb[0].mxu0
        %v2424 = vadd.f32 0.0, %v2423
        %v2425 = vpop.f32.mrb[0].mxu0
        %2426 = vmatprep.mubr.bf16.mxu0 0
        %2427 = vmatmul.mubr.bf16.gmra.mrb[0].mxu0 %v2270
        %v2428 = vpop.f32.mrb[0].mxu0
        %v2429 = vadd.f32 0.0, %v2428
        %v2430 = vpop.f32.mrb[0].mxu0
        %v2431 = vpop.f32.mrb[0].mxu0
        %v2432 = vadd.f32 0.0, %v2431
        %v2433 = vpop.f32.mrb[0].mxu0
        %2434 = vmatprep.mubr.bf16.mxu0 0
        %2435 = vmatmul.mubr.bf16.gmra.mrb[0].mxu0 %v2271
        %v2436 = vpop.f32.mrb[0].mxu0
        %v2437 = vadd.f32 0.0, %v2436
        %v2438 = vpop.f32.mrb[0].mxu0
        %v2439 = vpop.f32.mrb[0].mxu0
        %v2440 = vadd.f32 0.0, %v2439
        %v2441 = vpop.f32.mrb[0].mxu0
        %2442 = vmatprep.mubr.bf16.mxu0 0
        %2443 = vmatmul.mubr.bf16.gmra.mrb[0].mxu0 %v2272
        %v2444 = vpop.f32.mrb[0].mxu0
        %v2445 = vadd.f32 0.0, %v2444
        %v2446 = vpop.f32.mrb[0].mxu0
        %v2447 = vpop.f32.mrb[0].mxu0
        %v2448 = vadd.f32 0.0, %v2447
        %v2449 = vpop.f32.mrb[0].mxu0
        %2450 = vmatprep.mubr.bf16.mxu0 0
        %2451 = vmatmul.mubr.bf16.gmra.mrb[0].mxu0 %v2273
        %v2452 = vpop.f32.mrb[0].mxu0
        %v2453 = vadd.f32 0.0, %v2452
        %v2454 = vpop.f32.mrb[0].mxu0
        %v2455 = vpop.f32.mrb[0].mxu0
        %v2456 = vadd.f32 0.0, %v2455
        %v2457 = vpop.f32.mrb[0].mxu0
        %2458 = vmatprep.mubr.bf16.mxu0 0
        %2459 = vmatmul.mubr.bf16.gmra.mrb[0].mxu0 %v2274
        %v2460 = vpop.f32.mrb[0].mxu0
        %v2461 = vadd.f32 0.0, %v2460
        %v2462 = vpop.f32.mrb[0].mxu0
        %v2463 = vpop.f32.mrb[0].mxu0
        %v2464 = vadd.f32 0.0, %v2463
        %v2465 = vpop.f32.mrb[0].mxu0
        %2466 = vmatprep.mubr.bf16.mxu0 0
        %2467 = vmatmul.mubr.bf16.gmra.mrb[0].mxu0 %v2275
        %v2468 = vpop.f32.mrb[0].mxu0
        %v2469 = vadd.f32 0.0, %v2468
        %v2470 = vpop.f32.mrb[0].mxu0
        %v2471 = vpop.f32.mrb[0].mxu0
        %v2472 = vadd.f32 0.0, %v2471
        %v2473 = vpop.f32.mrb[0].mxu0
        %2474 = vmatprep.mubr.bf16.mxu0 0
        %2475 = vmatmul.mubr.bf16.gmra.mrb[0].mxu0 %v2276
        %v2476 = vpop.f32.mrb[0].mxu0
        %v2477 = vadd.f32 0.0, %v2476
        %v2478 = vpop.f32.mrb[0].mxu0
        %v2479 = vpop.f32.mrb[0].mxu0
        %v2480 = vadd.f32 0.0, %v2479
        %v2481 = vpop.f32.mrb[0].mxu0
        %2482 = vmatprep.mubr.bf16.mxu0 0
        %2483 = vmatmul.mubr.bf16.gmra.mrb[0].mxu0 %v2277
        %v2484 = vpop.f32.mrb[0].mxu0
        %v2485 = vadd.f32 0.0, %v2484
        %v2486 = vpop.f32.mrb[0].mxu0
        %v2487 = vpop.f32.mrb[0].mxu0
        %v2488 = vadd.f32 0.0, %v2487
        %v2489 = vpop.f32.mrb[0].mxu0
        %2490 = vmatprep.mubr.bf16.mxu0 0
        %2491 = vmatmul.mubr.bf16.gmra.mrb[0].mxu0 %v2278
        %v2492 = vpop.f32.mrb[0].mxu0
        %v2493 = vadd.f32 0.0, %v2492
        %v2494 = vpop.f32.mrb[0].mxu0
        %v2495 = vpop.f32.mrb[0].mxu0
        %v2496 = vadd.f32 0.0, %v2495
        %v2497 = vpop.f32.mrb[0].mxu0
        %2498 = vmatprep.mubr.bf16.mxu0 0
        %2499 = vmatmul.mubr.bf16.gmra.mrb[0].mxu0 %v2279
        %v2500 = vpop.f32.mrb[0].mxu0
        %v2501 = vadd.f32 0.0, %v2500
        %v2502 = vpop.f32.mrb[0].mxu0
        %v2503 = vpop.f32.mrb[0].mxu0
        %v2504 = vadd.f32 0.0, %v2503
        %v2505 = vpop.f32.mrb[0].mxu0
        %2506 = vmatprep.mubr.bf16.mxu0 0
        %2507 = vmatmul.mubr.bf16.gmra.mrb[0].mxu0 %v2280
        %v2508 = vpop.f32.mrb[0].mxu0
        %v2509 = vadd.f32 0.0, %v2508
        %v2510 = vpop.f32.mrb[0].mxu0
        %v2511 = vpop.f32.mrb[0].mxu0
        %v2512 = vadd.f32 0.0, %v2511
        %v2513 = vpop.f32.mrb[0].mxu0
        %2514 = vmatprep.mubr.bf16.mxu0 0
        %2515 = vmatmul.mubr.bf16.gmra.mrb[0].mxu0 %v2281
        %v2516 = vpop.f32.mrb[0].mxu0
        %v2517 = vadd.f32 0.0, %v2516
        %v2518 = vpop.f32.mrb[0].mxu0
        %v2519 = vpop.f32.mrb[0].mxu0
        %v2520 = vadd.f32 0.0, %v2519
        %v2521 = vpop.f32.mrb[0].mxu0
        %2522 = vmatprep.mubr.bf16.mxu0 0
        %2523 = vmatmul.mubr.bf16.gmra.mrb[0].mxu0 %v2282
        %v2524 = vpop.f32.mrb[0].mxu0
        %v2525 = vadd.f32 0.0, %v2524
        %v2526 = vpop.f32.mrb[0].mxu0
        %v2527 = vpop.f32.mrb[0].mxu0
        %v2528 = vadd.f32 0.0, %v2527
        %v2529 = vpop.f32.mrb[0].mxu0
        %2530 = vmatprep.mubr.bf16.mxu0 0
        %2531 = vmatmul.mubr.bf16.gmra.mrb[0].mxu0 %v2283
        %v2532 = vpop.f32.mrb[0].mxu0
        %v2533 = vadd.f32 0.0, %v2532
        %v2534 = vpop.f32.mrb[0].mxu0
        %v2535 = vpop.f32.mrb[0].mxu0
        %v2536 = vadd.f32 0.0, %v2535
        %v2537 = vpop.f32.mrb[0].mxu0
        %2538 = vmatprep.mubr.bf16.mxu0 0
        %2539 = vmatmul.mubr.bf16.gmra.mrb[0].mxu0 %v2284
        %v2540 = vpop.f32.mrb[0].mxu0
        %v2541 = vadd.f32 0.0, %v2540
        %v2542 = vpop.f32.mrb[0].mxu0
        %v2543 = vpop.f32.mrb[0].mxu0
        %v2544 = vadd.f32 0.0, %v2543
        %v2545 = vpop.f32.mrb[0].mxu0
        %2546 = vmatprep.mubr.bf16.mxu0 0
        %2547 = vmatmul.mubr.bf16.gmra.mrb[0].mxu0 %v2285
        %v2548 = vpop.f32.mrb[0].mxu0
        %v2549 = vadd.f32 0.0, %v2548
        %v2550 = vpop.f32.mrb[0].mxu0
        %v2551 = vpop.f32.mrb[0].mxu0
        %v2552 = vadd.f32 0.0, %v2551
        %v2553 = vpop.f32.mrb[0].mxu0
        %2554 = vmatprep.mubr.bf16.mxu0 0
        %2555 = vmatmul.mubr.bf16.gmra.mrb[0].mxu0 %v2286
        %v2556 = vpop.f32.mrb[0].mxu0
        %v2557 = vadd.f32 0.0, %v2556
        %v2558 = vpop.f32.mrb[0].mxu0
        %v2559 = vpop.f32.mrb[0].mxu0
        %v2560 = vadd.f32 0.0, %v2559
        %v2561 = vpop.f32.mrb[0].mxu0
        %2562 = vmatprep.mubr.bf16.mxu0 0
        %2563 = vmatmul.mubr.bf16.gmra.mrb[0].mxu0 %v2287
        %v2564 = vpop.f32.mrb[0].mxu0
        %v2565 = vadd.f32 0.0, %v2564
        %v2566 = vpop.f32.mrb[0].mxu0
        %v2567 = vpop.f32.mrb[0].mxu0
        %v2568 = vadd.f32 0.0, %v2567
        %v2569 = vpop.f32.mrb[0].mxu0
        %2570 = vmatprep.mubr.bf16.mxu0 0
        %2571 = vmatmul.mubr.bf16.gmra.mrb[0].mxu0 %v2288
        %v2572 = vpop.f32.mrb[0].mxu0
        %v2573 = vadd.f32 0.0, %v2572
        %v2574 = vpop.f32.mrb[0].mxu0
        %v2575 = vpop.f32.mrb[0].mxu0
        %v2576 = vadd.f32 0.0, %v2575
        %v2577 = vpop.f32.mrb[0].mxu0
        %2578 = vdwg.mxu0
        %v2579 = vld [vmem:[#allocation3] sm:$0xff]
        %v2580 = vld [vmem:[#allocation3 + $0x8] sm:$0xff]
        %v2581 = vld [vmem:[#allocation3 + $0x10] sm:$0xff]
        %v2582 = vld [vmem:[#allocation3 + $0x18] sm:$0xff]
        %v2583 = vld [vmem:[#allocation3 + $0x20] sm:$0xff]
        %v2584 = vld [vmem:[#allocation3 + $0x28] sm:$0xff]
        %v2585 = vld [vmem:[#allocation3 + $0x30] sm:$0xff]
        %v2586 = vld [vmem:[#allocation3 + $0x38] sm:$0xff]
        %v2587 = vld [vmem:[#allocation3 + $0x40] sm:$0xff]
        %v2588 = vld [vmem:[#allocation3 + $0x48] sm:$0xff]
        %v2589 = vld [vmem:[#allocation3 + $0x50] sm:$0xff]
        %v2590 = vld [vmem:[#allocation3 + $0x58] sm:$0xff]
        %v2591 = vld [vmem:[#allocation3 + $0x60] sm:$0xff]
        %v2592 = vld [vmem:[#allocation3 + $0x68] sm:$0xff]
        %v2593 = vld [vmem:[#allocation3 + $0x70] sm:$0xff]
        %v2594 = vld [vmem:[#allocation3 + $0x78] sm:$0xff]
        %v2595 = vld [vmem:[#allocation3 + $0x80] sm:$0xff]
        %v2596 = vld [vmem:[#allocation3 + $0x88] sm:$0xff]
        %v2597 = vld [vmem:[#allocation3 + $0x90] sm:$0xff]
        %v2598 = vld [vmem:[#allocation3 + $0x98] sm:$0xff]
        %v2599 = vld [vmem:[#allocation3 + $0xa0] sm:$0xff]
        %v2600 = vld [vmem:[#allocation3 + $0xa8] sm:$0xff]
        %v2601 = vld [vmem:[#allocation3 + $0xb0] sm:$0xff]
        %v2602 = vld [vmem:[#allocation3 + $0xb8] sm:$0xff]
        %v2603 = vld [vmem:[#allocation3 + $0xc0] sm:$0xff]
        %v2604 = vld [vmem:[#allocation3 + $0xc8] sm:$0xff]
        %v2605 = vld [vmem:[#allocation3 + $0xd0] sm:$0xff]
        %v2606 = vld [vmem:[#allocation3 + $0xd8] sm:$0xff]
        %v2607 = vld [vmem:[#allocation3 + $0xe0] sm:$0xff]
        %v2608 = vld [vmem:[#allocation3 + $0xe8] sm:$0xff]
        %v2609 = vld [vmem:[#allocation3 + $0xf0] sm:$0xff]
        %v2610 = vld [vmem:[#allocation3 + $0xf8] sm:$0xff]
        %v2611 = vld [vmem:[#allocation3 + $0x100] sm:$0xff]
        %v2612 = vld [vmem:[#allocation3 + $0x108] sm:$0xff]
        %v2613 = vld [vmem:[#allocation3 + $0x110] sm:$0xff]
        %v2614 = vld [vmem:[#allocation3 + $0x118] sm:$0xff]
        %v2615 = vld [vmem:[#allocation3 + $0x120] sm:$0xff]
        %v2616 = vld [vmem:[#allocation3 + $0x128] sm:$0xff]
        %v2617 = vld [vmem:[#allocation3 + $0x130] sm:$0xff]
        %v2618 = vld [vmem:[#allocation3 + $0x138] sm:$0xff]
        %v2619 = vld [vmem:[#allocation3 + $0x140] sm:$0xff]
        %v2620 = vld [vmem:[#allocation3 + $0x148] sm:$0xff]
        %v2621 = vld [vmem:[#allocation3 + $0x150] sm:$0xff]
        %v2622 = vld [vmem:[#allocation3 + $0x158] sm:$0xff]
        %v2623 = vld [vmem:[#allocation3 + $0x160] sm:$0xff]
        %v2624 = vld [vmem:[#allocation3 + $0x168] sm:$0xff]
        %v2625 = vld [vmem:[#allocation3 + $0x170] sm:$0xff]
        %v2626 = vld [vmem:[#allocation3 + $0x178] sm:$0xff]
        %v2627 = vadd.f32 %v2579, %v2389
        %v2628 = vadd.f32 %v2580, %v2392
        %v2629 = vadd.f32 %v2581, %v2397
        %v2630 = vadd.f32 %v2582, %v2400
        %v2631 = vadd.f32 %v2583, %v2405
        %v2632 = vadd.f32 %v2584, %v2408
        %v2633 = vadd.f32 %v2585, %v2413
        %v2634 = vadd.f32 %v2586, %v2416
        %v2635 = vadd.f32 %v2587, %v2421
        %v2636 = vadd.f32 %v2588, %v2424
        %v2637 = vadd.f32 %v2589, %v2429
        %v2638 = vadd.f32 %v2590, %v2432
        %v2639 = vadd.f32 %v2591, %v2437
        %v2640 = vadd.f32 %v2592, %v2440
        %v2641 = vadd.f32 %v2593, %v2445
        %v2642 = vadd.f32 %v2594, %v2448
        %v2643 = vadd.f32 %v2595, %v2453
        %v2644 = vadd.f32 %v2596, %v2456
        %v2645 = vadd.f32 %v2597, %v2461
        %v2646 = vadd.f32 %v2598, %v2464
        %v2647 = vadd.f32 %v2599, %v2469
        %v2648 = vadd.f32 %v2600, %v2472
        %v2649 = vadd.f32 %v2601, %v2477
        %v2650 = vadd.f32 %v2602, %v2480
        %v2651 = vadd.f32 %v2603, %v2485
        %v2652 = vadd.f32 %v2604, %v2488
        %v2653 = vadd.f32 %v2605, %v2493
        %v2654 = vadd.f32 %v2606, %v2496
        %v2655 = vadd.f32 %v2607, %v2501
        %v2656 = vadd.f32 %v2608, %v2504
        %v2657 = vadd.f32 %v2609, %v2509
        %v2658 = vadd.f32 %v2610, %v2512
        %v2659 = vadd.f32 %v2611, %v2517
        %v2660 = vadd.f32 %v2612, %v2520
        %v2661 = vadd.f32 %v2613, %v2525
        %v2662 = vadd.f32 %v2614, %v2528
        %v2663 = vadd.f32 %v2615, %v2533
        %v2664 = vadd.f32 %v2616, %v2536
        %v2665 = vadd.f32 %v2617, %v2541
        %v2666 = vadd.f32 %v2618, %v2544
        %v2667 = vadd.f32 %v2619, %v2549
        %v2668 = vadd.f32 %v2620, %v2552
        %v2669 = vadd.f32 %v2621, %v2557
        %v2670 = vadd.f32 %v2622, %v2560
        %v2671 = vadd.f32 %v2623, %v2565
        %v2672 = vadd.f32 %v2624, %v2568
        %v2673 = vadd.f32 %v2625, %v2573
        %v2674 = vadd.f32 %v2626, %v2576
        %2675 = vst [vmem:[#allocation3] sm:$0xff] %v2627
        %2676 = vst [vmem:[#allocation3 + $0x8] sm:$0xff] %v2628
        %2677 = vst [vmem:[#allocation3 + $0x10] sm:$0xff] %v2629
        %2678 = vst [vmem:[#allocation3 + $0x18] sm:$0xff] %v2630
        %2679 = vst [vmem:[#allocation3 + $0x20] sm:$0xff] %v2631
        %2680 = vst [vmem:[#allocation3 + $0x28] sm:$0xff] %v2632
        %2681 = vst [vmem:[#allocation3 + $0x30] sm:$0xff] %v2633
        %2682 = vst [vmem:[#allocation3 + $0x38] sm:$0xff] %v2634
        %2683 = vst [vmem:[#allocation3 + $0x40] sm:$0xff] %v2635
        %2684 = vst [vmem:[#allocation3 + $0x48] sm:$0xff] %v2636
        %2685 = vst [vmem:[#allocation3 + $0x50] sm:$0xff] %v2637
        %2686 = vst [vmem:[#allocation3 + $0x58] sm:$0xff] %v2638
        %2687 = vst [vmem:[#allocation3 + $0x60] sm:$0xff] %v2639
        %2688 = vst [vmem:[#allocation3 + $0x68] sm:$0xff] %v2640
        %2689 = vst [vmem:[#allocation3 + $0x70] sm:$0xff] %v2641
        %2690 = vst [vmem:[#allocation3 + $0x78] sm:$0xff] %v2642
        %2691 = vst [vmem:[#allocation3 + $0x80] sm:$0xff] %v2643
        %2692 = vst [vmem:[#allocation3 + $0x88] sm:$0xff] %v2644
        %2693 = vst [vmem:[#allocation3 + $0x90] sm:$0xff] %v2645
        %2694 = vst [vmem:[#allocation3 + $0x98] sm:$0xff] %v2646
        %2695 = vst [vmem:[#allocation3 + $0xa0] sm:$0xff] %v2647
        %2696 = vst [vmem:[#allocation3 + $0xa8] sm:$0xff] %v2648
        %2697 = vst [vmem:[#allocation3 + $0xb0] sm:$0xff] %v2649
        %2698 = vst [vmem:[#allocation3 + $0xb8] sm:$0xff] %v2650
        %2699 = vst [vmem:[#allocation3 + $0xc0] sm:$0xff] %v2651
        %2700 = vst [vmem:[#allocation3 + $0xc8] sm:$0xff] %v2652
        %2701 = vst [vmem:[#allocation3 + $0xd0] sm:$0xff] %v2653
        %2702 = vst [vmem:[#allocation3 + $0xd8] sm:$0xff] %v2654
        %2703 = vst [vmem:[#allocation3 + $0xe0] sm:$0xff] %v2655
        %2704 = vst [vmem:[#allocation3 + $0xe8] sm:$0xff] %v2656
        %2705 = vst [vmem:[#allocation3 + $0xf0] sm:$0xff] %v2657
        %2706 = vst [vmem:[#allocation3 + $0xf8] sm:$0xff] %v2658
        %2707 = vst [vmem:[#allocation3 + $0x100] sm:$0xff] %v2659
        %2708 = vst [vmem:[#allocation3 + $0x108] sm:$0xff] %v2660
        %2709 = vst [vmem:[#allocation3 + $0x110] sm:$0xff] %v2661
        %2710 = vst [vmem:[#allocation3 + $0x118] sm:$0xff] %v2662
        %2711 = vst [vmem:[#allocation3 + $0x120] sm:$0xff] %v2663
        %2712 = vst [vmem:[#allocation3 + $0x128] sm:$0xff] %v2664
        %2713 = vst [vmem:[#allocation3 + $0x130] sm:$0xff] %v2665
        %2714 = vst [vmem:[#allocation3 + $0x138] sm:$0xff] %v2666
        %2715 = vst [vmem:[#allocation3 + $0x140] sm:$0xff] %v2667
        %2716 = vst [vmem:[#allocation3 + $0x148] sm:$0xff] %v2668
        %2717 = vst [vmem:[#allocation3 + $0x150] sm:$0xff] %v2669
        %2718 = vst [vmem:[#allocation3 + $0x158] sm:$0xff] %v2670
        %2719 = vst [vmem:[#allocation3 + $0x160] sm:$0xff] %v2671
        %2720 = vst [vmem:[#allocation3 + $0x168] sm:$0xff] %v2672
        %2721 = vst [vmem:[#allocation3 + $0x170] sm:$0xff] %v2673
        %2722 = vst [vmem:[#allocation3 + $0x178] sm:$0xff] %v2674
        %v2723 = vld [vmem:[#allocation2 + $0x20] sm:$0xff]
        %v2724 = vld [vmem:[#allocation2 + $0x28] sm:$0xff]
        %v2725 = vld [vmem:[#allocation2 + $0x30] sm:$0xff]
        %v2726 = vld [vmem:[#allocation2 + $0x38] sm:$0xff]
        %v2727 = vld [vmem:[#allocation2 + $0x40] sm:$0xff]
        %v2728 = vld [vmem:[#allocation2 + $0x48] sm:$0xff]
        %v2729 = vld [vmem:[#allocation2 + $0x50] sm:$0xff]
        %v2730 = vld [vmem:[#allocation2 + $0x58] sm:$0xff]
        %v2731 = vld [vmem:[#allocation2 + $0x60] sm:$0xff]
        %v2732 = vld [vmem:[#allocation2 + $0x68] sm:$0xff]
        %v2733 = vld [vmem:[#allocation2 + $0x70] sm:$0xff]
        %v2734 = vld [vmem:[#allocation2 + $0x78] sm:$0xff]
        %v2735 = vld [vmem:[#allocation2 + $0x80] sm:$0xff]
        %v2736 = vld [vmem:[#allocation2 + $0x88] sm:$0xff]
        %v2737 = vld [vmem:[#allocation2 + $0x90] sm:$0xff]
        %v2738 = vld [vmem:[#allocation2 + $0x98] sm:$0xff]
        %v2739 = vld [vmem:[#allocation2 + $0xa0] sm:$0xff]
        %v2740 = vld [vmem:[#allocation2 + $0xa8] sm:$0xff]
        %v2741 = vld [vmem:[#allocation2 + $0xb0] sm:$0xff]
        %v2742 = vld [vmem:[#allocation2 + $0xb8] sm:$0xff]
        %v2743 = vld [vmem:[#allocation2 + $0xc0] sm:$0xff]
        %v2744 = vld [vmem:[#allocation2 + $0xc8] sm:$0xff]
        %v2745 = vld [vmem:[#allocation2 + $0xd0] sm:$0xff]
        %v2746 = vld [vmem:[#allocation2 + $0xd8] sm:$0xff]
        %v2747 = vld [vmem:[#allocation2 + $0xe0] sm:$0xff]
        %v2748 = vld [vmem:[#allocation2 + $0xe8] sm:$0xff]
        %v2749 = vld [vmem:[#allocation2 + $0xf0] sm:$0xff]
        %v2750 = vld [vmem:[#allocation2 + $0xf8] sm:$0xff]
        %v2751 = vld [vmem:[#allocation2 + $0x100] sm:$0xff]
        %v2752 = vld [vmem:[#allocation2 + $0x108] sm:$0xff]
        %v2753 = vld [vmem:[#allocation2 + $0x110] sm:$0xff]
        %v2754 = vld [vmem:[#allocation2 + $0x118] sm:$0xff]
        %v2755 = vld [vmem:[#allocation2 + $0x120] sm:$0xff]
        %v2756 = vld [vmem:[#allocation2 + $0x128] sm:$0xff]
        %v2757 = vld [vmem:[#allocation2 + $0x130] sm:$0xff]
        %v2758 = vld [vmem:[#allocation2 + $0x138] sm:$0xff]
        %v2759 = vld [vmem:[#allocation2 + $0x140] sm:$0xff]
        %v2760 = vld [vmem:[#allocation2 + $0x148] sm:$0xff]
        %v2761 = vld [vmem:[#allocation2 + $0x150] sm:$0xff]
        %v2762 = vld [vmem:[#allocation2 + $0x158] sm:$0xff]
        %v2763 = vld [vmem:[#allocation2 + $0x160] sm:$0xff]
        %v2764 = vld [vmem:[#allocation2 + $0x168] sm:$0xff]
        %v2765 = vld [vmem:[#allocation2 + $0x170] sm:$0xff]
        %v2766 = vld [vmem:[#allocation2 + $0x178] sm:$0xff]
        %v2767 = vld [vmem:[#allocation2 + $0x180] sm:$0xff]
        %v2768 = vld [vmem:[#allocation2 + $0x188] sm:$0xff]
        %v2769 = vld [vmem:[#allocation2 + $0x190] sm:$0xff]
        %v2770 = vld [vmem:[#allocation2 + $0x198] sm:$0xff]
        %v2771 = vpack.c.bf16 %v2724, %v2723
        %v2772 = vpack.c.bf16 %v2726, %v2725
        %v2773 = vpack.c.bf16 %v2728, %v2727
        %v2774 = vpack.c.bf16 %v2730, %v2729
        %v2775 = vpack.c.bf16 %v2732, %v2731
        %v2776 = vpack.c.bf16 %v2734, %v2733
        %v2777 = vpack.c.bf16 %v2736, %v2735
        %v2778 = vpack.c.bf16 %v2738, %v2737
        %v2779 = vpack.c.bf16 %v2740, %v2739
        %v2780 = vpack.c.bf16 %v2742, %v2741
        %v2781 = vpack.c.bf16 %v2744, %v2743
        %v2782 = vpack.c.bf16 %v2746, %v2745
        %v2783 = vpack.c.bf16 %v2748, %v2747
        %v2784 = vpack.c.bf16 %v2750, %v2749
        %v2785 = vpack.c.bf16 %v2752, %v2751
        %v2786 = vpack.c.bf16 %v2754, %v2753
        %v2787 = vpack.c.bf16 %v2756, %v2755
        %v2788 = vpack.c.bf16 %v2758, %v2757
        %v2789 = vpack.c.bf16 %v2760, %v2759
        %v2790 = vpack.c.bf16 %v2762, %v2761
        %v2791 = vpack.c.bf16 %v2764, %v2763
        %v2792 = vpack.c.bf16 %v2766, %v2765
        %v2793 = vpack.c.bf16 %v2768, %v2767
        %v2794 = vpack.c.bf16 %v2770, %v2769
        %s2795 = scalar_lea.vmem %s3, 256
        %v2796 = vld [vmem:[%s2795] sm:$0xf]
        %v2797 = vld [vmem:[%s2795 + $0x4] sm:$0xf]
        %v2798 = vld [vmem:[%s2795 + $0x8] sm:$0xf]
        %v2799 = vld [vmem:[%s2795 + $0xc] sm:$0xf]
        %v2800 = vld [vmem:[%s2795 + $0x10] sm:$0xf]
        %v2801 = vld [vmem:[%s2795 + $0x14] sm:$0xf]
        %v2802 = vld [vmem:[%s2795 + $0x18] sm:$0xf]
        %v2803 = vld [vmem:[%s2795 + $0x1c] sm:$0xf]
        %v2804 = vld [vmem:[%s2795 + $0x20] sm:$0xf]
        %v2805 = vld [vmem:[%s2795 + $0x24] sm:$0xf]
        %v2806 = vld [vmem:[%s2795 + $0x28] sm:$0xf]
        %v2807 = vld [vmem:[%s2795 + $0x2c] sm:$0xf]
        %v2808 = vld [vmem:[%s2795 + $0x30] sm:$0xf]
        %v2809 = vld [vmem:[%s2795 + $0x34] sm:$0xf]
        %v2810 = vld [vmem:[%s2795 + $0x38] sm:$0xf]
        %v2811 = vld [vmem:[%s2795 + $0x3c] sm:$0xf]
        %v2828 = vunpack.c.l.b16 %v2796
        %v2829 = vunpack.c.l.b16 %v2797
        %v2830 = vunpack.c.l.b16 %v2798
        %v2831 = vunpack.c.l.b16 %v2799
        %v2832 = vunpack.c.l.b16 %v2800
        %v2833 = vunpack.c.l.b16 %v2801
        %v2834 = vunpack.c.l.b16 %v2802
        %v2835 = vunpack.c.l.b16 %v2803
        %v2836 = vunpack.c.l.b16 %v2804
        %v2837 = vunpack.c.l.b16 %v2805
        %v2838 = vunpack.c.l.b16 %v2806
        %v2839 = vunpack.c.l.b16 %v2807
        %v2840 = vunpack.c.l.b16 %v2808
        %v2841 = vunpack.c.l.b16 %v2809
        %v2842 = vunpack.c.l.b16 %v2810
        %v2843 = vunpack.c.l.b16 %v2811
        %v2844 = vpack.c.b16 %v2829, %v2828
        %v2845 = vpack.c.b16 %v2831, %v2830
        %v2846 = vpack.c.b16 %v2833, %v2832
        %v2847 = vpack.c.b16 %v2835, %v2834
        %v2848 = vpack.c.b16 %v2837, %v2836
        %v2849 = vpack.c.b16 %v2839, %v2838
        %v2850 = vpack.c.b16 %v2841, %v2840
        %v2851 = vpack.c.b16 %v2843, %v2842
        %2860 = vmatprep.subr.bf16.mxu0 0
        %2861 = vmatpush1.bf16.msra.mxu0 %v2844
        %2862 = vmatprep.subr.bf16.mxu0 0
        %2863 = vmatpush1.bf16.msra.mxu0 %v2845
        %2864 = vmatprep.subr.bf16.mxu0 0
        %2865 = vmatpush1.bf16.msra.mxu0 %v2846
        %2866 = vmatprep.subr.bf16.mxu0 0
        %2867 = vmatpush1.bf16.msra.mxu0 %v2847
        %2868 = vmatprep.subr.bf16.mxu0 0
        %2869 = vmatpush1.bf16.msra.mxu0 %v2848
        %2870 = vmatprep.subr.bf16.mxu0 0
        %2871 = vmatpush1.bf16.msra.mxu0 %v2849
        %2872 = vmatprep.subr.bf16.mxu0 0
        %2873 = vmatpush1.bf16.msra.mxu0 %v2850
        %2874 = vmatprep.subr.bf16.mxu0 0
        %2875 = vmatpush1.bf16.msra.mxu0 %v2851
        %2876 = vmatprep.subr.bf16.mxu0 0
        %2877 = vmatpush1.bf16.msra.mxu0 0
        %2878 = vmatprep.subr.bf16.mxu0 0
        %2879 = vmatpush1.bf16.msra.mxu0 0
        %2880 = vmatprep.subr.bf16.mxu0 0
        %2881 = vmatpush1.bf16.msra.mxu0 0
        %2882 = vmatprep.subr.bf16.mxu0 0
        %2883 = vmatpush1.bf16.msra.mxu0 0
        %2884 = vmatprep.subr.bf16.mxu0 0
        %2885 = vmatpush1.bf16.msra.mxu0 0
        %2886 = vmatprep.subr.bf16.mxu0 0
        %2887 = vmatpush1.bf16.msra.mxu0 0
        %2888 = vmatprep.subr.bf16.mxu0 0
        %2889 = vmatpush1.bf16.msra.mxu0 0
        %2890 = vmatprep.subr.bf16.mxu0 0
        %2891 = vmatpush1.bf16.msra.mxu0 0
        %2892 = vmatprep.mubr.bf16.mxu0 0
        %2893 = vmatmul.mubr.bf16.gmra.mrb[0].mxu0 %v2771
        %v2894 = vpop.f32.mrb[0].mxu0
        %v2895 = vadd.f32 0.0, %v2894
        %v2896 = vpop.f32.mrb[0].mxu0
        %v2897 = vpop.f32.mrb[0].mxu0
        %v2898 = vadd.f32 0.0, %v2897
        %v2899 = vpop.f32.mrb[0].mxu0
        %2900 = vmatprep.mubr.bf16.mxu0 0
        %2901 = vmatmul.mubr.bf16.gmra.mrb[0].mxu0 %v2772
        %v2902 = vpop.f32.mrb[0].mxu0
        %v2903 = vadd.f32 0.0, %v2902
        %v2904 = vpop.f32.mrb[0].mxu0
        %v2905 = vpop.f32.mrb[0].mxu0
        %v2906 = vadd.f32 0.0, %v2905
        %v2907 = vpop.f32.mrb[0].mxu0
        %2908 = vmatprep.mubr.bf16.mxu0 0
        %2909 = vmatmul.mubr.bf16.gmra.mrb[0].mxu0 %v2773
        %v2910 = vpop.f32.mrb[0].mxu0
        %v2911 = vadd.f32 0.0, %v2910
        %v2912 = vpop.f32.mrb[0].mxu0
        %v2913 = vpop.f32.mrb[0].mxu0
        %v2914 = vadd.f32 0.0, %v2913
        %v2915 = vpop.f32.mrb[0].mxu0
        %2916 = vmatprep.mubr.bf16.mxu0 0
        %2917 = vmatmul.mubr.bf16.gmra.mrb[0].mxu0 %v2774
        %v2918 = vpop.f32.mrb[0].mxu0
        %v2919 = vadd.f32 0.0, %v2918
        %v2920 = vpop.f32.mrb[0].mxu0
        %v2921 = vpop.f32.mrb[0].mxu0
        %v2922 = vadd.f32 0.0, %v2921
        %v2923 = vpop.f32.mrb[0].mxu0
        %2924 = vmatprep.mubr.bf16.mxu0 0
        %2925 = vmatmul.mubr.bf16.gmra.mrb[0].mxu0 %v2775
        %v2926 = vpop.f32.mrb[0].mxu0
        %v2927 = vadd.f32 0.0, %v2926
        %v2928 = vpop.f32.mrb[0].mxu0
        %v2929 = vpop.f32.mrb[0].mxu0
        %v2930 = vadd.f32 0.0, %v2929
        %v2931 = vpop.f32.mrb[0].mxu0
        %2932 = vmatprep.mubr.bf16.mxu0 0
        %2933 = vmatmul.mubr.bf16.gmra.mrb[0].mxu0 %v2776
        %v2934 = vpop.f32.mrb[0].mxu0
        %v2935 = vadd.f32 0.0, %v2934
        %v2936 = vpop.f32.mrb[0].mxu0
        %v2937 = vpop.f32.mrb[0].mxu0
        %v2938 = vadd.f32 0.0, %v2937
        %v2939 = vpop.f32.mrb[0].mxu0
        %2940 = vmatprep.mubr.bf16.mxu0 0
        %2941 = vmatmul.mubr.bf16.gmra.mrb[0].mxu0 %v2777
        %v2942 = vpop.f32.mrb[0].mxu0
        %v2943 = vadd.f32 0.0, %v2942
        %v2944 = vpop.f32.mrb[0].mxu0
        %v2945 = vpop.f32.mrb[0].mxu0
        %v2946 = vadd.f32 0.0, %v2945
        %v2947 = vpop.f32.mrb[0].mxu0
        %2948 = vmatprep.mubr.bf16.mxu0 0
        %2949 = vmatmul.mubr.bf16.gmra.mrb[0].mxu0 %v2778
        %v2950 = vpop.f32.mrb[0].mxu0
        %v2951 = vadd.f32 0.0, %v2950
        %v2952 = vpop.f32.mrb[0].mxu0
        %v2953 = vpop.f32.mrb[0].mxu0
        %v2954 = vadd.f32 0.0, %v2953
        %v2955 = vpop.f32.mrb[0].mxu0
        %2956 = vmatprep.mubr.bf16.mxu0 0
        %2957 = vmatmul.mubr.bf16.gmra.mrb[0].mxu0 %v2779
        %v2958 = vpop.f32.mrb[0].mxu0
        %v2959 = vadd.f32 0.0, %v2958
        %v2960 = vpop.f32.mrb[0].mxu0
        %v2961 = vpop.f32.mrb[0].mxu0
        %v2962 = vadd.f32 0.0, %v2961
        %v2963 = vpop.f32.mrb[0].mxu0
        %2964 = vmatprep.mubr.bf16.mxu0 0
        %2965 = vmatmul.mubr.bf16.gmra.mrb[0].mxu0 %v2780
        %v2966 = vpop.f32.mrb[0].mxu0
        %v2967 = vadd.f32 0.0, %v2966
        %v2968 = vpop.f32.mrb[0].mxu0
        %v2969 = vpop.f32.mrb[0].mxu0
        %v2970 = vadd.f32 0.0, %v2969
        %v2971 = vpop.f32.mrb[0].mxu0
        %2972 = vmatprep.mubr.bf16.mxu0 0
        %2973 = vmatmul.mubr.bf16.gmra.mrb[0].mxu0 %v2781
        %v2974 = vpop.f32.mrb[0].mxu0
        %v2975 = vadd.f32 0.0, %v2974
        %v2976 = vpop.f32.mrb[0].mxu0
        %v2977 = vpop.f32.mrb[0].mxu0
        %v2978 = vadd.f32 0.0, %v2977
        %v2979 = vpop.f32.mrb[0].mxu0
        %2980 = vmatprep.mubr.bf16.mxu0 0
        %2981 = vmatmul.mubr.bf16.gmra.mrb[0].mxu0 %v2782
        %v2982 = vpop.f32.mrb[0].mxu0
        %v2983 = vadd.f32 0.0, %v2982
        %v2984 = vpop.f32.mrb[0].mxu0
        %v2985 = vpop.f32.mrb[0].mxu0
        %v2986 = vadd.f32 0.0, %v2985
        %v2987 = vpop.f32.mrb[0].mxu0
        %2988 = vmatprep.mubr.bf16.mxu0 0
        %2989 = vmatmul.mubr.bf16.gmra.mrb[0].mxu0 %v2783
        %v2990 = vpop.f32.mrb[0].mxu0
        %v2991 = vadd.f32 0.0, %v2990
        %v2992 = vpop.f32.mrb[0].mxu0
        %v2993 = vpop.f32.mrb[0].mxu0
        %v2994 = vadd.f32 0.0, %v2993
        %v2995 = vpop.f32.mrb[0].mxu0
        %2996 = vmatprep.mubr.bf16.mxu0 0
        %2997 = vmatmul.mubr.bf16.gmra.mrb[0].mxu0 %v2784
        %v2998 = vpop.f32.mrb[0].mxu0
        %v2999 = vadd.f32 0.0, %v2998
        %v3000 = vpop.f32.mrb[0].mxu0
        %v3001 = vpop.f32.mrb[0].mxu0
        %v3002 = vadd.f32 0.0, %v3001
        %v3003 = vpop.f32.mrb[0].mxu0
        %3004 = vmatprep.mubr.bf16.mxu0 0
        %3005 = vmatmul.mubr.bf16.gmra.mrb[0].mxu0 %v2785
        %v3006 = vpop.f32.mrb[0].mxu0
        %v3007 = vadd.f32 0.0, %v3006
        %v3008 = vpop.f32.mrb[0].mxu0
        %v3009 = vpop.f32.mrb[0].mxu0
        %v3010 = vadd.f32 0.0, %v3009
        %v3011 = vpop.f32.mrb[0].mxu0
        %3012 = vmatprep.mubr.bf16.mxu0 0
        %3013 = vmatmul.mubr.bf16.gmra.mrb[0].mxu0 %v2786
        %v3014 = vpop.f32.mrb[0].mxu0
        %v3015 = vadd.f32 0.0, %v3014
        %v3016 = vpop.f32.mrb[0].mxu0
        %v3017 = vpop.f32.mrb[0].mxu0
        %v3018 = vadd.f32 0.0, %v3017
        %v3019 = vpop.f32.mrb[0].mxu0
        %3020 = vmatprep.mubr.bf16.mxu0 0
        %3021 = vmatmul.mubr.bf16.gmra.mrb[0].mxu0 %v2787
        %v3022 = vpop.f32.mrb[0].mxu0
        %v3023 = vadd.f32 0.0, %v3022
        %v3024 = vpop.f32.mrb[0].mxu0
        %v3025 = vpop.f32.mrb[0].mxu0
        %v3026 = vadd.f32 0.0, %v3025
        %v3027 = vpop.f32.mrb[0].mxu0
        %3028 = vmatprep.mubr.bf16.mxu0 0
        %3029 = vmatmul.mubr.bf16.gmra.mrb[0].mxu0 %v2788
        %v3030 = vpop.f32.mrb[0].mxu0
        %v3031 = vadd.f32 0.0, %v3030
        %v3032 = vpop.f32.mrb[0].mxu0
        %v3033 = vpop.f32.mrb[0].mxu0
        %v3034 = vadd.f32 0.0, %v3033
        %v3035 = vpop.f32.mrb[0].mxu0
        %3036 = vmatprep.mubr.bf16.mxu0 0
        %3037 = vmatmul.mubr.bf16.gmra.mrb[0].mxu0 %v2789
        %v3038 = vpop.f32.mrb[0].mxu0
        %v3039 = vadd.f32 0.0, %v3038
        %v3040 = vpop.f32.mrb[0].mxu0
        %v3041 = vpop.f32.mrb[0].mxu0
        %v3042 = vadd.f32 0.0, %v3041
        %v3043 = vpop.f32.mrb[0].mxu0
        %3044 = vmatprep.mubr.bf16.mxu0 0
        %3045 = vmatmul.mubr.bf16.gmra.mrb[0].mxu0 %v2790
        %v3046 = vpop.f32.mrb[0].mxu0
        %v3047 = vadd.f32 0.0, %v3046
        %v3048 = vpop.f32.mrb[0].mxu0
        %v3049 = vpop.f32.mrb[0].mxu0
        %v3050 = vadd.f32 0.0, %v3049
        %v3051 = vpop.f32.mrb[0].mxu0
        %3052 = vmatprep.mubr.bf16.mxu0 0
        %3053 = vmatmul.mubr.bf16.gmra.mrb[0].mxu0 %v2791
        %v3054 = vpop.f32.mrb[0].mxu0
        %v3055 = vadd.f32 0.0, %v3054
        %v3056 = vpop.f32.mrb[0].mxu0
        %v3057 = vpop.f32.mrb[0].mxu0
        %v3058 = vadd.f32 0.0, %v3057
        %v3059 = vpop.f32.mrb[0].mxu0
        %3060 = vmatprep.mubr.bf16.mxu0 0
        %3061 = vmatmul.mubr.bf16.gmra.mrb[0].mxu0 %v2792
        %v3062 = vpop.f32.mrb[0].mxu0
        %v3063 = vadd.f32 0.0, %v3062
        %v3064 = vpop.f32.mrb[0].mxu0
        %v3065 = vpop.f32.mrb[0].mxu0
        %v3066 = vadd.f32 0.0, %v3065
        %v3067 = vpop.f32.mrb[0].mxu0
        %3068 = vmatprep.mubr.bf16.mxu0 0
        %3069 = vmatmul.mubr.bf16.gmra.mrb[0].mxu0 %v2793
        %v3070 = vpop.f32.mrb[0].mxu0
        %v3071 = vadd.f32 0.0, %v3070
        %v3072 = vpop.f32.mrb[0].mxu0
        %v3073 = vpop.f32.mrb[0].mxu0
        %v3074 = vadd.f32 0.0, %v3073
        %v3075 = vpop.f32.mrb[0].mxu0
        %3076 = vmatprep.mubr.bf16.mxu0 0
        %3077 = vmatmul.mubr.bf16.gmra.mrb[0].mxu0 %v2794
        %v3078 = vpop.f32.mrb[0].mxu0
        %v3079 = vadd.f32 0.0, %v3078
        %v3080 = vpop.f32.mrb[0].mxu0
        %v3081 = vpop.f32.mrb[0].mxu0
        %v3082 = vadd.f32 0.0, %v3081
        %v3083 = vpop.f32.mrb[0].mxu0
        %3084 = vdwg.mxu0
        %v3085 = vld [vmem:[#allocation3] sm:$0xff]
        %v3086 = vld [vmem:[#allocation3 + $0x8] sm:$0xff]
        %v3087 = vld [vmem:[#allocation3 + $0x10] sm:$0xff]
        %v3088 = vld [vmem:[#allocation3 + $0x18] sm:$0xff]
        %v3089 = vld [vmem:[#allocation3 + $0x20] sm:$0xff]
        %v3090 = vld [vmem:[#allocation3 + $0x28] sm:$0xff]
        %v3091 = vld [vmem:[#allocation3 + $0x30] sm:$0xff]
        %v3092 = vld [vmem:[#allocation3 + $0x38] sm:$0xff]
        %v3093 = vld [vmem:[#allocation3 + $0x40] sm:$0xff]
        %v3094 = vld [vmem:[#allocation3 + $0x48] sm:$0xff]
        %v3095 = vld [vmem:[#allocation3 + $0x50] sm:$0xff]
        %v3096 = vld [vmem:[#allocation3 + $0x58] sm:$0xff]
        %v3097 = vld [vmem:[#allocation3 + $0x60] sm:$0xff]
        %v3098 = vld [vmem:[#allocation3 + $0x68] sm:$0xff]
        %v3099 = vld [vmem:[#allocation3 + $0x70] sm:$0xff]
        %v3100 = vld [vmem:[#allocation3 + $0x78] sm:$0xff]
        %v3101 = vld [vmem:[#allocation3 + $0x80] sm:$0xff]
        %v3102 = vld [vmem:[#allocation3 + $0x88] sm:$0xff]
        %v3103 = vld [vmem:[#allocation3 + $0x90] sm:$0xff]
        %v3104 = vld [vmem:[#allocation3 + $0x98] sm:$0xff]
        %v3105 = vld [vmem:[#allocation3 + $0xa0] sm:$0xff]
        %v3106 = vld [vmem:[#allocation3 + $0xa8] sm:$0xff]
        %v3107 = vld [vmem:[#allocation3 + $0xb0] sm:$0xff]
        %v3108 = vld [vmem:[#allocation3 + $0xb8] sm:$0xff]
        %v3109 = vld [vmem:[#allocation3 + $0xc0] sm:$0xff]
        %v3110 = vld [vmem:[#allocation3 + $0xc8] sm:$0xff]
        %v3111 = vld [vmem:[#allocation3 + $0xd0] sm:$0xff]
        %v3112 = vld [vmem:[#allocation3 + $0xd8] sm:$0xff]
        %v3113 = vld [vmem:[#allocation3 + $0xe0] sm:$0xff]
        %v3114 = vld [vmem:[#allocation3 + $0xe8] sm:$0xff]
        %v3115 = vld [vmem:[#allocation3 + $0xf0] sm:$0xff]
        %v3116 = vld [vmem:[#allocation3 + $0xf8] sm:$0xff]
        %v3117 = vld [vmem:[#allocation3 + $0x100] sm:$0xff]
        %v3118 = vld [vmem:[#allocation3 + $0x108] sm:$0xff]
        %v3119 = vld [vmem:[#allocation3 + $0x110] sm:$0xff]
        %v3120 = vld [vmem:[#allocation3 + $0x118] sm:$0xff]
        %v3121 = vld [vmem:[#allocation3 + $0x120] sm:$0xff]
        %v3122 = vld [vmem:[#allocation3 + $0x128] sm:$0xff]
        %v3123 = vld [vmem:[#allocation3 + $0x130] sm:$0xff]
        %v3124 = vld [vmem:[#allocation3 + $0x138] sm:$0xff]
        %v3125 = vld [vmem:[#allocation3 + $0x140] sm:$0xff]
        %v3126 = vld [vmem:[#allocation3 + $0x148] sm:$0xff]
        %v3127 = vld [vmem:[#allocation3 + $0x150] sm:$0xff]
        %v3128 = vld [vmem:[#allocation3 + $0x158] sm:$0xff]
        %v3129 = vld [vmem:[#allocation3 + $0x160] sm:$0xff]
        %v3130 = vld [vmem:[#allocation3 + $0x168] sm:$0xff]
        %v3131 = vld [vmem:[#allocation3 + $0x170] sm:$0xff]
        %v3132 = vld [vmem:[#allocation3 + $0x178] sm:$0xff]
        %v3133 = vadd.f32 %v3085, %v2895
        %v3134 = vadd.f32 %v3086, %v2898
        %v3135 = vadd.f32 %v3087, %v2903
        %v3136 = vadd.f32 %v3088, %v2906
        %v3137 = vadd.f32 %v3089, %v2911
        %v3138 = vadd.f32 %v3090, %v2914
        %v3139 = vadd.f32 %v3091, %v2919
        %v3140 = vadd.f32 %v3092, %v2922
        %v3141 = vadd.f32 %v3093, %v2927
        %v3142 = vadd.f32 %v3094, %v2930
        %v3143 = vadd.f32 %v3095, %v2935
        %v3144 = vadd.f32 %v3096, %v2938
        %v3145 = vadd.f32 %v3097, %v2943
        %v3146 = vadd.f32 %v3098, %v2946
        %v3147 = vadd.f32 %v3099, %v2951
        %v3148 = vadd.f32 %v3100, %v2954
        %v3149 = vadd.f32 %v3101, %v2959
        %v3150 = vadd.f32 %v3102, %v2962
        %v3151 = vadd.f32 %v3103, %v2967
        %v3152 = vadd.f32 %v3104, %v2970
        %v3153 = vadd.f32 %v3105, %v2975
        %v3154 = vadd.f32 %v3106, %v2978
        %v3155 = vadd.f32 %v3107, %v2983
        %v3156 = vadd.f32 %v3108, %v2986
        %v3157 = vadd.f32 %v3109, %v2991
        %v3158 = vadd.f32 %v3110, %v2994
        %v3159 = vadd.f32 %v3111, %v2999
        %v3160 = vadd.f32 %v3112, %v3002
        %v3161 = vadd.f32 %v3113, %v3007
        %v3162 = vadd.f32 %v3114, %v3010
        %v3163 = vadd.f32 %v3115, %v3015
        %v3164 = vadd.f32 %v3116, %v3018
        %v3165 = vadd.f32 %v3117, %v3023
        %v3166 = vadd.f32 %v3118, %v3026
        %v3167 = vadd.f32 %v3119, %v3031
        %v3168 = vadd.f32 %v3120, %v3034
        %v3169 = vadd.f32 %v3121, %v3039
        %v3170 = vadd.f32 %v3122, %v3042
        %v3171 = vadd.f32 %v3123, %v3047
        %v3172 = vadd.f32 %v3124, %v3050
        %v3173 = vadd.f32 %v3125, %v3055
        %v3174 = vadd.f32 %v3126, %v3058
        %v3175 = vadd.f32 %v3127, %v3063
        %v3176 = vadd.f32 %v3128, %v3066
        %v3177 = vadd.f32 %v3129, %v3071
        %v3178 = vadd.f32 %v3130, %v3074
        %v3179 = vadd.f32 %v3131, %v3079
        %v3180 = vadd.f32 %v3132, %v3082
        %3181 = vst [vmem:[#allocation3] sm:$0xff] %v3133
        %3182 = vst [vmem:[#allocation3 + $0x8] sm:$0xff] %v3134
        %3183 = vst [vmem:[#allocation3 + $0x10] sm:$0xff] %v3135
        %3184 = vst [vmem:[#allocation3 + $0x18] sm:$0xff] %v3136
        %3185 = vst [vmem:[#allocation3 + $0x20] sm:$0xff] %v3137
        %3186 = vst [vmem:[#allocation3 + $0x28] sm:$0xff] %v3138
        %3187 = vst [vmem:[#allocation3 + $0x30] sm:$0xff] %v3139
        %3188 = vst [vmem:[#allocation3 + $0x38] sm:$0xff] %v3140
        %3189 = vst [vmem:[#allocation3 + $0x40] sm:$0xff] %v3141
        %3190 = vst [vmem:[#allocation3 + $0x48] sm:$0xff] %v3142
        %3191 = vst [vmem:[#allocation3 + $0x50] sm:$0xff] %v3143
        %3192 = vst [vmem:[#allocation3 + $0x58] sm:$0xff] %v3144
        %3193 = vst [vmem:[#allocation3 + $0x60] sm:$0xff] %v3145
        %3194 = vst [vmem:[#allocation3 + $0x68] sm:$0xff] %v3146
        %3195 = vst [vmem:[#allocation3 + $0x70] sm:$0xff] %v3147
        %3196 = vst [vmem:[#allocation3 + $0x78] sm:$0xff] %v3148
        %3197 = vst [vmem:[#allocation3 + $0x80] sm:$0xff] %v3149
        %3198 = vst [vmem:[#allocation3 + $0x88] sm:$0xff] %v3150
        %3199 = vst [vmem:[#allocation3 + $0x90] sm:$0xff] %v3151
        %3200 = vst [vmem:[#allocation3 + $0x98] sm:$0xff] %v3152
        %3201 = vst [vmem:[#allocation3 + $0xa0] sm:$0xff] %v3153
        %3202 = vst [vmem:[#allocation3 + $0xa8] sm:$0xff] %v3154
        %3203 = vst [vmem:[#allocation3 + $0xb0] sm:$0xff] %v3155
        %3204 = vst [vmem:[#allocation3 + $0xb8] sm:$0xff] %v3156
        %3205 = vst [vmem:[#allocation3 + $0xc0] sm:$0xff] %v3157
        %3206 = vst [vmem:[#allocation3 + $0xc8] sm:$0xff] %v3158
        %3207 = vst [vmem:[#allocation3 + $0xd0] sm:$0xff] %v3159
        %3208 = vst [vmem:[#allocation3 + $0xd8] sm:$0xff] %v3160
        %3209 = vst [vmem:[#allocation3 + $0xe0] sm:$0xff] %v3161
        %3210 = vst [vmem:[#allocation3 + $0xe8] sm:$0xff] %v3162
        %3211 = vst [vmem:[#allocation3 + $0xf0] sm:$0xff] %v3163
        %3212 = vst [vmem:[#allocation3 + $0xf8] sm:$0xff] %v3164
        %3213 = vst [vmem:[#allocation3 + $0x100] sm:$0xff] %v3165
        %3214 = vst [vmem:[#allocation3 + $0x108] sm:$0xff] %v3166
        %3215 = vst [vmem:[#allocation3 + $0x110] sm:$0xff] %v3167
        %3216 = vst [vmem:[#allocation3 + $0x118] sm:$0xff] %v3168
        %3217 = vst [vmem:[#allocation3 + $0x120] sm:$0xff] %v3169
        %3218 = vst [vmem:[#allocation3 + $0x128] sm:$0xff] %v3170
        %3219 = vst [vmem:[#allocation3 + $0x130] sm:$0xff] %v3171
        %3220 = vst [vmem:[#allocation3 + $0x138] sm:$0xff] %v3172
        %3221 = vst [vmem:[#allocation3 + $0x140] sm:$0xff] %v3173
        %3222 = vst [vmem:[#allocation3 + $0x148] sm:$0xff] %v3174
        %3223 = vst [vmem:[#allocation3 + $0x150] sm:$0xff] %v3175
        %3224 = vst [vmem:[#allocation3 + $0x158] sm:$0xff] %v3176
        %3225 = vst [vmem:[#allocation3 + $0x160] sm:$0xff] %v3177
        %3226 = vst [vmem:[#allocation3 + $0x168] sm:$0xff] %v3178
        %3227 = vst [vmem:[#allocation3 + $0x170] sm:$0xff] %v3179
        %3228 = vst [vmem:[#allocation3 + $0x178] sm:$0xff] %v3180
        %v3229 = vld [vmem:[#allocation2 + $0x21] sm:$0xff]
        %v3230 = vld [vmem:[#allocation2 + $0x29] sm:$0xff]
        %v3231 = vld [vmem:[#allocation2 + $0x31] sm:$0xff]
        %v3232 = vld [vmem:[#allocation2 + $0x39] sm:$0xff]
        %v3233 = vld [vmem:[#allocation2 + $0x41] sm:$0xff]
        %v3234 = vld [vmem:[#allocation2 + $0x49] sm:$0xff]
        %v3235 = vld [vmem:[#allocation2 + $0x51] sm:$0xff]
        %v3236 = vld [vmem:[#allocation2 + $0x59] sm:$0xff]
        %v3237 = vld [vmem:[#allocation2 + $0x61] sm:$0xff]
        %v3238 = vld [vmem:[#allocation2 + $0x69] sm:$0xff]
        %v3239 = vld [vmem:[#allocation2 + $0x71] sm:$0xff]
        %v3240 = vld [vmem:[#allocation2 + $0x79] sm:$0xff]
        %v3241 = vld [vmem:[#allocation2 + $0x81] sm:$0xff]
        %v3242 = vld [vmem:[#allocation2 + $0x89] sm:$0xff]
        %v3243 = vld [vmem:[#allocation2 + $0x91] sm:$0xff]
        %v3244 = vld [vmem:[#allocation2 + $0x99] sm:$0xff]
        %v3245 = vld [vmem:[#allocation2 + $0xa1] sm:$0xff]
        %v3246 = vld [vmem:[#allocation2 + $0xa9] sm:$0xff]
        %v3247 = vld [vmem:[#allocation2 + $0xb1] sm:$0xff]
        %v3248 = vld [vmem:[#allocation2 + $0xb9] sm:$0xff]
        %v3249 = vld [vmem:[#allocation2 + $0xc1] sm:$0xff]
        %v3250 = vld [vmem:[#allocation2 + $0xc9] sm:$0xff]
        %v3251 = vld [vmem:[#allocation2 + $0xd1] sm:$0xff]
        %v3252 = vld [vmem:[#allocation2 + $0xd9] sm:$0xff]
        %v3253 = vld [vmem:[#allocation2 + $0xe1] sm:$0xff]
        %v3254 = vld [vmem:[#allocation2 + $0xe9] sm:$0xff]
        %v3255 = vld [vmem:[#allocation2 + $0xf1] sm:$0xff]
        %v3256 = vld [vmem:[#allocation2 + $0xf9] sm:$0xff]
        %v3257 = vld [vmem:[#allocation2 + $0x101] sm:$0xff]
        %v3258 = vld [vmem:[#allocation2 + $0x109] sm:$0xff]
        %v3259 = vld [vmem:[#allocation2 + $0x111] sm:$0xff]
        %v3260 = vld [vmem:[#allocation2 + $0x119] sm:$0xff]
        %v3261 = vld [vmem:[#allocation2 + $0x121] sm:$0xff]
        %v3262 = vld [vmem:[#allocation2 + $0x129] sm:$0xff]
        %v3263 = vld [vmem:[#allocation2 + $0x131] sm:$0xff]
        %v3264 = vld [vmem:[#allocation2 + $0x139] sm:$0xff]
        %v3265 = vld [vmem:[#allocation2 + $0x141] sm:$0xff]
        %v3266 = vld [vmem:[#allocation2 + $0x149] sm:$0xff]
        %v3267 = vld [vmem:[#allocation2 + $0x151] sm:$0xff]
        %v3268 = vld [vmem:[#allocation2 + $0x159] sm:$0xff]
        %v3269 = vld [vmem:[#allocation2 + $0x161] sm:$0xff]
        %v3270 = vld [vmem:[#allocation2 + $0x169] sm:$0xff]
        %v3271 = vld [vmem:[#allocation2 + $0x171] sm:$0xff]
        %v3272 = vld [vmem:[#allocation2 + $0x179] sm:$0xff]
        %v3273 = vld [vmem:[#allocation2 + $0x181] sm:$0xff]
        %v3274 = vld [vmem:[#allocation2 + $0x189] sm:$0xff]
        %v3275 = vld [vmem:[#allocation2 + $0x191] sm:$0xff]
        %v3276 = vld [vmem:[#allocation2 + $0x199] sm:$0xff]
        %v3277 = vpack.c.bf16 %v3230, %v3229
        %v3278 = vpack.c.bf16 %v3232, %v3231
        %v3279 = vpack.c.bf16 %v3234, %v3233
        %v3280 = vpack.c.bf16 %v3236, %v3235
        %v3281 = vpack.c.bf16 %v3238, %v3237
        %v3282 = vpack.c.bf16 %v3240, %v3239
        %v3283 = vpack.c.bf16 %v3242, %v3241
        %v3284 = vpack.c.bf16 %v3244, %v3243
        %v3285 = vpack.c.bf16 %v3246, %v3245
        %v3286 = vpack.c.bf16 %v3248, %v3247
        %v3287 = vpack.c.bf16 %v3250, %v3249
        %v3288 = vpack.c.bf16 %v3252, %v3251
        %v3289 = vpack.c.bf16 %v3254, %v3253
        %v3290 = vpack.c.bf16 %v3256, %v3255
        %v3291 = vpack.c.bf16 %v3258, %v3257
        %v3292 = vpack.c.bf16 %v3260, %v3259
        %v3293 = vpack.c.bf16 %v3262, %v3261
        %v3294 = vpack.c.bf16 %v3264, %v3263
        %v3295 = vpack.c.bf16 %v3266, %v3265
        %v3296 = vpack.c.bf16 %v3268, %v3267
        %v3297 = vpack.c.bf16 %v3270, %v3269
        %v3298 = vpack.c.bf16 %v3272, %v3271
        %v3299 = vpack.c.bf16 %v3274, %v3273
        %v3300 = vpack.c.bf16 %v3276, %v3275
        %s3301 = scalar_lea.vmem %s3, 320
        %v3302 = vld [vmem:[%s3301] sm:$0xf]
        %v3303 = vld [vmem:[%s3301 + $0x4] sm:$0xf]
        %v3304 = vld [vmem:[%s3301 + $0x8] sm:$0xf]
        %v3305 = vld [vmem:[%s3301 + $0xc] sm:$0xf]
        %v3306 = vld [vmem:[%s3301 + $0x10] sm:$0xf]
        %v3307 = vld [vmem:[%s3301 + $0x14] sm:$0xf]
        %v3308 = vld [vmem:[%s3301 + $0x18] sm:$0xf]
        %v3309 = vld [vmem:[%s3301 + $0x1c] sm:$0xf]
        %v3310 = vld [vmem:[%s3301 + $0x20] sm:$0xf]
        %v3311 = vld [vmem:[%s3301 + $0x24] sm:$0xf]
        %v3312 = vld [vmem:[%s3301 + $0x28] sm:$0xf]
        %v3313 = vld [vmem:[%s3301 + $0x2c] sm:$0xf]
        %v3314 = vld [vmem:[%s3301 + $0x30] sm:$0xf]
        %v3315 = vld [vmem:[%s3301 + $0x34] sm:$0xf]
        %v3316 = vld [vmem:[%s3301 + $0x38] sm:$0xf]
        %v3317 = vld [vmem:[%s3301 + $0x3c] sm:$0xf]
        %v3334 = vunpack.c.l.b16 %v3302
        %v3335 = vunpack.c.l.b16 %v3303
        %v3336 = vunpack.c.l.b16 %v3304
        %v3337 = vunpack.c.l.b16 %v3305
        %v3338 = vunpack.c.l.b16 %v3306
        %v3339 = vunpack.c.l.b16 %v3307
        %v3340 = vunpack.c.l.b16 %v3308
        %v3341 = vunpack.c.l.b16 %v3309
        %v3342 = vunpack.c.l.b16 %v3310
        %v3343 = vunpack.c.l.b16 %v3311
        %v3344 = vunpack.c.l.b16 %v3312
        %v3345 = vunpack.c.l.b16 %v3313
        %v3346 = vunpack.c.l.b16 %v3314
        %v3347 = vunpack.c.l.b16 %v3315
        %v3348 = vunpack.c.l.b16 %v3316
        %v3349 = vunpack.c.l.b16 %v3317
        %v3350 = vpack.c.b16 %v3335, %v3334
        %v3351 = vpack.c.b16 %v3337, %v3336
        %v3352 = vpack.c.b16 %v3339, %v3338
        %v3353 = vpack.c.b16 %v3341, %v3340
        %v3354 = vpack.c.b16 %v3343, %v3342
        %v3355 = vpack.c.b16 %v3345, %v3344
        %v3356 = vpack.c.b16 %v3347, %v3346
        %v3357 = vpack.c.b16 %v3349, %v3348
        %3366 = vmatprep.subr.bf16.mxu0 0
        %3367 = vmatpush1.bf16.msra.mxu0 %v3350
        %3368 = vmatprep.subr.bf16.mxu0 0
        %3369 = vmatpush1.bf16.msra.mxu0 %v3351
        %3370 = vmatprep.subr.bf16.mxu0 0
        %3371 = vmatpush1.bf16.msra.mxu0 %v3352
        %3372 = vmatprep.subr.bf16.mxu0 0
        %3373 = vmatpush1.bf16.msra.mxu0 %v3353
        %3374 = vmatprep.subr.bf16.mxu0 0
        %3375 = vmatpush1.bf16.msra.mxu0 %v3354
        %3376 = vmatprep.subr.bf16.mxu0 0
        %3377 = vmatpush1.bf16.msra.mxu0 %v3355
        %3378 = vmatprep.subr.bf16.mxu0 0
        %3379 = vmatpush1.bf16.msra.mxu0 %v3356
        %3380 = vmatprep.subr.bf16.mxu0 0
        %3381 = vmatpush1.bf16.msra.mxu0 %v3357
        %3382 = vmatprep.subr.bf16.mxu0 0
        %3383 = vmatpush1.bf16.msra.mxu0 0
        %3384 = vmatprep.subr.bf16.mxu0 0
        %3385 = vmatpush1.bf16.msra.mxu0 0
        %3386 = vmatprep.subr.bf16.mxu0 0
        %3387 = vmatpush1.bf16.msra.mxu0 0
        %3388 = vmatprep.subr.bf16.mxu0 0
        %3389 = vmatpush1.bf16.msra.mxu0 0
        %3390 = vmatprep.subr.bf16.mxu0 0
        %3391 = vmatpush1.bf16.msra.mxu0 0
        %3392 = vmatprep.subr.bf16.mxu0 0
        %3393 = vmatpush1.bf16.msra.mxu0 0
        %3394 = vmatprep.subr.bf16.mxu0 0
        %3395 = vmatpush1.bf16.msra.mxu0 0
        %3396 = vmatprep.subr.bf16.mxu0 0
        %3397 = vmatpush1.bf16.msra.mxu0 0
        %3398 = vmatprep.mubr.bf16.mxu0 0
        %3399 = vmatmul.mubr.bf16.gmra.mrb[0].mxu0 %v3277
        %v3400 = vpop.f32.mrb[0].mxu0
        %v3401 = vadd.f32 0.0, %v3400
        %v3402 = vpop.f32.mrb[0].mxu0
        %v3403 = vpop.f32.mrb[0].mxu0
        %v3404 = vadd.f32 0.0, %v3403
        %v3405 = vpop.f32.mrb[0].mxu0
        %3406 = vmatprep.mubr.bf16.mxu0 0
        %3407 = vmatmul.mubr.bf16.gmra.mrb[0].mxu0 %v3278
        %v3408 = vpop.f32.mrb[0].mxu0
        %v3409 = vadd.f32 0.0, %v3408
        %v3410 = vpop.f32.mrb[0].mxu0
        %v3411 = vpop.f32.mrb[0].mxu0
        %v3412 = vadd.f32 0.0, %v3411
        %v3413 = vpop.f32.mrb[0].mxu0
        %3414 = vmatprep.mubr.bf16.mxu0 0
        %3415 = vmatmul.mubr.bf16.gmra.mrb[0].mxu0 %v3279
        %v3416 = vpop.f32.mrb[0].mxu0
        %v3417 = vadd.f32 0.0, %v3416
        %v3418 = vpop.f32.mrb[0].mxu0
        %v3419 = vpop.f32.mrb[0].mxu0
        %v3420 = vadd.f32 0.0, %v3419
        %v3421 = vpop.f32.mrb[0].mxu0
        %3422 = vmatprep.mubr.bf16.mxu0 0
        %3423 = vmatmul.mubr.bf16.gmra.mrb[0].mxu0 %v3280
        %v3424 = vpop.f32.mrb[0].mxu0
        %v3425 = vadd.f32 0.0, %v3424
        %v3426 = vpop.f32.mrb[0].mxu0
        %v3427 = vpop.f32.mrb[0].mxu0
        %v3428 = vadd.f32 0.0, %v3427
        %v3429 = vpop.f32.mrb[0].mxu0
        %3430 = vmatprep.mubr.bf16.mxu0 0
        %3431 = vmatmul.mubr.bf16.gmra.mrb[0].mxu0 %v3281
        %v3432 = vpop.f32.mrb[0].mxu0
        %v3433 = vadd.f32 0.0, %v3432
        %v3434 = vpop.f32.mrb[0].mxu0
        %v3435 = vpop.f32.mrb[0].mxu0
        %v3436 = vadd.f32 0.0, %v3435
        %v3437 = vpop.f32.mrb[0].mxu0
        %3438 = vmatprep.mubr.bf16.mxu0 0
        %3439 = vmatmul.mubr.bf16.gmra.mrb[0].mxu0 %v3282
        %v3440 = vpop.f32.mrb[0].mxu0
        %v3441 = vadd.f32 0.0, %v3440
        %v3442 = vpop.f32.mrb[0].mxu0
        %v3443 = vpop.f32.mrb[0].mxu0
        %v3444 = vadd.f32 0.0, %v3443
        %v3445 = vpop.f32.mrb[0].mxu0
        %3446 = vmatprep.mubr.bf16.mxu0 0
        %3447 = vmatmul.mubr.bf16.gmra.mrb[0].mxu0 %v3283
        %v3448 = vpop.f32.mrb[0].mxu0
        %v3449 = vadd.f32 0.0, %v3448
        %v3450 = vpop.f32.mrb[0].mxu0
        %v3451 = vpop.f32.mrb[0].mxu0
        %v3452 = vadd.f32 0.0, %v3451
        %v3453 = vpop.f32.mrb[0].mxu0
        %3454 = vmatprep.mubr.bf16.mxu0 0
        %3455 = vmatmul.mubr.bf16.gmra.mrb[0].mxu0 %v3284
        %v3456 = vpop.f32.mrb[0].mxu0
        %v3457 = vadd.f32 0.0, %v3456
        %v3458 = vpop.f32.mrb[0].mxu0
        %v3459 = vpop.f32.mrb[0].mxu0
        %v3460 = vadd.f32 0.0, %v3459
        %v3461 = vpop.f32.mrb[0].mxu0
        %3462 = vmatprep.mubr.bf16.mxu0 0
        %3463 = vmatmul.mubr.bf16.gmra.mrb[0].mxu0 %v3285
        %v3464 = vpop.f32.mrb[0].mxu0
        %v3465 = vadd.f32 0.0, %v3464
        %v3466 = vpop.f32.mrb[0].mxu0
        %v3467 = vpop.f32.mrb[0].mxu0
        %v3468 = vadd.f32 0.0, %v3467
        %v3469 = vpop.f32.mrb[0].mxu0
        %3470 = vmatprep.mubr.bf16.mxu0 0
        %3471 = vmatmul.mubr.bf16.gmra.mrb[0].mxu0 %v3286
        %v3472 = vpop.f32.mrb[0].mxu0
        %v3473 = vadd.f32 0.0, %v3472
        %v3474 = vpop.f32.mrb[0].mxu0
        %v3475 = vpop.f32.mrb[0].mxu0
        %v3476 = vadd.f32 0.0, %v3475
        %v3477 = vpop.f32.mrb[0].mxu0
        %3478 = vmatprep.mubr.bf16.mxu0 0
        %3479 = vmatmul.mubr.bf16.gmra.mrb[0].mxu0 %v3287
        %v3480 = vpop.f32.mrb[0].mxu0
        %v3481 = vadd.f32 0.0, %v3480
        %v3482 = vpop.f32.mrb[0].mxu0
        %v3483 = vpop.f32.mrb[0].mxu0
        %v3484 = vadd.f32 0.0, %v3483
        %v3485 = vpop.f32.mrb[0].mxu0
        %3486 = vmatprep.mubr.bf16.mxu0 0
        %3487 = vmatmul.mubr.bf16.gmra.mrb[0].mxu0 %v3288
        %v3488 = vpop.f32.mrb[0].mxu0
        %v3489 = vadd.f32 0.0, %v3488
        %v3490 = vpop.f32.mrb[0].mxu0
        %v3491 = vpop.f32.mrb[0].mxu0
        %v3492 = vadd.f32 0.0, %v3491
        %v3493 = vpop.f32.mrb[0].mxu0
        %3494 = vmatprep.mubr.bf16.mxu0 0
        %3495 = vmatmul.mubr.bf16.gmra.mrb[0].mxu0 %v3289
        %v3496 = vpop.f32.mrb[0].mxu0
        %v3497 = vadd.f32 0.0, %v3496
        %v3498 = vpop.f32.mrb[0].mxu0
        %v3499 = vpop.f32.mrb[0].mxu0
        %v3500 = vadd.f32 0.0, %v3499
        %v3501 = vpop.f32.mrb[0].mxu0
        %3502 = vmatprep.mubr.bf16.mxu0 0
        %3503 = vmatmul.mubr.bf16.gmra.mrb[0].mxu0 %v3290
        %v3504 = vpop.f32.mrb[0].mxu0
        %v3505 = vadd.f32 0.0, %v3504
        %v3506 = vpop.f32.mrb[0].mxu0
        %v3507 = vpop.f32.mrb[0].mxu0
        %v3508 = vadd.f32 0.0, %v3507
        %v3509 = vpop.f32.mrb[0].mxu0
        %3510 = vmatprep.mubr.bf16.mxu0 0
        %3511 = vmatmul.mubr.bf16.gmra.mrb[0].mxu0 %v3291
        %v3512 = vpop.f32.mrb[0].mxu0
        %v3513 = vadd.f32 0.0, %v3512
        %v3514 = vpop.f32.mrb[0].mxu0
        %v3515 = vpop.f32.mrb[0].mxu0
        %v3516 = vadd.f32 0.0, %v3515
        %v3517 = vpop.f32.mrb[0].mxu0
        %3518 = vmatprep.mubr.bf16.mxu0 0
        %3519 = vmatmul.mubr.bf16.gmra.mrb[0].mxu0 %v3292
        %v3520 = vpop.f32.mrb[0].mxu0
        %v3521 = vadd.f32 0.0, %v3520
        %v3522 = vpop.f32.mrb[0].mxu0
        %v3523 = vpop.f32.mrb[0].mxu0
        %v3524 = vadd.f32 0.0, %v3523
        %v3525 = vpop.f32.mrb[0].mxu0
        %3526 = vmatprep.mubr.bf16.mxu0 0
        %3527 = vmatmul.mubr.bf16.gmra.mrb[0].mxu0 %v3293
        %v3528 = vpop.f32.mrb[0].mxu0
        %v3529 = vadd.f32 0.0, %v3528
        %v3530 = vpop.f32.mrb[0].mxu0
        %v3531 = vpop.f32.mrb[0].mxu0
        %v3532 = vadd.f32 0.0, %v3531
        %v3533 = vpop.f32.mrb[0].mxu0
        %3534 = vmatprep.mubr.bf16.mxu0 0
        %3535 = vmatmul.mubr.bf16.gmra.mrb[0].mxu0 %v3294
        %v3536 = vpop.f32.mrb[0].mxu0
        %v3537 = vadd.f32 0.0, %v3536
        %v3538 = vpop.f32.mrb[0].mxu0
        %v3539 = vpop.f32.mrb[0].mxu0
        %v3540 = vadd.f32 0.0, %v3539
        %v3541 = vpop.f32.mrb[0].mxu0
        %3542 = vmatprep.mubr.bf16.mxu0 0
        %3543 = vmatmul.mubr.bf16.gmra.mrb[0].mxu0 %v3295
        %v3544 = vpop.f32.mrb[0].mxu0
        %v3545 = vadd.f32 0.0, %v3544
        %v3546 = vpop.f32.mrb[0].mxu0
        %v3547 = vpop.f32.mrb[0].mxu0
        %v3548 = vadd.f32 0.0, %v3547
        %v3549 = vpop.f32.mrb[0].mxu0
        %3550 = vmatprep.mubr.bf16.mxu0 0
        %3551 = vmatmul.mubr.bf16.gmra.mrb[0].mxu0 %v3296
        %v3552 = vpop.f32.mrb[0].mxu0
        %v3553 = vadd.f32 0.0, %v3552
        %v3554 = vpop.f32.mrb[0].mxu0
        %v3555 = vpop.f32.mrb[0].mxu0
        %v3556 = vadd.f32 0.0, %v3555
        %v3557 = vpop.f32.mrb[0].mxu0
        %3558 = vmatprep.mubr.bf16.mxu0 0
        %3559 = vmatmul.mubr.bf16.gmra.mrb[0].mxu0 %v3297
        %v3560 = vpop.f32.mrb[0].mxu0
        %v3561 = vadd.f32 0.0, %v3560
        %v3562 = vpop.f32.mrb[0].mxu0
        %v3563 = vpop.f32.mrb[0].mxu0
        %v3564 = vadd.f32 0.0, %v3563
        %v3565 = vpop.f32.mrb[0].mxu0
        %3566 = vmatprep.mubr.bf16.mxu0 0
        %3567 = vmatmul.mubr.bf16.gmra.mrb[0].mxu0 %v3298
        %v3568 = vpop.f32.mrb[0].mxu0
        %v3569 = vadd.f32 0.0, %v3568
        %v3570 = vpop.f32.mrb[0].mxu0
        %v3571 = vpop.f32.mrb[0].mxu0
        %v3572 = vadd.f32 0.0, %v3571
        %v3573 = vpop.f32.mrb[0].mxu0
        %3574 = vmatprep.mubr.bf16.mxu0 0
        %3575 = vmatmul.mubr.bf16.gmra.mrb[0].mxu0 %v3299
        %v3576 = vpop.f32.mrb[0].mxu0
        %v3577 = vadd.f32 0.0, %v3576
        %v3578 = vpop.f32.mrb[0].mxu0
        %v3579 = vpop.f32.mrb[0].mxu0
        %v3580 = vadd.f32 0.0, %v3579
        %v3581 = vpop.f32.mrb[0].mxu0
        %3582 = vmatprep.mubr.bf16.mxu0 0
        %3583 = vmatmul.mubr.bf16.gmra.mrb[0].mxu0 %v3300
        %v3584 = vpop.f32.mrb[0].mxu0
        %v3585 = vadd.f32 0.0, %v3584
        %v3586 = vpop.f32.mrb[0].mxu0
        %v3587 = vpop.f32.mrb[0].mxu0
        %v3588 = vadd.f32 0.0, %v3587
        %v3589 = vpop.f32.mrb[0].mxu0
        %3590 = vdwg.mxu0
        %v3591 = vld [vmem:[#allocation3] sm:$0xff]
        %v3592 = vld [vmem:[#allocation3 + $0x8] sm:$0xff]
        %v3593 = vld [vmem:[#allocation3 + $0x10] sm:$0xff]
        %v3594 = vld [vmem:[#allocation3 + $0x18] sm:$0xff]
        %v3595 = vld [vmem:[#allocation3 + $0x20] sm:$0xff]
        %v3596 = vld [vmem:[#allocation3 + $0x28] sm:$0xff]
        %v3597 = vld [vmem:[#allocation3 + $0x30] sm:$0xff]
        %v3598 = vld [vmem:[#allocation3 + $0x38] sm:$0xff]
        %v3599 = vld [vmem:[#allocation3 + $0x40] sm:$0xff]
        %v3600 = vld [vmem:[#allocation3 + $0x48] sm:$0xff]
        %v3601 = vld [vmem:[#allocation3 + $0x50] sm:$0xff]
        %v3602 = vld [vmem:[#allocation3 + $0x58] sm:$0xff]
        %v3603 = vld [vmem:[#allocation3 + $0x60] sm:$0xff]
        %v3604 = vld [vmem:[#allocation3 + $0x68] sm:$0xff]
        %v3605 = vld [vmem:[#allocation3 + $0x70] sm:$0xff]
        %v3606 = vld [vmem:[#allocation3 + $0x78] sm:$0xff]
        %v3607 = vld [vmem:[#allocation3 + $0x80] sm:$0xff]
        %v3608 = vld [vmem:[#allocation3 + $0x88] sm:$0xff]
        %v3609 = vld [vmem:[#allocation3 + $0x90] sm:$0xff]
        %v3610 = vld [vmem:[#allocation3 + $0x98] sm:$0xff]
        %v3611 = vld [vmem:[#allocation3 + $0xa0] sm:$0xff]
        %v3612 = vld [vmem:[#allocation3 + $0xa8] sm:$0xff]
        %v3613 = vld [vmem:[#allocation3 + $0xb0] sm:$0xff]
        %v3614 = vld [vmem:[#allocation3 + $0xb8] sm:$0xff]
        %v3615 = vld [vmem:[#allocation3 + $0xc0] sm:$0xff]
        %v3616 = vld [vmem:[#allocation3 + $0xc8] sm:$0xff]
        %v3617 = vld [vmem:[#allocation3 + $0xd0] sm:$0xff]
        %v3618 = vld [vmem:[#allocation3 + $0xd8] sm:$0xff]
        %v3619 = vld [vmem:[#allocation3 + $0xe0] sm:$0xff]
        %v3620 = vld [vmem:[#allocation3 + $0xe8] sm:$0xff]
        %v3621 = vld [vmem:[#allocation3 + $0xf0] sm:$0xff]
        %v3622 = vld [vmem:[#allocation3 + $0xf8] sm:$0xff]
        %v3623 = vld [vmem:[#allocation3 + $0x100] sm:$0xff]
        %v3624 = vld [vmem:[#allocation3 + $0x108] sm:$0xff]
        %v3625 = vld [vmem:[#allocation3 + $0x110] sm:$0xff]
        %v3626 = vld [vmem:[#allocation3 + $0x118] sm:$0xff]
        %v3627 = vld [vmem:[#allocation3 + $0x120] sm:$0xff]
        %v3628 = vld [vmem:[#allocation3 + $0x128] sm:$0xff]
        %v3629 = vld [vmem:[#allocation3 + $0x130] sm:$0xff]
        %v3630 = vld [vmem:[#allocation3 + $0x138] sm:$0xff]
        %v3631 = vld [vmem:[#allocation3 + $0x140] sm:$0xff]
        %v3632 = vld [vmem:[#allocation3 + $0x148] sm:$0xff]
        %v3633 = vld [vmem:[#allocation3 + $0x150] sm:$0xff]
        %v3634 = vld [vmem:[#allocation3 + $0x158] sm:$0xff]
        %v3635 = vld [vmem:[#allocation3 + $0x160] sm:$0xff]
        %v3636 = vld [vmem:[#allocation3 + $0x168] sm:$0xff]
        %v3637 = vld [vmem:[#allocation3 + $0x170] sm:$0xff]
        %v3638 = vld [vmem:[#allocation3 + $0x178] sm:$0xff]
        %v3639 = vadd.f32 %v3591, %v3401
        %v3640 = vadd.f32 %v3592, %v3404
        %v3641 = vadd.f32 %v3593, %v3409
        %v3642 = vadd.f32 %v3594, %v3412
        %v3643 = vadd.f32 %v3595, %v3417
        %v3644 = vadd.f32 %v3596, %v3420
        %v3645 = vadd.f32 %v3597, %v3425
        %v3646 = vadd.f32 %v3598, %v3428
        %v3647 = vadd.f32 %v3599, %v3433
        %v3648 = vadd.f32 %v3600, %v3436
        %v3649 = vadd.f32 %v3601, %v3441
        %v3650 = vadd.f32 %v3602, %v3444
        %v3651 = vadd.f32 %v3603, %v3449
        %v3652 = vadd.f32 %v3604, %v3452
        %v3653 = vadd.f32 %v3605, %v3457
        %v3654 = vadd.f32 %v3606, %v3460
        %v3655 = vadd.f32 %v3607, %v3465
        %v3656 = vadd.f32 %v3608, %v3468
        %v3657 = vadd.f32 %v3609, %v3473
        %v3658 = vadd.f32 %v3610, %v3476
        %v3659 = vadd.f32 %v3611, %v3481
        %v3660 = vadd.f32 %v3612, %v3484
        %v3661 = vadd.f32 %v3613, %v3489
        %v3662 = vadd.f32 %v3614, %v3492
        %v3663 = vadd.f32 %v3615, %v3497
        %v3664 = vadd.f32 %v3616, %v3500
        %v3665 = vadd.f32 %v3617, %v3505
        %v3666 = vadd.f32 %v3618, %v3508
        %v3667 = vadd.f32 %v3619, %v3513
        %v3668 = vadd.f32 %v3620, %v3516
        %v3669 = vadd.f32 %v3621, %v3521
        %v3670 = vadd.f32 %v3622, %v3524
        %v3671 = vadd.f32 %v3623, %v3529
        %v3672 = vadd.f32 %v3624, %v3532
        %v3673 = vadd.f32 %v3625, %v3537
        %v3674 = vadd.f32 %v3626, %v3540
        %v3675 = vadd.f32 %v3627, %v3545
        %v3676 = vadd.f32 %v3628, %v3548
        %v3677 = vadd.f32 %v3629, %v3553
        %v3678 = vadd.f32 %v3630, %v3556
        %v3679 = vadd.f32 %v3631, %v3561
        %v3680 = vadd.f32 %v3632, %v3564
        %v3681 = vadd.f32 %v3633, %v3569
        %v3682 = vadd.f32 %v3634, %v3572
        %v3683 = vadd.f32 %v3635, %v3577
        %v3684 = vadd.f32 %v3636, %v3580
        %v3685 = vadd.f32 %v3637, %v3585
        %v3686 = vadd.f32 %v3638, %v3588
        %3687 = vst [vmem:[#allocation3] sm:$0xff] %v3639
        %3688 = vst [vmem:[#allocation3 + $0x8] sm:$0xff] %v3640
        %3689 = vst [vmem:[#allocation3 + $0x10] sm:$0xff] %v3641
        %3690 = vst [vmem:[#allocation3 + $0x18] sm:$0xff] %v3642
        %3691 = vst [vmem:[#allocation3 + $0x20] sm:$0xff] %v3643
        %3692 = vst [vmem:[#allocation3 + $0x28] sm:$0xff] %v3644
        %3693 = vst [vmem:[#allocation3 + $0x30] sm:$0xff] %v3645
        %3694 = vst [vmem:[#allocation3 + $0x38] sm:$0xff] %v3646
        %3695 = vst [vmem:[#allocation3 + $0x40] sm:$0xff] %v3647
        %3696 = vst [vmem:[#allocation3 + $0x48] sm:$0xff] %v3648
        %3697 = vst [vmem:[#allocation3 + $0x50] sm:$0xff] %v3649
        %3698 = vst [vmem:[#allocation3 + $0x58] sm:$0xff] %v3650
        %3699 = vst [vmem:[#allocation3 + $0x60] sm:$0xff] %v3651
        %3700 = vst [vmem:[#allocation3 + $0x68] sm:$0xff] %v3652
        %3701 = vst [vmem:[#allocation3 + $0x70] sm:$0xff] %v3653
        %3702 = vst [vmem:[#allocation3 + $0x78] sm:$0xff] %v3654
        %3703 = vst [vmem:[#allocation3 + $0x80] sm:$0xff] %v3655
        %3704 = vst [vmem:[#allocation3 + $0x88] sm:$0xff] %v3656
        %3705 = vst [vmem:[#allocation3 + $0x90] sm:$0xff] %v3657
        %3706 = vst [vmem:[#allocation3 + $0x98] sm:$0xff] %v3658
        %3707 = vst [vmem:[#allocation3 + $0xa0] sm:$0xff] %v3659
        %3708 = vst [vmem:[#allocation3 + $0xa8] sm:$0xff] %v3660
        %3709 = vst [vmem:[#allocation3 + $0xb0] sm:$0xff] %v3661
        %3710 = vst [vmem:[#allocation3 + $0xb8] sm:$0xff] %v3662
        %3711 = vst [vmem:[#allocation3 + $0xc0] sm:$0xff] %v3663
        %3712 = vst [vmem:[#allocation3 + $0xc8] sm:$0xff] %v3664
        %3713 = vst [vmem:[#allocation3 + $0xd0] sm:$0xff] %v3665
        %3714 = vst [vmem:[#allocation3 + $0xd8] sm:$0xff] %v3666
        %3715 = vst [vmem:[#allocation3 + $0xe0] sm:$0xff] %v3667
        %3716 = vst [vmem:[#allocation3 + $0xe8] sm:$0xff] %v3668
        %3717 = vst [vmem:[#allocation3 + $0xf0] sm:$0xff] %v3669
        %3718 = vst [vmem:[#allocation3 + $0xf8] sm:$0xff] %v3670
        %3719 = vst [vmem:[#allocation3 + $0x100] sm:$0xff] %v3671
        %3720 = vst [vmem:[#allocation3 + $0x108] sm:$0xff] %v3672
        %3721 = vst [vmem:[#allocation3 + $0x110] sm:$0xff] %v3673
        %3722 = vst [vmem:[#allocation3 + $0x118] sm:$0xff] %v3674
        %3723 = vst [vmem:[#allocation3 + $0x120] sm:$0xff] %v3675
        %3724 = vst [vmem:[#allocation3 + $0x128] sm:$0xff] %v3676
        %3725 = vst [vmem:[#allocation3 + $0x130] sm:$0xff] %v3677
        %3726 = vst [vmem:[#allocation3 + $0x138] sm:$0xff] %v3678
        %3727 = vst [vmem:[#allocation3 + $0x140] sm:$0xff] %v3679
        %3728 = vst [vmem:[#allocation3 + $0x148] sm:$0xff] %v3680
        %3729 = vst [vmem:[#allocation3 + $0x150] sm:$0xff] %v3681
        %3730 = vst [vmem:[#allocation3 + $0x158] sm:$0xff] %v3682
        %3731 = vst [vmem:[#allocation3 + $0x160] sm:$0xff] %v3683
        %3732 = vst [vmem:[#allocation3 + $0x168] sm:$0xff] %v3684
        %3733 = vst [vmem:[#allocation3 + $0x170] sm:$0xff] %v3685
        %3734 = vst [vmem:[#allocation3 + $0x178] sm:$0xff] %v3686
        %v3735 = vld [vmem:[#allocation2 + $0x37] sm:$0xff]
        %v3736 = vld [vmem:[#allocation2 + $0x3f] sm:$0xff]
        %v3737 = vld [vmem:[#allocation2 + $0x47] sm:$0xff]
        %v3738 = vld [vmem:[#allocation2 + $0x4f] sm:$0xff]
        %v3739 = vld [vmem:[#allocation2 + $0x57] sm:$0xff]
        %v3740 = vld [vmem:[#allocation2 + $0x5f] sm:$0xff]
        %v3741 = vld [vmem:[#allocation2 + $0x67] sm:$0xff]
        %v3742 = vld [vmem:[#allocation2 + $0x6f] sm:$0xff]
        %v3743 = vld [vmem:[#allocation2 + $0x77] sm:$0xff]
        %v3744 = vld [vmem:[#allocation2 + $0x7f] sm:$0xff]
        %v3745 = vld [vmem:[#allocation2 + $0x87] sm:$0xff]
        %v3746 = vld [vmem:[#allocation2 + $0x8f] sm:$0xff]
        %v3747 = vld [vmem:[#allocation2 + $0x97] sm:$0xff]
        %v3748 = vld [vmem:[#allocation2 + $0x9f] sm:$0xff]
        %v3749 = vld [vmem:[#allocation2 + $0xa7] sm:$0xff]
        %v3750 = vld [vmem:[#allocation2 + $0xaf] sm:$0xff]
        %v3751 = vld [vmem:[#allocation2 + $0xb7] sm:$0xff]
        %v3752 = vld [vmem:[#allocation2 + $0xbf] sm:$0xff]
        %v3753 = vld [vmem:[#allocation2 + $0xc7] sm:$0xff]
        %v3754 = vld [vmem:[#allocation2 + $0xcf] sm:$0xff]
        %v3755 = vld [vmem:[#allocation2 + $0xd7] sm:$0xff]
        %v3756 = vld [vmem:[#allocation2 + $0xdf] sm:$0xff]
        %v3757 = vld [vmem:[#allocation2 + $0xe7] sm:$0xff]
        %v3758 = vld [vmem:[#allocation2 + $0xef] sm:$0xff]
        %v3759 = vld [vmem:[#allocation2 + $0xf7] sm:$0xff]
        %v3760 = vld [vmem:[#allocation2 + $0xff] sm:$0xff]
        %v3761 = vld [vmem:[#allocation2 + $0x107] sm:$0xff]
        %v3762 = vld [vmem:[#allocation2 + $0x10f] sm:$0xff]
        %v3763 = vld [vmem:[#allocation2 + $0x117] sm:$0xff]
        %v3764 = vld [vmem:[#allocation2 + $0x11f] sm:$0xff]
        %v3765 = vld [vmem:[#allocation2 + $0x127] sm:$0xff]
        %v3766 = vld [vmem:[#allocation2 + $0x12f] sm:$0xff]
        %v3767 = vld [vmem:[#allocation2 + $0x137] sm:$0xff]
        %v3768 = vld [vmem:[#allocation2 + $0x13f] sm:$0xff]
        %v3769 = vld [vmem:[#allocation2 + $0x147] sm:$0xff]
        %v3770 = vld [vmem:[#allocation2 + $0x14f] sm:$0xff]
        %v3771 = vld [vmem:[#allocation2 + $0x157] sm:$0xff]
        %v3772 = vld [vmem:[#allocation2 + $0x15f] sm:$0xff]
        %v3773 = vld [vmem:[#allocation2 + $0x167] sm:$0xff]
        %v3774 = vld [vmem:[#allocation2 + $0x16f] sm:$0xff]
        %v3775 = vld [vmem:[#allocation2 + $0x177] sm:$0xff]
        %v3776 = vld [vmem:[#allocation2 + $0x17f] sm:$0xff]
        %v3777 = vld [vmem:[#allocation2 + $0x187] sm:$0xff]
        %v3778 = vld [vmem:[#allocation2 + $0x18f] sm:$0xff]
        %v3779 = vld [vmem:[#allocation2 + $0x197] sm:$0xff]
        %v3780 = vld [vmem:[#allocation2 + $0x19f] sm:$0xff]
        %v3781 = vld [vmem:[#allocation2 + $0x1a7] sm:$0xff]
        %v3782 = vld [vmem:[#allocation2 + $0x1af] sm:$0xff]
        %v3783 = vpack.c.bf16 %v3736, %v3735
        %v3784 = vpack.c.bf16 %v3738, %v3737
        %v3785 = vpack.c.bf16 %v3740, %v3739
        %v3786 = vpack.c.bf16 %v3742, %v3741
        %v3787 = vpack.c.bf16 %v3744, %v3743
        %v3788 = vpack.c.bf16 %v3746, %v3745
        %v3789 = vpack.c.bf16 %v3748, %v3747
        %v3790 = vpack.c.bf16 %v3750, %v3749
        %v3791 = vpack.c.bf16 %v3752, %v3751
        %v3792 = vpack.c.bf16 %v3754, %v3753
        %v3793 = vpack.c.bf16 %v3756, %v3755
        %v3794 = vpack.c.bf16 %v3758, %v3757
        %v3795 = vpack.c.bf16 %v3760, %v3759
        %v3796 = vpack.c.bf16 %v3762, %v3761
        %v3797 = vpack.c.bf16 %v3764, %v3763
        %v3798 = vpack.c.bf16 %v3766, %v3765
        %v3799 = vpack.c.bf16 %v3768, %v3767
        %v3800 = vpack.c.bf16 %v3770, %v3769
        %v3801 = vpack.c.bf16 %v3772, %v3771
        %v3802 = vpack.c.bf16 %v3774, %v3773
        %v3803 = vpack.c.bf16 %v3776, %v3775
        %v3804 = vpack.c.bf16 %v3778, %v3777
        %v3805 = vpack.c.bf16 %v3780, %v3779
        %v3806 = vpack.c.bf16 %v3782, %v3781
        %s3807 = scalar_lea.vmem %s3, 384
        %v3808 = vld [vmem:[%s3807] sm:$0xf]
        %v3809 = vld [vmem:[%s3807 + $0x4] sm:$0xf]
        %v3810 = vld [vmem:[%s3807 + $0x8] sm:$0xf]
        %v3811 = vld [vmem:[%s3807 + $0xc] sm:$0xf]
        %v3812 = vld [vmem:[%s3807 + $0x10] sm:$0xf]
        %v3813 = vld [vmem:[%s3807 + $0x14] sm:$0xf]
        %v3814 = vld [vmem:[%s3807 + $0x18] sm:$0xf]
        %v3815 = vld [vmem:[%s3807 + $0x1c] sm:$0xf]
        %v3816 = vld [vmem:[%s3807 + $0x20] sm:$0xf]
        %v3817 = vld [vmem:[%s3807 + $0x24] sm:$0xf]
        %v3818 = vld [vmem:[%s3807 + $0x28] sm:$0xf]
        %v3819 = vld [vmem:[%s3807 + $0x2c] sm:$0xf]
        %v3820 = vld [vmem:[%s3807 + $0x30] sm:$0xf]
        %v3821 = vld [vmem:[%s3807 + $0x34] sm:$0xf]
        %v3822 = vld [vmem:[%s3807 + $0x38] sm:$0xf]
        %v3823 = vld [vmem:[%s3807 + $0x3c] sm:$0xf]
        %v3840 = vunpack.c.l.b16 %v3808
        %v3841 = vunpack.c.l.b16 %v3809
        %v3842 = vunpack.c.l.b16 %v3810
        %v3843 = vunpack.c.l.b16 %v3811
        %v3844 = vunpack.c.l.b16 %v3812
        %v3845 = vunpack.c.l.b16 %v3813
        %v3846 = vunpack.c.l.b16 %v3814
        %v3847 = vunpack.c.l.b16 %v3815
        %v3848 = vunpack.c.l.b16 %v3816
        %v3849 = vunpack.c.l.b16 %v3817
        %v3850 = vunpack.c.l.b16 %v3818
        %v3851 = vunpack.c.l.b16 %v3819
        %v3852 = vunpack.c.l.b16 %v3820
        %v3853 = vunpack.c.l.b16 %v3821
        %v3854 = vunpack.c.l.b16 %v3822
        %v3855 = vunpack.c.l.b16 %v3823
        %v3856 = vpack.c.b16 %v3841, %v3840
        %v3857 = vpack.c.b16 %v3843, %v3842
        %v3858 = vpack.c.b16 %v3845, %v3844
        %v3859 = vpack.c.b16 %v3847, %v3846
        %v3860 = vpack.c.b16 %v3849, %v3848
        %v3861 = vpack.c.b16 %v3851, %v3850
        %v3862 = vpack.c.b16 %v3853, %v3852
        %v3863 = vpack.c.b16 %v3855, %v3854
        %3872 = vmatprep.subr.bf16.mxu0 0
        %3873 = vmatpush1.bf16.msra.mxu0 %v3856
        %3874 = vmatprep.subr.bf16.mxu0 0
        %3875 = vmatpush1.bf16.msra.mxu0 %v3857
        %3876 = vmatprep.subr.bf16.mxu0 0
        %3877 = vmatpush1.bf16.msra.mxu0 %v3858
        %3878 = vmatprep.subr.bf16.mxu0 0
        %3879 = vmatpush1.bf16.msra.mxu0 %v3859
        %3880 = vmatprep.subr.bf16.mxu0 0
        %3881 = vmatpush1.bf16.msra.mxu0 %v3860
        %3882 = vmatprep.subr.bf16.mxu0 0
        %3883 = vmatpush1.bf16.msra.mxu0 %v3861
        %3884 = vmatprep.subr.bf16.mxu0 0
        %3885 = vmatpush1.bf16.msra.mxu0 %v3862
        %3886 = vmatprep.subr.bf16.mxu0 0
        %3887 = vmatpush1.bf16.msra.mxu0 %v3863
        %3888 = vmatprep.subr.bf16.mxu0 0
        %3889 = vmatpush1.bf16.msra.mxu0 0
        %3890 = vmatprep.subr.bf16.mxu0 0
        %3891 = vmatpush1.bf16.msra.mxu0 0
        %3892 = vmatprep.subr.bf16.mxu0 0
        %3893 = vmatpush1.bf16.msra.mxu0 0
        %3894 = vmatprep.subr.bf16.mxu0 0
        %3895 = vmatpush1.bf16.msra.mxu0 0
        %3896 = vmatprep.subr.bf16.mxu0 0
        %3897 = vmatpush1.bf16.msra.mxu0 0
        %3898 = vmatprep.subr.bf16.mxu0 0
        %3899 = vmatpush1.bf16.msra.mxu0 0
        %3900 = vmatprep.subr.bf16.mxu0 0
        %3901 = vmatpush1.bf16.msra.mxu0 0
        %3902 = vmatprep.subr.bf16.mxu0 0
        %3903 = vmatpush1.bf16.msra.mxu0 0
        %3904 = vmatprep.mubr.bf16.mxu0 0
        %3905 = vmatmul.mubr.bf16.gmra.mrb[0].mxu0 %v3783
        %v3906 = vpop.f32.mrb[0].mxu0
        %v3907 = vadd.f32 0.0, %v3906
        %v3908 = vpop.f32.mrb[0].mxu0
        %v3909 = vpop.f32.mrb[0].mxu0
        %v3910 = vadd.f32 0.0, %v3909
        %v3911 = vpop.f32.mrb[0].mxu0
        %3912 = vmatprep.mubr.bf16.mxu0 0
        %3913 = vmatmul.mubr.bf16.gmra.mrb[0].mxu0 %v3784
        %v3914 = vpop.f32.mrb[0].mxu0
        %v3915 = vadd.f32 0.0, %v3914
        %v3916 = vpop.f32.mrb[0].mxu0
        %v3917 = vpop.f32.mrb[0].mxu0
        %v3918 = vadd.f32 0.0, %v3917
        %v3919 = vpop.f32.mrb[0].mxu0
        %3920 = vmatprep.mubr.bf16.mxu0 0
        %3921 = vmatmul.mubr.bf16.gmra.mrb[0].mxu0 %v3785
        %v3922 = vpop.f32.mrb[0].mxu0
        %v3923 = vadd.f32 0.0, %v3922
        %v3924 = vpop.f32.mrb[0].mxu0
        %v3925 = vpop.f32.mrb[0].mxu0
        %v3926 = vadd.f32 0.0, %v3925
        %v3927 = vpop.f32.mrb[0].mxu0
        %3928 = vmatprep.mubr.bf16.mxu0 0
        %3929 = vmatmul.mubr.bf16.gmra.mrb[0].mxu0 %v3786
        %v3930 = vpop.f32.mrb[0].mxu0
        %v3931 = vadd.f32 0.0, %v3930
        %v3932 = vpop.f32.mrb[0].mxu0
        %v3933 = vpop.f32.mrb[0].mxu0
        %v3934 = vadd.f32 0.0, %v3933
        %v3935 = vpop.f32.mrb[0].mxu0
        %3936 = vmatprep.mubr.bf16.mxu0 0
        %3937 = vmatmul.mubr.bf16.gmra.mrb[0].mxu0 %v3787
        %v3938 = vpop.f32.mrb[0].mxu0
        %v3939 = vadd.f32 0.0, %v3938
        %v3940 = vpop.f32.mrb[0].mxu0
        %v3941 = vpop.f32.mrb[0].mxu0
        %v3942 = vadd.f32 0.0, %v3941
        %v3943 = vpop.f32.mrb[0].mxu0
        %3944 = vmatprep.mubr.bf16.mxu0 0
        %3945 = vmatmul.mubr.bf16.gmra.mrb[0].mxu0 %v3788
        %v3946 = vpop.f32.mrb[0].mxu0
        %v3947 = vadd.f32 0.0, %v3946
        %v3948 = vpop.f32.mrb[0].mxu0
        %v3949 = vpop.f32.mrb[0].mxu0
        %v3950 = vadd.f32 0.0, %v3949
        %v3951 = vpop.f32.mrb[0].mxu0
        %3952 = vmatprep.mubr.bf16.mxu0 0
        %3953 = vmatmul.mubr.bf16.gmra.mrb[0].mxu0 %v3789
        %v3954 = vpop.f32.mrb[0].mxu0
        %v3955 = vadd.f32 0.0, %v3954
        %v3956 = vpop.f32.mrb[0].mxu0
        %v3957 = vpop.f32.mrb[0].mxu0
        %v3958 = vadd.f32 0.0, %v3957
        %v3959 = vpop.f32.mrb[0].mxu0
        %3960 = vmatprep.mubr.bf16.mxu0 0
        %3961 = vmatmul.mubr.bf16.gmra.mrb[0].mxu0 %v3790
        %v3962 = vpop.f32.mrb[0].mxu0
        %v3963 = vadd.f32 0.0, %v3962
        %v3964 = vpop.f32.mrb[0].mxu0
        %v3965 = vpop.f32.mrb[0].mxu0
        %v3966 = vadd.f32 0.0, %v3965
        %v3967 = vpop.f32.mrb[0].mxu0
        %3968 = vmatprep.mubr.bf16.mxu0 0
        %3969 = vmatmul.mubr.bf16.gmra.mrb[0].mxu0 %v3791
        %v3970 = vpop.f32.mrb[0].mxu0
        %v3971 = vadd.f32 0.0, %v3970
        %v3972 = vpop.f32.mrb[0].mxu0
        %v3973 = vpop.f32.mrb[0].mxu0
        %v3974 = vadd.f32 0.0, %v3973
        %v3975 = vpop.f32.mrb[0].mxu0
        %3976 = vmatprep.mubr.bf16.mxu0 0
        %3977 = vmatmul.mubr.bf16.gmra.mrb[0].mxu0 %v3792
        %v3978 = vpop.f32.mrb[0].mxu0
        %v3979 = vadd.f32 0.0, %v3978
        %v3980 = vpop.f32.mrb[0].mxu0
        %v3981 = vpop.f32.mrb[0].mxu0
        %v3982 = vadd.f32 0.0, %v3981
        %v3983 = vpop.f32.mrb[0].mxu0
        %3984 = vmatprep.mubr.bf16.mxu0 0
        %3985 = vmatmul.mubr.bf16.gmra.mrb[0].mxu0 %v3793
        %v3986 = vpop.f32.mrb[0].mxu0
        %v3987 = vadd.f32 0.0, %v3986
        %v3988 = vpop.f32.mrb[0].mxu0
        %v3989 = vpop.f32.mrb[0].mxu0
        %v3990 = vadd.f32 0.0, %v3989
        %v3991 = vpop.f32.mrb[0].mxu0
        %3992 = vmatprep.mubr.bf16.mxu0 0
        %3993 = vmatmul.mubr.bf16.gmra.mrb[0].mxu0 %v3794
        %v3994 = vpop.f32.mrb[0].mxu0
        %v3995 = vadd.f32 0.0, %v3994
        %v3996 = vpop.f32.mrb[0].mxu0
        %v3997 = vpop.f32.mrb[0].mxu0
        %v3998 = vadd.f32 0.0, %v3997
        %v3999 = vpop.f32.mrb[0].mxu0
        %4000 = vmatprep.mubr.bf16.mxu0 0
        %4001 = vmatmul.mubr.bf16.gmra.mrb[0].mxu0 %v3795
        %v4002 = vpop.f32.mrb[0].mxu0
        %v4003 = vadd.f32 0.0, %v4002
        %v4004 = vpop.f32.mrb[0].mxu0
        %v4005 = vpop.f32.mrb[0].mxu0
        %v4006 = vadd.f32 0.0, %v4005
        %v4007 = vpop.f32.mrb[0].mxu0
        %4008 = vmatprep.mubr.bf16.mxu0 0
        %4009 = vmatmul.mubr.bf16.gmra.mrb[0].mxu0 %v3796
        %v4010 = vpop.f32.mrb[0].mxu0
        %v4011 = vadd.f32 0.0, %v4010
        %v4012 = vpop.f32.mrb[0].mxu0
        %v4013 = vpop.f32.mrb[0].mxu0
        %v4014 = vadd.f32 0.0, %v4013
        %v4015 = vpop.f32.mrb[0].mxu0
        %4016 = vmatprep.mubr.bf16.mxu0 0
        %4017 = vmatmul.mubr.bf16.gmra.mrb[0].mxu0 %v3797
        %v4018 = vpop.f32.mrb[0].mxu0
        %v4019 = vadd.f32 0.0, %v4018
        %v4020 = vpop.f32.mrb[0].mxu0
        %v4021 = vpop.f32.mrb[0].mxu0
        %v4022 = vadd.f32 0.0, %v4021
        %v4023 = vpop.f32.mrb[0].mxu0
        %4024 = vmatprep.mubr.bf16.mxu0 0
        %4025 = vmatmul.mubr.bf16.gmra.mrb[0].mxu0 %v3798
        %v4026 = vpop.f32.mrb[0].mxu0
        %v4027 = vadd.f32 0.0, %v4026
        %v4028 = vpop.f32.mrb[0].mxu0
        %v4029 = vpop.f32.mrb[0].mxu0
        %v4030 = vadd.f32 0.0, %v4029
        %v4031 = vpop.f32.mrb[0].mxu0
        %4032 = vmatprep.mubr.bf16.mxu0 0
        %4033 = vmatmul.mubr.bf16.gmra.mrb[0].mxu0 %v3799
        %v4034 = vpop.f32.mrb[0].mxu0
        %v4035 = vadd.f32 0.0, %v4034
        %v4036 = vpop.f32.mrb[0].mxu0
        %v4037 = vpop.f32.mrb[0].mxu0
        %v4038 = vadd.f32 0.0, %v4037
        %v4039 = vpop.f32.mrb[0].mxu0
        %4040 = vmatprep.mubr.bf16.mxu0 0
        %4041 = vmatmul.mubr.bf16.gmra.mrb[0].mxu0 %v3800
        %v4042 = vpop.f32.mrb[0].mxu0
        %v4043 = vadd.f32 0.0, %v4042
        %v4044 = vpop.f32.mrb[0].mxu0
        %v4045 = vpop.f32.mrb[0].mxu0
        %v4046 = vadd.f32 0.0, %v4045
        %v4047 = vpop.f32.mrb[0].mxu0
        %4048 = vmatprep.mubr.bf16.mxu0 0
        %4049 = vmatmul.mubr.bf16.gmra.mrb[0].mxu0 %v3801
        %v4050 = vpop.f32.mrb[0].mxu0
        %v4051 = vadd.f32 0.0, %v4050
        %v4052 = vpop.f32.mrb[0].mxu0
        %v4053 = vpop.f32.mrb[0].mxu0
        %v4054 = vadd.f32 0.0, %v4053
        %v4055 = vpop.f32.mrb[0].mxu0
        %4056 = vmatprep.mubr.bf16.mxu0 0
        %4057 = vmatmul.mubr.bf16.gmra.mrb[0].mxu0 %v3802
        %v4058 = vpop.f32.mrb[0].mxu0
        %v4059 = vadd.f32 0.0, %v4058
        %v4060 = vpop.f32.mrb[0].mxu0
        %v4061 = vpop.f32.mrb[0].mxu0
        %v4062 = vadd.f32 0.0, %v4061
        %v4063 = vpop.f32.mrb[0].mxu0
        %4064 = vmatprep.mubr.bf16.mxu0 0
        %4065 = vmatmul.mubr.bf16.gmra.mrb[0].mxu0 %v3803
        %v4066 = vpop.f32.mrb[0].mxu0
        %v4067 = vadd.f32 0.0, %v4066
        %v4068 = vpop.f32.mrb[0].mxu0
        %v4069 = vpop.f32.mrb[0].mxu0
        %v4070 = vadd.f32 0.0, %v4069
        %v4071 = vpop.f32.mrb[0].mxu0
        %4072 = vmatprep.mubr.bf16.mxu0 0
        %4073 = vmatmul.mubr.bf16.gmra.mrb[0].mxu0 %v3804
        %v4074 = vpop.f32.mrb[0].mxu0
        %v4075 = vadd.f32 0.0, %v4074
        %v4076 = vpop.f32.mrb[0].mxu0
        %v4077 = vpop.f32.mrb[0].mxu0
        %v4078 = vadd.f32 0.0, %v4077
        %v4079 = vpop.f32.mrb[0].mxu0
        %4080 = vmatprep.mubr.bf16.mxu0 0
        %4081 = vmatmul.mubr.bf16.gmra.mrb[0].mxu0 %v3805
        %v4082 = vpop.f32.mrb[0].mxu0
        %v4083 = vadd.f32 0.0, %v4082
        %v4084 = vpop.f32.mrb[0].mxu0
        %v4085 = vpop.f32.mrb[0].mxu0
        %v4086 = vadd.f32 0.0, %v4085
        %v4087 = vpop.f32.mrb[0].mxu0
        %4088 = vmatprep.mubr.bf16.mxu0 0
        %4089 = vmatmul.mubr.bf16.gmra.mrb[0].mxu0 %v3806
        %v4090 = vpop.f32.mrb[0].mxu0
        %v4091 = vadd.f32 0.0, %v4090
        %v4092 = vpop.f32.mrb[0].mxu0
        %v4093 = vpop.f32.mrb[0].mxu0
        %v4094 = vadd.f32 0.0, %v4093
        %v4095 = vpop.f32.mrb[0].mxu0
        %4096 = vdwg.mxu0
        %v4097 = vld [vmem:[#allocation3] sm:$0xff]
        %v4098 = vld [vmem:[#allocation3 + $0x8] sm:$0xff]
        %v4099 = vld [vmem:[#allocation3 + $0x10] sm:$0xff]
        %v4100 = vld [vmem:[#allocation3 + $0x18] sm:$0xff]
        %v4101 = vld [vmem:[#allocation3 + $0x20] sm:$0xff]
        %v4102 = vld [vmem:[#allocation3 + $0x28] sm:$0xff]
        %v4103 = vld [vmem:[#allocation3 + $0x30] sm:$0xff]
        %v4104 = vld [vmem:[#allocation3 + $0x38] sm:$0xff]
        %v4105 = vld [vmem:[#allocation3 + $0x40] sm:$0xff]
        %v4106 = vld [vmem:[#allocation3 + $0x48] sm:$0xff]
        %v4107 = vld [vmem:[#allocation3 + $0x50] sm:$0xff]
        %v4108 = vld [vmem:[#allocation3 + $0x58] sm:$0xff]
        %v4109 = vld [vmem:[#allocation3 + $0x60] sm:$0xff]
        %v4110 = vld [vmem:[#allocation3 + $0x68] sm:$0xff]
        %v4111 = vld [vmem:[#allocation3 + $0x70] sm:$0xff]
        %v4112 = vld [vmem:[#allocation3 + $0x78] sm:$0xff]
        %v4113 = vld [vmem:[#allocation3 + $0x80] sm:$0xff]
        %v4114 = vld [vmem:[#allocation3 + $0x88] sm:$0xff]
        %v4115 = vld [vmem:[#allocation3 + $0x90] sm:$0xff]
        %v4116 = vld [vmem:[#allocation3 + $0x98] sm:$0xff]
        %v4117 = vld [vmem:[#allocation3 + $0xa0] sm:$0xff]
        %v4118 = vld [vmem:[#allocation3 + $0xa8] sm:$0xff]
        %v4119 = vld [vmem:[#allocation3 + $0xb0] sm:$0xff]
        %v4120 = vld [vmem:[#allocation3 + $0xb8] sm:$0xff]
        %v4121 = vld [vmem:[#allocation3 + $0xc0] sm:$0xff]
        %v4122 = vld [vmem:[#allocation3 + $0xc8] sm:$0xff]
        %v4123 = vld [vmem:[#allocation3 + $0xd0] sm:$0xff]
        %v4124 = vld [vmem:[#allocation3 + $0xd8] sm:$0xff]
        %v4125 = vld [vmem:[#allocation3 + $0xe0] sm:$0xff]
        %v4126 = vld [vmem:[#allocation3 + $0xe8] sm:$0xff]
        %v4127 = vld [vmem:[#allocation3 + $0xf0] sm:$0xff]
        %v4128 = vld [vmem:[#allocation3 + $0xf8] sm:$0xff]
        %v4129 = vld [vmem:[#allocation3 + $0x100] sm:$0xff]
        %v4130 = vld [vmem:[#allocation3 + $0x108] sm:$0xff]
        %v4131 = vld [vmem:[#allocation3 + $0x110] sm:$0xff]
        %v4132 = vld [vmem:[#allocation3 + $0x118] sm:$0xff]
        %v4133 = vld [vmem:[#allocation3 + $0x120] sm:$0xff]
        %v4134 = vld [vmem:[#allocation3 + $0x128] sm:$0xff]
        %v4135 = vld [vmem:[#allocation3 + $0x130] sm:$0xff]
        %v4136 = vld [vmem:[#allocation3 + $0x138] sm:$0xff]
        %v4137 = vld [vmem:[#allocation3 + $0x140] sm:$0xff]
        %v4138 = vld [vmem:[#allocation3 + $0x148] sm:$0xff]
        %v4139 = vld [vmem:[#allocation3 + $0x150] sm:$0xff]
        %v4140 = vld [vmem:[#allocation3 + $0x158] sm:$0xff]
        %v4141 = vld [vmem:[#allocation3 + $0x160] sm:$0xff]
        %v4142 = vld [vmem:[#allocation3 + $0x168] sm:$0xff]
        %v4143 = vld [vmem:[#allocation3 + $0x170] sm:$0xff]
        %v4144 = vld [vmem:[#allocation3 + $0x178] sm:$0xff]
        %v4145 = vadd.f32 %v4097, %v3907
        %v4146 = vadd.f32 %v4098, %v3910
        %v4147 = vadd.f32 %v4099, %v3915
        %v4148 = vadd.f32 %v4100, %v3918
        %v4149 = vadd.f32 %v4101, %v3923
        %v4150 = vadd.f32 %v4102, %v3926
        %v4151 = vadd.f32 %v4103, %v3931
        %v4152 = vadd.f32 %v4104, %v3934
        %v4153 = vadd.f32 %v4105, %v3939
        %v4154 = vadd.f32 %v4106, %v3942
        %v4155 = vadd.f32 %v4107, %v3947
        %v4156 = vadd.f32 %v4108, %v3950
        %v4157 = vadd.f32 %v4109, %v3955
        %v4158 = vadd.f32 %v4110, %v3958
        %v4159 = vadd.f32 %v4111, %v3963
        %v4160 = vadd.f32 %v4112, %v3966
        %v4161 = vadd.f32 %v4113, %v3971
        %v4162 = vadd.f32 %v4114, %v3974
        %v4163 = vadd.f32 %v4115, %v3979
        %v4164 = vadd.f32 %v4116, %v3982
        %v4165 = vadd.f32 %v4117, %v3987
        %v4166 = vadd.f32 %v4118, %v3990
        %v4167 = vadd.f32 %v4119, %v3995
        %v4168 = vadd.f32 %v4120, %v3998
        %v4169 = vadd.f32 %v4121, %v4003
        %v4170 = vadd.f32 %v4122, %v4006
        %v4171 = vadd.f32 %v4123, %v4011
        %v4172 = vadd.f32 %v4124, %v4014
        %v4173 = vadd.f32 %v4125, %v4019
        %v4174 = vadd.f32 %v4126, %v4022
        %v4175 = vadd.f32 %v4127, %v4027
        %v4176 = vadd.f32 %v4128, %v4030
        %v4177 = vadd.f32 %v4129, %v4035
        %v4178 = vadd.f32 %v4130, %v4038
        %v4179 = vadd.f32 %v4131, %v4043
        %v4180 = vadd.f32 %v4132, %v4046
        %v4181 = vadd.f32 %v4133, %v4051
        %v4182 = vadd.f32 %v4134, %v4054
        %v4183 = vadd.f32 %v4135, %v4059
        %v4184 = vadd.f32 %v4136, %v4062
        %v4185 = vadd.f32 %v4137, %v4067
        %v4186 = vadd.f32 %v4138, %v4070
        %v4187 = vadd.f32 %v4139, %v4075
        %v4188 = vadd.f32 %v4140, %v4078
        %v4189 = vadd.f32 %v4141, %v4083
        %v4190 = vadd.f32 %v4142, %v4086
        %v4191 = vadd.f32 %v4143, %v4091
        %v4192 = vadd.f32 %v4144, %v4094
        %4193 = vst [vmem:[#allocation3] sm:$0xff] %v4145
        %4194 = vst [vmem:[#allocation3 + $0x8] sm:$0xff] %v4146
        %4195 = vst [vmem:[#allocation3 + $0x10] sm:$0xff] %v4147
        %4196 = vst [vmem:[#allocation3 + $0x18] sm:$0xff] %v4148
        %4197 = vst [vmem:[#allocation3 + $0x20] sm:$0xff] %v4149
        %4198 = vst [vmem:[#allocation3 + $0x28] sm:$0xff] %v4150
        %4199 = vst [vmem:[#allocation3 + $0x30] sm:$0xff] %v4151
        %4200 = vst [vmem:[#allocation3 + $0x38] sm:$0xff] %v4152
        %4201 = vst [vmem:[#allocation3 + $0x40] sm:$0xff] %v4153
        %4202 = vst [vmem:[#allocation3 + $0x48] sm:$0xff] %v4154
        %4203 = vst [vmem:[#allocation3 + $0x50] sm:$0xff] %v4155
        %4204 = vst [vmem:[#allocation3 + $0x58] sm:$0xff] %v4156
        %4205 = vst [vmem:[#allocation3 + $0x60] sm:$0xff] %v4157
        %4206 = vst [vmem:[#allocation3 + $0x68] sm:$0xff] %v4158
        %4207 = vst [vmem:[#allocation3 + $0x70] sm:$0xff] %v4159
        %4208 = vst [vmem:[#allocation3 + $0x78] sm:$0xff] %v4160
        %4209 = vst [vmem:[#allocation3 + $0x80] sm:$0xff] %v4161
        %4210 = vst [vmem:[#allocation3 + $0x88] sm:$0xff] %v4162
        %4211 = vst [vmem:[#allocation3 + $0x90] sm:$0xff] %v4163
        %4212 = vst [vmem:[#allocation3 + $0x98] sm:$0xff] %v4164
        %4213 = vst [vmem:[#allocation3 + $0xa0] sm:$0xff] %v4165
        %4214 = vst [vmem:[#allocation3 + $0xa8] sm:$0xff] %v4166
        %4215 = vst [vmem:[#allocation3 + $0xb0] sm:$0xff] %v4167
        %4216 = vst [vmem:[#allocation3 + $0xb8] sm:$0xff] %v4168
        %4217 = vst [vmem:[#allocation3 + $0xc0] sm:$0xff] %v4169
        %4218 = vst [vmem:[#allocation3 + $0xc8] sm:$0xff] %v4170
        %4219 = vst [vmem:[#allocation3 + $0xd0] sm:$0xff] %v4171
        %4220 = vst [vmem:[#allocation3 + $0xd8] sm:$0xff] %v4172
        %4221 = vst [vmem:[#allocation3 + $0xe0] sm:$0xff] %v4173
        %4222 = vst [vmem:[#allocation3 + $0xe8] sm:$0xff] %v4174
        %4223 = vst [vmem:[#allocation3 + $0xf0] sm:$0xff] %v4175
        %4224 = vst [vmem:[#allocation3 + $0xf8] sm:$0xff] %v4176
        %4225 = vst [vmem:[#allocation3 + $0x100] sm:$0xff] %v4177
        %4226 = vst [vmem:[#allocation3 + $0x108] sm:$0xff] %v4178
        %4227 = vst [vmem:[#allocation3 + $0x110] sm:$0xff] %v4179
        %4228 = vst [vmem:[#allocation3 + $0x118] sm:$0xff] %v4180
        %4229 = vst [vmem:[#allocation3 + $0x120] sm:$0xff] %v4181
        %4230 = vst [vmem:[#allocation3 + $0x128] sm:$0xff] %v4182
        %4231 = vst [vmem:[#allocation3 + $0x130] sm:$0xff] %v4183
        %4232 = vst [vmem:[#allocation3 + $0x138] sm:$0xff] %v4184
        %4233 = vst [vmem:[#allocation3 + $0x140] sm:$0xff] %v4185
        %4234 = vst [vmem:[#allocation3 + $0x148] sm:$0xff] %v4186
        %4235 = vst [vmem:[#allocation3 + $0x150] sm:$0xff] %v4187
        %4236 = vst [vmem:[#allocation3 + $0x158] sm:$0xff] %v4188
        %4237 = vst [vmem:[#allocation3 + $0x160] sm:$0xff] %v4189
        %4238 = vst [vmem:[#allocation3 + $0x168] sm:$0xff] %v4190
        %4239 = vst [vmem:[#allocation3 + $0x170] sm:$0xff] %v4191
        %4240 = vst [vmem:[#allocation3 + $0x178] sm:$0xff] %v4192
        %v4241 = vld [vmem:[#allocation2 + $0x38] sm:$0xff]
        %v4242 = vld [vmem:[#allocation2 + $0x40] sm:$0xff]
        %v4243 = vld [vmem:[#allocation2 + $0x48] sm:$0xff]
        %v4244 = vld [vmem:[#allocation2 + $0x50] sm:$0xff]
        %v4245 = vld [vmem:[#allocation2 + $0x58] sm:$0xff]
        %v4246 = vld [vmem:[#allocation2 + $0x60] sm:$0xff]
        %v4247 = vld [vmem:[#allocation2 + $0x68] sm:$0xff]
        %v4248 = vld [vmem:[#allocation2 + $0x70] sm:$0xff]
        %v4249 = vld [vmem:[#allocation2 + $0x78] sm:$0xff]
        %v4250 = vld [vmem:[#allocation2 + $0x80] sm:$0xff]
        %v4251 = vld [vmem:[#allocation2 + $0x88] sm:$0xff]
        %v4252 = vld [vmem:[#allocation2 + $0x90] sm:$0xff]
        %v4253 = vld [vmem:[#allocation2 + $0x98] sm:$0xff]
        %v4254 = vld [vmem:[#allocation2 + $0xa0] sm:$0xff]
        %v4255 = vld [vmem:[#allocation2 + $0xa8] sm:$0xff]
        %v4256 = vld [vmem:[#allocation2 + $0xb0] sm:$0xff]
        %v4257 = vld [vmem:[#allocation2 + $0xb8] sm:$0xff]
        %v4258 = vld [vmem:[#allocation2 + $0xc0] sm:$0xff]
        %v4259 = vld [vmem:[#allocation2 + $0xc8] sm:$0xff]
        %v4260 = vld [vmem:[#allocation2 + $0xd0] sm:$0xff]
        %v4261 = vld [vmem:[#allocation2 + $0xd8] sm:$0xff]
        %v4262 = vld [vmem:[#allocation2 + $0xe0] sm:$0xff]
        %v4263 = vld [vmem:[#allocation2 + $0xe8] sm:$0xff]
        %v4264 = vld [vmem:[#allocation2 + $0xf0] sm:$0xff]
        %v4265 = vld [vmem:[#allocation2 + $0xf8] sm:$0xff]
        %v4266 = vld [vmem:[#allocation2 + $0x100] sm:$0xff]
        %v4267 = vld [vmem:[#allocation2 + $0x108] sm:$0xff]
        %v4268 = vld [vmem:[#allocation2 + $0x110] sm:$0xff]
        %v4269 = vld [vmem:[#allocation2 + $0x118] sm:$0xff]
        %v4270 = vld [vmem:[#allocation2 + $0x120] sm:$0xff]
        %v4271 = vld [vmem:[#allocation2 + $0x128] sm:$0xff]
        %v4272 = vld [vmem:[#allocation2 + $0x130] sm:$0xff]
        %v4273 = vld [vmem:[#allocation2 + $0x138] sm:$0xff]
        %v4274 = vld [vmem:[#allocation2 + $0x140] sm:$0xff]
        %v4275 = vld [vmem:[#allocation2 + $0x148] sm:$0xff]
        %v4276 = vld [vmem:[#allocation2 + $0x150] sm:$0xff]
        %v4277 = vld [vmem:[#allocation2 + $0x158] sm:$0xff]
        %v4278 = vld [vmem:[#allocation2 + $0x160] sm:$0xff]
        %v4279 = vld [vmem:[#allocation2 + $0x168] sm:$0xff]
        %v4280 = vld [vmem:[#allocation2 + $0x170] sm:$0xff]
        %v4281 = vld [vmem:[#allocation2 + $0x178] sm:$0xff]
        %v4282 = vld [vmem:[#allocation2 + $0x180] sm:$0xff]
        %v4283 = vld [vmem:[#allocation2 + $0x188] sm:$0xff]
        %v4284 = vld [vmem:[#allocation2 + $0x190] sm:$0xff]
        %v4285 = vld [vmem:[#allocation2 + $0x198] sm:$0xff]
        %v4286 = vld [vmem:[#allocation2 + $0x1a0] sm:$0xff]
        %v4287 = vld [vmem:[#allocation2 + $0x1a8] sm:$0xff]
        %v4288 = vld [vmem:[#allocation2 + $0x1b0] sm:$0xff]
        %v4289 = vpack.c.bf16 %v4242, %v4241
        %v4290 = vpack.c.bf16 %v4244, %v4243
        %v4291 = vpack.c.bf16 %v4246, %v4245
        %v4292 = vpack.c.bf16 %v4248, %v4247
        %v4293 = vpack.c.bf16 %v4250, %v4249
        %v4294 = vpack.c.bf16 %v4252, %v4251
        %v4295 = vpack.c.bf16 %v4254, %v4253
        %v4296 = vpack.c.bf16 %v4256, %v4255
        %v4297 = vpack.c.bf16 %v4258, %v4257
        %v4298 = vpack.c.bf16 %v4260, %v4259
        %v4299 = vpack.c.bf16 %v4262, %v4261
        %v4300 = vpack.c.bf16 %v4264, %v4263
        %v4301 = vpack.c.bf16 %v4266, %v4265
        %v4302 = vpack.c.bf16 %v4268, %v4267
        %v4303 = vpack.c.bf16 %v4270, %v4269
        %v4304 = vpack.c.bf16 %v4272, %v4271
        %v4305 = vpack.c.bf16 %v4274, %v4273
        %v4306 = vpack.c.bf16 %v4276, %v4275
        %v4307 = vpack.c.bf16 %v4278, %v4277
        %v4308 = vpack.c.bf16 %v4280, %v4279
        %v4309 = vpack.c.bf16 %v4282, %v4281
        %v4310 = vpack.c.bf16 %v4284, %v4283
        %v4311 = vpack.c.bf16 %v4286, %v4285
        %v4312 = vpack.c.bf16 %v4288, %v4287
        %s4313 = scalar_lea.vmem %s3, 448
        %v4314 = vld [vmem:[%s4313] sm:$0xf]
        %v4315 = vld [vmem:[%s4313 + $0x4] sm:$0xf]
        %v4316 = vld [vmem:[%s4313 + $0x8] sm:$0xf]
        %v4317 = vld [vmem:[%s4313 + $0xc] sm:$0xf]
        %v4318 = vld [vmem:[%s4313 + $0x10] sm:$0xf]
        %v4319 = vld [vmem:[%s4313 + $0x14] sm:$0xf]
        %v4320 = vld [vmem:[%s4313 + $0x18] sm:$0xf]
        %v4321 = vld [vmem:[%s4313 + $0x1c] sm:$0xf]
        %v4322 = vld [vmem:[%s4313 + $0x20] sm:$0xf]
        %v4323 = vld [vmem:[%s4313 + $0x24] sm:$0xf]
        %v4324 = vld [vmem:[%s4313 + $0x28] sm:$0xf]
        %v4325 = vld [vmem:[%s4313 + $0x2c] sm:$0xf]
        %v4326 = vld [vmem:[%s4313 + $0x30] sm:$0xf]
        %v4327 = vld [vmem:[%s4313 + $0x34] sm:$0xf]
        %v4328 = vld [vmem:[%s4313 + $0x38] sm:$0xf]
        %v4329 = vld [vmem:[%s4313 + $0x3c] sm:$0xf]
        %v4346 = vunpack.c.l.b16 %v4314
        %v4347 = vunpack.c.l.b16 %v4315
        %v4348 = vunpack.c.l.b16 %v4316
        %v4349 = vunpack.c.l.b16 %v4317
        %v4350 = vunpack.c.l.b16 %v4318
        %v4351 = vunpack.c.l.b16 %v4319
        %v4352 = vunpack.c.l.b16 %v4320
        %v4353 = vunpack.c.l.b16 %v4321
        %v4354 = vunpack.c.l.b16 %v4322
        %v4355 = vunpack.c.l.b16 %v4323
        %v4356 = vunpack.c.l.b16 %v4324
        %v4357 = vunpack.c.l.b16 %v4325
        %v4358 = vunpack.c.l.b16 %v4326
        %v4359 = vunpack.c.l.b16 %v4327
        %v4360 = vunpack.c.l.b16 %v4328
        %v4361 = vunpack.c.l.b16 %v4329
        %v4362 = vpack.c.b16 %v4347, %v4346
        %v4363 = vpack.c.b16 %v4349, %v4348
        %v4364 = vpack.c.b16 %v4351, %v4350
        %v4365 = vpack.c.b16 %v4353, %v4352
        %v4366 = vpack.c.b16 %v4355, %v4354
        %v4367 = vpack.c.b16 %v4357, %v4356
        %v4368 = vpack.c.b16 %v4359, %v4358
        %v4369 = vpack.c.b16 %v4361, %v4360
        %4378 = vmatprep.subr.bf16.mxu0 0
        %4379 = vmatpush1.bf16.msra.mxu0 %v4362
        %4380 = vmatprep.subr.bf16.mxu0 0
        %4381 = vmatpush1.bf16.msra.mxu0 %v4363
        %4382 = vmatprep.subr.bf16.mxu0 0
        %4383 = vmatpush1.bf16.msra.mxu0 %v4364
        %4384 = vmatprep.subr.bf16.mxu0 0
        %4385 = vmatpush1.bf16.msra.mxu0 %v4365
        %4386 = vmatprep.subr.bf16.mxu0 0
        %4387 = vmatpush1.bf16.msra.mxu0 %v4366
        %4388 = vmatprep.subr.bf16.mxu0 0
        %4389 = vmatpush1.bf16.msra.mxu0 %v4367
        %4390 = vmatprep.subr.bf16.mxu0 0
        %4391 = vmatpush1.bf16.msra.mxu0 %v4368
        %4392 = vmatprep.subr.bf16.mxu0 0
        %4393 = vmatpush1.bf16.msra.mxu0 %v4369
        %4394 = vmatprep.subr.bf16.mxu0 0
        %4395 = vmatpush1.bf16.msra.mxu0 0
        %4396 = vmatprep.subr.bf16.mxu0 0
        %4397 = vmatpush1.bf16.msra.mxu0 0
        %4398 = vmatprep.subr.bf16.mxu0 0
        %4399 = vmatpush1.bf16.msra.mxu0 0
        %4400 = vmatprep.subr.bf16.mxu0 0
        %4401 = vmatpush1.bf16.msra.mxu0 0
        %4402 = vmatprep.subr.bf16.mxu0 0
        %4403 = vmatpush1.bf16.msra.mxu0 0
        %4404 = vmatprep.subr.bf16.mxu0 0
        %4405 = vmatpush1.bf16.msra.mxu0 0
        %4406 = vmatprep.subr.bf16.mxu0 0
        %4407 = vmatpush1.bf16.msra.mxu0 0
        %4408 = vmatprep.subr.bf16.mxu0 0
        %4409 = vmatpush1.bf16.msra.mxu0 0
        %4410 = vmatprep.mubr.bf16.mxu0 0
        %4411 = vmatmul.mubr.bf16.gmra.mrb[0].mxu0 %v4289
        %v4412 = vpop.f32.mrb[0].mxu0
        %v4413 = vadd.f32 0.0, %v4412
        %v4414 = vpop.f32.mrb[0].mxu0
        %v4415 = vpop.f32.mrb[0].mxu0
        %v4416 = vadd.f32 0.0, %v4415
        %v4417 = vpop.f32.mrb[0].mxu0
        %4418 = vmatprep.mubr.bf16.mxu0 0
        %4419 = vmatmul.mubr.bf16.gmra.mrb[0].mxu0 %v4290
        %v4420 = vpop.f32.mrb[0].mxu0
        %v4421 = vadd.f32 0.0, %v4420
        %v4422 = vpop.f32.mrb[0].mxu0
        %v4423 = vpop.f32.mrb[0].mxu0
        %v4424 = vadd.f32 0.0, %v4423
        %v4425 = vpop.f32.mrb[0].mxu0
        %4426 = vmatprep.mubr.bf16.mxu0 0
        %4427 = vmatmul.mubr.bf16.gmra.mrb[0].mxu0 %v4291
        %v4428 = vpop.f32.mrb[0].mxu0
        %v4429 = vadd.f32 0.0, %v4428
        %v4430 = vpop.f32.mrb[0].mxu0
        %v4431 = vpop.f32.mrb[0].mxu0
        %v4432 = vadd.f32 0.0, %v4431
        %v4433 = vpop.f32.mrb[0].mxu0
        %4434 = vmatprep.mubr.bf16.mxu0 0
        %4435 = vmatmul.mubr.bf16.gmra.mrb[0].mxu0 %v4292
        %v4436 = vpop.f32.mrb[0].mxu0
        %v4437 = vadd.f32 0.0, %v4436
        %v4438 = vpop.f32.mrb[0].mxu0
        %v4439 = vpop.f32.mrb[0].mxu0
        %v4440 = vadd.f32 0.0, %v4439
        %v4441 = vpop.f32.mrb[0].mxu0
        %4442 = vmatprep.mubr.bf16.mxu0 0
        %4443 = vmatmul.mubr.bf16.gmra.mrb[0].mxu0 %v4293
        %v4444 = vpop.f32.mrb[0].mxu0
        %v4445 = vadd.f32 0.0, %v4444
        %v4446 = vpop.f32.mrb[0].mxu0
        %v4447 = vpop.f32.mrb[0].mxu0
        %v4448 = vadd.f32 0.0, %v4447
        %v4449 = vpop.f32.mrb[0].mxu0
        %4450 = vmatprep.mubr.bf16.mxu0 0
        %4451 = vmatmul.mubr.bf16.gmra.mrb[0].mxu0 %v4294
        %v4452 = vpop.f32.mrb[0].mxu0
        %v4453 = vadd.f32 0.0, %v4452
        %v4454 = vpop.f32.mrb[0].mxu0
        %v4455 = vpop.f32.mrb[0].mxu0
        %v4456 = vadd.f32 0.0, %v4455
        %v4457 = vpop.f32.mrb[0].mxu0
        %4458 = vmatprep.mubr.bf16.mxu0 0
        %4459 = vmatmul.mubr.bf16.gmra.mrb[0].mxu0 %v4295
        %v4460 = vpop.f32.mrb[0].mxu0
        %v4461 = vadd.f32 0.0, %v4460
        %v4462 = vpop.f32.mrb[0].mxu0
        %v4463 = vpop.f32.mrb[0].mxu0
        %v4464 = vadd.f32 0.0, %v4463
        %v4465 = vpop.f32.mrb[0].mxu0
        %4466 = vmatprep.mubr.bf16.mxu0 0
        %4467 = vmatmul.mubr.bf16.gmra.mrb[0].mxu0 %v4296
        %v4468 = vpop.f32.mrb[0].mxu0
        %v4469 = vadd.f32 0.0, %v4468
        %v4470 = vpop.f32.mrb[0].mxu0
        %v4471 = vpop.f32.mrb[0].mxu0
        %v4472 = vadd.f32 0.0, %v4471
        %v4473 = vpop.f32.mrb[0].mxu0
        %4474 = vmatprep.mubr.bf16.mxu0 0
        %4475 = vmatmul.mubr.bf16.gmra.mrb[0].mxu0 %v4297
        %v4476 = vpop.f32.mrb[0].mxu0
        %v4477 = vadd.f32 0.0, %v4476
        %v4478 = vpop.f32.mrb[0].mxu0
        %v4479 = vpop.f32.mrb[0].mxu0
        %v4480 = vadd.f32 0.0, %v4479
        %v4481 = vpop.f32.mrb[0].mxu0
        %4482 = vmatprep.mubr.bf16.mxu0 0
        %4483 = vmatmul.mubr.bf16.gmra.mrb[0].mxu0 %v4298
        %v4484 = vpop.f32.mrb[0].mxu0
        %v4485 = vadd.f32 0.0, %v4484
        %v4486 = vpop.f32.mrb[0].mxu0
        %v4487 = vpop.f32.mrb[0].mxu0
        %v4488 = vadd.f32 0.0, %v4487
        %v4489 = vpop.f32.mrb[0].mxu0
        %4490 = vmatprep.mubr.bf16.mxu0 0
        %4491 = vmatmul.mubr.bf16.gmra.mrb[0].mxu0 %v4299
        %v4492 = vpop.f32.mrb[0].mxu0
        %v4493 = vadd.f32 0.0, %v4492
        %v4494 = vpop.f32.mrb[0].mxu0
        %v4495 = vpop.f32.mrb[0].mxu0
        %v4496 = vadd.f32 0.0, %v4495
        %v4497 = vpop.f32.mrb[0].mxu0
        %4498 = vmatprep.mubr.bf16.mxu0 0
        %4499 = vmatmul.mubr.bf16.gmra.mrb[0].mxu0 %v4300
        %v4500 = vpop.f32.mrb[0].mxu0
        %v4501 = vadd.f32 0.0, %v4500
        %v4502 = vpop.f32.mrb[0].mxu0
        %v4503 = vpop.f32.mrb[0].mxu0
        %v4504 = vadd.f32 0.0, %v4503
        %v4505 = vpop.f32.mrb[0].mxu0
        %4506 = vmatprep.mubr.bf16.mxu0 0
        %4507 = vmatmul.mubr.bf16.gmra.mrb[0].mxu0 %v4301
        %v4508 = vpop.f32.mrb[0].mxu0
        %v4509 = vadd.f32 0.0, %v4508
        %v4510 = vpop.f32.mrb[0].mxu0
        %v4511 = vpop.f32.mrb[0].mxu0
        %v4512 = vadd.f32 0.0, %v4511
        %v4513 = vpop.f32.mrb[0].mxu0
        %4514 = vmatprep.mubr.bf16.mxu0 0
        %4515 = vmatmul.mubr.bf16.gmra.mrb[0].mxu0 %v4302
        %v4516 = vpop.f32.mrb[0].mxu0
        %v4517 = vadd.f32 0.0, %v4516
        %v4518 = vpop.f32.mrb[0].mxu0
        %v4519 = vpop.f32.mrb[0].mxu0
        %v4520 = vadd.f32 0.0, %v4519
        %v4521 = vpop.f32.mrb[0].mxu0
        %4522 = vmatprep.mubr.bf16.mxu0 0
        %4523 = vmatmul.mubr.bf16.gmra.mrb[0].mxu0 %v4303
        %v4524 = vpop.f32.mrb[0].mxu0
        %v4525 = vadd.f32 0.0, %v4524
        %v4526 = vpop.f32.mrb[0].mxu0
        %v4527 = vpop.f32.mrb[0].mxu0
        %v4528 = vadd.f32 0.0, %v4527
        %v4529 = vpop.f32.mrb[0].mxu0
        %4530 = vmatprep.mubr.bf16.mxu0 0
        %4531 = vmatmul.mubr.bf16.gmra.mrb[0].mxu0 %v4304
        %v4532 = vpop.f32.mrb[0].mxu0
        %v4533 = vadd.f32 0.0, %v4532
        %v4534 = vpop.f32.mrb[0].mxu0
        %v4535 = vpop.f32.mrb[0].mxu0
        %v4536 = vadd.f32 0.0, %v4535
        %v4537 = vpop.f32.mrb[0].mxu0
        %4538 = vmatprep.mubr.bf16.mxu0 0
        %4539 = vmatmul.mubr.bf16.gmra.mrb[0].mxu0 %v4305
        %v4540 = vpop.f32.mrb[0].mxu0
        %v4541 = vadd.f32 0.0, %v4540
        %v4542 = vpop.f32.mrb[0].mxu0
        %v4543 = vpop.f32.mrb[0].mxu0
        %v4544 = vadd.f32 0.0, %v4543
        %v4545 = vpop.f32.mrb[0].mxu0
        %4546 = vmatprep.mubr.bf16.mxu0 0
        %4547 = vmatmul.mubr.bf16.gmra.mrb[0].mxu0 %v4306
        %v4548 = vpop.f32.mrb[0].mxu0
        %v4549 = vadd.f32 0.0, %v4548
        %v4550 = vpop.f32.mrb[0].mxu0
        %v4551 = vpop.f32.mrb[0].mxu0
        %v4552 = vadd.f32 0.0, %v4551
        %v4553 = vpop.f32.mrb[0].mxu0
        %4554 = vmatprep.mubr.bf16.mxu0 0
        %4555 = vmatmul.mubr.bf16.gmra.mrb[0].mxu0 %v4307
        %v4556 = vpop.f32.mrb[0].mxu0
        %v4557 = vadd.f32 0.0, %v4556
        %v4558 = vpop.f32.mrb[0].mxu0
        %v4559 = vpop.f32.mrb[0].mxu0
        %v4560 = vadd.f32 0.0, %v4559
        %v4561 = vpop.f32.mrb[0].mxu0
        %4562 = vmatprep.mubr.bf16.mxu0 0
        %4563 = vmatmul.mubr.bf16.gmra.mrb[0].mxu0 %v4308
        %v4564 = vpop.f32.mrb[0].mxu0
        %v4565 = vadd.f32 0.0, %v4564
        %v4566 = vpop.f32.mrb[0].mxu0
        %v4567 = vpop.f32.mrb[0].mxu0
        %v4568 = vadd.f32 0.0, %v4567
        %v4569 = vpop.f32.mrb[0].mxu0
        %4570 = vmatprep.mubr.bf16.mxu0 0
        %4571 = vmatmul.mubr.bf16.gmra.mrb[0].mxu0 %v4309
        %v4572 = vpop.f32.mrb[0].mxu0
        %v4573 = vadd.f32 0.0, %v4572
        %v4574 = vpop.f32.mrb[0].mxu0
        %v4575 = vpop.f32.mrb[0].mxu0
        %v4576 = vadd.f32 0.0, %v4575
        %v4577 = vpop.f32.mrb[0].mxu0
        %4578 = vmatprep.mubr.bf16.mxu0 0
        %4579 = vmatmul.mubr.bf16.gmra.mrb[0].mxu0 %v4310
        %v4580 = vpop.f32.mrb[0].mxu0
        %v4581 = vadd.f32 0.0, %v4580
        %v4582 = vpop.f32.mrb[0].mxu0
        %v4583 = vpop.f32.mrb[0].mxu0
        %v4584 = vadd.f32 0.0, %v4583
        %v4585 = vpop.f32.mrb[0].mxu0
        %4586 = vmatprep.mubr.bf16.mxu0 0
        %4587 = vmatmul.mubr.bf16.gmra.mrb[0].mxu0 %v4311
        %v4588 = vpop.f32.mrb[0].mxu0
        %v4589 = vadd.f32 0.0, %v4588
        %v4590 = vpop.f32.mrb[0].mxu0
        %v4591 = vpop.f32.mrb[0].mxu0
        %v4592 = vadd.f32 0.0, %v4591
        %v4593 = vpop.f32.mrb[0].mxu0
        %4594 = vmatprep.mubr.bf16.mxu0 0
        %4595 = vmatmul.mubr.bf16.gmra.mrb[0].mxu0 %v4312
        %v4596 = vpop.f32.mrb[0].mxu0
        %v4597 = vadd.f32 0.0, %v4596
        %v4598 = vpop.f32.mrb[0].mxu0
        %v4599 = vpop.f32.mrb[0].mxu0
        %v4600 = vadd.f32 0.0, %v4599
        %v4601 = vpop.f32.mrb[0].mxu0
        %4602 = vdwg.mxu0
        %v4603 = vld [vmem:[#allocation3] sm:$0xff]
        %v4604 = vld [vmem:[#allocation3 + $0x8] sm:$0xff]
        %v4605 = vld [vmem:[#allocation3 + $0x10] sm:$0xff]
        %v4606 = vld [vmem:[#allocation3 + $0x18] sm:$0xff]
        %v4607 = vld [vmem:[#allocation3 + $0x20] sm:$0xff]
        %v4608 = vld [vmem:[#allocation3 + $0x28] sm:$0xff]
        %v4609 = vld [vmem:[#allocation3 + $0x30] sm:$0xff]
        %v4610 = vld [vmem:[#allocation3 + $0x38] sm:$0xff]
        %v4611 = vld [vmem:[#allocation3 + $0x40] sm:$0xff]
        %v4612 = vld [vmem:[#allocation3 + $0x48] sm:$0xff]
        %v4613 = vld [vmem:[#allocation3 + $0x50] sm:$0xff]
        %v4614 = vld [vmem:[#allocation3 + $0x58] sm:$0xff]
        %v4615 = vld [vmem:[#allocation3 + $0x60] sm:$0xff]
        %v4616 = vld [vmem:[#allocation3 + $0x68] sm:$0xff]
        %v4617 = vld [vmem:[#allocation3 + $0x70] sm:$0xff]
        %v4618 = vld [vmem:[#allocation3 + $0x78] sm:$0xff]
        %v4619 = vld [vmem:[#allocation3 + $0x80] sm:$0xff]
        %v4620 = vld [vmem:[#allocation3 + $0x88] sm:$0xff]
        %v4621 = vld [vmem:[#allocation3 + $0x90] sm:$0xff]
        %v4622 = vld [vmem:[#allocation3 + $0x98] sm:$0xff]
        %v4623 = vld [vmem:[#allocation3 + $0xa0] sm:$0xff]
        %v4624 = vld [vmem:[#allocation3 + $0xa8] sm:$0xff]
        %v4625 = vld [vmem:[#allocation3 + $0xb0] sm:$0xff]
        %v4626 = vld [vmem:[#allocation3 + $0xb8] sm:$0xff]
        %v4627 = vld [vmem:[#allocation3 + $0xc0] sm:$0xff]
        %v4628 = vld [vmem:[#allocation3 + $0xc8] sm:$0xff]
        %v4629 = vld [vmem:[#allocation3 + $0xd0] sm:$0xff]
        %v4630 = vld [vmem:[#allocation3 + $0xd8] sm:$0xff]
        %v4631 = vld [vmem:[#allocation3 + $0xe0] sm:$0xff]
        %v4632 = vld [vmem:[#allocation3 + $0xe8] sm:$0xff]
        %v4633 = vld [vmem:[#allocation3 + $0xf0] sm:$0xff]
        %v4634 = vld [vmem:[#allocation3 + $0xf8] sm:$0xff]
        %v4635 = vld [vmem:[#allocation3 + $0x100] sm:$0xff]
        %v4636 = vld [vmem:[#allocation3 + $0x108] sm:$0xff]
        %v4637 = vld [vmem:[#allocation3 + $0x110] sm:$0xff]
        %v4638 = vld [vmem:[#allocation3 + $0x118] sm:$0xff]
        %v4639 = vld [vmem:[#allocation3 + $0x120] sm:$0xff]
        %v4640 = vld [vmem:[#allocation3 + $0x128] sm:$0xff]
        %v4641 = vld [vmem:[#allocation3 + $0x130] sm:$0xff]
        %v4642 = vld [vmem:[#allocation3 + $0x138] sm:$0xff]
        %v4643 = vld [vmem:[#allocation3 + $0x140] sm:$0xff]
        %v4644 = vld [vmem:[#allocation3 + $0x148] sm:$0xff]
        %v4645 = vld [vmem:[#allocation3 + $0x150] sm:$0xff]
        %v4646 = vld [vmem:[#allocation3 + $0x158] sm:$0xff]
        %v4647 = vld [vmem:[#allocation3 + $0x160] sm:$0xff]
        %v4648 = vld [vmem:[#allocation3 + $0x168] sm:$0xff]
        %v4649 = vld [vmem:[#allocation3 + $0x170] sm:$0xff]
        %v4650 = vld [vmem:[#allocation3 + $0x178] sm:$0xff]
        %v4651 = vadd.f32 %v4603, %v4413
        %v4652 = vadd.f32 %v4604, %v4416
        %v4653 = vadd.f32 %v4605, %v4421
        %v4654 = vadd.f32 %v4606, %v4424
        %v4655 = vadd.f32 %v4607, %v4429
        %v4656 = vadd.f32 %v4608, %v4432
        %v4657 = vadd.f32 %v4609, %v4437
        %v4658 = vadd.f32 %v4610, %v4440
        %v4659 = vadd.f32 %v4611, %v4445
        %v4660 = vadd.f32 %v4612, %v4448
        %v4661 = vadd.f32 %v4613, %v4453
        %v4662 = vadd.f32 %v4614, %v4456
        %v4663 = vadd.f32 %v4615, %v4461
        %v4664 = vadd.f32 %v4616, %v4464
        %v4665 = vadd.f32 %v4617, %v4469
        %v4666 = vadd.f32 %v4618, %v4472
        %v4667 = vadd.f32 %v4619, %v4477
        %v4668 = vadd.f32 %v4620, %v4480
        %v4669 = vadd.f32 %v4621, %v4485
        %v4670 = vadd.f32 %v4622, %v4488
        %v4671 = vadd.f32 %v4623, %v4493
        %v4672 = vadd.f32 %v4624, %v4496
        %v4673 = vadd.f32 %v4625, %v4501
        %v4674 = vadd.f32 %v4626, %v4504
        %v4675 = vadd.f32 %v4627, %v4509
        %v4676 = vadd.f32 %v4628, %v4512
        %v4677 = vadd.f32 %v4629, %v4517
        %v4678 = vadd.f32 %v4630, %v4520
        %v4679 = vadd.f32 %v4631, %v4525
        %v4680 = vadd.f32 %v4632, %v4528
        %v4681 = vadd.f32 %v4633, %v4533
        %v4682 = vadd.f32 %v4634, %v4536
        %v4683 = vadd.f32 %v4635, %v4541
        %v4684 = vadd.f32 %v4636, %v4544
        %v4685 = vadd.f32 %v4637, %v4549
        %v4686 = vadd.f32 %v4638, %v4552
        %v4687 = vadd.f32 %v4639, %v4557
        %v4688 = vadd.f32 %v4640, %v4560
        %v4689 = vadd.f32 %v4641, %v4565
        %v4690 = vadd.f32 %v4642, %v4568
        %v4691 = vadd.f32 %v4643, %v4573
        %v4692 = vadd.f32 %v4644, %v4576
        %v4693 = vadd.f32 %v4645, %v4581
        %v4694 = vadd.f32 %v4646, %v4584
        %v4695 = vadd.f32 %v4647, %v4589
        %v4696 = vadd.f32 %v4648, %v4592
        %v4697 = vadd.f32 %v4649, %v4597
        %v4698 = vadd.f32 %v4650, %v4600
        %4699 = vst [vmem:[#allocation3] sm:$0xff] %v4651
        %4700 = vst [vmem:[#allocation3 + $0x8] sm:$0xff] %v4652
        %4701 = vst [vmem:[#allocation3 + $0x10] sm:$0xff] %v4653
        %4702 = vst [vmem:[#allocation3 + $0x18] sm:$0xff] %v4654
        %4703 = vst [vmem:[#allocation3 + $0x20] sm:$0xff] %v4655
        %4704 = vst [vmem:[#allocation3 + $0x28] sm:$0xff] %v4656
        %4705 = vst [vmem:[#allocation3 + $0x30] sm:$0xff] %v4657
        %4706 = vst [vmem:[#allocation3 + $0x38] sm:$0xff] %v4658
        %4707 = vst [vmem:[#allocation3 + $0x40] sm:$0xff] %v4659
        %4708 = vst [vmem:[#allocation3 + $0x48] sm:$0xff] %v4660
        %4709 = vst [vmem:[#allocation3 + $0x50] sm:$0xff] %v4661
        %4710 = vst [vmem:[#allocation3 + $0x58] sm:$0xff] %v4662
        %4711 = vst [vmem:[#allocation3 + $0x60] sm:$0xff] %v4663
        %4712 = vst [vmem:[#allocation3 + $0x68] sm:$0xff] %v4664
        %4713 = vst [vmem:[#allocation3 + $0x70] sm:$0xff] %v4665
        %4714 = vst [vmem:[#allocation3 + $0x78] sm:$0xff] %v4666
        %4715 = vst [vmem:[#allocation3 + $0x80] sm:$0xff] %v4667
        %4716 = vst [vmem:[#allocation3 + $0x88] sm:$0xff] %v4668
        %4717 = vst [vmem:[#allocation3 + $0x90] sm:$0xff] %v4669
        %4718 = vst [vmem:[#allocation3 + $0x98] sm:$0xff] %v4670
        %4719 = vst [vmem:[#allocation3 + $0xa0] sm:$0xff] %v4671
        %4720 = vst [vmem:[#allocation3 + $0xa8] sm:$0xff] %v4672
        %4721 = vst [vmem:[#allocation3 + $0xb0] sm:$0xff] %v4673
        %4722 = vst [vmem:[#allocation3 + $0xb8] sm:$0xff] %v4674
        %4723 = vst [vmem:[#allocation3 + $0xc0] sm:$0xff] %v4675
        %4724 = vst [vmem:[#allocation3 + $0xc8] sm:$0xff] %v4676
        %4725 = vst [vmem:[#allocation3 + $0xd0] sm:$0xff] %v4677
        %4726 = vst [vmem:[#allocation3 + $0xd8] sm:$0xff] %v4678
        %4727 = vst [vmem:[#allocation3 + $0xe0] sm:$0xff] %v4679
        %4728 = vst [vmem:[#allocation3 + $0xe8] sm:$0xff] %v4680
        %4729 = vst [vmem:[#allocation3 + $0xf0] sm:$0xff] %v4681
        %4730 = vst [vmem:[#allocation3 + $0xf8] sm:$0xff] %v4682
        %4731 = vst [vmem:[#allocation3 + $0x100] sm:$0xff] %v4683
        %4732 = vst [vmem:[#allocation3 + $0x108] sm:$0xff] %v4684
        %4733 = vst [vmem:[#allocation3 + $0x110] sm:$0xff] %v4685
        %4734 = vst [vmem:[#allocation3 + $0x118] sm:$0xff] %v4686
        %4735 = vst [vmem:[#allocation3 + $0x120] sm:$0xff] %v4687
        %4736 = vst [vmem:[#allocation3 + $0x128] sm:$0xff] %v4688
        %4737 = vst [vmem:[#allocation3 + $0x130] sm:$0xff] %v4689
        %4738 = vst [vmem:[#allocation3 + $0x138] sm:$0xff] %v4690
        %4739 = vst [vmem:[#allocation3 + $0x140] sm:$0xff] %v4691
        %4740 = vst [vmem:[#allocation3 + $0x148] sm:$0xff] %v4692
        %4741 = vst [vmem:[#allocation3 + $0x150] sm:$0xff] %v4693
        %4742 = vst [vmem:[#allocation3 + $0x158] sm:$0xff] %v4694
        %4743 = vst [vmem:[#allocation3 + $0x160] sm:$0xff] %v4695
        %4744 = vst [vmem:[#allocation3 + $0x168] sm:$0xff] %v4696
        %4745 = vst [vmem:[#allocation3 + $0x170] sm:$0xff] %v4697
        %4746 = vst [vmem:[#allocation3 + $0x178] sm:$0xff] %v4698
        %v4747 = vld [vmem:[#allocation2 + $0x39] sm:$0xff]
        %v4748 = vld [vmem:[#allocation2 + $0x41] sm:$0xff]
        %v4749 = vld [vmem:[#allocation2 + $0x49] sm:$0xff]
        %v4750 = vld [vmem:[#allocation2 + $0x51] sm:$0xff]
        %v4751 = vld [vmem:[#allocation2 + $0x59] sm:$0xff]
        %v4752 = vld [vmem:[#allocation2 + $0x61] sm:$0xff]
        %v4753 = vld [vmem:[#allocation2 + $0x69] sm:$0xff]
        %v4754 = vld [vmem:[#allocation2 + $0x71] sm:$0xff]
        %v4755 = vld [vmem:[#allocation2 + $0x79] sm:$0xff]
        %v4756 = vld [vmem:[#allocation2 + $0x81] sm:$0xff]
        %v4757 = vld [vmem:[#allocation2 + $0x89] sm:$0xff]
        %v4758 = vld [vmem:[#allocation2 + $0x91] sm:$0xff]
        %v4759 = vld [vmem:[#allocation2 + $0x99] sm:$0xff]
        %v4760 = vld [vmem:[#allocation2 + $0xa1] sm:$0xff]
        %v4761 = vld [vmem:[#allocation2 + $0xa9] sm:$0xff]
        %v4762 = vld [vmem:[#allocation2 + $0xb1] sm:$0xff]
        %v4763 = vld [vmem:[#allocation2 + $0xb9] sm:$0xff]
        %v4764 = vld [vmem:[#allocation2 + $0xc1] sm:$0xff]
        %v4765 = vld [vmem:[#allocation2 + $0xc9] sm:$0xff]
        %v4766 = vld [vmem:[#allocation2 + $0xd1] sm:$0xff]
        %v4767 = vld [vmem:[#allocation2 + $0xd9] sm:$0xff]
        %v4768 = vld [vmem:[#allocation2 + $0xe1] sm:$0xff]
        %v4769 = vld [vmem:[#allocation2 + $0xe9] sm:$0xff]
        %v4770 = vld [vmem:[#allocation2 + $0xf1] sm:$0xff]
        %v4771 = vld [vmem:[#allocation2 + $0xf9] sm:$0xff]
        %v4772 = vld [vmem:[#allocation2 + $0x101] sm:$0xff]
        %v4773 = vld [vmem:[#allocation2 + $0x109] sm:$0xff]
        %v4774 = vld [vmem:[#allocation2 + $0x111] sm:$0xff]
        %v4775 = vld [vmem:[#allocation2 + $0x119] sm:$0xff]
        %v4776 = vld [vmem:[#allocation2 + $0x121] sm:$0xff]
        %v4777 = vld [vmem:[#allocation2 + $0x129] sm:$0xff]
        %v4778 = vld [vmem:[#allocation2 + $0x131] sm:$0xff]
        %v4779 = vld [vmem:[#allocation2 + $0x139] sm:$0xff]
        %v4780 = vld [vmem:[#allocation2 + $0x141] sm:$0xff]
        %v4781 = vld [vmem:[#allocation2 + $0x149] sm:$0xff]
        %v4782 = vld [vmem:[#allocation2 + $0x151] sm:$0xff]
        %v4783 = vld [vmem:[#allocation2 + $0x159] sm:$0xff]
        %v4784 = vld [vmem:[#allocation2 + $0x161] sm:$0xff]
        %v4785 = vld [vmem:[#allocation2 + $0x169] sm:$0xff]
        %v4786 = vld [vmem:[#allocation2 + $0x171] sm:$0xff]
        %v4787 = vld [vmem:[#allocation2 + $0x179] sm:$0xff]
        %v4788 = vld [vmem:[#allocation2 + $0x181] sm:$0xff]
        %v4789 = vld [vmem:[#allocation2 + $0x189] sm:$0xff]
        %v4790 = vld [vmem:[#allocation2 + $0x191] sm:$0xff]
        %v4791 = vld [vmem:[#allocation2 + $0x199] sm:$0xff]
        %v4792 = vld [vmem:[#allocation2 + $0x1a1] sm:$0xff]
        %v4793 = vld [vmem:[#allocation2 + $0x1a9] sm:$0xff]
        %v4794 = vld [vmem:[#allocation2 + $0x1b1] sm:$0xff]
        %v4795 = vpack.c.bf16 %v4748, %v4747
        %v4796 = vpack.c.bf16 %v4750, %v4749
        %v4797 = vpack.c.bf16 %v4752, %v4751
        %v4798 = vpack.c.bf16 %v4754, %v4753
        %v4799 = vpack.c.bf16 %v4756, %v4755
        %v4800 = vpack.c.bf16 %v4758, %v4757
        %v4801 = vpack.c.bf16 %v4760, %v4759
        %v4802 = vpack.c.bf16 %v4762, %v4761
        %v4803 = vpack.c.bf16 %v4764, %v4763
        %v4804 = vpack.c.bf16 %v4766, %v4765
        %v4805 = vpack.c.bf16 %v4768, %v4767
        %v4806 = vpack.c.bf16 %v4770, %v4769
        %v4807 = vpack.c.bf16 %v4772, %v4771
        %v4808 = vpack.c.bf16 %v4774, %v4773
        %v4809 = vpack.c.bf16 %v4776, %v4775
        %v4810 = vpack.c.bf16 %v4778, %v4777
        %v4811 = vpack.c.bf16 %v4780, %v4779
        %v4812 = vpack.c.bf16 %v4782, %v4781
        %v4813 = vpack.c.bf16 %v4784, %v4783
        %v4814 = vpack.c.bf16 %v4786, %v4785
        %v4815 = vpack.c.bf16 %v4788, %v4787
        %v4816 = vpack.c.bf16 %v4790, %v4789
        %v4817 = vpack.c.bf16 %v4792, %v4791
        %v4818 = vpack.c.bf16 %v4794, %v4793
        %s4819 = scalar_lea.vmem %s3, 512
        %v4820 = vld [vmem:[%s4819] sm:$0xf]
        %v4821 = vld [vmem:[%s4819 + $0x4] sm:$0xf]
        %v4822 = vld [vmem:[%s4819 + $0x8] sm:$0xf]
        %v4823 = vld [vmem:[%s4819 + $0xc] sm:$0xf]
        %v4824 = vld [vmem:[%s4819 + $0x10] sm:$0xf]
        %v4825 = vld [vmem:[%s4819 + $0x14] sm:$0xf]
        %v4826 = vld [vmem:[%s4819 + $0x18] sm:$0xf]
        %v4827 = vld [vmem:[%s4819 + $0x1c] sm:$0xf]
        %v4828 = vld [vmem:[%s4819 + $0x20] sm:$0xf]
        %v4829 = vld [vmem:[%s4819 + $0x24] sm:$0xf]
        %v4830 = vld [vmem:[%s4819 + $0x28] sm:$0xf]
        %v4831 = vld [vmem:[%s4819 + $0x2c] sm:$0xf]
        %v4832 = vld [vmem:[%s4819 + $0x30] sm:$0xf]
        %v4833 = vld [vmem:[%s4819 + $0x34] sm:$0xf]
        %v4834 = vld [vmem:[%s4819 + $0x38] sm:$0xf]
        %v4835 = vld [vmem:[%s4819 + $0x3c] sm:$0xf]
        %v4852 = vunpack.c.l.b16 %v4820
        %v4853 = vunpack.c.l.b16 %v4821
        %v4854 = vunpack.c.l.b16 %v4822
        %v4855 = vunpack.c.l.b16 %v4823
        %v4856 = vunpack.c.l.b16 %v4824
        %v4857 = vunpack.c.l.b16 %v4825
        %v4858 = vunpack.c.l.b16 %v4826
        %v4859 = vunpack.c.l.b16 %v4827
        %v4860 = vunpack.c.l.b16 %v4828
        %v4861 = vunpack.c.l.b16 %v4829
        %v4862 = vunpack.c.l.b16 %v4830
        %v4863 = vunpack.c.l.b16 %v4831
        %v4864 = vunpack.c.l.b16 %v4832
        %v4865 = vunpack.c.l.b16 %v4833
        %v4866 = vunpack.c.l.b16 %v4834
        %v4867 = vunpack.c.l.b16 %v4835
        %v4868 = vpack.c.b16 %v4853, %v4852
        %v4869 = vpack.c.b16 %v4855, %v4854
        %v4870 = vpack.c.b16 %v4857, %v4856
        %v4871 = vpack.c.b16 %v4859, %v4858
        %v4872 = vpack.c.b16 %v4861, %v4860
        %v4873 = vpack.c.b16 %v4863, %v4862
        %v4874 = vpack.c.b16 %v4865, %v4864
        %v4875 = vpack.c.b16 %v4867, %v4866
        %4884 = vmatprep.subr.bf16.mxu0 0
        %4885 = vmatpush1.bf16.msra.mxu0 %v4868
        %4886 = vmatprep.subr.bf16.mxu0 0
        %4887 = vmatpush1.bf16.msra.mxu0 %v4869
        %4888 = vmatprep.subr.bf16.mxu0 0
        %4889 = vmatpush1.bf16.msra.mxu0 %v4870
        %4890 = vmatprep.subr.bf16.mxu0 0
        %4891 = vmatpush1.bf16.msra.mxu0 %v4871
        %4892 = vmatprep.subr.bf16.mxu0 0
        %4893 = vmatpush1.bf16.msra.mxu0 %v4872
        %4894 = vmatprep.subr.bf16.mxu0 0
        %4895 = vmatpush1.bf16.msra.mxu0 %v4873
        %4896 = vmatprep.subr.bf16.mxu0 0
        %4897 = vmatpush1.bf16.msra.mxu0 %v4874
        %4898 = vmatprep.subr.bf16.mxu0 0
        %4899 = vmatpush1.bf16.msra.mxu0 %v4875
        %4900 = vmatprep.subr.bf16.mxu0 0
        %4901 = vmatpush1.bf16.msra.mxu0 0
        %4902 = vmatprep.subr.bf16.mxu0 0
        %4903 = vmatpush1.bf16.msra.mxu0 0
        %4904 = vmatprep.subr.bf16.mxu0 0
        %4905 = vmatpush1.bf16.msra.mxu0 0
        %4906 = vmatprep.subr.bf16.mxu0 0
        %4907 = vmatpush1.bf16.msra.mxu0 0
        %4908 = vmatprep.subr.bf16.mxu0 0
        %4909 = vmatpush1.bf16.msra.mxu0 0
        %4910 = vmatprep.subr.bf16.mxu0 0
        %4911 = vmatpush1.bf16.msra.mxu0 0
        %4912 = vmatprep.subr.bf16.mxu0 0
        %4913 = vmatpush1.bf16.msra.mxu0 0
        %4914 = vmatprep.subr.bf16.mxu0 0
        %4915 = vmatpush1.bf16.msra.mxu0 0
        %4916 = vmatprep.mubr.bf16.mxu0 0
        %4917 = vmatmul.mubr.bf16.gmra.mrb[0].mxu0 %v4795
        %v4918 = vpop.f32.mrb[0].mxu0
        %v4919 = vadd.f32 0.0, %v4918
        %v4920 = vpop.f32.mrb[0].mxu0
        %v4921 = vpop.f32.mrb[0].mxu0
        %v4922 = vadd.f32 0.0, %v4921
        %v4923 = vpop.f32.mrb[0].mxu0
        %4924 = vmatprep.mubr.bf16.mxu0 0
        %4925 = vmatmul.mubr.bf16.gmra.mrb[0].mxu0 %v4796
        %v4926 = vpop.f32.mrb[0].mxu0
        %v4927 = vadd.f32 0.0, %v4926
        %v4928 = vpop.f32.mrb[0].mxu0
        %v4929 = vpop.f32.mrb[0].mxu0
        %v4930 = vadd.f32 0.0, %v4929
        %v4931 = vpop.f32.mrb[0].mxu0
        %4932 = vmatprep.mubr.bf16.mxu0 0
        %4933 = vmatmul.mubr.bf16.gmra.mrb[0].mxu0 %v4797
        %v4934 = vpop.f32.mrb[0].mxu0
        %v4935 = vadd.f32 0.0, %v4934
        %v4936 = vpop.f32.mrb[0].mxu0
        %v4937 = vpop.f32.mrb[0].mxu0
        %v4938 = vadd.f32 0.0, %v4937
        %v4939 = vpop.f32.mrb[0].mxu0
        %4940 = vmatprep.mubr.bf16.mxu0 0
        %4941 = vmatmul.mubr.bf16.gmra.mrb[0].mxu0 %v4798
        %v4942 = vpop.f32.mrb[0].mxu0
        %v4943 = vadd.f32 0.0, %v4942
        %v4944 = vpop.f32.mrb[0].mxu0
        %v4945 = vpop.f32.mrb[0].mxu0
        %v4946 = vadd.f32 0.0, %v4945
        %v4947 = vpop.f32.mrb[0].mxu0
        %4948 = vmatprep.mubr.bf16.mxu0 0
        %4949 = vmatmul.mubr.bf16.gmra.mrb[0].mxu0 %v4799
        %v4950 = vpop.f32.mrb[0].mxu0
        %v4951 = vadd.f32 0.0, %v4950
        %v4952 = vpop.f32.mrb[0].mxu0
        %v4953 = vpop.f32.mrb[0].mxu0
        %v4954 = vadd.f32 0.0, %v4953
        %v4955 = vpop.f32.mrb[0].mxu0
        %4956 = vmatprep.mubr.bf16.mxu0 0
        %4957 = vmatmul.mubr.bf16.gmra.mrb[0].mxu0 %v4800
        %v4958 = vpop.f32.mrb[0].mxu0
        %v4959 = vadd.f32 0.0, %v4958
        %v4960 = vpop.f32.mrb[0].mxu0
        %v4961 = vpop.f32.mrb[0].mxu0
        %v4962 = vadd.f32 0.0, %v4961
        %v4963 = vpop.f32.mrb[0].mxu0
        %4964 = vmatprep.mubr.bf16.mxu0 0
        %4965 = vmatmul.mubr.bf16.gmra.mrb[0].mxu0 %v4801
        %v4966 = vpop.f32.mrb[0].mxu0
        %v4967 = vadd.f32 0.0, %v4966
        %v4968 = vpop.f32.mrb[0].mxu0
        %v4969 = vpop.f32.mrb[0].mxu0
        %v4970 = vadd.f32 0.0, %v4969
        %v4971 = vpop.f32.mrb[0].mxu0
        %4972 = vmatprep.mubr.bf16.mxu0 0
        %4973 = vmatmul.mubr.bf16.gmra.mrb[0].mxu0 %v4802
        %v4974 = vpop.f32.mrb[0].mxu0
        %v4975 = vadd.f32 0.0, %v4974
        %v4976 = vpop.f32.mrb[0].mxu0
        %v4977 = vpop.f32.mrb[0].mxu0
        %v4978 = vadd.f32 0.0, %v4977
        %v4979 = vpop.f32.mrb[0].mxu0
        %4980 = vmatprep.mubr.bf16.mxu0 0
        %4981 = vmatmul.mubr.bf16.gmra.mrb[0].mxu0 %v4803
        %v4982 = vpop.f32.mrb[0].mxu0
        %v4983 = vadd.f32 0.0, %v4982
        %v4984 = vpop.f32.mrb[0].mxu0
        %v4985 = vpop.f32.mrb[0].mxu0
        %v4986 = vadd.f32 0.0, %v4985
        %v4987 = vpop.f32.mrb[0].mxu0
        %4988 = vmatprep.mubr.bf16.mxu0 0
        %4989 = vmatmul.mubr.bf16.gmra.mrb[0].mxu0 %v4804
        %v4990 = vpop.f32.mrb[0].mxu0
        %v4991 = vadd.f32 0.0, %v4990
        %v4992 = vpop.f32.mrb[0].mxu0
        %v4993 = vpop.f32.mrb[0].mxu0
        %v4994 = vadd.f32 0.0, %v4993
        %v4995 = vpop.f32.mrb[0].mxu0
        %4996 = vmatprep.mubr.bf16.mxu0 0
        %4997 = vmatmul.mubr.bf16.gmra.mrb[0].mxu0 %v4805
        %v4998 = vpop.f32.mrb[0].mxu0
        %v4999 = vadd.f32 0.0, %v4998
        %v5000 = vpop.f32.mrb[0].mxu0
        %v5001 = vpop.f32.mrb[0].mxu0
        %v5002 = vadd.f32 0.0, %v5001
        %v5003 = vpop.f32.mrb[0].mxu0
        %5004 = vmatprep.mubr.bf16.mxu0 0
        %5005 = vmatmul.mubr.bf16.gmra.mrb[0].mxu0 %v4806
        %v5006 = vpop.f32.mrb[0].mxu0
        %v5007 = vadd.f32 0.0, %v5006
        %v5008 = vpop.f32.mrb[0].mxu0
        %v5009 = vpop.f32.mrb[0].mxu0
        %v5010 = vadd.f32 0.0, %v5009
        %v5011 = vpop.f32.mrb[0].mxu0
        %5012 = vmatprep.mubr.bf16.mxu0 0
        %5013 = vmatmul.mubr.bf16.gmra.mrb[0].mxu0 %v4807
        %v5014 = vpop.f32.mrb[0].mxu0
        %v5015 = vadd.f32 0.0, %v5014
        %v5016 = vpop.f32.mrb[0].mxu0
        %v5017 = vpop.f32.mrb[0].mxu0
        %v5018 = vadd.f32 0.0, %v5017
        %v5019 = vpop.f32.mrb[0].mxu0
        %5020 = vmatprep.mubr.bf16.mxu0 0
        %5021 = vmatmul.mubr.bf16.gmra.mrb[0].mxu0 %v4808
        %v5022 = vpop.f32.mrb[0].mxu0
        %v5023 = vadd.f32 0.0, %v5022
        %v5024 = vpop.f32.mrb[0].mxu0
        %v5025 = vpop.f32.mrb[0].mxu0
        %v5026 = vadd.f32 0.0, %v5025
        %v5027 = vpop.f32.mrb[0].mxu0
        %5028 = vmatprep.mubr.bf16.mxu0 0
        %5029 = vmatmul.mubr.bf16.gmra.mrb[0].mxu0 %v4809
        %v5030 = vpop.f32.mrb[0].mxu0
        %v5031 = vadd.f32 0.0, %v5030
        %v5032 = vpop.f32.mrb[0].mxu0
        %v5033 = vpop.f32.mrb[0].mxu0
        %v5034 = vadd.f32 0.0, %v5033
        %v5035 = vpop.f32.mrb[0].mxu0
        %5036 = vmatprep.mubr.bf16.mxu0 0
        %5037 = vmatmul.mubr.bf16.gmra.mrb[0].mxu0 %v4810
        %v5038 = vpop.f32.mrb[0].mxu0
        %v5039 = vadd.f32 0.0, %v5038
        %v5040 = vpop.f32.mrb[0].mxu0
        %v5041 = vpop.f32.mrb[0].mxu0
        %v5042 = vadd.f32 0.0, %v5041
        %v5043 = vpop.f32.mrb[0].mxu0
        %5044 = vmatprep.mubr.bf16.mxu0 0
        %5045 = vmatmul.mubr.bf16.gmra.mrb[0].mxu0 %v4811
        %v5046 = vpop.f32.mrb[0].mxu0
        %v5047 = vadd.f32 0.0, %v5046
        %v5048 = vpop.f32.mrb[0].mxu0
        %v5049 = vpop.f32.mrb[0].mxu0
        %v5050 = vadd.f32 0.0, %v5049
        %v5051 = vpop.f32.mrb[0].mxu0
        %5052 = vmatprep.mubr.bf16.mxu0 0
        %5053 = vmatmul.mubr.bf16.gmra.mrb[0].mxu0 %v4812
        %v5054 = vpop.f32.mrb[0].mxu0
        %v5055 = vadd.f32 0.0, %v5054
        %v5056 = vpop.f32.mrb[0].mxu0
        %v5057 = vpop.f32.mrb[0].mxu0
        %v5058 = vadd.f32 0.0, %v5057
        %v5059 = vpop.f32.mrb[0].mxu0
        %5060 = vmatprep.mubr.bf16.mxu0 0
        %5061 = vmatmul.mubr.bf16.gmra.mrb[0].mxu0 %v4813
        %v5062 = vpop.f32.mrb[0].mxu0
        %v5063 = vadd.f32 0.0, %v5062
        %v5064 = vpop.f32.mrb[0].mxu0
        %v5065 = vpop.f32.mrb[0].mxu0
        %v5066 = vadd.f32 0.0, %v5065
        %v5067 = vpop.f32.mrb[0].mxu0
        %5068 = vmatprep.mubr.bf16.mxu0 0
        %5069 = vmatmul.mubr.bf16.gmra.mrb[0].mxu0 %v4814
        %v5070 = vpop.f32.mrb[0].mxu0
        %v5071 = vadd.f32 0.0, %v5070
        %v5072 = vpop.f32.mrb[0].mxu0
        %v5073 = vpop.f32.mrb[0].mxu0
        %v5074 = vadd.f32 0.0, %v5073
        %v5075 = vpop.f32.mrb[0].mxu0
        %5076 = vmatprep.mubr.bf16.mxu0 0
        %5077 = vmatmul.mubr.bf16.gmra.mrb[0].mxu0 %v4815
        %v5078 = vpop.f32.mrb[0].mxu0
        %v5079 = vadd.f32 0.0, %v5078
        %v5080 = vpop.f32.mrb[0].mxu0
        %v5081 = vpop.f32.mrb[0].mxu0
        %v5082 = vadd.f32 0.0, %v5081
        %v5083 = vpop.f32.mrb[0].mxu0
        %5084 = vmatprep.mubr.bf16.mxu0 0
        %5085 = vmatmul.mubr.bf16.gmra.mrb[0].mxu0 %v4816
        %v5086 = vpop.f32.mrb[0].mxu0
        %v5087 = vadd.f32 0.0, %v5086
        %v5088 = vpop.f32.mrb[0].mxu0
        %v5089 = vpop.f32.mrb[0].mxu0
        %v5090 = vadd.f32 0.0, %v5089
        %v5091 = vpop.f32.mrb[0].mxu0
        %5092 = vmatprep.mubr.bf16.mxu0 0
        %5093 = vmatmul.mubr.bf16.gmra.mrb[0].mxu0 %v4817
        %v5094 = vpop.f32.mrb[0].mxu0
        %v5095 = vadd.f32 0.0, %v5094
        %v5096 = vpop.f32.mrb[0].mxu0
        %v5097 = vpop.f32.mrb[0].mxu0
        %v5098 = vadd.f32 0.0, %v5097
        %v5099 = vpop.f32.mrb[0].mxu0
        %5100 = vmatprep.mubr.bf16.mxu0 0
        %5101 = vmatmul.mubr.bf16.gmra.mrb[0].mxu0 %v4818
        %v5102 = vpop.f32.mrb[0].mxu0
        %v5103 = vadd.f32 0.0, %v5102
        %v5104 = vpop.f32.mrb[0].mxu0
        %v5105 = vpop.f32.mrb[0].mxu0
        %v5106 = vadd.f32 0.0, %v5105
        %v5107 = vpop.f32.mrb[0].mxu0
        %5108 = vdwg.mxu0
        %v5109 = vld [vmem:[#allocation3] sm:$0xff]
        %v5110 = vld [vmem:[#allocation3 + $0x8] sm:$0xff]
        %v5111 = vld [vmem:[#allocation3 + $0x10] sm:$0xff]
        %v5112 = vld [vmem:[#allocation3 + $0x18] sm:$0xff]
        %v5113 = vld [vmem:[#allocation3 + $0x20] sm:$0xff]
        %v5114 = vld [vmem:[#allocation3 + $0x28] sm:$0xff]
        %v5115 = vld [vmem:[#allocation3 + $0x30] sm:$0xff]
        %v5116 = vld [vmem:[#allocation3 + $0x38] sm:$0xff]
        %v5117 = vld [vmem:[#allocation3 + $0x40] sm:$0xff]
        %v5118 = vld [vmem:[#allocation3 + $0x48] sm:$0xff]
        %v5119 = vld [vmem:[#allocation3 + $0x50] sm:$0xff]
        %v5120 = vld [vmem:[#allocation3 + $0x58] sm:$0xff]
        %v5121 = vld [vmem:[#allocation3 + $0x60] sm:$0xff]
        %v5122 = vld [vmem:[#allocation3 + $0x68] sm:$0xff]
        %v5123 = vld [vmem:[#allocation3 + $0x70] sm:$0xff]
        %v5124 = vld [vmem:[#allocation3 + $0x78] sm:$0xff]
        %v5125 = vld [vmem:[#allocation3 + $0x80] sm:$0xff]
        %v5126 = vld [vmem:[#allocation3 + $0x88] sm:$0xff]
        %v5127 = vld [vmem:[#allocation3 + $0x90] sm:$0xff]
        %v5128 = vld [vmem:[#allocation3 + $0x98] sm:$0xff]
        %v5129 = vld [vmem:[#allocation3 + $0xa0] sm:$0xff]
        %v5130 = vld [vmem:[#allocation3 + $0xa8] sm:$0xff]
        %v5131 = vld [vmem:[#allocation3 + $0xb0] sm:$0xff]
        %v5132 = vld [vmem:[#allocation3 + $0xb8] sm:$0xff]
        %v5133 = vld [vmem:[#allocation3 + $0xc0] sm:$0xff]
        %v5134 = vld [vmem:[#allocation3 + $0xc8] sm:$0xff]
        %v5135 = vld [vmem:[#allocation3 + $0xd0] sm:$0xff]
        %v5136 = vld [vmem:[#allocation3 + $0xd8] sm:$0xff]
        %v5137 = vld [vmem:[#allocation3 + $0xe0] sm:$0xff]
        %v5138 = vld [vmem:[#allocation3 + $0xe8] sm:$0xff]
        %v5139 = vld [vmem:[#allocation3 + $0xf0] sm:$0xff]
        %v5140 = vld [vmem:[#allocation3 + $0xf8] sm:$0xff]
        %v5141 = vld [vmem:[#allocation3 + $0x100] sm:$0xff]
        %v5142 = vld [vmem:[#allocation3 + $0x108] sm:$0xff]
        %v5143 = vld [vmem:[#allocation3 + $0x110] sm:$0xff]
        %v5144 = vld [vmem:[#allocation3 + $0x118] sm:$0xff]
        %v5145 = vld [vmem:[#allocation3 + $0x120] sm:$0xff]
        %v5146 = vld [vmem:[#allocation3 + $0x128] sm:$0xff]
        %v5147 = vld [vmem:[#allocation3 + $0x130] sm:$0xff]
        %v5148 = vld [vmem:[#allocation3 + $0x138] sm:$0xff]
        %v5149 = vld [vmem:[#allocation3 + $0x140] sm:$0xff]
        %v5150 = vld [vmem:[#allocation3 + $0x148] sm:$0xff]
        %v5151 = vld [vmem:[#allocation3 + $0x150] sm:$0xff]
        %v5152 = vld [vmem:[#allocation3 + $0x158] sm:$0xff]
        %v5153 = vld [vmem:[#allocation3 + $0x160] sm:$0xff]
        %v5154 = vld [vmem:[#allocation3 + $0x168] sm:$0xff]
        %v5155 = vld [vmem:[#allocation3 + $0x170] sm:$0xff]
        %v5156 = vld [vmem:[#allocation3 + $0x178] sm:$0xff]
        %v5157 = vadd.f32 %v5109, %v4919
        %v5158 = vadd.f32 %v5110, %v4922
        %v5159 = vadd.f32 %v5111, %v4927
        %v5160 = vadd.f32 %v5112, %v4930
        %v5161 = vadd.f32 %v5113, %v4935
        %v5162 = vadd.f32 %v5114, %v4938
        %v5163 = vadd.f32 %v5115, %v4943
        %v5164 = vadd.f32 %v5116, %v4946
        %v5165 = vadd.f32 %v5117, %v4951
        %v5166 = vadd.f32 %v5118, %v4954
        %v5167 = vadd.f32 %v5119, %v4959
        %v5168 = vadd.f32 %v5120, %v4962
        %v5169 = vadd.f32 %v5121, %v4967
        %v5170 = vadd.f32 %v5122, %v4970
        %v5171 = vadd.f32 %v5123, %v4975
        %v5172 = vadd.f32 %v5124, %v4978
        %v5173 = vadd.f32 %v5125, %v4983
        %v5174 = vadd.f32 %v5126, %v4986
        %v5175 = vadd.f32 %v5127, %v4991
        %v5176 = vadd.f32 %v5128, %v4994
        %v5177 = vadd.f32 %v5129, %v4999
        %v5178 = vadd.f32 %v5130, %v5002
        %v5179 = vadd.f32 %v5131, %v5007
        %v5180 = vadd.f32 %v5132, %v5010
        %v5181 = vadd.f32 %v5133, %v5015
        %v5182 = vadd.f32 %v5134, %v5018
        %v5183 = vadd.f32 %v5135, %v5023
        %v5184 = vadd.f32 %v5136, %v5026
        %v5185 = vadd.f32 %v5137, %v5031
        %v5186 = vadd.f32 %v5138, %v5034
        %v5187 = vadd.f32 %v5139, %v5039
        %v5188 = vadd.f32 %v5140, %v5042
        %v5189 = vadd.f32 %v5141, %v5047
        %v5190 = vadd.f32 %v5142, %v5050
        %v5191 = vadd.f32 %v5143, %v5055
        %v5192 = vadd.f32 %v5144, %v5058
        %v5193 = vadd.f32 %v5145, %v5063
        %v5194 = vadd.f32 %v5146, %v5066
        %v5195 = vadd.f32 %v5147, %v5071
        %v5196 = vadd.f32 %v5148, %v5074
        %v5197 = vadd.f32 %v5149, %v5079
        %v5198 = vadd.f32 %v5150, %v5082
        %v5199 = vadd.f32 %v5151, %v5087
        %v5200 = vadd.f32 %v5152, %v5090
        %v5201 = vadd.f32 %v5153, %v5095
        %v5202 = vadd.f32 %v5154, %v5098
        %v5203 = vadd.f32 %v5155, %v5103
        %v5204 = vadd.f32 %v5156, %v5106
        %5205 = vst [vmem:[#allocation3] sm:$0xff] %v5157
        %5206 = vst [vmem:[#allocation3 + $0x8] sm:$0xff] %v5158
        %5207 = vst [vmem:[#allocation3 + $0x10] sm:$0xff] %v5159
        %5208 = vst [vmem:[#allocation3 + $0x18] sm:$0xff] %v5160
        %5209 = vst [vmem:[#allocation3 + $0x20] sm:$0xff] %v5161
        %5210 = vst [vmem:[#allocation3 + $0x28] sm:$0xff] %v5162
        %5211 = vst [vmem:[#allocation3 + $0x30] sm:$0xff] %v5163
        %5212 = vst [vmem:[#allocation3 + $0x38] sm:$0xff] %v5164
        %5213 = vst [vmem:[#allocation3 + $0x40] sm:$0xff] %v5165
        %5214 = vst [vmem:[#allocation3 + $0x48] sm:$0xff] %v5166
        %5215 = vst [vmem:[#allocation3 + $0x50] sm:$0xff] %v5167
        %5216 = vst [vmem:[#allocation3 + $0x58] sm:$0xff] %v5168
        %5217 = vst [vmem:[#allocation3 + $0x60] sm:$0xff] %v5169
        %5218 = vst [vmem:[#allocation3 + $0x68] sm:$0xff] %v5170
        %5219 = vst [vmem:[#allocation3 + $0x70] sm:$0xff] %v5171
        %5220 = vst [vmem:[#allocation3 + $0x78] sm:$0xff] %v5172
        %5221 = vst [vmem:[#allocation3 + $0x80] sm:$0xff] %v5173
        %5222 = vst [vmem:[#allocation3 + $0x88] sm:$0xff] %v5174
        %5223 = vst [vmem:[#allocation3 + $0x90] sm:$0xff] %v5175
        %5224 = vst [vmem:[#allocation3 + $0x98] sm:$0xff] %v5176
        %5225 = vst [vmem:[#allocation3 + $0xa0] sm:$0xff] %v5177
        %5226 = vst [vmem:[#allocation3 + $0xa8] sm:$0xff] %v5178
        %5227 = vst [vmem:[#allocation3 + $0xb0] sm:$0xff] %v5179
        %5228 = vst [vmem:[#allocation3 + $0xb8] sm:$0xff] %v5180
        %5229 = vst [vmem:[#allocation3 + $0xc0] sm:$0xff] %v5181
        %5230 = vst [vmem:[#allocation3 + $0xc8] sm:$0xff] %v5182
        %5231 = vst [vmem:[#allocation3 + $0xd0] sm:$0xff] %v5183
        %5232 = vst [vmem:[#allocation3 + $0xd8] sm:$0xff] %v5184
        %5233 = vst [vmem:[#allocation3 + $0xe0] sm:$0xff] %v5185
        %5234 = vst [vmem:[#allocation3 + $0xe8] sm:$0xff] %v5186
        %5235 = vst [vmem:[#allocation3 + $0xf0] sm:$0xff] %v5187
        %5236 = vst [vmem:[#allocation3 + $0xf8] sm:$0xff] %v5188
        %5237 = vst [vmem:[#allocation3 + $0x100] sm:$0xff] %v5189
        %5238 = vst [vmem:[#allocation3 + $0x108] sm:$0xff] %v5190
        %5239 = vst [vmem:[#allocation3 + $0x110] sm:$0xff] %v5191
        %5240 = vst [vmem:[#allocation3 + $0x118] sm:$0xff] %v5192
        %5241 = vst [vmem:[#allocation3 + $0x120] sm:$0xff] %v5193
        %5242 = vst [vmem:[#allocation3 + $0x128] sm:$0xff] %v5194
        %5243 = vst [vmem:[#allocation3 + $0x130] sm:$0xff] %v5195
        %5244 = vst [vmem:[#allocation3 + $0x138] sm:$0xff] %v5196
        %5245 = vst [vmem:[#allocation3 + $0x140] sm:$0xff] %v5197
        %5246 = vst [vmem:[#allocation3 + $0x148] sm:$0xff] %v5198
        %5247 = vst [vmem:[#allocation3 + $0x150] sm:$0xff] %v5199
        %5248 = vst [vmem:[#allocation3 + $0x158] sm:$0xff] %v5200
        %5249 = vst [vmem:[#allocation3 + $0x160] sm:$0xff] %v5201
        %5250 = vst [vmem:[#allocation3 + $0x168] sm:$0xff] %v5202
        %5251 = vst [vmem:[#allocation3 + $0x170] sm:$0xff] %v5203
        %5252 = vst [vmem:[#allocation3 + $0x178] sm:$0xff] %v5204
        %v5253 = vld [vmem:[#allocation3] sm:$0xff]
        %v5254 = vld [vmem:[#allocation3 + $0x8] sm:$0xff]
        %v5255 = vld [vmem:[#allocation3 + $0x18] sm:$0xff]
        %v5256 = vld [vmem:[#allocation3 + $0x20] sm:$0xff]
        %v5257 = vld [vmem:[#allocation3 + $0x30] sm:$0xff]
        %v5258 = vld [vmem:[#allocation3 + $0x38] sm:$0xff]
        %v5259 = vld [vmem:[#allocation3 + $0x48] sm:$0xff]
        %v5260 = vld [vmem:[#allocation3 + $0x50] sm:$0xff]
        %v5261 = vld [vmem:[#allocation3 + $0x60] sm:$0xff]
        %v5262 = vld [vmem:[#allocation3 + $0x68] sm:$0xff]
        %v5263 = vld [vmem:[#allocation3 + $0x78] sm:$0xff]
        %v5264 = vld [vmem:[#allocation3 + $0x80] sm:$0xff]
        %v5265 = vld [vmem:[#allocation3 + $0x90] sm:$0xff]
        %v5266 = vld [vmem:[#allocation3 + $0x98] sm:$0xff]
        %v5267 = vld [vmem:[#allocation3 + $0xa8] sm:$0xff]
        %v5268 = vld [vmem:[#allocation3 + $0xb0] sm:$0xff]
        %v5269 = vld [vmem:[#allocation3 + $0xc0] sm:$0xff]
        %v5270 = vld [vmem:[#allocation3 + $0xc8] sm:$0xff]
        %v5271 = vld [vmem:[#allocation3 + $0xd8] sm:$0xff]
        %v5272 = vld [vmem:[#allocation3 + $0xe0] sm:$0xff]
        %v5273 = vld [vmem:[#allocation3 + $0xf0] sm:$0xff]
        %v5274 = vld [vmem:[#allocation3 + $0xf8] sm:$0xff]
        %v5275 = vld [vmem:[#allocation3 + $0x108] sm:$0xff]
        %v5276 = vld [vmem:[#allocation3 + $0x110] sm:$0xff]
        %v5277 = vld [vmem:[#allocation3 + $0x120] sm:$0xff]
        %v5278 = vld [vmem:[#allocation3 + $0x128] sm:$0xff]
        %v5279 = vld [vmem:[#allocation3 + $0x138] sm:$0xff]
        %v5280 = vld [vmem:[#allocation3 + $0x140] sm:$0xff]
        %v5281 = vld [vmem:[#allocation3 + $0x150] sm:$0xff]
        %v5282 = vld [vmem:[#allocation3 + $0x158] sm:$0xff]
        %v5283 = vld [vmem:[#allocation3 + $0x168] sm:$0xff]
        %v5284 = vld [vmem:[#allocation3 + $0x170] sm:$0xff]
        %v5285 = vld [vmem:[%s4] sm:$0x1]
        %v5287 = vlaneseq
        %v5288 = vshrl.u32 %v5287, 7
        %v5289 = vsub.s32 0, %v5288
        %v5290 = vrot.slane %v5285, %v5289
        %v5292 = vadd.f32 %v5253, %v5290
        %v5293 = vadd.f32 %v5254, %v5290
        %v5294 = vadd.f32 %v5255, %v5290
        %v5295 = vadd.f32 %v5256, %v5290
        %v5296 = vadd.f32 %v5257, %v5290
        %v5297 = vadd.f32 %v5258, %v5290
        %v5298 = vadd.f32 %v5259, %v5290
        %v5299 = vadd.f32 %v5260, %v5290
        %v5300 = vadd.f32 %v5261, %v5290
        %v5301 = vadd.f32 %v5262, %v5290
        %v5302 = vadd.f32 %v5263, %v5290
        %v5303 = vadd.f32 %v5264, %v5290
        %v5304 = vadd.f32 %v5265, %v5290
        %v5305 = vadd.f32 %v5266, %v5290
        %v5306 = vadd.f32 %v5267, %v5290
        %v5307 = vadd.f32 %v5268, %v5290
        %v5308 = vadd.f32 %v5269, %v5290
        %v5309 = vadd.f32 %v5270, %v5290
        %v5310 = vadd.f32 %v5271, %v5290
        %v5311 = vadd.f32 %v5272, %v5290
        %v5312 = vadd.f32 %v5273, %v5290
        %v5313 = vadd.f32 %v5274, %v5290
        %v5314 = vadd.f32 %v5275, %v5290
        %v5315 = vadd.f32 %v5276, %v5290
        %v5316 = vadd.f32 %v5277, %v5290
        %v5317 = vadd.f32 %v5278, %v5290
        %v5318 = vadd.f32 %v5279, %v5290
        %v5319 = vadd.f32 %v5280, %v5290
        %v5320 = vadd.f32 %v5281, %v5290
        %v5321 = vadd.f32 %v5282, %v5290
        %v5322 = vadd.f32 %v5283, %v5290
        %v5323 = vadd.f32 %v5284, %v5290
        %5324 = vxpose.xlu0.b32.start [1/16] %v5292, 128
        %5325 = vxpose.xlu0.b32.cont [2/16] %v5293, 128
        %5326 = vxpose.xlu0.b32.cont [3/16] %v5294, 128
        %5327 = vxpose.xlu0.b32.cont [4/16] %v5295, 128
        %5328 = vxpose.xlu0.b32.cont [5/16] %v5296, 128
        %5329 = vxpose.xlu0.b32.cont [6/16] %v5297, 128
        %5330 = vxpose.xlu0.b32.cont [7/16] %v5298, 128
        %5331 = vxpose.xlu0.b32.cont [8/16] %v5299, 128
        %5332 = vxpose.xlu0.b32.cont [9/16] %v5300, 128
        %5333 = vxpose.xlu0.b32.cont [10/16] %v5301, 128
        %5334 = vxpose.xlu0.b32.cont [11/16] %v5302, 128
        %5335 = vxpose.xlu0.b32.cont [12/16] %v5303, 128
        %5336 = vxpose.xlu0.b32.cont [13/16] %v5304, 128
        %5337 = vxpose.xlu0.b32.cont [14/16] %v5305, 128
        %5338 = vxpose.xlu0.b32.cont [15/16] %v5306, 128
        %5339 = vxpose.xlu0.b32.end [16/16] %v5307, 128
        %v5340 = vpop.trf.xlu0
        %v5341 = vpop.trf.xlu0
        %v5342 = vpop.trf.xlu0
        %v5343 = vpop.trf.xlu0
        %v5344 = vpop.trf.xlu0
        %v5345 = vpop.trf.xlu0
        %v5346 = vpop.trf.xlu0
        %v5347 = vpop.trf.xlu0
        %v5348 = vpop.trf.xlu0
        %v5349 = vpop.trf.xlu0
        %v5350 = vpop.trf.xlu0
        %v5351 = vpop.trf.xlu0
        %v5352 = vpop.trf.xlu0
        %v5353 = vpop.trf.xlu0
        %v5354 = vpop.trf.xlu0
        %v5355 = vpop.trf.xlu0
        %5356 = vxpose.xlu0.b32.start [1/16] %v5308, 128
        %5357 = vxpose.xlu0.b32.cont [2/16] %v5309, 128
        %5358 = vxpose.xlu0.b32.cont [3/16] %v5310, 128
        %5359 = vxpose.xlu0.b32.cont [4/16] %v5311, 128
        %5360 = vxpose.xlu0.b32.cont [5/16] %v5312, 128
        %5361 = vxpose.xlu0.b32.cont [6/16] %v5313, 128
        %5362 = vxpose.xlu0.b32.cont [7/16] %v5314, 128
        %5363 = vxpose.xlu0.b32.cont [8/16] %v5315, 128
        %5364 = vxpose.xlu0.b32.cont [9/16] %v5316, 128
        %5365 = vxpose.xlu0.b32.cont [10/16] %v5317, 128
        %5366 = vxpose.xlu0.b32.cont [11/16] %v5318, 128
        %5367 = vxpose.xlu0.b32.cont [12/16] %v5319, 128
        %5368 = vxpose.xlu0.b32.cont [13/16] %v5320, 128
        %5369 = vxpose.xlu0.b32.cont [14/16] %v5321, 128
        %5370 = vxpose.xlu0.b32.cont [15/16] %v5322, 128
        %5371 = vxpose.xlu0.b32.end [16/16] %v5323, 128
        %v5372 = vpop.trf.xlu0
        %v5373 = vpop.trf.xlu0
        %v5374 = vpop.trf.xlu0
        %v5375 = vpop.trf.xlu0
        %v5376 = vpop.trf.xlu0
        %v5377 = vpop.trf.xlu0
        %v5378 = vpop.trf.xlu0
        %v5379 = vpop.trf.xlu0
        %v5380 = vpop.trf.xlu0
        %v5381 = vpop.trf.xlu0
        %v5382 = vpop.trf.xlu0
        %v5383 = vpop.trf.xlu0
        %v5384 = vpop.trf.xlu0
        %v5385 = vpop.trf.xlu0
        %v5386 = vpop.trf.xlu0
        %v5387 = vpop.trf.xlu0
        %v5388 = vld [vmem:[%s388] sm:$0xff]
        %v5389 = vld [vmem:[%s388 + $0x8] sm:$0xff]
        %v5390 = vld [vmem:[%s388 + $0x10] sm:$0xff]
        %v5391 = vld [vmem:[%s388 + $0x18] sm:$0xff]
        %v5392 = vld [vmem:[%s388 + $0x20] sm:$0xff]
        %v5393 = vld [vmem:[%s388 + $0x28] sm:$0xff]
        %v5394 = vld [vmem:[%s388 + $0x30] sm:$0xff]
        %v5395 = vld [vmem:[%s388 + $0x38] sm:$0xff]
        %v5396 = vld [vmem:[%s5] sm:$0xff]
        %v5397 = vld [vmem:[%s5 + $0x8] sm:$0xff]
        %v5398 = vld [vmem:[%s5 + $0x10] sm:$0xff]
        %v5399 = vld [vmem:[%s5 + $0x18] sm:$0xff]
        %v5400 = vld [vmem:[%s5 + $0x20] sm:$0xff]
        %v5401 = vld [vmem:[%s5 + $0x28] sm:$0xff]
        %v5402 = vld [vmem:[%s5 + $0x30] sm:$0xff]
        %v5403 = vld [vmem:[%s5 + $0x38] sm:$0xff]
        %v5404 = vmul.f32 %v5388, %v5396
        %v5405 = vmul.f32 %v5389, %v5397
        %v5406 = vmul.f32 %v5390, %v5398
        %v5407 = vmul.f32 %v5391, %v5399
        %v5408 = vmul.f32 %v5392, %v5400
        %v5409 = vmul.f32 %v5393, %v5401
        %v5410 = vmul.f32 %v5394, %v5402
        %v5411 = vmul.f32 %v5395, %v5403
        %v5412 = vadd.f32 %v5340, %v5404
        %v5413 = vadd.f32 %v5372, %v5405
        %v5414 = vadd.f32 %v5341, %v5406
        %v5415 = vadd.f32 %v5373, %v5407
        %v5416 = vadd.f32 %v5342, %v5408
        %v5417 = vadd.f32 %v5374, %v5409
        %v5418 = vadd.f32 %v5343, %v5410
        %v5419 = vadd.f32 %v5375, %v5411
        %v5420 = vxor.u32 %v5412, 2147483648
        %v5421 = vxor.u32 %v5413, 2147483648
        %v5422 = vxor.u32 %v5414, 2147483648
        %v5423 = vxor.u32 %v5415, 2147483648
        %v5424 = vxor.u32 %v5416, 2147483648
        %v5425 = vxor.u32 %v5417, 2147483648
        %v5426 = vxor.u32 %v5418, 2147483648
        %v5427 = vxor.u32 %v5419, 2147483648
        %v5428 = vmul.f32 %v5420, 1.442695
        %v5429 = vpow.pop %v5428
        %v5430 = vmul.f32 %v5421, 1.442695
        %v5431 = vpow.pop %v5430
        %v5432 = vmul.f32 %v5422, 1.442695
        %v5433 = vpow.pop %v5432
        %v5434 = vmul.f32 %v5423, 1.442695
        %v5435 = vpow.pop %v5434
        %v5436 = vmul.f32 %v5424, 1.442695
        %v5437 = vpow.pop %v5436
        %v5438 = vmul.f32 %v5425, 1.442695
        %v5439 = vpow.pop %v5438
        %v5440 = vmul.f32 %v5426, 1.442695
        %v5441 = vpow.pop %v5440
        %v5442 = vmul.f32 %v5427, 1.442695
        %v5443 = vpow.pop %v5442
        %v5444 = vadd.f32 %v5429, 1.0
        %v5445 = vadd.f32 %v5431, 1.0
        %v5446 = vadd.f32 %v5433, 1.0
        %v5447 = vadd.f32 %v5435, 1.0
        %v5448 = vadd.f32 %v5437, 1.0
        %v5449 = vadd.f32 %v5439, 1.0
        %v5450 = vadd.f32 %v5441, 1.0
        %v5451 = vadd.f32 %v5443, 1.0
        %v5452 = vrcp.pop %v5444
        %v5453 = vmul.f32 1.0, %v5452
        %v5454 = vrcp.pop %v5445
        %v5455 = vmul.f32 1.0, %v5454
        %v5456 = vrcp.pop %v5446
        %v5457 = vmul.f32 1.0, %v5456
        %v5458 = vrcp.pop %v5447
        %v5459 = vmul.f32 1.0, %v5458
        %v5460 = vrcp.pop %v5448
        %v5461 = vmul.f32 1.0, %v5460
        %v5462 = vrcp.pop %v5449
        %v5463 = vmul.f32 1.0, %v5462
        %v5464 = vrcp.pop %v5450
        %v5465 = vmul.f32 1.0, %v5464
        %v5466 = vrcp.pop %v5451
        %v5467 = vmul.f32 1.0, %v5466
        %v5468 = vld [vmem:[#allocation9] sm:$0xff]
        %v5469 = vld [vmem:[#allocation9 + $0x8] sm:$0xff]
        %v5470 = vld [vmem:[#allocation9 + $0x10] sm:$0xff]
        %v5471 = vld [vmem:[#allocation9 + $0x18] sm:$0xff]
        %v5472 = vld [vmem:[#allocation9 + $0x20] sm:$0xff]
        %v5473 = vld [vmem:[#allocation9 + $0x28] sm:$0xff]
        %v5474 = vld [vmem:[#allocation9 + $0x30] sm:$0xff]
        %v5475 = vld [vmem:[#allocation9 + $0x38] sm:$0xff]
        %v5476 = vmul.f32 %v5388, %v5468
        %v5477 = vmul.f32 %v5389, %v5469
        %v5478 = vmul.f32 %v5390, %v5470
        %v5479 = vmul.f32 %v5391, %v5471
        %v5480 = vmul.f32 %v5392, %v5472
        %v5481 = vmul.f32 %v5393, %v5473
        %v5482 = vmul.f32 %v5394, %v5474
        %v5483 = vmul.f32 %v5395, %v5475
        %v5484 = vadd.f32 %v5344, %v5476
        %v5485 = vadd.f32 %v5376, %v5477
        %v5486 = vadd.f32 %v5345, %v5478
        %v5487 = vadd.f32 %v5377, %v5479
        %v5488 = vadd.f32 %v5346, %v5480
        %v5489 = vadd.f32 %v5378, %v5481
        %v5490 = vadd.f32 %v5347, %v5482
        %v5491 = vadd.f32 %v5379, %v5483
        %v5492 = vxor.u32 %v5484, 2147483648
        %v5493 = vxor.u32 %v5485, 2147483648
        %v5494 = vxor.u32 %v5486, 2147483648
        %v5495 = vxor.u32 %v5487, 2147483648
        %v5496 = vxor.u32 %v5488, 2147483648
        %v5497 = vxor.u32 %v5489, 2147483648
        %v5498 = vxor.u32 %v5490, 2147483648
        %v5499 = vxor.u32 %v5491, 2147483648
        %v5500 = vmul.f32 %v5492, 1.442695
        %v5501 = vpow.pop %v5500
        %v5502 = vmul.f32 %v5493, 1.442695
        %v5503 = vpow.pop %v5502
        %v5504 = vmul.f32 %v5494, 1.442695
        %v5505 = vpow.pop %v5504
        %v5506 = vmul.f32 %v5495, 1.442695
        %v5507 = vpow.pop %v5506
        %v5508 = vmul.f32 %v5496, 1.442695
        %v5509 = vpow.pop %v5508
        %v5510 = vmul.f32 %v5497, 1.442695
        %v5511 = vpow.pop %v5510
        %v5512 = vmul.f32 %v5498, 1.442695
        %v5513 = vpow.pop %v5512
        %v5514 = vmul.f32 %v5499, 1.442695
        %v5515 = vpow.pop %v5514
        %v5516 = vadd.f32 %v5501, 1.0
        %v5517 = vadd.f32 %v5503, 1.0
        %v5518 = vadd.f32 %v5505, 1.0
        %v5519 = vadd.f32 %v5507, 1.0
        %v5520 = vadd.f32 %v5509, 1.0
        %v5521 = vadd.f32 %v5511, 1.0
        %v5522 = vadd.f32 %v5513, 1.0
        %v5523 = vadd.f32 %v5515, 1.0
        %v5524 = vrcp.pop %v5516
        %v5525 = vmul.f32 1.0, %v5524
        %v5526 = vrcp.pop %v5517
        %v5527 = vmul.f32 1.0, %v5526
        %v5528 = vrcp.pop %v5518
        %v5529 = vmul.f32 1.0, %v5528
        %v5530 = vrcp.pop %v5519
        %v5531 = vmul.f32 1.0, %v5530
        %v5532 = vrcp.pop %v5520
        %v5533 = vmul.f32 1.0, %v5532
        %v5534 = vrcp.pop %v5521
        %v5535 = vmul.f32 1.0, %v5534
        %v5536 = vrcp.pop %v5522
        %v5537 = vmul.f32 1.0, %v5536
        %v5538 = vrcp.pop %v5523
        %v5539 = vmul.f32 1.0, %v5538
        %v5540 = vmul.f32 %v5525, %v5388
        %v5541 = vmul.f32 %v5527, %v5389
        %v5542 = vmul.f32 %v5529, %v5390
        %v5543 = vmul.f32 %v5531, %v5391
        %v5544 = vmul.f32 %v5533, %v5392
        %v5545 = vmul.f32 %v5535, %v5393
        %v5546 = vmul.f32 %v5537, %v5394
        %v5547 = vmul.f32 %v5539, %v5395
        %v5548 = vtanh.pop %v5348
        %v5549 = vtanh.pop %v5380
        %v5550 = vtanh.pop %v5349
        %v5551 = vtanh.pop %v5381
        %v5552 = vtanh.pop %v5350
        %v5553 = vtanh.pop %v5382
        %v5554 = vtanh.pop %v5351
        %v5555 = vtanh.pop %v5383
        %v5556 = vmul.f32 %v5453, %v5548
        %v5557 = vmul.f32 %v5455, %v5549
        %v5558 = vmul.f32 %v5457, %v5550
        %v5559 = vmul.f32 %v5459, %v5551
        %v5560 = vmul.f32 %v5461, %v5552
        %v5561 = vmul.f32 %v5463, %v5553
        %v5562 = vmul.f32 %v5465, %v5554
        %v5563 = vmul.f32 %v5467, %v5555
        %v5564 = vadd.f32 %v5540, %v5556
        %v5565 = vadd.f32 %v5541, %v5557
        %v5566 = vadd.f32 %v5542, %v5558
        %v5567 = vadd.f32 %v5543, %v5559
        %v5568 = vadd.f32 %v5544, %v5560
        %v5569 = vadd.f32 %v5545, %v5561
        %v5570 = vadd.f32 %v5546, %v5562
        %v5571 = vadd.f32 %v5547, %v5563
        %v5572 = vld [vmem:[#allocation10] sm:$0xff]
        %v5573 = vld [vmem:[#allocation10 + $0x8] sm:$0xff]
        %v5574 = vld [vmem:[#allocation10 + $0x10] sm:$0xff]
        %v5575 = vld [vmem:[#allocation10 + $0x18] sm:$0xff]
        %v5576 = vld [vmem:[#allocation10 + $0x20] sm:$0xff]
        %v5577 = vld [vmem:[#allocation10 + $0x28] sm:$0xff]
        %v5578 = vld [vmem:[#allocation10 + $0x30] sm:$0xff]
        %v5579 = vld [vmem:[#allocation10 + $0x38] sm:$0xff]
        %v5580 = vmul.f32 %v5564, %v5572
        %v5581 = vmul.f32 %v5565, %v5573
        %v5582 = vmul.f32 %v5566, %v5574
        %v5583 = vmul.f32 %v5567, %v5575
        %v5584 = vmul.f32 %v5568, %v5576
        %v5585 = vmul.f32 %v5569, %v5577
        %v5586 = vmul.f32 %v5570, %v5578
        %v5587 = vmul.f32 %v5571, %v5579
        %v5588 = vadd.f32 %v5352, %v5580
        %v5589 = vadd.f32 %v5384, %v5581
        %v5590 = vadd.f32 %v5353, %v5582
        %v5591 = vadd.f32 %v5385, %v5583
        %v5592 = vadd.f32 %v5354, %v5584
        %v5593 = vadd.f32 %v5386, %v5585
        %v5594 = vadd.f32 %v5355, %v5586
        %v5595 = vadd.f32 %v5387, %v5587
        %v5596 = vxor.u32 %v5588, 2147483648
        %v5597 = vxor.u32 %v5589, 2147483648
        %v5598 = vxor.u32 %v5590, 2147483648
        %v5599 = vxor.u32 %v5591, 2147483648
        %v5600 = vxor.u32 %v5592, 2147483648
        %v5601 = vxor.u32 %v5593, 2147483648
        %v5602 = vxor.u32 %v5594, 2147483648
        %v5603 = vxor.u32 %v5595, 2147483648
        %v5604 = vmul.f32 %v5596, 1.442695
        %v5605 = vpow.pop %v5604
        %v5606 = vmul.f32 %v5597, 1.442695
        %v5607 = vpow.pop %v5606
        %v5608 = vmul.f32 %v5598, 1.442695
        %v5609 = vpow.pop %v5608
        %v5610 = vmul.f32 %v5599, 1.442695
        %v5611 = vpow.pop %v5610
        %v5612 = vmul.f32 %v5600, 1.442695
        %v5613 = vpow.pop %v5612
        %v5614 = vmul.f32 %v5601, 1.442695
        %v5615 = vpow.pop %v5614
        %v5616 = vmul.f32 %v5602, 1.442695
        %v5617 = vpow.pop %v5616
        %v5618 = vmul.f32 %v5603, 1.442695
        %v5619 = vpow.pop %v5618
        %v5620 = vadd.f32 %v5605, 1.0
        %v5621 = vadd.f32 %v5607, 1.0
        %v5622 = vadd.f32 %v5609, 1.0
        %v5623 = vadd.f32 %v5611, 1.0
        %v5624 = vadd.f32 %v5613, 1.0
        %v5625 = vadd.f32 %v5615, 1.0
        %v5626 = vadd.f32 %v5617, 1.0
        %v5627 = vadd.f32 %v5619, 1.0
        %v5628 = vrcp.pop %v5620
        %v5629 = vmul.f32 1.0, %v5628
        %v5630 = vrcp.pop %v5621
        %v5631 = vmul.f32 1.0, %v5630
        %v5632 = vrcp.pop %v5622
        %v5633 = vmul.f32 1.0, %v5632
        %v5634 = vrcp.pop %v5623
        %v5635 = vmul.f32 1.0, %v5634
        %v5636 = vrcp.pop %v5624
        %v5637 = vmul.f32 1.0, %v5636
        %v5638 = vrcp.pop %v5625
        %v5639 = vmul.f32 1.0, %v5638
        %v5640 = vrcp.pop %v5626
        %v5641 = vmul.f32 1.0, %v5640
        %v5642 = vrcp.pop %v5627
        %v5643 = vmul.f32 1.0, %v5642
        %v5644 = vtanh.pop %v5564
        %v5645 = vtanh.pop %v5565
        %v5646 = vtanh.pop %v5566
        %v5647 = vtanh.pop %v5567
        %v5648 = vtanh.pop %v5568
        %v5649 = vtanh.pop %v5569
        %v5650 = vtanh.pop %v5570
        %v5651 = vtanh.pop %v5571
        %v5652 = vmul.f32 %v5629, %v5644
        %v5653 = vmul.f32 %v5631, %v5645
        %v5654 = vmul.f32 %v5633, %v5646
        %v5655 = vmul.f32 %v5635, %v5647
        %v5656 = vmul.f32 %v5637, %v5648
        %v5657 = vmul.f32 %v5639, %v5649
        %v5658 = vmul.f32 %v5641, %v5650
        %v5659 = vmul.f32 %v5643, %v5651
        %5660 = vst [vmem:[%s438] sm:$0xff] %v5652
        %5661 = vst [vmem:[%s438 + $0x8] sm:$0xff] %v5653
        %5662 = vst [vmem:[%s438 + $0x10] sm:$0xff] %v5654
        %5663 = vst [vmem:[%s438 + $0x18] sm:$0xff] %v5655
        %5664 = vst [vmem:[%s438 + $0x20] sm:$0xff] %v5656
        %5665 = vst [vmem:[%s438 + $0x28] sm:$0xff] %v5657
        %5666 = vst [vmem:[%s438 + $0x30] sm:$0xff] %v5658
        %5667 = vst [vmem:[%s438 + $0x38] sm:$0xff] %v5659
        %5668 = vst [vmem:[%s445] sm:$0xff] %v5564
        %5669 = vst [vmem:[%s445 + $0x8] sm:$0xff] %v5565
        %5670 = vst [vmem:[%s445 + $0x10] sm:$0xff] %v5566
        %5671 = vst [vmem:[%s445 + $0x18] sm:$0xff] %v5567
        %5672 = vst [vmem:[%s445 + $0x20] sm:$0xff] %v5568
        %5673 = vst [vmem:[%s445 + $0x28] sm:$0xff] %v5569
        %5674 = vst [vmem:[%s445 + $0x30] sm:$0xff] %v5570
        %5675 = vst [vmem:[%s445 + $0x38] sm:$0xff] %v5571
        %s5676 = sand.u32 %s225, 1
        %s5677 = scalar_lea.sflag [#allocation6], %s5676
        %s5678 = sand.u32 %s225, 1
        %s5679 = smul.addr %s5678, 64
        %s5680 = scalar_lea.vmem [#allocation12], %s5679
        %s5681 = sand.u32 %s251, 1
        %s5682 = scalar_lea.sflag [#allocation14], %s5681
        %s5683 = sand.u32 %s251, 1
        %s5684 = smul.addr %s5683, 64
        %s5685 = scalar_lea.vmem [#allocation13], %s5684
        // Predicated region
        $region69: #{tpu_custom_call.1} parent=51 // pred_check
          %p5686 = pneg %p235
        $region70: #{tpu_custom_call.1} parent=51 // pred_check_branch
          %5688 = sbr.rel (%p5686) target = $region72
        $region71: #{tpu_custom_call.1} parent=51 // pred_region
          %s5690 = ssub.s32 1024, 1024
          %5691 = vsyncadd %s5677, %s5690
          %s5692 = smul.addr %s34, 8
          %s5693 = smul.addr %s5692, 128
          %s5694 = scalar_lea.hbm %s8, %s5693
          %s5695 = sshll.u32 %s5680, 4
          %s5696 = int_to_ptr.vmem [resolvable:$true] %s5695
          %5701 = dma.vmem_to_hbm [thread:$0]  %s5696, 1024, %s5694, %s5677, 256, 256, 16
        $region72: #{tpu_custom_call.1} parent=51 // pred_fallthru
          _
        // Predicated region
        $region73: #{tpu_custom_call.1} parent=51 // pred_check
          %p5702 = pneg %p261
        $region74: #{tpu_custom_call.1} parent=51 // pred_check_branch
          %5704 = sbr.rel (%p5702) target = $region76
        $region75: #{tpu_custom_call.1} parent=51 // pred_region
          %s5706 = ssub.s32 1024, 1024
          %5707 = vsyncadd %s5682, %s5706
          %s5708 = smul.addr %s34, 8
          %s5709 = smul.addr %s5708, 128
          %s5710 = scalar_lea.hbm %s9, %s5709
          %s5711 = sshll.u32 %s5685, 4
          %s5712 = int_to_ptr.vmem [resolvable:$true] %s5711
          %5717 = dma.vmem_to_hbm [thread:$0]  %s5712, 1024, %s5710, %s5682, 256, 256, 16
        $region76: #{tpu_custom_call.1} parent=51 // pred_fallthru
          _
      $region52: #{tpu_custom_call.1} parent=5 // pred_fallthru
        _
      %p5718 = scmp.le.s32.totalorder 2, %s29
      // Predicated region
      $region77: #{tpu_custom_call.1} parent=5 // pred_check
        %p5719 = pneg %p5718
      $region78: #{tpu_custom_call.1} parent=5 // pred_check_branch
        %5721 = sbr.rel (%p5719) target = $region80
      $region79: #{tpu_custom_call.1} parent=5 // pred_region
        %s5722 = ssub.s32 %s29, 2
        // Predicated region
        $region81: #{tpu_custom_call.1} parent=79 // pred_check
          %p5723 = pneg %p241
        $region82: #{tpu_custom_call.1} parent=79 // pred_check_branch
          %5725 = sbr.rel (%p5723) target = $region84
        $region83: #{tpu_custom_call.1} parent=79 // pred_region
          %s5726 = sand.u32 %s226, 1
          %s5727 = scalar_lea.sflag [#allocation6], %s5726
          %s5728 = sand.u32 %s226, 1
          %s5729 = smul.addr %s5728, 64
          %s5730 = scalar_lea.vmem [#allocation12], %s5729
          %5731 = dma.done %s5727, 1024
        $region84: #{tpu_custom_call.1} parent=79 // pred_fallthru
          _
        // Predicated region
        $region85: #{tpu_custom_call.1} parent=79 // pred_check
          %p5732 = pneg %p267
        $region86: #{tpu_custom_call.1} parent=79 // pred_check_branch
          %5734 = sbr.rel (%p5732) target = $region88
        $region87: #{tpu_custom_call.1} parent=79 // pred_region
          %s5735 = sand.u32 %s252, 1
          %s5736 = scalar_lea.sflag [#allocation14], %s5735
          %s5737 = sand.u32 %s252, 1
          %s5738 = smul.addr %s5737, 64
          %s5739 = scalar_lea.vmem [#allocation13], %s5738
          %5740 = dma.done %s5736, 1024
        $region88: #{tpu_custom_call.1} parent=79 // pred_fallthru
          _
      $region80: #{tpu_custom_call.1} parent=5 // pred_fallthru
        _
    $region6: #{tpu_custom_call.1} parent=1 // loop_footer
      %s33 = sadd.s32 1, %s29
    $region7: #{tpu_custom_call.1} parent=1 // loop_footer_branch
      %28 = sbr.rel target = $region3
    $region8: #{tpu_custom_call.1} parent=1 // loop_exit
      _
    %5741 = vsyncpa [#allocation5], 1
    %s5742 = scalar_lea.sflag [#allocation5], 1
    %5743 = vsyncpa %s5742, 1
    %5744 = vsyncpa [#allocation8], 1
    %s5745 = scalar_lea.sflag [#allocation8], 1
    %5746 = vsyncpa %s5745, 1
    %5747 = vsyncpa [#allocation11], 1
    %5748 = vsyncpa [#allocation6], 1
    %s5749 = scalar_lea.sflag [#allocation6], 1
    %5750 = vsyncpa %s5749, 1
    %5751 = vsyncpa [#allocation14], 1
    %s5752 = scalar_lea.sflag [#allocation14], 1
    %5753 = vsyncpa %s5752, 1

</llo_original>
